<compile_context>
chip_gen: v5e
topology: v5e:2x2
jax: 0.10.0
libtpu: 0.0.40
codegen_flags: <defaults>
</compile_context>

<pallas_src>
import jax
import jax.numpy as jnp
from jax import lax
from jax.experimental import pallas as pl
from jax.experimental.pallas import tpu as pltpu


# ----------------------------------------------------------------------------
# Fused Pallas kernel: conv1/bn1/relu -> conv2/bn2/relu -> SA1..SA4 -> cat
# ----------------------------------------------------------------------------

def stacked_attention_kernel(x_ref, c1w_ref, c1b_ref, c2w_ref, c2b_ref,
                             wqk_ref, wv_ref, bv_ref, wt_ref, bt_ref, o_ref):
    f32 = jnp.float32
    bf16 = jnp.bfloat16

    h = x_ref[0]                                                   # [N, C] f32

    # conv1 + (folded) bn1 + ReLU ; conv2 + bn2 + ReLU — back to back on the
    # resident tile, bf16 operands, f32 accumulation.
    h = jnp.maximum(
        jnp.dot(h.astype(bf16), c1w_ref[...],
                preferred_element_type=f32) + c1b_ref[...], 0.0)
    h = jnp.maximum(
        jnp.dot(h.astype(bf16), c2w_ref[...],
                preferred_element_type=f32) + c2b_ref[...], 0.0)

    # Four SA (offset-attention) layers; activation never leaves VMEM.
    for l in range(4):
        hb = h.astype(bf16)
        # q_conv.weight == k_conv.weight (tied) -> single projection.
        qk = jnp.dot(hb, wqk_ref[l], preferred_element_type=f32)   # [N, C/4]
        qkb = qk.astype(bf16)
        # energy[q, k] = <qk[q], qk[k]>
        energy = lax.dot_general(qkb, qkb, (((1,), (1,)), ((), ())),
                                 preferred_element_type=f32)       # [Nq, Nk]
        attn = jax.nn.softmax(energy, axis=-1)                     # over keys
        # divide by sum over queries; reciprocal goes to the EUP slot.
        attn = attn * pl.reciprocal(1e-9 + jnp.sum(attn, axis=0, keepdims=True),
                                    approx=True)
        v = jnp.dot(hb, wv_ref[l], preferred_element_type=f32) + bv_ref[l]
        # x_r[m, c] = sum_n attn[n, m] * v[n, c]
        x_r = lax.dot_general(attn.astype(bf16), v.astype(bf16),
                              (((0,), (0,)), ((), ())),
                              preferred_element_type=f32)          # [N, C]
        # trans_conv + (folded) after_norm + ReLU, residual add.
        z = jnp.dot((h - x_r).astype(bf16), wt_ref[l],
                    preferred_element_type=f32) + bt_ref[l]
        h = h + jnp.maximum(z, 0.0)
        # write this layer's output into its slice of the concat directly.
        o_ref[0, l] = h


def stacked_attention_forward(packed, x):
    """x: [B, C, N] (torch NCW layout).  Returns [B, 4*C, N] = cat(x1..x4, dim=1)."""
    B, C, N = x.shape
    x_nl = jnp.transpose(x, (0, 2, 1))                             # [B, N, C]

    out = pl.pallas_call(
        stacked_attention_kernel,
        out_shape=jax.ShapeDtypeStruct((B, 4, N, C), jnp.float32),
        grid=(B,),
        in_specs=[
            pl.BlockSpec((1, N, C), lambda b: (b, 0, 0)),          # x (per-batch)
            pl.BlockSpec((C, C), lambda b: (0, 0)),                # conv1 (BN-folded)
            pl.BlockSpec((1, C), lambda b: (0, 0)),                # bn1 bias
            pl.BlockSpec((C, C), lambda b: (0, 0)),                # conv2 (BN-folded)
            pl.BlockSpec((1, C), lambda b: (0, 0)),                # bn2 bias
            pl.BlockSpec((4, C, C // 4), lambda b: (0, 0, 0)),     # wqk (tied q/k)
            pl.BlockSpec((4, C, C), lambda b: (0, 0, 0)),          # wv
            pl.BlockSpec((4, 1, C), lambda b: (0, 0, 0)),          # bv
            pl.BlockSpec((4, C, C), lambda b: (0, 0, 0)),          # wt (BN-folded)
            pl.BlockSpec((4, 1, C), lambda b: (0, 0, 0)),          # bt (BN-folded)
        ],
        out_specs=pl.BlockSpec((1, 4, N, C), lambda b: (b, 0, 0, 0)),
        compiler_params=pltpu.CompilerParams(
            dimension_semantics=("parallel",)),                    # B>=2 -> both v7x TCs
    )(x_nl, packed["c1w"], packed["c1b"], packed["c2w"], packed["c2b"],
      packed["wqk"], packed["wv"], packed["bv"], packed["wt"], packed["bt"])

    # torch.cat((x1, x2, x3, x4), dim=1) on [B, C, N] tensors -> [B, 4C, N]
    return jnp.transpose(out, (0, 1, 3, 2)).reshape(B, 4 * C, N)


# ----------------------------------------------------------------------------
# Parameters: raw (f32, torch-like) + packed (BN-folded, bf16 matmul weights)
# ----------------------------------------------------------------------------

def init_params(key, channels=256):
    C = channels
    keys = iter(jax.random.split(key, 64))

    def w(shape, scale=0.05):
        return (scale * jax.random.normal(next(keys), shape)).astype(jnp.float32)

    def bn(c):
        gamma = jax.random.uniform(next(keys), (c,), minval=0.5, maxval=1.5)
        beta = 0.1 * jax.random.normal(next(keys), (c,))
        mean = 0.1 * jax.random.normal(next(keys), (c,))
        var = jax.random.uniform(next(keys), (c,), minval=0.5, maxval=1.5)
        s = (gamma / jnp.sqrt(var + 1e-5)).astype(jnp.float32)
        b = (beta - mean * s).astype(jnp.float32)
        return s, b

    p = {"conv1_w": w((C, C))}
    p["bn1_s"], p["bn1_b"] = bn(C)
    p["conv2_w"] = w((C, C))
    p["bn2_s"], p["bn2_b"] = bn(C)
    sa = []
    for _ in range(4):
        s, b = bn(C)
        sa.append(dict(wqk=w((C, C // 4)), wv=w((C, C)), bv=w((C,)),
                       wt=w((C, C)), bt=w((C,)), bn_s=s, bn_b=b))
    p["sa"] = sa
    return p


def pack_params(raw):
    """Fold BN scales into weights, cast matmul weights to bf16, stack SA layers."""
    C = raw["conv1_w"].shape[0]

    def fold_cols(w, s):  # per-output-channel (column) scale
        return (w * s[None, :]).astype(jnp.bfloat16)

    packed = {
        "c1w": fold_cols(raw["conv1_w"], raw["bn1_s"]),
        "c1b": raw["bn1_b"].reshape(1, C),
        "c2w": fold_cols(raw["conv2_w"], raw["bn2_s"]),
        "c2b": raw["bn2_b"].reshape(1, C),
    }
    wqk, wv, bv, wt, bt = [], [], [], [], []
    for l in raw["sa"]:
        wqk.append(l["wqk"].astype(jnp.bfloat16))
        wv.append(l["wv"].astype(jnp.bfloat16))
        bv.append(l["bv"].reshape(1, C))
        # (y @ Wt + bt) * s + b  ==  y @ (Wt*s) + (bt*s + b)
        wt.append((l["wt"] * l["bn_s"][None, :]).astype(jnp.bfloat16))
        bt.append((l["bt"] * l["bn_s"] + l["bn_b"]).reshape(1, C))
    packed["wqk"] = jnp.stack(wqk)
    packed["wv"] = jnp.stack(wv)
    packed["bv"] = jnp.stack(bv)
    packed["wt"] = jnp.stack(wt)
    packed["bt"] = jnp.stack(bt)
    return packed


# ----------------------------------------------------------------------------
# Pure-JAX f32 reference (mirrors the torch module exactly)
# ----------------------------------------------------------------------------

def reference_forward(raw, x):
    B, C, N = x.shape
    h = jnp.transpose(x, (0, 2, 1))                                # [B, N, C]
    h = jax.nn.relu((h @ raw["conv1_w"]) * raw["bn1_s"] + raw["bn1_b"])
    h = jax.nn.relu((h @ raw["conv2_w"]) * raw["bn2_s"] + raw["bn2_b"])
    outs = []
    for l in raw["sa"]:
        qk = h @ l["wqk"]                                          # [B, N, C/4]
        energy = jnp.einsum("bqc,bkc->bqk", qk, qk)
        attn = jax.nn.softmax(energy, axis=-1)
        attn = attn / (1e-9 + jnp.sum(attn, axis=1, keepdims=True))
        v = h @ l["wv"] + l["bv"]
        x_r = jnp.einsum("bnm,bnc->bmc", attn, v)
        z = jax.nn.relu(((h - x_r) @ l["wt"] + l["bt"]) * l["bn_s"] + l["bn_b"])
        h = h + z
        outs.append(h)
    out = jnp.stack(outs, axis=1)                                  # [B, 4, N, C]
    return jnp.transpose(out, (0, 1, 3, 2)).reshape(B, 4 * C, N)


# ----------------------------------------------------------------------------
# Demo
# ----------------------------------------------------------------------------

if __name__ == "__main__":
    key = jax.random.PRNGKey(0)
    kp, kx = jax.random.split(key)

    B, C, N = 2, 256, 128          # module default channels=256; small N, B

    raw = init_params(kp, channels=C)
    packed = pack_params(raw)
    x = jax.random.uniform(kx, (B, C, N), dtype=jnp.float32)

    fwd = jax.jit(stacked_attention_forward)
    out = fwd(packed, x)
    jax.block_until_ready(out)

    assert out.shape == (B, 4 * C, N), out.shape
    assert bool(jnp.all(jnp.isfinite(out)))

    ref = reference_forward(raw, x)
    rel_err = float(jnp.max(jnp.abs(out - ref)) / (jnp.max(jnp.abs(ref)) + 1e-6))
    assert rel_err < 7.5e-2, f"relative error too large: {rel_err}"

    print("KERNEL_OK")
</pallas_src>

<mosaic_0001>
module attributes {stable_mosaic.version = 11 : i64} {
  func.func @stacked_attention_kernel(%arg0: i32, %arg1: memref<1x128x256xf32, #tpu.memory_space<vmem>>, %arg2: memref<256x256xbf16, #tpu.memory_space<vmem>>, %arg3: memref<1x256xf32, #tpu.memory_space<vmem>>, %arg4: memref<256x256xbf16, #tpu.memory_space<vmem>>, %arg5: memref<1x256xf32, #tpu.memory_space<vmem>>, %arg6: memref<4x256x64xbf16, #tpu.memory_space<vmem>>, %arg7: memref<4x256x256xbf16, #tpu.memory_space<vmem>>, %arg8: memref<4x1x256xf32, #tpu.memory_space<vmem>>, %arg9: memref<4x256x256xbf16, #tpu.memory_space<vmem>>, %arg10: memref<4x1x256xf32, #tpu.memory_space<vmem>>, %arg11: memref<1x4x128x256xf32, #tpu.memory_space<vmem>>) attributes {dimension_semantics = [#tpu.dimension_semantics<parallel>], iteration_bounds = array<i64: 2>, scalar_prefetch = 0 : i64, scratch_operands = 0 : i64, tpu.core_type = #tpu.core_type<tc>, window_params = [{transform_indices = @transform_0, window_bounds = array<i64: 1, 128, 256>}, {pipeline_mode = #tpu.pipeline_mode<synchronous>, transform_indices = @transform_1, window_bounds = array<i64: 256, 256>}, {pipeline_mode = #tpu.pipeline_mode<synchronous>, transform_indices = @transform_2, window_bounds = array<i64: 1, 256>}, {pipeline_mode = #tpu.pipeline_mode<synchronous>, transform_indices = @transform_3, window_bounds = array<i64: 256, 256>}, {pipeline_mode = #tpu.pipeline_mode<synchronous>, transform_indices = @transform_4, window_bounds = array<i64: 1, 256>}, {pipeline_mode = #tpu.pipeline_mode<synchronous>, transform_indices = @transform_5, window_bounds = array<i64: 4, 256, 64>}, {pipeline_mode = #tpu.pipeline_mode<synchronous>, transform_indices = @transform_6, window_bounds = array<i64: 4, 256, 256>}, {pipeline_mode = #tpu.pipeline_mode<synchronous>, transform_indices = @transform_7, window_bounds = array<i64: 4, 1, 256>}, {pipeline_mode = #tpu.pipeline_mode<synchronous>, transform_indices = @transform_8, window_bounds = array<i64: 4, 256, 256>}, {pipeline_mode = #tpu.pipeline_mode<synchronous>, transform_indices = @transform_9, window_bounds = array<i64: 4, 1, 256>}, {transform_indices = @transform_10, window_bounds = array<i64: 1, 4, 128, 256>}]} {
    %c0 = arith.constant 0 : index
    %c0_0 = arith.constant 0 : index
    %c0_1 = arith.constant 0 : index
    %0 = vector.load %arg1[%c0, %c0_0, %c0_1] : memref<1x128x256xf32, #tpu.memory_space<vmem>>, vector<1x128x256xf32>
    %1 = vector.shape_cast %0 : vector<1x128x256xf32> to vector<128x256xf32>
    %2 = arith.truncf %1 : vector<128x256xf32> to vector<128x256xbf16>
    %c0_2 = arith.constant 0 : index
    %c0_3 = arith.constant 0 : index
    %3 = vector.load %arg2[%c0_2, %c0_3] : memref<256x256xbf16, #tpu.memory_space<vmem>>, vector<256x256xbf16>
    %cst = arith.constant dense<0.000000e+00> : vector<128x256xf32>
    %4 = tpu.matmul %2, %3, %cst {dimension_numbers = #tpu.dot_dimension_numbers<[1], [0], [0], [1], [0, 0, 1, 1], [], []>} : vector<128x256xbf16>, vector<256x256xbf16>, vector<128x256xf32> -> vector<128x256xf32>
    %c0_4 = arith.constant 0 : index
    %c0_5 = arith.constant 0 : index
    %5 = vector.load %arg3[%c0_4, %c0_5] : memref<1x256xf32, #tpu.memory_space<vmem>>, vector<1x256xf32>
    %6 = vector.broadcast %5 : vector<1x256xf32> to vector<128x256xf32>
    %7 = arith.addf %4, %6 : vector<128x256xf32>
    %cst_6 = arith.constant 0.000000e+00 : f32
    %8 = vector.broadcast %cst_6 : f32 to vector<128x256xf32>
    %9 = arith.maximumf %7, %8 : vector<128x256xf32>
    %10 = arith.truncf %9 : vector<128x256xf32> to vector<128x256xbf16>
    %c0_7 = arith.constant 0 : index
    %c0_8 = arith.constant 0 : index
    %11 = vector.load %arg4[%c0_7, %c0_8] : memref<256x256xbf16, #tpu.memory_space<vmem>>, vector<256x256xbf16>
    %cst_9 = arith.constant dense<0.000000e+00> : vector<128x256xf32>
    %12 = tpu.matmul %10, %11, %cst_9 {dimension_numbers = #tpu.dot_dimension_numbers<[1], [0], [0], [1], [0, 0, 1, 1], [], []>} : vector<128x256xbf16>, vector<256x256xbf16>, vector<128x256xf32> -> vector<128x256xf32>
    %c0_10 = arith.constant 0 : index
    %c0_11 = arith.constant 0 : index
    %13 = vector.load %arg5[%c0_10, %c0_11] : memref<1x256xf32, #tpu.memory_space<vmem>>, vector<1x256xf32>
    %14 = vector.broadcast %13 : vector<1x256xf32> to vector<128x256xf32>
    %15 = arith.addf %12, %14 : vector<128x256xf32>
    %cst_12 = arith.constant 0.000000e+00 : f32
    %16 = vector.broadcast %cst_12 : f32 to vector<128x256xf32>
    %17 = arith.maximumf %15, %16 : vector<128x256xf32>
    %18 = arith.truncf %17 : vector<128x256xf32> to vector<128x256xbf16>
    %c0_13 = arith.constant 0 : index
    %c0_14 = arith.constant 0 : index
    %c0_15 = arith.constant 0 : index
    %19 = vector.load %arg6[%c0_13, %c0_14, %c0_15] : memref<4x256x64xbf16, #tpu.memory_space<vmem>>, vector<1x256x64xbf16>
    %20 = vector.shape_cast %19 : vector<1x256x64xbf16> to vector<256x64xbf16>
    %cst_16 = arith.constant dense<0.000000e+00> : vector<128x64xf32>
    %21 = tpu.matmul %18, %20, %cst_16 {dimension_numbers = #tpu.dot_dimension_numbers<[1], [0], [0], [1], [0, 0, 1, 1], [], []>} : vector<128x256xbf16>, vector<256x64xbf16>, vector<128x64xf32> -> vector<128x64xf32>
    %22 = arith.truncf %21 : vector<128x64xf32> to vector<128x64xbf16>
    %cst_17 = arith.constant dense<0.000000e+00> : vector<128x128xf32>
    %23 = tpu.matmul %22, %22, %cst_17 {dimension_numbers = #tpu.dot_dimension_numbers<[1], [1], [0], [0], [0, 0, 1, 0], [], []>} : vector<128x64xbf16>, vector<128x64xbf16>, vector<128x128xf32> -> vector<128x128xf32>
    %cst_18 = arith.constant dense<0xFF800000> : vector<128xf32>
    %24 = vector.multi_reduction <maximumf>, %23, %cst_18 [1] : vector<128x128xf32> to vector<128xf32>
    %cst_19 = arith.constant 0xFF800000 : f32
    %25 = vector.broadcast %cst_19 : f32 to vector<128xf32>
    %26 = arith.maximumf %25, %24 : vector<128xf32>
    %27 = vector.shape_cast %26 : vector<128xf32> to vector<128x1xf32>
    %28 = vector.broadcast %27 : vector<128x1xf32> to vector<128x128xf32>
    %29 = arith.subf %23, %28 : vector<128x128xf32>
    %30 = math.exp %29 : vector<128x128xf32>
    %cst_20 = arith.constant dense<0.000000e+00> : vector<128xf32>
    %31 = vector.multi_reduction <add>, %30, %cst_20 [1] : vector<128x128xf32> to vector<128xf32>
    %32 = vector.shape_cast %31 : vector<128xf32> to vector<128x1xf32>
    %33 = vector.broadcast %32 : vector<128x1xf32> to vector<128x128xf32>
    %34 = arith.divf %30, %33 : vector<128x128xf32>
    %cst_21 = arith.constant dense<0.000000e+00> : vector<128xf32>
    %35 = vector.multi_reduction <add>, %34, %cst_21 [0] : vector<128x128xf32> to vector<128xf32>
    %36 = vector.shape_cast %35 : vector<128xf32> to vector<1x128xf32>
    %cst_22 = arith.constant 9.99999971E-10 : f32
    %37 = vector.broadcast %cst_22 : f32 to vector<1x128xf32>
    %38 = arith.addf %37, %36 : vector<1x128xf32>
    %39 = tpu.reciprocal %38 {approx = true} : vector<1x128xf32> -> vector<1x128xf32>
    %40 = vector.broadcast %39 : vector<1x128xf32> to vector<128x128xf32>
    %41 = arith.mulf %34, %40 : vector<128x128xf32>
    %c0_23 = arith.constant 0 : index
    %c0_24 = arith.constant 0 : index
    %c0_25 = arith.constant 0 : index
    %42 = vector.load %arg7[%c0_23, %c0_24, %c0_25] : memref<4x256x256xbf16, #tpu.memory_space<vmem>>, vector<1x256x256xbf16>
    %43 = vector.shape_cast %42 : vector<1x256x256xbf16> to vector<256x256xbf16>
    %cst_26 = arith.constant dense<0.000000e+00> : vector<128x256xf32>
    %44 = tpu.matmul %18, %43, %cst_26 {dimension_numbers = #tpu.dot_dimension_numbers<[1], [0], [0], [1], [0, 0, 1, 1], [], []>} : vector<128x256xbf16>, vector<256x256xbf16>, vector<128x256xf32> -> vector<128x256xf32>
    %c0_27 = arith.constant 0 : index
    %c0_28 = arith.constant 0 : index
    %c0_29 = arith.constant 0 : index
    %45 = vector.load %arg8[%c0_27, %c0_28, %c0_29] : memref<4x1x256xf32, #tpu.memory_space<vmem>>, vector<1x1x256xf32>
    %46 = vector.shape_cast %45 : vector<1x1x256xf32> to vector<1x256xf32>
    %47 = vector.broadcast %46 : vector<1x256xf32> to vector<128x256xf32>
    %48 = arith.addf %44, %47 : vector<128x256xf32>
    %49 = arith.truncf %41 : vector<128x128xf32> to vector<128x128xbf16>
    %50 = arith.truncf %48 : vector<128x256xf32> to vector<128x256xbf16>
    %cst_30 = arith.constant dense<0.000000e+00> : vector<128x256xf32>
    %51 = tpu.matmul %49, %50, %cst_30 {dimension_numbers = #tpu.dot_dimension_numbers<[0], [0], [1], [1], [0, 1, 1, 1], [], []>} : vector<128x128xbf16>, vector<128x256xbf16>, vector<128x256xf32> -> vector<128x256xf32>
    %52 = arith.subf %17, %51 : vector<128x256xf32>
    %53 = arith.truncf %52 : vector<128x256xf32> to vector<128x256xbf16>
    %c0_31 = arith.constant 0 : index
    %c0_32 = arith.constant 0 : index
    %c0_33 = arith.constant 0 : index
    %54 = vector.load %arg9[%c0_31, %c0_32, %c0_33] : memref<4x256x256xbf16, #tpu.memory_space<vmem>>, vector<1x256x256xbf16>
    %55 = vector.shape_cast %54 : vector<1x256x256xbf16> to vector<256x256xbf16>
    %cst_34 = arith.constant dense<0.000000e+00> : vector<128x256xf32>
    %56 = tpu.matmul %53, %55, %cst_34 {dimension_numbers = #tpu.dot_dimension_numbers<[1], [0], [0], [1], [0, 0, 1, 1], [], []>} : vector<128x256xbf16>, vector<256x256xbf16>, vector<128x256xf32> -> vector<128x256xf32>
    %c0_35 = arith.constant 0 : index
    %c0_36 = arith.constant 0 : index
    %c0_37 = arith.constant 0 : index
    %57 = vector.load %arg10[%c0_35, %c0_36, %c0_37] : memref<4x1x256xf32, #tpu.memory_space<vmem>>, vector<1x1x256xf32>
    %58 = vector.shape_cast %57 : vector<1x1x256xf32> to vector<1x256xf32>
    %59 = vector.broadcast %58 : vector<1x256xf32> to vector<128x256xf32>
    %60 = arith.addf %56, %59 : vector<128x256xf32>
    %cst_38 = arith.constant 0.000000e+00 : f32
    %61 = vector.broadcast %cst_38 : f32 to vector<128x256xf32>
    %62 = arith.maximumf %60, %61 : vector<128x256xf32>
    %63 = arith.addf %17, %62 : vector<128x256xf32>
    %c0_39 = arith.constant 0 : index
    %c0_40 = arith.constant 0 : index
    %c0_41 = arith.constant 0 : index
    %c0_42 = arith.constant 0 : index
    %64 = vector.load %arg11[%c0_39, %c0_40, %c0_41, %c0_42] : memref<1x4x128x256xf32, #tpu.memory_space<vmem>>, vector<1x1x128x256xf32>
    %65 = vector.shape_cast %64 : vector<1x1x128x256xf32> to vector<128x256xf32>
    %66 = vector.shape_cast %63 : vector<128x256xf32> to vector<1x1x128x256xf32>
    tpu.vector_store %arg11[%c0_39, %c0_40, %c0_41, %c0_42], %66 {strides = array<i32>} : memref<1x4x128x256xf32, #tpu.memory_space<vmem>>, vector<1x1x128x256xf32>,
    %67 = arith.truncf %63 : vector<128x256xf32> to vector<128x256xbf16>
    %c1 = arith.constant 1 : index
    %c0_43 = arith.constant 0 : index
    %c0_44 = arith.constant 0 : index
    %68 = vector.load %arg6[%c1, %c0_43, %c0_44] : memref<4x256x64xbf16, #tpu.memory_space<vmem>>, vector<1x256x64xbf16>
    %69 = vector.shape_cast %68 : vector<1x256x64xbf16> to vector<256x64xbf16>
    %cst_45 = arith.constant dense<0.000000e+00> : vector<128x64xf32>
    %70 = tpu.matmul %67, %69, %cst_45 {dimension_numbers = #tpu.dot_dimension_numbers<[1], [0], [0], [1], [0, 0, 1, 1], [], []>} : vector<128x256xbf16>, vector<256x64xbf16>, vector<128x64xf32> -> vector<128x64xf32>
    %71 = arith.truncf %70 : vector<128x64xf32> to vector<128x64xbf16>
    %cst_46 = arith.constant dense<0.000000e+00> : vector<128x128xf32>
    %72 = tpu.matmul %71, %71, %cst_46 {dimension_numbers = #tpu.dot_dimension_numbers<[1], [1], [0], [0], [0, 0, 1, 0], [], []>} : vector<128x64xbf16>, vector<128x64xbf16>, vector<128x128xf32> -> vector<128x128xf32>
    %cst_47 = arith.constant dense<0xFF800000> : vector<128xf32>
    %73 = vector.multi_reduction <maximumf>, %72, %cst_47 [1] : vector<128x128xf32> to vector<128xf32>
    %cst_48 = arith.constant 0xFF800000 : f32
    %74 = vector.broadcast %cst_48 : f32 to vector<128xf32>
    %75 = arith.maximumf %74, %73 : vector<128xf32>
    %76 = vector.shape_cast %75 : vector<128xf32> to vector<128x1xf32>
    %77 = vector.broadcast %76 : vector<128x1xf32> to vector<128x128xf32>
    %78 = arith.subf %72, %77 : vector<128x128xf32>
    %79 = math.exp %78 : vector<128x128xf32>
    %cst_49 = arith.constant dense<0.000000e+00> : vector<128xf32>
    %80 = vector.multi_reduction <add>, %79, %cst_49 [1] : vector<128x128xf32> to vector<128xf32>
    %81 = vector.shape_cast %80 : vector<128xf32> to vector<128x1xf32>
    %82 = vector.broadcast %81 : vector<128x1xf32> to vector<128x128xf32>
    %83 = arith.divf %79, %82 : vector<128x128xf32>
    %cst_50 = arith.constant dense<0.000000e+00> : vector<128xf32>
    %84 = vector.multi_reduction <add>, %83, %cst_50 [0] : vector<128x128xf32> to vector<128xf32>
    %85 = vector.shape_cast %84 : vector<128xf32> to vector<1x128xf32>
    %cst_51 = arith.constant 9.99999971E-10 : f32
    %86 = vector.broadcast %cst_51 : f32 to vector<1x128xf32>
    %87 = arith.addf %86, %85 : vector<1x128xf32>
    %88 = tpu.reciprocal %87 {approx = true} : vector<1x128xf32> -> vector<1x128xf32>
    %89 = vector.broadcast %88 : vector<1x128xf32> to vector<128x128xf32>
    %90 = arith.mulf %83, %89 : vector<128x128xf32>
    %c1_52 = arith.constant 1 : index
    %c0_53 = arith.constant 0 : index
    %c0_54 = arith.constant 0 : index
    %91 = vector.load %arg7[%c1_52, %c0_53, %c0_54] : memref<4x256x256xbf16, #tpu.memory_space<vmem>>, vector<1x256x256xbf16>
    %92 = vector.shape_cast %91 : vector<1x256x256xbf16> to vector<256x256xbf16>
    %cst_55 = arith.constant dense<0.000000e+00> : vector<128x256xf32>
    %93 = tpu.matmul %67, %92, %cst_55 {dimension_numbers = #tpu.dot_dimension_numbers<[1], [0], [0], [1], [0, 0, 1, 1], [], []>} : vector<128x256xbf16>, vector<256x256xbf16>, vector<128x256xf32> -> vector<128x256xf32>
    %c1_56 = arith.constant 1 : index
    %c0_57 = arith.constant 0 : index
    %c0_58 = arith.constant 0 : index
    %94 = vector.load %arg8[%c1_56, %c0_57, %c0_58] : memref<4x1x256xf32, #tpu.memory_space<vmem>>, vector<1x1x256xf32>
    %95 = vector.shape_cast %94 : vector<1x1x256xf32> to vector<1x256xf32>
    %96 = vector.broadcast %95 : vector<1x256xf32> to vector<128x256xf32>
    %97 = arith.addf %93, %96 : vector<128x256xf32>
    %98 = arith.truncf %90 : vector<128x128xf32> to vector<128x128xbf16>
    %99 = arith.truncf %97 : vector<128x256xf32> to vector<128x256xbf16>
    %cst_59 = arith.constant dense<0.000000e+00> : vector<128x256xf32>
    %100 = tpu.matmul %98, %99, %cst_59 {dimension_numbers = #tpu.dot_dimension_numbers<[0], [0], [1], [1], [0, 1, 1, 1], [], []>} : vector<128x128xbf16>, vector<128x256xbf16>, vector<128x256xf32> -> vector<128x256xf32>
    %101 = arith.subf %63, %100 : vector<128x256xf32>
    %102 = arith.truncf %101 : vector<128x256xf32> to vector<128x256xbf16>
    %c1_60 = arith.constant 1 : index
    %c0_61 = arith.constant 0 : index
    %c0_62 = arith.constant 0 : index
    %103 = vector.load %arg9[%c1_60, %c0_61, %c0_62] : memref<4x256x256xbf16, #tpu.memory_space<vmem>>, vector<1x256x256xbf16>
    %104 = vector.shape_cast %103 : vector<1x256x256xbf16> to vector<256x256xbf16>
    %cst_63 = arith.constant dense<0.000000e+00> : vector<128x256xf32>
    %105 = tpu.matmul %102, %104, %cst_63 {dimension_numbers = #tpu.dot_dimension_numbers<[1], [0], [0], [1], [0, 0, 1, 1], [], []>} : vector<128x256xbf16>, vector<256x256xbf16>, vector<128x256xf32> -> vector<128x256xf32>
    %c1_64 = arith.constant 1 : index
    %c0_65 = arith.constant 0 : index
    %c0_66 = arith.constant 0 : index
    %106 = vector.load %arg10[%c1_64, %c0_65, %c0_66] : memref<4x1x256xf32, #tpu.memory_space<vmem>>, vector<1x1x256xf32>
    %107 = vector.shape_cast %106 : vector<1x1x256xf32> to vector<1x256xf32>
    %108 = vector.broadcast %107 : vector<1x256xf32> to vector<128x256xf32>
    %109 = arith.addf %105, %108 : vector<128x256xf32>
    %cst_67 = arith.constant 0.000000e+00 : f32
    %110 = vector.broadcast %cst_67 : f32 to vector<128x256xf32>
    %111 = arith.maximumf %109, %110 : vector<128x256xf32>
    %112 = arith.addf %63, %111 : vector<128x256xf32>
    %c0_68 = arith.constant 0 : index
    %c1_69 = arith.constant 1 : index
    %c0_70 = arith.constant 0 : index
    %c0_71 = arith.constant 0 : index
    %113 = vector.load %arg11[%c0_68, %c1_69, %c0_70, %c0_71] : memref<1x4x128x256xf32, #tpu.memory_space<vmem>>, vector<1x1x128x256xf32>
    %114 = vector.shape_cast %113 : vector<1x1x128x256xf32> to vector<128x256xf32>
    %115 = vector.shape_cast %112 : vector<128x256xf32> to vector<1x1x128x256xf32>
    tpu.vector_store %arg11[%c0_68, %c1_69, %c0_70, %c0_71], %115 {strides = array<i32>} : memref<1x4x128x256xf32, #tpu.memory_space<vmem>>, vector<1x1x128x256xf32>,
    %116 = arith.truncf %112 : vector<128x256xf32> to vector<128x256xbf16>
    %c2 = arith.constant 2 : index
    %c0_72 = arith.constant 0 : index
    %c0_73 = arith.constant 0 : index
    %117 = vector.load %arg6[%c2, %c0_72, %c0_73] : memref<4x256x64xbf16, #tpu.memory_space<vmem>>, vector<1x256x64xbf16>
    %118 = vector.shape_cast %117 : vector<1x256x64xbf16> to vector<256x64xbf16>
    %cst_74 = arith.constant dense<0.000000e+00> : vector<128x64xf32>
    %119 = tpu.matmul %116, %118, %cst_74 {dimension_numbers = #tpu.dot_dimension_numbers<[1], [0], [0], [1], [0, 0, 1, 1], [], []>} : vector<128x256xbf16>, vector<256x64xbf16>, vector<128x64xf32> -> vector<128x64xf32>
    %120 = arith.truncf %119 : vector<128x64xf32> to vector<128x64xbf16>
    %cst_75 = arith.constant dense<0.000000e+00> : vector<128x128xf32>
    %121 = tpu.matmul %120, %120, %cst_75 {dimension_numbers = #tpu.dot_dimension_numbers<[1], [1], [0], [0], [0, 0, 1, 0], [], []>} : vector<128x64xbf16>, vector<128x64xbf16>, vector<128x128xf32> -> vector<128x128xf32>
    %cst_76 = arith.constant dense<0xFF800000> : vector<128xf32>
    %122 = vector.multi_reduction <maximumf>, %121, %cst_76 [1] : vector<128x128xf32> to vector<128xf32>
    %cst_77 = arith.constant 0xFF800000 : f32
    %123 = vector.broadcast %cst_77 : f32 to vector<128xf32>
    %124 = arith.maximumf %123, %122 : vector<128xf32>
    %125 = vector.shape_cast %124 : vector<128xf32> to vector<128x1xf32>
    %126 = vector.broadcast %125 : vector<128x1xf32> to vector<128x128xf32>
    %127 = arith.subf %121, %126 : vector<128x128xf32>
    %128 = math.exp %127 : vector<128x128xf32>
    %cst_78 = arith.constant dense<0.000000e+00> : vector<128xf32>
    %129 = vector.multi_reduction <add>, %128, %cst_78 [1] : vector<128x128xf32> to vector<128xf32>
    %130 = vector.shape_cast %129 : vector<128xf32> to vector<128x1xf32>
    %131 = vector.broadcast %130 : vector<128x1xf32> to vector<128x128xf32>
    %132 = arith.divf %128, %131 : vector<128x128xf32>
    %cst_79 = arith.constant dense<0.000000e+00> : vector<128xf32>
    %133 = vector.multi_reduction <add>, %132, %cst_79 [0] : vector<128x128xf32> to vector<128xf32>
    %134 = vector.shape_cast %133 : vector<128xf32> to vector<1x128xf32>
    %cst_80 = arith.constant 9.99999971E-10 : f32
    %135 = vector.broadcast %cst_80 : f32 to vector<1x128xf32>
    %136 = arith.addf %135, %134 : vector<1x128xf32>
    %137 = tpu.reciprocal %136 {approx = true} : vector<1x128xf32> -> vector<1x128xf32>
    %138 = vector.broadcast %137 : vector<1x128xf32> to vector<128x128xf32>
    %139 = arith.mulf %132, %138 : vector<128x128xf32>
    %c2_81 = arith.constant 2 : index
    %c0_82 = arith.constant 0 : index
    %c0_83 = arith.constant 0 : index
    %140 = vector.load %arg7[%c2_81, %c0_82, %c0_83] : memref<4x256x256xbf16, #tpu.memory_space<vmem>>, vector<1x256x256xbf16>
    %141 = vector.shape_cast %140 : vector<1x256x256xbf16> to vector<256x256xbf16>
    %cst_84 = arith.constant dense<0.000000e+00> : vector<128x256xf32>
    %142 = tpu.matmul %116, %141, %cst_84 {dimension_numbers = #tpu.dot_dimension_numbers<[1], [0], [0], [1], [0, 0, 1, 1], [], []>} : vector<128x256xbf16>, vector<256x256xbf16>, vector<128x256xf32> -> vector<128x256xf32>
    %c2_85 = arith.constant 2 : index
    %c0_86 = arith.constant 0 : index
    %c0_87 = arith.constant 0 : index
    %143 = vector.load %arg8[%c2_85, %c0_86, %c0_87] : memref<4x1x256xf32, #tpu.memory_space<vmem>>, vector<1x1x256xf32>
    %144 = vector.shape_cast %143 : vector<1x1x256xf32> to vector<1x256xf32>
    %145 = vector.broadcast %144 : vector<1x256xf32> to vector<128x256xf32>
    %146 = arith.addf %142, %145 : vector<128x256xf32>
    %147 = arith.truncf %139 : vector<128x128xf32> to vector<128x128xbf16>
    %148 = arith.truncf %146 : vector<128x256xf32> to vector<128x256xbf16>
    %cst_88 = arith.constant dense<0.000000e+00> : vector<128x256xf32>
    %149 = tpu.matmul %147, %148, %cst_88 {dimension_numbers = #tpu.dot_dimension_numbers<[0], [0], [1], [1], [0, 1, 1, 1], [], []>} : vector<128x128xbf16>, vector<128x256xbf16>, vector<128x256xf32> -> vector<128x256xf32>
    %150 = arith.subf %112, %149 : vector<128x256xf32>
    %151 = arith.truncf %150 : vector<128x256xf32> to vector<128x256xbf16>
    %c2_89 = arith.constant 2 : index
    %c0_90 = arith.constant 0 : index
    %c0_91 = arith.constant 0 : index
    %152 = vector.load %arg9[%c2_89, %c0_90, %c0_91] : memref<4x256x256xbf16, #tpu.memory_space<vmem>>, vector<1x256x256xbf16>
    %153 = vector.shape_cast %152 : vector<1x256x256xbf16> to vector<256x256xbf16>
    %cst_92 = arith.constant dense<0.000000e+00> : vector<128x256xf32>
    %154 = tpu.matmul %151, %153, %cst_92 {dimension_numbers = #tpu.dot_dimension_numbers<[1], [0], [0], [1], [0, 0, 1, 1], [], []>} : vector<128x256xbf16>, vector<256x256xbf16>, vector<128x256xf32> -> vector<128x256xf32>
    %c2_93 = arith.constant 2 : index
    %c0_94 = arith.constant 0 : index
    %c0_95 = arith.constant 0 : index
    %155 = vector.load %arg10[%c2_93, %c0_94, %c0_95] : memref<4x1x256xf32, #tpu.memory_space<vmem>>, vector<1x1x256xf32>
    %156 = vector.shape_cast %155 : vector<1x1x256xf32> to vector<1x256xf32>
    %157 = vector.broadcast %156 : vector<1x256xf32> to vector<128x256xf32>
    %158 = arith.addf %154, %157 : vector<128x256xf32>
    %cst_96 = arith.constant 0.000000e+00 : f32
    %159 = vector.broadcast %cst_96 : f32 to vector<128x256xf32>
    %160 = arith.maximumf %158, %159 : vector<128x256xf32>
    %161 = arith.addf %112, %160 : vector<128x256xf32>
    %c0_97 = arith.constant 0 : index
    %c2_98 = arith.constant 2 : index
    %c0_99 = arith.constant 0 : index
    %c0_100 = arith.constant 0 : index
    %162 = vector.load %arg11[%c0_97, %c2_98, %c0_99, %c0_100] : memref<1x4x128x256xf32, #tpu.memory_space<vmem>>, vector<1x1x128x256xf32>
    %163 = vector.shape_cast %162 : vector<1x1x128x256xf32> to vector<128x256xf32>
    %164 = vector.shape_cast %161 : vector<128x256xf32> to vector<1x1x128x256xf32>
    tpu.vector_store %arg11[%c0_97, %c2_98, %c0_99, %c0_100], %164 {strides = array<i32>} : memref<1x4x128x256xf32, #tpu.memory_space<vmem>>, vector<1x1x128x256xf32>,
    %165 = arith.truncf %161 : vector<128x256xf32> to vector<128x256xbf16>
    %c3 = arith.constant 3 : index
    %c0_101 = arith.constant 0 : index
    %c0_102 = arith.constant 0 : index
    %166 = vector.load %arg6[%c3, %c0_101, %c0_102] : memref<4x256x64xbf16, #tpu.memory_space<vmem>>, vector<1x256x64xbf16>
    %167 = vector.shape_cast %166 : vector<1x256x64xbf16> to vector<256x64xbf16>
    %cst_103 = arith.constant dense<0.000000e+00> : vector<128x64xf32>
    %168 = tpu.matmul %165, %167, %cst_103 {dimension_numbers = #tpu.dot_dimension_numbers<[1], [0], [0], [1], [0, 0, 1, 1], [], []>} : vector<128x256xbf16>, vector<256x64xbf16>, vector<128x64xf32> -> vector<128x64xf32>
    %169 = arith.truncf %168 : vector<128x64xf32> to vector<128x64xbf16>
    %cst_104 = arith.constant dense<0.000000e+00> : vector<128x128xf32>
    %170 = tpu.matmul %169, %169, %cst_104 {dimension_numbers = #tpu.dot_dimension_numbers<[1], [1], [0], [0], [0, 0, 1, 0], [], []>} : vector<128x64xbf16>, vector<128x64xbf16>, vector<128x128xf32> -> vector<128x128xf32>
    %cst_105 = arith.constant dense<0xFF800000> : vector<128xf32>
    %171 = vector.multi_reduction <maximumf>, %170, %cst_105 [1] : vector<128x128xf32> to vector<128xf32>
    %cst_106 = arith.constant 0xFF800000 : f32
    %172 = vector.broadcast %cst_106 : f32 to vector<128xf32>
    %173 = arith.maximumf %172, %171 : vector<128xf32>
    %174 = vector.shape_cast %173 : vector<128xf32> to vector<128x1xf32>
    %175 = vector.broadcast %174 : vector<128x1xf32> to vector<128x128xf32>
    %176 = arith.subf %170, %175 : vector<128x128xf32>
    %177 = math.exp %176 : vector<128x128xf32>
    %cst_107 = arith.constant dense<0.000000e+00> : vector<128xf32>
    %178 = vector.multi_reduction <add>, %177, %cst_107 [1] : vector<128x128xf32> to vector<128xf32>
    %179 = vector.shape_cast %178 : vector<128xf32> to vector<128x1xf32>
    %180 = vector.broadcast %179 : vector<128x1xf32> to vector<128x128xf32>
    %181 = arith.divf %177, %180 : vector<128x128xf32>
    %cst_108 = arith.constant dense<0.000000e+00> : vector<128xf32>
    %182 = vector.multi_reduction <add>, %181, %cst_108 [0] : vector<128x128xf32> to vector<128xf32>
    %183 = vector.shape_cast %182 : vector<128xf32> to vector<1x128xf32>
    %cst_109 = arith.constant 9.99999971E-10 : f32
    %184 = vector.broadcast %cst_109 : f32 to vector<1x128xf32>
    %185 = arith.addf %184, %183 : vector<1x128xf32>
    %186 = tpu.reciprocal %185 {approx = true} : vector<1x128xf32> -> vector<1x128xf32>
    %187 = vector.broadcast %186 : vector<1x128xf32> to vector<128x128xf32>
    %188 = arith.mulf %181, %187 : vector<128x128xf32>
    %c3_110 = arith.constant 3 : index
    %c0_111 = arith.constant 0 : index
    %c0_112 = arith.constant 0 : index
    %189 = vector.load %arg7[%c3_110, %c0_111, %c0_112] : memref<4x256x256xbf16, #tpu.memory_space<vmem>>, vector<1x256x256xbf16>
    %190 = vector.shape_cast %189 : vector<1x256x256xbf16> to vector<256x256xbf16>
    %cst_113 = arith.constant dense<0.000000e+00> : vector<128x256xf32>
    %191 = tpu.matmul %165, %190, %cst_113 {dimension_numbers = #tpu.dot_dimension_numbers<[1], [0], [0], [1], [0, 0, 1, 1], [], []>} : vector<128x256xbf16>, vector<256x256xbf16>, vector<128x256xf32> -> vector<128x256xf32>
    %c3_114 = arith.constant 3 : index
    %c0_115 = arith.constant 0 : index
    %c0_116 = arith.constant 0 : index
    %192 = vector.load %arg8[%c3_114, %c0_115, %c0_116] : memref<4x1x256xf32, #tpu.memory_space<vmem>>, vector<1x1x256xf32>
    %193 = vector.shape_cast %192 : vector<1x1x256xf32> to vector<1x256xf32>
    %194 = vector.broadcast %193 : vector<1x256xf32> to vector<128x256xf32>
    %195 = arith.addf %191, %194 : vector<128x256xf32>
    %196 = arith.truncf %188 : vector<128x128xf32> to vector<128x128xbf16>
    %197 = arith.truncf %195 : vector<128x256xf32> to vector<128x256xbf16>
    %cst_117 = arith.constant dense<0.000000e+00> : vector<128x256xf32>
    %198 = tpu.matmul %196, %197, %cst_117 {dimension_numbers = #tpu.dot_dimension_numbers<[0], [0], [1], [1], [0, 1, 1, 1], [], []>} : vector<128x128xbf16>, vector<128x256xbf16>, vector<128x256xf32> -> vector<128x256xf32>
    %199 = arith.subf %161, %198 : vector<128x256xf32>
    %200 = arith.truncf %199 : vector<128x256xf32> to vector<128x256xbf16>
    %c3_118 = arith.constant 3 : index
    %c0_119 = arith.constant 0 : index
    %c0_120 = arith.constant 0 : index
    %201 = vector.load %arg9[%c3_118, %c0_119, %c0_120] : memref<4x256x256xbf16, #tpu.memory_space<vmem>>, vector<1x256x256xbf16>
    %202 = vector.shape_cast %201 : vector<1x256x256xbf16> to vector<256x256xbf16>
    %cst_121 = arith.constant dense<0.000000e+00> : vector<128x256xf32>
    %203 = tpu.matmul %200, %202, %cst_121 {dimension_numbers = #tpu.dot_dimension_numbers<[1], [0], [0], [1], [0, 0, 1, 1], [], []>} : vector<128x256xbf16>, vector<256x256xbf16>, vector<128x256xf32> -> vector<128x256xf32>
    %c3_122 = arith.constant 3 : index
    %c0_123 = arith.constant 0 : index
    %c0_124 = arith.constant 0 : index
    %204 = vector.load %arg10[%c3_122, %c0_123, %c0_124] : memref<4x1x256xf32, #tpu.memory_space<vmem>>, vector<1x1x256xf32>
    %205 = vector.shape_cast %204 : vector<1x1x256xf32> to vector<1x256xf32>
    %206 = vector.broadcast %205 : vector<1x256xf32> to vector<128x256xf32>
    %207 = arith.addf %203, %206 : vector<128x256xf32>
    %cst_125 = arith.constant 0.000000e+00 : f32
    %208 = vector.broadcast %cst_125 : f32 to vector<128x256xf32>
    %209 = arith.maximumf %207, %208 : vector<128x256xf32>
    %210 = arith.addf %161, %209 : vector<128x256xf32>
    %c0_126 = arith.constant 0 : index
    %c3_127 = arith.constant 3 : index
    %c0_128 = arith.constant 0 : index
    %c0_129 = arith.constant 0 : index
    %211 = vector.load %arg11[%c0_126, %c3_127, %c0_128, %c0_129] : memref<1x4x128x256xf32, #tpu.memory_space<vmem>>, vector<1x1x128x256xf32>
    %212 = vector.shape_cast %211 : vector<1x1x128x256xf32> to vector<128x256xf32>
    %213 = vector.shape_cast %210 : vector<128x256xf32> to vector<1x1x128x256xf32>
    tpu.vector_store %arg11[%c0_126, %c3_127, %c0_128, %c0_129], %213 {strides = array<i32>} : memref<1x4x128x256xf32, #tpu.memory_space<vmem>>, vector<1x1x128x256xf32>,
    return
  }
  func.func @transform_0(%arg0: i32) -> (i32, i32, i32) {
    %c0_i32 = arith.constant 0 : i32
    %c0_i32_0 = arith.constant 0 : i32
    %c0_i32_1 = arith.constant 0 : i32
    return %arg0, %c0_i32, %c0_i32_0 : i32, i32, i32
  }
  func.func @transform_1(%arg0: i32) -> (i32, i32) {
    %c0_i32 = arith.constant 0 : i32
    %c0_i32_0 = arith.constant 0 : i32
    %c0_i32_1 = arith.constant 0 : i32
    return %c0_i32, %c0_i32_0 : i32, i32
  }
  func.func @transform_2(%arg0: i32) -> (i32, i32) {
    %c0_i32 = arith.constant 0 : i32
    %c0_i32_0 = arith.constant 0 : i32
    %c0_i32_1 = arith.constant 0 : i32
    return %c0_i32, %c0_i32_0 : i32, i32
  }
  func.func @transform_3(%arg0: i32) -> (i32, i32) {
    %c0_i32 = arith.constant 0 : i32
    %c0_i32_0 = arith.constant 0 : i32
    %c0_i32_1 = arith.constant 0 : i32
    return %c0_i32, %c0_i32_0 : i32, i32
  }
  func.func @transform_4(%arg0: i32) -> (i32, i32) {
    %c0_i32 = arith.constant 0 : i32
    %c0_i32_0 = arith.constant 0 : i32
    %c0_i32_1 = arith.constant 0 : i32
    return %c0_i32, %c0_i32_0 : i32, i32
  }
  func.func @transform_5(%arg0: i32) -> (i32, i32, i32) {
    %c0_i32 = arith.constant 0 : i32
    %c0_i32_0 = arith.constant 0 : i32
    %c0_i32_1 = arith.constant 0 : i32
    %c0_i32_2 = arith.constant 0 : i32
    return %c0_i32, %c0_i32_0, %c0_i32_1 : i32, i32, i32
  }
  func.func @transform_6(%arg0: i32) -> (i32, i32, i32) {
    %c0_i32 = arith.constant 0 : i32
    %c0_i32_0 = arith.constant 0 : i32
    %c0_i32_1 = arith.constant 0 : i32
    %c0_i32_2 = arith.constant 0 : i32
    return %c0_i32, %c0_i32_0, %c0_i32_1 : i32, i32, i32
  }
  func.func @transform_7(%arg0: i32) -> (i32, i32, i32) {
    %c0_i32 = arith.constant 0 : i32
    %c0_i32_0 = arith.constant 0 : i32
    %c0_i32_1 = arith.constant 0 : i32
    %c0_i32_2 = arith.constant 0 : i32
    return %c0_i32, %c0_i32_0, %c0_i32_1 : i32, i32, i32
  }
  func.func @transform_8(%arg0: i32) -> (i32, i32, i32) {
    %c0_i32 = arith.constant 0 : i32
    %c0_i32_0 = arith.constant 0 : i32
    %c0_i32_1 = arith.constant 0 : i32
    %c0_i32_2 = arith.constant 0 : i32
    return %c0_i32, %c0_i32_0, %c0_i32_1 : i32, i32, i32
  }
  func.func @transform_9(%arg0: i32) -> (i32, i32, i32) {
    %c0_i32 = arith.constant 0 : i32
    %c0_i32_0 = arith.constant 0 : i32
    %c0_i32_1 = arith.constant 0 : i32
    %c0_i32_2 = arith.constant 0 : i32
    return %c0_i32, %c0_i32_0, %c0_i32_1 : i32, i32, i32
  }
  func.func @transform_10(%arg0: i32) -> (i32, i32, i32, i32) {
    %c0_i32 = arith.constant 0 : i32
    %c0_i32_0 = arith.constant 0 : i32
    %c0_i32_1 = arith.constant 0 : i32
    %c0_i32_2 = arith.constant 0 : i32
    return %arg0, %c0_i32, %c0_i32_0, %c0_i32_1 : i32, i32, i32, i32
  }
}

</mosaic_0001>

<llo_original>
// kernel: stacked_attention_forward.1
$region0: #{stacked_attention_forward.1}
  #allocation0 [shape = 'u32[]', space=smem, size = 0x4, offset = 0x4, fixed_abs, tag = 'smem constant byte address 0x4 - core index']
  #allocation1 [shape = 'u32[72,128]{1,0:T(1,128)}', space=vmem, size = 0x9000, scoped, tag = 'internal scratch']
  %s0 = inlined_call_operand.vmem [shape: f32[2,128,256], index: 0, kind: input, shape index: {}]
  %s1 = inlined_call_operand.vmem [shape: bf16[256,256], index: 1, kind: input, shape index: {}]
  %s2 = inlined_call_operand.hbm [shape: f32[1,256], index: 2, kind: input, shape index: {}]
  %s3 = inlined_call_operand.hbm [shape: bf16[256,256], index: 3, kind: input, shape index: {}]
  %s4 = inlined_call_operand.hbm [shape: f32[1,256], index: 4, kind: input, shape index: {}]
  %s5 = inlined_call_operand.vmem [shape: bf16[4,256,64], index: 5, kind: input, shape index: {}]
  %s6 = inlined_call_operand.vmem [shape: bf16[4,256,256], index: 6, kind: input, shape index: {}]
  %s7 = inlined_call_operand.vmem [shape: f32[4,1,256], index: 7, kind: input, shape index: {}]
  %s8 = inlined_call_operand.hbm [shape: bf16[4,256,256], index: 8, kind: input, shape index: {}]
  %s9 = inlined_call_operand.hbm [shape: f32[4,1,256], index: 9, kind: input, shape index: {}]
  %s10 = inlined_call_operand.vmem [shape: f32[2,4,128,256], index: 10, kind: output, shape index: {}]
  %s11 = sld [smem:[#allocation0]]
  $region93: #{stacked_attention_forward.1} parent=0
    _
  %s13 = ssub.s32 1, %s11
  %s14 = scalar_select 0, %s13, %s11
  $region1: #{stacked_attention_forward.1} parent=0
    #allocation2 [shape = 'u8[1024]{0}', space=vmem, size = 0x400, scoped, tag = 'input window, operand 2, single buffered']
    #allocation3 [shape = 's32[2]{0}', space=sflag, size = 0x8, scoped, tag = 'scoped memory for stacked_attention_forward.1']
    #allocation4 [shape = 'u8[131072]{0}', space=vmem, size = 0x20000, scoped, tag = 'input window, operand 3, single buffered']
    #allocation5 [shape = 's32[1]{0}', space=sflag, size = 0x4, scoped, tag = 'scoped memory for stacked_attention_forward.1']
    #allocation6 [shape = 'u8[1024]{0}', space=vmem, size = 0x400, scoped, tag = 'input window, operand 4, single buffered']
    #allocation7 [shape = 'u8[524288]{0}', space=vmem, size = 0x80000, scoped, tag = 'input window, operand 8, single buffered']
    #allocation8 [shape = 's32[1]{0}', space=sflag, size = 0x4, scoped, tag = 'scoped memory for stacked_attention_forward.1']
    #allocation9 [shape = 'u8[4096]{0}', space=vmem, size = 0x1000, scoped, tag = 'input window, operand 9, single buffered']
    %15 = vsyncpa [#allocation3], 0
    %16 = vsyncpa [#allocation5], 0
    %17 = vsyncpa [#allocation8], 0
    loop: start=0, step=1, limit=4
    $region2: #{stacked_attention_forward.1} parent=1 // loop_pre_header
      _
    $region3: #{stacked_attention_forward.1} parent=1 // loop_header
      %s19 = sphi 0, %s23
      %p20 = scmp.ge.s32.totalorder %s19, 4
      %s29 = sphi 0, %s31
      %s32 = sphi 0, %s29
      %s33 = sphi 0, %s32
      %s49 = sphi 0, %s33
      %s53 = sphi 0, %s53
      %s55 = sphi 0, %s53
      %s56 = sphi 0, %s55
      %s70 = sphi 0, %s56
      %s74 = sphi 0, %s74
      %s76 = sphi 0, %s74
      %s77 = sphi 0, %s76
      %s91 = sphi 0, %s77
      %s95 = sphi 0, %s95
      %s97 = sphi 0, %s95
      %s98 = sphi 0, %s97
      %s112 = sphi 0, %s98
      %s116 = sphi 0, %s116
      %s118 = sphi 0, %s116
      %s119 = sphi 0, %s118
      %s133 = sphi 0, %s119
      %s137 = sphi 0, %s137
      %s139 = sphi 0, %s137
      %s140 = sphi 0, %s139
      %s154 = sphi 0, %s140
      %s158 = sphi 0, %s158
      %s160 = sphi 0, %s158
      %s161 = sphi 0, %s160
      %s175 = sphi 0, %s161
      %s179 = sphi 0, %s179
      %s181 = sphi 0, %s179
      %s182 = sphi 0, %s181
      %s196 = sphi 0, %s182
      %s200 = sphi 0, %s200
      %s202 = sphi 0, %s200
      %s203 = sphi 0, %s202
      %s217 = sphi 0, %s203
      %s221 = sphi 0, %s221
      %s223 = sphi 0, %s221
      %s224 = sphi 0, %s223
      %s238 = sphi 0, %s224
      %s244 = sphi 0, %s246
      %s247 = sphi 0, %s244
      %s248 = sphi 0, %s247
      %s264 = sphi 0, %s248
    $region4: #{stacked_attention_forward.1} parent=1 // loop_header_branch
      %22 = sbr.rel (%p20) target = $region8
    $region5: #{stacked_attention_forward.1} parent=1 // loop_body
      %s24 = ssub.s32 %s19, 1
      %s25 = ssub.s32 %s19, 2
      %s26 = sadd.s32 %s19, 1
      %s27 = ssub.s32 %s19, %s26
      %p28 = scmp.eq.s32.totalorder %s27, 0
      %s30 = sadd.s32 %s29, 1
      %s31 = scalar_select %p28, %s29, %s30
      %p34 = pneg %p28
      %p35 = scmp.eq.s32.totalorder %s19, 1
      %p36 = por %p34, %p35
      %p37 = scmp.ne.s32.totalorder %s29, %s32
      %p38 = scmp.eq.s32.totalorder %s19, 0
      %p39 = por %p37, %p38
      %p40 = scmp.ne.s32.totalorder %s29, %s32
      %p41 = scmp.eq.s32.totalorder %s24, 1
      %p42 = por %p40, %p41
      %p43 = scmp.ne.s32.totalorder %s32, %s33
      %p44 = scmp.eq.s32.totalorder %s24, 0
      %p45 = por %p43, %p44
      %p46 = scmp.ne.s32.totalorder %s32, %s33
      %p47 = scmp.eq.s32.totalorder %s25, 1
      %p48 = por %p46, %p47
      %p50 = scmp.ne.s32.totalorder %s33, %s49
      %p51 = scmp.eq.s32.totalorder %s25, 0
      %p52 = por %p50, %p51
      %s54 = sadd.s32 %s53, 1
      %p57 = scmp.eq.s32.totalorder %s19, 1
      %p58 = scmp.ne.s32.totalorder %s53, %s55
      %p59 = scmp.eq.s32.totalorder %s19, 0
      %p60 = por %p58, %p59
      %p61 = scmp.ne.s32.totalorder %s53, %s55
      %p62 = scmp.eq.s32.totalorder %s24, 1
      %p63 = por %p61, %p62
      %p64 = scmp.ne.s32.totalorder %s55, %s56
      %p65 = scmp.eq.s32.totalorder %s24, 0
      %p66 = por %p64, %p65
      %p67 = scmp.ne.s32.totalorder %s55, %s56
      %p68 = scmp.eq.s32.totalorder %s25, 1
      %p69 = por %p67, %p68
      %p71 = scmp.ne.s32.totalorder %s56, %s70
      %p72 = scmp.eq.s32.totalorder %s25, 0
      %p73 = por %p71, %p72
      %s75 = sadd.s32 %s74, 1
      %p78 = scmp.eq.s32.totalorder %s19, 1
      %p79 = scmp.ne.s32.totalorder %s74, %s76
      %p80 = scmp.eq.s32.totalorder %s19, 0
      %p81 = por %p79, %p80
      %p82 = scmp.ne.s32.totalorder %s74, %s76
      %p83 = scmp.eq.s32.totalorder %s24, 1
      %p84 = por %p82, %p83
      %p85 = scmp.ne.s32.totalorder %s76, %s77
      %p86 = scmp.eq.s32.totalorder %s24, 0
      %p87 = por %p85, %p86
      %p88 = scmp.ne.s32.totalorder %s76, %s77
      %p89 = scmp.eq.s32.totalorder %s25, 1
      %p90 = por %p88, %p89
      %p92 = scmp.ne.s32.totalorder %s77, %s91
      %p93 = scmp.eq.s32.totalorder %s25, 0
      %p94 = por %p92, %p93
      %s96 = sadd.s32 %s95, 1
      %p99 = scmp.eq.s32.totalorder %s19, 1
      %p100 = scmp.ne.s32.totalorder %s95, %s97
      %p101 = scmp.eq.s32.totalorder %s19, 0
      %p102 = por %p100, %p101
      %p103 = scmp.ne.s32.totalorder %s95, %s97
      %p104 = scmp.eq.s32.totalorder %s24, 1
      %p105 = por %p103, %p104
      %p106 = scmp.ne.s32.totalorder %s97, %s98
      %p107 = scmp.eq.s32.totalorder %s24, 0
      %p108 = por %p106, %p107
      %p109 = scmp.ne.s32.totalorder %s97, %s98
      %p110 = scmp.eq.s32.totalorder %s25, 1
      %p111 = por %p109, %p110
      %p113 = scmp.ne.s32.totalorder %s98, %s112
      %p114 = scmp.eq.s32.totalorder %s25, 0
      %p115 = por %p113, %p114
      %s117 = sadd.s32 %s116, 1
      %p120 = scmp.eq.s32.totalorder %s19, 1
      %p121 = scmp.ne.s32.totalorder %s116, %s118
      %p122 = scmp.eq.s32.totalorder %s19, 0
      %p123 = por %p121, %p122
      %p124 = scmp.ne.s32.totalorder %s116, %s118
      %p125 = scmp.eq.s32.totalorder %s24, 1
      %p126 = por %p124, %p125
      %p127 = scmp.ne.s32.totalorder %s118, %s119
      %p128 = scmp.eq.s32.totalorder %s24, 0
      %p129 = por %p127, %p128
      %p130 = scmp.ne.s32.totalorder %s118, %s119
      %p131 = scmp.eq.s32.totalorder %s25, 1
      %p132 = por %p130, %p131
      %p134 = scmp.ne.s32.totalorder %s119, %s133
      %p135 = scmp.eq.s32.totalorder %s25, 0
      %p136 = por %p134, %p135
      %s138 = sadd.s32 %s137, 1
      %p141 = scmp.eq.s32.totalorder %s19, 1
      %p142 = scmp.ne.s32.totalorder %s137, %s139
      %p143 = scmp.eq.s32.totalorder %s19, 0
      %p144 = por %p142, %p143
      %p145 = scmp.ne.s32.totalorder %s137, %s139
      %p146 = scmp.eq.s32.totalorder %s24, 1
      %p147 = por %p145, %p146
      %p148 = scmp.ne.s32.totalorder %s139, %s140
      %p149 = scmp.eq.s32.totalorder %s24, 0
      %p150 = por %p148, %p149
      %p151 = scmp.ne.s32.totalorder %s139, %s140
      %p152 = scmp.eq.s32.totalorder %s25, 1
      %p153 = por %p151, %p152
      %p155 = scmp.ne.s32.totalorder %s140, %s154
      %p156 = scmp.eq.s32.totalorder %s25, 0
      %p157 = por %p155, %p156
      %s159 = sadd.s32 %s158, 1
      %p162 = scmp.eq.s32.totalorder %s19, 1
      %p163 = scmp.ne.s32.totalorder %s158, %s160
      %p164 = scmp.eq.s32.totalorder %s19, 0
      %p165 = por %p163, %p164
      %p166 = scmp.ne.s32.totalorder %s158, %s160
      %p167 = scmp.eq.s32.totalorder %s24, 1
      %p168 = por %p166, %p167
      %p169 = scmp.ne.s32.totalorder %s160, %s161
      %p170 = scmp.eq.s32.totalorder %s24, 0
      %p171 = por %p169, %p170
      %p172 = scmp.ne.s32.totalorder %s160, %s161
      %p173 = scmp.eq.s32.totalorder %s25, 1
      %p174 = por %p172, %p173
      %p176 = scmp.ne.s32.totalorder %s161, %s175
      %p177 = scmp.eq.s32.totalorder %s25, 0
      %p178 = por %p176, %p177
      %s180 = sadd.s32 %s179, 1
      %p183 = scmp.eq.s32.totalorder %s19, 1
      %p184 = scmp.ne.s32.totalorder %s179, %s181
      %p185 = scmp.eq.s32.totalorder %s19, 0
      %p186 = por %p184, %p185
      %p187 = scmp.ne.s32.totalorder %s179, %s181
      %p188 = scmp.eq.s32.totalorder %s24, 1
      %p189 = por %p187, %p188
      %p190 = scmp.ne.s32.totalorder %s181, %s182
      %p191 = scmp.eq.s32.totalorder %s24, 0
      %p192 = por %p190, %p191
      %p193 = scmp.ne.s32.totalorder %s181, %s182
      %p194 = scmp.eq.s32.totalorder %s25, 1
      %p195 = por %p193, %p194
      %p197 = scmp.ne.s32.totalorder %s182, %s196
      %p198 = scmp.eq.s32.totalorder %s25, 0
      %p199 = por %p197, %p198
      %s201 = sadd.s32 %s200, 1
      %p204 = scmp.eq.s32.totalorder %s19, 1
      %p205 = scmp.ne.s32.totalorder %s200, %s202
      %p206 = scmp.eq.s32.totalorder %s19, 0
      %p207 = por %p205, %p206
      %p208 = scmp.ne.s32.totalorder %s200, %s202
      %p209 = scmp.eq.s32.totalorder %s24, 1
      %p210 = por %p208, %p209
      %p211 = scmp.ne.s32.totalorder %s202, %s203
      %p212 = scmp.eq.s32.totalorder %s24, 0
      %p213 = por %p211, %p212
      %p214 = scmp.ne.s32.totalorder %s202, %s203
      %p215 = scmp.eq.s32.totalorder %s25, 1
      %p216 = por %p214, %p215
      %p218 = scmp.ne.s32.totalorder %s203, %s217
      %p219 = scmp.eq.s32.totalorder %s25, 0
      %p220 = por %p218, %p219
      %s222 = sadd.s32 %s221, 1
      %p225 = scmp.eq.s32.totalorder %s19, 1
      %p226 = scmp.ne.s32.totalorder %s221, %s223
      %p227 = scmp.eq.s32.totalorder %s19, 0
      %p228 = por %p226, %p227
      %p229 = scmp.ne.s32.totalorder %s221, %s223
      %p230 = scmp.eq.s32.totalorder %s24, 1
      %p231 = por %p229, %p230
      %p232 = scmp.ne.s32.totalorder %s223, %s224
      %p233 = scmp.eq.s32.totalorder %s24, 0
      %p234 = por %p232, %p233
      %p235 = scmp.ne.s32.totalorder %s223, %s224
      %p236 = scmp.eq.s32.totalorder %s25, 1
      %p237 = por %p235, %p236
      %p239 = scmp.ne.s32.totalorder %s224, %s238
      %p240 = scmp.eq.s32.totalorder %s25, 0
      %p241 = por %p239, %p240
      %s242 = ssub.s32 %s19, %s26
      %p243 = scmp.eq.s32.totalorder %s242, 0
      %s245 = sadd.s32 %s244, 1
      %s246 = scalar_select %p243, %s244, %s245
      %p249 = pneg %p243
      %p250 = scmp.eq.s32.totalorder %s19, 1
      %p251 = por %p249, %p250
      %p252 = scmp.ne.s32.totalorder %s244, %s247
      %p253 = scmp.eq.s32.totalorder %s19, 0
      %p254 = por %p252, %p253
      %p255 = scmp.ne.s32.totalorder %s244, %s247
      %p256 = scmp.eq.s32.totalorder %s24, 1
      %p257 = por %p255, %p256
      %p258 = scmp.ne.s32.totalorder %s247, %s248
      %p259 = scmp.eq.s32.totalorder %s24, 0
      %p260 = por %p258, %p259
      %p261 = scmp.ne.s32.totalorder %s247, %s248
      %p262 = scmp.eq.s32.totalorder %s25, 1
      %p263 = por %p261, %p262
      %p265 = scmp.ne.s32.totalorder %s248, %s264
      %p266 = scmp.eq.s32.totalorder %s25, 0
      %p267 = por %p265, %p266
      %p268 = scmp.le.s32.totalorder 1, %s19
      %p269 = scmp.lt.s32.totalorder %s19, 3
      %p270 = pnand %p268, %p269
      %p271 = pneg %p270
      // Predicated region
      $region9: #{stacked_attention_forward.1} parent=5 // pred_check
        _
      $region10: #{stacked_attention_forward.1} parent=5 // pred_check_branch
        %273 = sbr.rel (%p270) target = $region12
      $region11: #{stacked_attention_forward.1} parent=5 // pred_region
        %s274 = ssub.s32 %s19, 1
        // Predicated region
        $region13: #{stacked_attention_forward.1} parent=11 // pred_check
          %p275 = pneg %p66
        $region14: #{stacked_attention_forward.1} parent=11 // pred_check_branch
          %277 = sbr.rel (%p275) target = $region16
        $region15: #{stacked_attention_forward.1} parent=11 // pred_region
          _
        $region16: #{stacked_attention_forward.1} parent=11 // pred_fallthru
          _
        // Predicated region
        $region17: #{stacked_attention_forward.1} parent=11 // pred_check
          %p278 = pneg %p87
        $region18: #{stacked_attention_forward.1} parent=11 // pred_check_branch
          %280 = sbr.rel (%p278) target = $region20
        $region19: #{stacked_attention_forward.1} parent=11 // pred_region
          %282 = vsyncadd [#allocation3], 0
          %s284 = sshll.u32 %s2, 4
          %s285 = int_to_ptr.hbm [resolvable:$true] %s284
          %s286 = sshll.u32 [#allocation2], 4
          %s287 = int_to_ptr.vmem [resolvable:$true] %s286
          %289 = dma.hbm_to_vmem [thread:$0]  %s285, 32, %s287, [#allocation3]
        $region20: #{stacked_attention_forward.1} parent=11 // pred_fallthru
          _
        // Predicated region
        $region21: #{stacked_attention_forward.1} parent=11 // pred_check
          %p290 = pneg %p108
        $region22: #{stacked_attention_forward.1} parent=11 // pred_check_branch
          %292 = sbr.rel (%p290) target = $region24
        $region23: #{stacked_attention_forward.1} parent=11 // pred_region
          %294 = vsyncadd [#allocation5], 0
          %s295 = sshll.u32 %s3, 4
          %s296 = int_to_ptr.hbm [resolvable:$true] %s295
          %s297 = sshll.u32 [#allocation4], 4
          %s298 = int_to_ptr.vmem [resolvable:$true] %s297
          %303 = dma.hbm_to_vmem [thread:$0]  %s296, 4096, %s298, [#allocation5], 128, 128, 8
        $region24: #{stacked_attention_forward.1} parent=11 // pred_fallthru
          _
        // Predicated region
        $region25: #{stacked_attention_forward.1} parent=11 // pred_check
          %p304 = pneg %p129
        $region26: #{stacked_attention_forward.1} parent=11 // pred_check_branch
          %306 = sbr.rel (%p304) target = $region28
        $region27: #{stacked_attention_forward.1} parent=11 // pred_region
          %308 = vsyncadd [#allocation5], 0
          %s310 = sshll.u32 %s4, 4
          %s311 = int_to_ptr.hbm [resolvable:$true] %s310
          %s312 = sshll.u32 [#allocation6], 4
          %s313 = int_to_ptr.vmem [resolvable:$true] %s312
          %315 = dma.hbm_to_vmem [thread:$0]  %s311, 32, %s313, [#allocation5]
        $region28: #{stacked_attention_forward.1} parent=11 // pred_fallthru
          _
        // Predicated region
        $region29: #{stacked_attention_forward.1} parent=11 // pred_check
          %p316 = pneg %p150
        $region30: #{stacked_attention_forward.1} parent=11 // pred_check_branch
          %318 = sbr.rel (%p316) target = $region32
        $region31: #{stacked_attention_forward.1} parent=11 // pred_region
          _
        $region32: #{stacked_attention_forward.1} parent=11 // pred_fallthru
          _
        // Predicated region
        $region33: #{stacked_attention_forward.1} parent=11 // pred_check
          %p319 = pneg %p171
        $region34: #{stacked_attention_forward.1} parent=11 // pred_check_branch
          %321 = sbr.rel (%p319) target = $region36
        $region35: #{stacked_attention_forward.1} parent=11 // pred_region
          _
        $region36: #{stacked_attention_forward.1} parent=11 // pred_fallthru
          _
        // Predicated region
        $region37: #{stacked_attention_forward.1} parent=11 // pred_check
          %p322 = pneg %p192
        $region38: #{stacked_attention_forward.1} parent=11 // pred_check_branch
          %324 = sbr.rel (%p322) target = $region40
        $region39: #{stacked_attention_forward.1} parent=11 // pred_region
          _
        $region40: #{stacked_attention_forward.1} parent=11 // pred_fallthru
          _
        // Predicated region
        $region41: #{stacked_attention_forward.1} parent=11 // pred_check
          %p325 = pneg %p213
        $region42: #{stacked_attention_forward.1} parent=11 // pred_check_branch
          %327 = sbr.rel (%p325) target = $region44
        $region43: #{stacked_attention_forward.1} parent=11 // pred_region
          %329 = vsyncadd [#allocation8], 0
          %s330 = sshll.u32 %s8, 4
          %s331 = int_to_ptr.hbm [resolvable:$true] %s330
          %s332 = sshll.u32 [#allocation7], 4
          %s333 = int_to_ptr.vmem [resolvable:$true] %s332
          %338 = dma.hbm_to_vmem [thread:$0]  %s331, 16384, %s333, [#allocation8], 128, 128, 8
        $region44: #{stacked_attention_forward.1} parent=11 // pred_fallthru
          _
        // Predicated region
        $region45: #{stacked_attention_forward.1} parent=11 // pred_check
          %p339 = pneg %p234
        $region46: #{stacked_attention_forward.1} parent=11 // pred_check_branch
          %341 = sbr.rel (%p339) target = $region48
        $region47: #{stacked_attention_forward.1} parent=11 // pred_region
          %343 = vsyncadd [#allocation8], 0
          %s344 = sshll.u32 %s9, 4
          %s345 = int_to_ptr.hbm [resolvable:$true] %s344
          %s346 = sshll.u32 [#allocation9], 4
          %s347 = int_to_ptr.vmem [resolvable:$true] %s346
          %352 = dma.hbm_to_vmem [thread:$0]  %s345, 128, %s347, [#allocation8], 32, 32, 2
        $region48: #{stacked_attention_forward.1} parent=11 // pred_fallthru
          _
      $region12: #{stacked_attention_forward.1} parent=5 // pred_fallthru
        _
      %p353 = scmp.lt.s32.totalorder %s19, 2
      // Predicated region
      $region49: #{stacked_attention_forward.1} parent=5 // pred_check
        %p354 = pneg %p353
      $region50: #{stacked_attention_forward.1} parent=5 // pred_check_branch
        %356 = sbr.rel (%p354) target = $region52
      $region51: #{stacked_attention_forward.1} parent=5 // pred_region
        // Predicated region
        $region53: #{stacked_attention_forward.1} parent=51 // pred_check
          %p357 = pneg %p39
        $region54: #{stacked_attention_forward.1} parent=51 // pred_check_branch
          %359 = sbr.rel (%p357) target = $region56
        $region55: #{stacked_attention_forward.1} parent=51 // pred_region
          %p360 = scmp.lt.s32.totalorder %s19, 1
          %s361 = scalar_select %p360, %s19, 1
          %s362 = smul.addr %s361, 32
          %s363 = smul.addr %s362, 8
          %s364 = scalar_lea.vmem %s0, %s363
        $region56: #{stacked_attention_forward.1} parent=51 // pred_fallthru
          _
      $region52: #{stacked_attention_forward.1} parent=5 // pred_fallthru
        _
      %p365 = scmp.le.s32.totalorder 1, %s19
      %p366 = scmp.lt.s32.totalorder %s19, 3
      %p367 = pnand %p365, %p366
      %p368 = pneg %p367
      // Predicated region
      $region57: #{stacked_attention_forward.1} parent=5 // pred_check
        _
      $region58: #{stacked_attention_forward.1} parent=5 // pred_check_branch
        %370 = sbr.rel (%p367) target = $region60
      $region59: #{stacked_attention_forward.1} parent=5 // pred_region
        %s371 = ssub.s32 %s19, 1
        // Predicated region
        $region61: #{stacked_attention_forward.1} parent=59 // pred_check
          %p372 = pneg %p87
        $region62: #{stacked_attention_forward.1} parent=59 // pred_check_branch
          %374 = sbr.rel (%p372) target = $region64
        $region63: #{stacked_attention_forward.1} parent=59 // pred_region
          %376 = dma.done [#allocation3], 32
        $region64: #{stacked_attention_forward.1} parent=59 // pred_fallthru
          _
        // Predicated region
        $region65: #{stacked_attention_forward.1} parent=59 // pred_check
          %p377 = pneg %p108
        $region66: #{stacked_attention_forward.1} parent=59 // pred_check_branch
          %379 = sbr.rel (%p377) target = $region68
        $region67: #{stacked_attention_forward.1} parent=59 // pred_region
          %381 = dma.done [#allocation5], 4096
        $region68: #{stacked_attention_forward.1} parent=59 // pred_fallthru
          _
        // Predicated region
        $region69: #{stacked_attention_forward.1} parent=59 // pred_check
          %p382 = pneg %p129
        $region70: #{stacked_attention_forward.1} parent=59 // pred_check_branch
          %384 = sbr.rel (%p382) target = $region72
        $region71: #{stacked_attention_forward.1} parent=59 // pred_region
          %386 = dma.done [#allocation5], 32
        $region72: #{stacked_attention_forward.1} parent=59 // pred_fallthru
          _
        // Predicated region
        $region73: #{stacked_attention_forward.1} parent=59 // pred_check
          %p387 = pneg %p213
        $region74: #{stacked_attention_forward.1} parent=59 // pred_check_branch
          %389 = sbr.rel (%p387) target = $region76
        $region75: #{stacked_attention_forward.1} parent=59 // pred_region
          %391 = dma.done [#allocation8], 16384
        $region76: #{stacked_attention_forward.1} parent=59 // pred_fallthru
          _
        // Predicated region
        $region77: #{stacked_attention_forward.1} parent=59 // pred_check
          %p392 = pneg %p234
        $region78: #{stacked_attention_forward.1} parent=59 // pred_check_branch
          %394 = sbr.rel (%p392) target = $region80
        $region79: #{stacked_attention_forward.1} parent=59 // pred_region
          %396 = dma.done [#allocation8], 128
        $region80: #{stacked_attention_forward.1} parent=59 // pred_fallthru
          _
        %p397 = scmp.lt.s32.totalorder %s24, 1
        %s398 = scalar_select %p397, %s24, 1
        %s399 = smul.addr %s398, 32
        %s400 = smul.addr %s399, 8
        %s401 = scalar_lea.vmem %s0, %s400
        %p402 = pneg %p45
        %p403 = pneg %p42
        %p404 = pneg %p66
        %p405 = pneg %p63
        %p406 = pneg %p87
        %p407 = pneg %p84
        %p408 = pneg %p108
        %p409 = pneg %p105
        %p410 = pneg %p129
        %p411 = pneg %p126
        %p412 = pneg %p150
        %p413 = pneg %p147
        %p414 = pneg %p171
        %p415 = pneg %p168
        %p416 = pneg %p192
        %p417 = pneg %p189
        %p418 = pneg %p213
        %p419 = pneg %p210
        %p420 = pneg %p234
        %p421 = pneg %p231
        %p422 = pneg %p260
        %p423 = pneg %p257
        %p424 = scmp.lt.s32.totalorder %s24, 1
        %s425 = scalar_select %p424, %s24, 1
        %s426 = smul.addr %s425, 128
        %s427 = smul.addr %s426, 8
        %s428 = scalar_lea.vmem %s10, %s427
        %p429 = scmp.lt.s32.totalorder %s24, 1
        %s430 = scalar_select %p429, %s24, 1
        %s431 = smul.addr %s430, 32
        %s432 = smul.addr %s431, 8
        %s433 = scalar_lea.vmem %s0, %s432
        %p434 = scmp.lt.s32.totalorder %s24, 1
        %s435 = scalar_select %p434, %s24, 1
        %s436 = smul.addr %s435, 128
        %s437 = smul.addr %s436, 8
        %s438 = scalar_lea.vmem %s10, %s437
        %v439 = vld [vmem:[%s433] sm:$0xff]
        %v440 = vld [vmem:[%s433 + $0x8] sm:$0xff]
        %v441 = vld [vmem:[%s433 + $0x10] sm:$0xff]
        %v442 = vld [vmem:[%s433 + $0x18] sm:$0xff]
        %v443 = vld [vmem:[%s433 + $0x20] sm:$0xff]
        %v444 = vld [vmem:[%s433 + $0x28] sm:$0xff]
        %v445 = vld [vmem:[%s433 + $0x30] sm:$0xff]
        %v446 = vld [vmem:[%s433 + $0x38] sm:$0xff]
        %v447 = vld [vmem:[%s433 + $0x40] sm:$0xff]
        %v448 = vld [vmem:[%s433 + $0x48] sm:$0xff]
        %v449 = vld [vmem:[%s433 + $0x50] sm:$0xff]
        %v450 = vld [vmem:[%s433 + $0x58] sm:$0xff]
        %v451 = vld [vmem:[%s433 + $0x60] sm:$0xff]
        %v452 = vld [vmem:[%s433 + $0x68] sm:$0xff]
        %v453 = vld [vmem:[%s433 + $0x70] sm:$0xff]
        %v454 = vld [vmem:[%s433 + $0x78] sm:$0xff]
        %v455 = vld [vmem:[%s433 + $0x80] sm:$0xff]
        %v456 = vld [vmem:[%s433 + $0x88] sm:$0xff]
        %v457 = vld [vmem:[%s433 + $0x90] sm:$0xff]
        %v458 = vld [vmem:[%s433 + $0x98] sm:$0xff]
        %v459 = vld [vmem:[%s433 + $0xa0] sm:$0xff]
        %v460 = vld [vmem:[%s433 + $0xa8] sm:$0xff]
        %v461 = vld [vmem:[%s433 + $0xb0] sm:$0xff]
        %v462 = vld [vmem:[%s433 + $0xb8] sm:$0xff]
        %v463 = vld [vmem:[%s433 + $0xc0] sm:$0xff]
        %v464 = vld [vmem:[%s433 + $0xc8] sm:$0xff]
        %v465 = vld [vmem:[%s433 + $0xd0] sm:$0xff]
        %v466 = vld [vmem:[%s433 + $0xd8] sm:$0xff]
        %v467 = vld [vmem:[%s433 + $0xe0] sm:$0xff]
        %v468 = vld [vmem:[%s433 + $0xe8] sm:$0xff]
        %v469 = vld [vmem:[%s433 + $0xf0] sm:$0xff]
        %v470 = vld [vmem:[%s433 + $0xf8] sm:$0xff]
        %v471 = vpack.c.bf16 %v441, %v439
        %v472 = vpack.c.bf16 %v442, %v440
        %v473 = vpack.c.bf16 %v445, %v443
        %v474 = vpack.c.bf16 %v446, %v444
        %v475 = vpack.c.bf16 %v449, %v447
        %v476 = vpack.c.bf16 %v450, %v448
        %v477 = vpack.c.bf16 %v453, %v451
        %v478 = vpack.c.bf16 %v454, %v452
        %v479 = vpack.c.bf16 %v457, %v455
        %v480 = vpack.c.bf16 %v458, %v456
        %v481 = vpack.c.bf16 %v461, %v459
        %v482 = vpack.c.bf16 %v462, %v460
        %v483 = vpack.c.bf16 %v465, %v463
        %v484 = vpack.c.bf16 %v466, %v464
        %v485 = vpack.c.bf16 %v469, %v467
        %v486 = vpack.c.bf16 %v470, %v468
        %v487 = vld [vmem:[%s1] sm:$0xff]
        %v488 = vld [vmem:[%s1 + $0x8] sm:$0xff]
        %v489 = vld [vmem:[%s1 + $0x10] sm:$0xff]
        %v490 = vld [vmem:[%s1 + $0x18] sm:$0xff]
        %v491 = vld [vmem:[%s1 + $0x20] sm:$0xff]
        %v492 = vld [vmem:[%s1 + $0x28] sm:$0xff]
        %v493 = vld [vmem:[%s1 + $0x30] sm:$0xff]
        %v494 = vld [vmem:[%s1 + $0x38] sm:$0xff]
        %v495 = vld [vmem:[%s1 + $0x40] sm:$0xff]
        %v496 = vld [vmem:[%s1 + $0x48] sm:$0xff]
        %v497 = vld [vmem:[%s1 + $0x50] sm:$0xff]
        %v498 = vld [vmem:[%s1 + $0x58] sm:$0xff]
        %v499 = vld [vmem:[%s1 + $0x60] sm:$0xff]
        %v500 = vld [vmem:[%s1 + $0x68] sm:$0xff]
        %v501 = vld [vmem:[%s1 + $0x70] sm:$0xff]
        %v502 = vld [vmem:[%s1 + $0x78] sm:$0xff]
        %v503 = vld [vmem:[%s1 + $0x80] sm:$0xff]
        %v504 = vld [vmem:[%s1 + $0x88] sm:$0xff]
        %v505 = vld [vmem:[%s1 + $0x90] sm:$0xff]
        %v506 = vld [vmem:[%s1 + $0x98] sm:$0xff]
        %v507 = vld [vmem:[%s1 + $0xa0] sm:$0xff]
        %v508 = vld [vmem:[%s1 + $0xa8] sm:$0xff]
        %v509 = vld [vmem:[%s1 + $0xb0] sm:$0xff]
        %v510 = vld [vmem:[%s1 + $0xb8] sm:$0xff]
        %v511 = vld [vmem:[%s1 + $0xc0] sm:$0xff]
        %v512 = vld [vmem:[%s1 + $0xc8] sm:$0xff]
        %v513 = vld [vmem:[%s1 + $0xd0] sm:$0xff]
        %v514 = vld [vmem:[%s1 + $0xd8] sm:$0xff]
        %v515 = vld [vmem:[%s1 + $0xe0] sm:$0xff]
        %v516 = vld [vmem:[%s1 + $0xe8] sm:$0xff]
        %v517 = vld [vmem:[%s1 + $0xf0] sm:$0xff]
        %v518 = vld [vmem:[%s1 + $0xf8] sm:$0xff]
        %v519 = vld [vmem:[#allocation2] sm:$0x3]
        %v521 = vperm.slane %v519, 0
        %v522 = vperm.slane %v519, 1
        %v557 = vunpack.c.l.b16 %v487
        %v558 = vunpack.c.h.b16 %v487
        %v559 = vunpack.c.l.b16 %v488
        %v560 = vunpack.c.h.b16 %v488
        %v561 = vunpack.c.l.b16 %v489
        %v562 = vunpack.c.h.b16 %v489
        %v563 = vunpack.c.l.b16 %v490
        %v564 = vunpack.c.h.b16 %v490
        %v565 = vunpack.c.l.b16 %v491
        %v566 = vunpack.c.h.b16 %v491
        %v567 = vunpack.c.l.b16 %v492
        %v568 = vunpack.c.h.b16 %v492
        %v569 = vunpack.c.l.b16 %v493
        %v570 = vunpack.c.h.b16 %v493
        %v571 = vunpack.c.l.b16 %v494
        %v572 = vunpack.c.h.b16 %v494
        %v573 = vunpack.c.l.b16 %v495
        %v574 = vunpack.c.h.b16 %v495
        %v575 = vunpack.c.l.b16 %v496
        %v576 = vunpack.c.h.b16 %v496
        %v577 = vunpack.c.l.b16 %v497
        %v578 = vunpack.c.h.b16 %v497
        %v579 = vunpack.c.l.b16 %v498
        %v580 = vunpack.c.h.b16 %v498
        %v581 = vunpack.c.l.b16 %v499
        %v582 = vunpack.c.h.b16 %v499
        %v583 = vunpack.c.l.b16 %v500
        %v584 = vunpack.c.h.b16 %v500
        %v585 = vunpack.c.l.b16 %v501
        %v586 = vunpack.c.h.b16 %v501
        %v587 = vunpack.c.l.b16 %v502
        %v588 = vunpack.c.h.b16 %v502
        %v589 = vunpack.c.l.b16 %v503
        %v590 = vunpack.c.h.b16 %v503
        %v591 = vunpack.c.l.b16 %v504
        %v592 = vunpack.c.h.b16 %v504
        %v593 = vunpack.c.l.b16 %v505
        %v594 = vunpack.c.h.b16 %v505
        %v595 = vunpack.c.l.b16 %v506
        %v596 = vunpack.c.h.b16 %v506
        %v597 = vunpack.c.l.b16 %v507
        %v598 = vunpack.c.h.b16 %v507
        %v599 = vunpack.c.l.b16 %v508
        %v600 = vunpack.c.h.b16 %v508
        %v601 = vunpack.c.l.b16 %v509
        %v602 = vunpack.c.h.b16 %v509
        %v603 = vunpack.c.l.b16 %v510
        %v604 = vunpack.c.h.b16 %v510
        %v605 = vunpack.c.l.b16 %v511
        %v606 = vunpack.c.h.b16 %v511
        %v607 = vunpack.c.l.b16 %v512
        %v608 = vunpack.c.h.b16 %v512
        %v609 = vunpack.c.l.b16 %v513
        %v610 = vunpack.c.h.b16 %v513
        %v611 = vunpack.c.l.b16 %v514
        %v612 = vunpack.c.h.b16 %v514
        %v613 = vunpack.c.l.b16 %v515
        %v614 = vunpack.c.h.b16 %v515
        %v615 = vunpack.c.l.b16 %v516
        %v616 = vunpack.c.h.b16 %v516
        %v617 = vunpack.c.l.b16 %v517
        %v618 = vunpack.c.h.b16 %v517
        %v619 = vunpack.c.l.b16 %v518
        %v620 = vunpack.c.h.b16 %v518
        %v621 = vpack.c.b16 %v559, %v557
        %v622 = vpack.c.b16 %v560, %v558
        %v623 = vpack.c.b16 %v563, %v561
        %v624 = vpack.c.b16 %v564, %v562
        %v625 = vpack.c.b16 %v567, %v565
        %v626 = vpack.c.b16 %v568, %v566
        %v627 = vpack.c.b16 %v571, %v569
        %v628 = vpack.c.b16 %v572, %v570
        %v629 = vpack.c.b16 %v575, %v573
        %v630 = vpack.c.b16 %v576, %v574
        %v631 = vpack.c.b16 %v579, %v577
        %v632 = vpack.c.b16 %v580, %v578
        %v633 = vpack.c.b16 %v583, %v581
        %v634 = vpack.c.b16 %v584, %v582
        %v635 = vpack.c.b16 %v587, %v585
        %v636 = vpack.c.b16 %v588, %v586
        %v637 = vpack.c.b16 %v591, %v589
        %v638 = vpack.c.b16 %v592, %v590
        %v639 = vpack.c.b16 %v595, %v593
        %v640 = vpack.c.b16 %v596, %v594
        %v641 = vpack.c.b16 %v599, %v597
        %v642 = vpack.c.b16 %v600, %v598
        %v643 = vpack.c.b16 %v603, %v601
        %v644 = vpack.c.b16 %v604, %v602
        %v645 = vpack.c.b16 %v607, %v605
        %v646 = vpack.c.b16 %v608, %v606
        %v647 = vpack.c.b16 %v611, %v609
        %v648 = vpack.c.b16 %v612, %v610
        %v649 = vpack.c.b16 %v615, %v613
        %v650 = vpack.c.b16 %v616, %v614
        %v651 = vpack.c.b16 %v619, %v617
        %v652 = vpack.c.b16 %v620, %v618
        %685 = vmatpush.bf16.msra.mxu0 %v635
        %686 = vmatpush.bf16.msra.mxu0 %v633
        %687 = vmatpush.bf16.msra.mxu0 %v631
        %688 = vmatpush.bf16.msra.mxu0 %v629
        %689 = vmatpush.bf16.msra.mxu0 %v627
        %690 = vmatpush.bf16.msra.mxu0 %v625
        %691 = vmatpush.bf16.msra.mxu0 %v623
        %692 = vmatpush.bf16.msra.mxu0 %v621
        %693 = vmatmul.bf16.gmra.mxu0 %v471
        %v694 = vpop.f32.mrf.mxu0
        %v695 = vadd.f32 %v521, %v694
        %v696 = vpop.f32.mrf.mxu0
        %v697 = vadd.f32 %v521, %v696
        %698 = vmatmul.bf16.gmra.mxu0 %v473
        %v699 = vpop.f32.mrf.mxu0
        %v700 = vadd.f32 %v521, %v699
        %v701 = vpop.f32.mrf.mxu0
        %v702 = vadd.f32 %v521, %v701
        %703 = vmatmul.bf16.gmra.mxu0 %v475
        %v704 = vpop.f32.mrf.mxu0
        %v705 = vadd.f32 %v521, %v704
        %v706 = vpop.f32.mrf.mxu0
        %v707 = vadd.f32 %v521, %v706
        %708 = vmatmul.bf16.gmra.mxu0 %v477
        %v709 = vpop.f32.mrf.mxu0
        %v710 = vadd.f32 %v521, %v709
        %v711 = vpop.f32.mrf.mxu0
        %v712 = vadd.f32 %v521, %v711
        %713 = vmatmul.bf16.gmra.mxu0 %v479
        %v714 = vpop.f32.mrf.mxu0
        %v715 = vadd.f32 %v521, %v714
        %v716 = vpop.f32.mrf.mxu0
        %v717 = vadd.f32 %v521, %v716
        %718 = vmatmul.bf16.gmra.mxu0 %v481
        %v719 = vpop.f32.mrf.mxu0
        %v720 = vadd.f32 %v521, %v719
        %v721 = vpop.f32.mrf.mxu0
        %v722 = vadd.f32 %v521, %v721
        %723 = vmatmul.bf16.gmra.mxu0 %v483
        %v724 = vpop.f32.mrf.mxu0
        %v725 = vadd.f32 %v521, %v724
        %v726 = vpop.f32.mrf.mxu0
        %v727 = vadd.f32 %v521, %v726
        %728 = vmatmul.bf16.gmra.mxu0 %v485
        %v729 = vpop.f32.mrf.mxu0
        %v730 = vadd.f32 %v521, %v729
        %v731 = vpop.f32.mrf.mxu0
        %v732 = vadd.f32 %v521, %v731
        %733 = vdwg.mxu0
        %734 = vmatpush.bf16.msra.mxu0 %v651
        %735 = vmatpush.bf16.msra.mxu0 %v649
        %736 = vmatpush.bf16.msra.mxu0 %v647
        %737 = vmatpush.bf16.msra.mxu0 %v645
        %738 = vmatpush.bf16.msra.mxu0 %v643
        %739 = vmatpush.bf16.msra.mxu0 %v641
        %740 = vmatpush.bf16.msra.mxu0 %v639
        %741 = vmatpush.bf16.msra.mxu0 %v637
        %742 = vmatmul.bf16.gmra.mxu0 %v472
        %v743 = vpop.f32.mrf.mxu0
        %v744 = vadd.f32 %v695, %v743
        %v745 = vpop.f32.mrf.mxu0
        %v746 = vadd.f32 %v697, %v745
        %747 = vmatmul.bf16.gmra.mxu0 %v474
        %v748 = vpop.f32.mrf.mxu0
        %v749 = vadd.f32 %v700, %v748
        %v750 = vpop.f32.mrf.mxu0
        %v751 = vadd.f32 %v702, %v750
        %752 = vmatmul.bf16.gmra.mxu0 %v476
        %v753 = vpop.f32.mrf.mxu0
        %v754 = vadd.f32 %v705, %v753
        %v755 = vpop.f32.mrf.mxu0
        %v756 = vadd.f32 %v707, %v755
        %757 = vmatmul.bf16.gmra.mxu0 %v478
        %v758 = vpop.f32.mrf.mxu0
        %v759 = vadd.f32 %v710, %v758
        %v760 = vpop.f32.mrf.mxu0
        %v761 = vadd.f32 %v712, %v760
        %762 = vmatmul.bf16.gmra.mxu0 %v480
        %v763 = vpop.f32.mrf.mxu0
        %v764 = vadd.f32 %v715, %v763
        %v765 = vpop.f32.mrf.mxu0
        %v766 = vadd.f32 %v717, %v765
        %767 = vmatmul.bf16.gmra.mxu0 %v482
        %v768 = vpop.f32.mrf.mxu0
        %v769 = vadd.f32 %v720, %v768
        %v770 = vpop.f32.mrf.mxu0
        %v771 = vadd.f32 %v722, %v770
        %772 = vmatmul.bf16.gmra.mxu0 %v484
        %v773 = vpop.f32.mrf.mxu0
        %v774 = vadd.f32 %v725, %v773
        %v775 = vpop.f32.mrf.mxu0
        %v776 = vadd.f32 %v727, %v775
        %777 = vmatmul.bf16.gmra.mxu0 %v486
        %v778 = vpop.f32.mrf.mxu0
        %v779 = vadd.f32 %v730, %v778
        %v780 = vpop.f32.mrf.mxu0
        %v781 = vadd.f32 %v732, %v780
        %782 = vdwg.mxu0
        %783 = vmatpush.bf16.msra.mxu0 %v636
        %784 = vmatpush.bf16.msra.mxu0 %v634
        %785 = vmatpush.bf16.msra.mxu0 %v632
        %786 = vmatpush.bf16.msra.mxu0 %v630
        %787 = vmatpush.bf16.msra.mxu0 %v628
        %788 = vmatpush.bf16.msra.mxu0 %v626
        %789 = vmatpush.bf16.msra.mxu0 %v624
        %790 = vmatpush.bf16.msra.mxu0 %v622
        %791 = vmatmul.bf16.gmra.mxu0 %v471
        %v792 = vpop.f32.mrf.mxu0
        %v793 = vadd.f32 %v522, %v792
        %v794 = vpop.f32.mrf.mxu0
        %v795 = vadd.f32 %v522, %v794
        %796 = vmatmul.bf16.gmra.mxu0 %v473
        %v797 = vpop.f32.mrf.mxu0
        %v798 = vadd.f32 %v522, %v797
        %v799 = vpop.f32.mrf.mxu0
        %v800 = vadd.f32 %v522, %v799
        %801 = vmatmul.bf16.gmra.mxu0 %v475
        %v802 = vpop.f32.mrf.mxu0
        %v803 = vadd.f32 %v522, %v802
        %v804 = vpop.f32.mrf.mxu0
        %v805 = vadd.f32 %v522, %v804
        %806 = vmatmul.bf16.gmra.mxu0 %v477
        %v807 = vpop.f32.mrf.mxu0
        %v808 = vadd.f32 %v522, %v807
        %v809 = vpop.f32.mrf.mxu0
        %v810 = vadd.f32 %v522, %v809
        %811 = vmatmul.bf16.gmra.mxu0 %v479
        %v812 = vpop.f32.mrf.mxu0
        %v813 = vadd.f32 %v522, %v812
        %v814 = vpop.f32.mrf.mxu0
        %v815 = vadd.f32 %v522, %v814
        %816 = vmatmul.bf16.gmra.mxu0 %v481
        %v817 = vpop.f32.mrf.mxu0
        %v818 = vadd.f32 %v522, %v817
        %v819 = vpop.f32.mrf.mxu0
        %v820 = vadd.f32 %v522, %v819
        %821 = vmatmul.bf16.gmra.mxu0 %v483
        %v822 = vpop.f32.mrf.mxu0
        %v823 = vadd.f32 %v522, %v822
        %v824 = vpop.f32.mrf.mxu0
        %v825 = vadd.f32 %v522, %v824
        %826 = vmatmul.bf16.gmra.mxu0 %v485
        %v827 = vpop.f32.mrf.mxu0
        %v828 = vadd.f32 %v522, %v827
        %v829 = vpop.f32.mrf.mxu0
        %v830 = vadd.f32 %v522, %v829
        %831 = vdwg.mxu0
        %832 = vmatpush.bf16.msra.mxu0 %v652
        %833 = vmatpush.bf16.msra.mxu0 %v650
        %834 = vmatpush.bf16.msra.mxu0 %v648
        %835 = vmatpush.bf16.msra.mxu0 %v646
        %836 = vmatpush.bf16.msra.mxu0 %v644
        %837 = vmatpush.bf16.msra.mxu0 %v642
        %838 = vmatpush.bf16.msra.mxu0 %v640
        %839 = vmatpush.bf16.msra.mxu0 %v638
        %840 = vmatmul.bf16.gmra.mxu0 %v472
        %v841 = vpop.f32.mrf.mxu0
        %v842 = vadd.f32 %v793, %v841
        %v843 = vpop.f32.mrf.mxu0
        %v844 = vadd.f32 %v795, %v843
        %845 = vmatmul.bf16.gmra.mxu0 %v474
        %v846 = vpop.f32.mrf.mxu0
        %v847 = vadd.f32 %v798, %v846
        %v848 = vpop.f32.mrf.mxu0
        %v849 = vadd.f32 %v800, %v848
        %850 = vmatmul.bf16.gmra.mxu0 %v476
        %v851 = vpop.f32.mrf.mxu0
        %v852 = vadd.f32 %v803, %v851
        %v853 = vpop.f32.mrf.mxu0
        %v854 = vadd.f32 %v805, %v853
        %855 = vmatmul.bf16.gmra.mxu0 %v478
        %v856 = vpop.f32.mrf.mxu0
        %v857 = vadd.f32 %v808, %v856
        %v858 = vpop.f32.mrf.mxu0
        %v859 = vadd.f32 %v810, %v858
        %860 = vmatmul.bf16.gmra.mxu0 %v480
        %v861 = vpop.f32.mrf.mxu0
        %v862 = vadd.f32 %v813, %v861
        %v863 = vpop.f32.mrf.mxu0
        %v864 = vadd.f32 %v815, %v863
        %865 = vmatmul.bf16.gmra.mxu0 %v482
        %v866 = vpop.f32.mrf.mxu0
        %v867 = vadd.f32 %v818, %v866
        %v868 = vpop.f32.mrf.mxu0
        %v869 = vadd.f32 %v820, %v868
        %870 = vmatmul.bf16.gmra.mxu0 %v484
        %v871 = vpop.f32.mrf.mxu0
        %v872 = vadd.f32 %v823, %v871
        %v873 = vpop.f32.mrf.mxu0
        %v874 = vadd.f32 %v825, %v873
        %875 = vmatmul.bf16.gmra.mxu0 %v486
        %v876 = vpop.f32.mrf.mxu0
        %v877 = vadd.f32 %v828, %v876
        %v878 = vpop.f32.mrf.mxu0
        %v879 = vadd.f32 %v830, %v878
        %880 = vdwg.mxu0
        %v881 = vmax.f32 %v744, 0.0
        %v882 = vmax.f32 %v842, 0.0
        %v883 = vmax.f32 %v746, 0.0
        %v884 = vmax.f32 %v844, 0.0
        %v885 = vmax.f32 %v749, 0.0
        %v886 = vmax.f32 %v847, 0.0
        %v887 = vmax.f32 %v751, 0.0
        %v888 = vmax.f32 %v849, 0.0
        %v889 = vmax.f32 %v754, 0.0
        %v890 = vmax.f32 %v852, 0.0
        %v891 = vmax.f32 %v756, 0.0
        %v892 = vmax.f32 %v854, 0.0
        %v893 = vmax.f32 %v759, 0.0
        %v894 = vmax.f32 %v857, 0.0
        %v895 = vmax.f32 %v761, 0.0
        %v896 = vmax.f32 %v859, 0.0
        %v897 = vmax.f32 %v764, 0.0
        %v898 = vmax.f32 %v862, 0.0
        %v899 = vmax.f32 %v766, 0.0
        %v900 = vmax.f32 %v864, 0.0
        %v901 = vmax.f32 %v769, 0.0
        %v902 = vmax.f32 %v867, 0.0
        %v903 = vmax.f32 %v771, 0.0
        %v904 = vmax.f32 %v869, 0.0
        %v905 = vmax.f32 %v774, 0.0
        %v906 = vmax.f32 %v872, 0.0
        %v907 = vmax.f32 %v776, 0.0
        %v908 = vmax.f32 %v874, 0.0
        %v909 = vmax.f32 %v779, 0.0
        %v910 = vmax.f32 %v877, 0.0
        %v911 = vmax.f32 %v781, 0.0
        %v912 = vmax.f32 %v879, 0.0
        %v913 = vpack.c.bf16 %v883, %v881
        %v914 = vpack.c.bf16 %v884, %v882
        %v915 = vpack.c.bf16 %v887, %v885
        %v916 = vpack.c.bf16 %v888, %v886
        %v917 = vpack.c.bf16 %v891, %v889
        %v918 = vpack.c.bf16 %v892, %v890
        %v919 = vpack.c.bf16 %v895, %v893
        %v920 = vpack.c.bf16 %v896, %v894
        %v921 = vpack.c.bf16 %v899, %v897
        %v922 = vpack.c.bf16 %v900, %v898
        %v923 = vpack.c.bf16 %v903, %v901
        %v924 = vpack.c.bf16 %v904, %v902
        %v925 = vpack.c.bf16 %v907, %v905
        %v926 = vpack.c.bf16 %v908, %v906
        %v927 = vpack.c.bf16 %v911, %v909
        %v928 = vpack.c.bf16 %v912, %v910
        %v929 = vld [vmem:[#allocation4] sm:$0xff]
        %v930 = vld [vmem:[#allocation4 + $0x8] sm:$0xff]
        %v931 = vld [vmem:[#allocation4 + $0x10] sm:$0xff]
        %v932 = vld [vmem:[#allocation4 + $0x18] sm:$0xff]
        %v933 = vld [vmem:[#allocation4 + $0x20] sm:$0xff]
        %v934 = vld [vmem:[#allocation4 + $0x28] sm:$0xff]
        %v935 = vld [vmem:[#allocation4 + $0x30] sm:$0xff]
        %v936 = vld [vmem:[#allocation4 + $0x38] sm:$0xff]
        %v937 = vld [vmem:[#allocation4 + $0x40] sm:$0xff]
        %v938 = vld [vmem:[#allocation4 + $0x48] sm:$0xff]
        %v939 = vld [vmem:[#allocation4 + $0x50] sm:$0xff]
        %v940 = vld [vmem:[#allocation4 + $0x58] sm:$0xff]
        %v941 = vld [vmem:[#allocation4 + $0x60] sm:$0xff]
        %v942 = vld [vmem:[#allocation4 + $0x68] sm:$0xff]
        %v943 = vld [vmem:[#allocation4 + $0x70] sm:$0xff]
        %v944 = vld [vmem:[#allocation4 + $0x78] sm:$0xff]
        %v945 = vld [vmem:[#allocation4 + $0x80] sm:$0xff]
        %v946 = vld [vmem:[#allocation4 + $0x88] sm:$0xff]
        %v947 = vld [vmem:[#allocation4 + $0x90] sm:$0xff]
        %v948 = vld [vmem:[#allocation4 + $0x98] sm:$0xff]
        %v949 = vld [vmem:[#allocation4 + $0xa0] sm:$0xff]
        %v950 = vld [vmem:[#allocation4 + $0xa8] sm:$0xff]
        %v951 = vld [vmem:[#allocation4 + $0xb0] sm:$0xff]
        %v952 = vld [vmem:[#allocation4 + $0xb8] sm:$0xff]
        %v953 = vld [vmem:[#allocation4 + $0xc0] sm:$0xff]
        %v954 = vld [vmem:[#allocation4 + $0xc8] sm:$0xff]
        %v955 = vld [vmem:[#allocation4 + $0xd0] sm:$0xff]
        %v956 = vld [vmem:[#allocation4 + $0xd8] sm:$0xff]
        %v957 = vld [vmem:[#allocation4 + $0xe0] sm:$0xff]
        %v958 = vld [vmem:[#allocation4 + $0xe8] sm:$0xff]
        %v959 = vld [vmem:[#allocation4 + $0xf0] sm:$0xff]
        %v960 = vld [vmem:[#allocation4 + $0xf8] sm:$0xff]
        %v961 = vld [vmem:[#allocation6] sm:$0x3]
        %v963 = vperm.slane %v961, 0
        %v964 = vperm.slane %v961, 1
        %v999 = vunpack.c.l.b16 %v929
        %v1000 = vunpack.c.h.b16 %v929
        %v1001 = vunpack.c.l.b16 %v930
        %v1002 = vunpack.c.h.b16 %v930
        %v1003 = vunpack.c.l.b16 %v931
        %v1004 = vunpack.c.h.b16 %v931
        %v1005 = vunpack.c.l.b16 %v932
        %v1006 = vunpack.c.h.b16 %v932
        %v1007 = vunpack.c.l.b16 %v933
        %v1008 = vunpack.c.h.b16 %v933
        %v1009 = vunpack.c.l.b16 %v934
        %v1010 = vunpack.c.h.b16 %v934
        %v1011 = vunpack.c.l.b16 %v935
        %v1012 = vunpack.c.h.b16 %v935
        %v1013 = vunpack.c.l.b16 %v936
        %v1014 = vunpack.c.h.b16 %v936
        %v1015 = vunpack.c.l.b16 %v937
        %v1016 = vunpack.c.h.b16 %v937
        %v1017 = vunpack.c.l.b16 %v938
        %v1018 = vunpack.c.h.b16 %v938
        %v1019 = vunpack.c.l.b16 %v939
        %v1020 = vunpack.c.h.b16 %v939
        %v1021 = vunpack.c.l.b16 %v940
        %v1022 = vunpack.c.h.b16 %v940
        %v1023 = vunpack.c.l.b16 %v941
        %v1024 = vunpack.c.h.b16 %v941
        %v1025 = vunpack.c.l.b16 %v942
        %v1026 = vunpack.c.h.b16 %v942
        %v1027 = vunpack.c.l.b16 %v943
        %v1028 = vunpack.c.h.b16 %v943
        %v1029 = vunpack.c.l.b16 %v944
        %v1030 = vunpack.c.h.b16 %v944
        %v1031 = vunpack.c.l.b16 %v945
        %v1032 = vunpack.c.h.b16 %v945
        %v1033 = vunpack.c.l.b16 %v946
        %v1034 = vunpack.c.h.b16 %v946
        %v1035 = vunpack.c.l.b16 %v947
        %v1036 = vunpack.c.h.b16 %v947
        %v1037 = vunpack.c.l.b16 %v948
        %v1038 = vunpack.c.h.b16 %v948
        %v1039 = vunpack.c.l.b16 %v949
        %v1040 = vunpack.c.h.b16 %v949
        %v1041 = vunpack.c.l.b16 %v950
        %v1042 = vunpack.c.h.b16 %v950
        %v1043 = vunpack.c.l.b16 %v951
        %v1044 = vunpack.c.h.b16 %v951
        %v1045 = vunpack.c.l.b16 %v952
        %v1046 = vunpack.c.h.b16 %v952
        %v1047 = vunpack.c.l.b16 %v953
        %v1048 = vunpack.c.h.b16 %v953
        %v1049 = vunpack.c.l.b16 %v954
        %v1050 = vunpack.c.h.b16 %v954
        %v1051 = vunpack.c.l.b16 %v955
        %v1052 = vunpack.c.h.b16 %v955
        %v1053 = vunpack.c.l.b16 %v956
        %v1054 = vunpack.c.h.b16 %v956
        %v1055 = vunpack.c.l.b16 %v957
        %v1056 = vunpack.c.h.b16 %v957
        %v1057 = vunpack.c.l.b16 %v958
        %v1058 = vunpack.c.h.b16 %v958
        %v1059 = vunpack.c.l.b16 %v959
        %v1060 = vunpack.c.h.b16 %v959
        %v1061 = vunpack.c.l.b16 %v960
        %v1062 = vunpack.c.h.b16 %v960
        %v1063 = vpack.c.b16 %v1001, %v999
        %v1064 = vpack.c.b16 %v1002, %v1000
        %v1065 = vpack.c.b16 %v1005, %v1003
        %v1066 = vpack.c.b16 %v1006, %v1004
        %v1067 = vpack.c.b16 %v1009, %v1007
        %v1068 = vpack.c.b16 %v1010, %v1008
        %v1069 = vpack.c.b16 %v1013, %v1011
        %v1070 = vpack.c.b16 %v1014, %v1012
        %v1071 = vpack.c.b16 %v1017, %v1015
        %v1072 = vpack.c.b16 %v1018, %v1016
        %v1073 = vpack.c.b16 %v1021, %v1019
        %v1074 = vpack.c.b16 %v1022, %v1020
        %v1075 = vpack.c.b16 %v1025, %v1023
        %v1076 = vpack.c.b16 %v1026, %v1024
        %v1077 = vpack.c.b16 %v1029, %v1027
        %v1078 = vpack.c.b16 %v1030, %v1028
        %v1079 = vpack.c.b16 %v1033, %v1031
        %v1080 = vpack.c.b16 %v1034, %v1032
        %v1081 = vpack.c.b16 %v1037, %v1035
        %v1082 = vpack.c.b16 %v1038, %v1036
        %v1083 = vpack.c.b16 %v1041, %v1039
        %v1084 = vpack.c.b16 %v1042, %v1040
        %v1085 = vpack.c.b16 %v1045, %v1043
        %v1086 = vpack.c.b16 %v1046, %v1044
        %v1087 = vpack.c.b16 %v1049, %v1047
        %v1088 = vpack.c.b16 %v1050, %v1048
        %v1089 = vpack.c.b16 %v1053, %v1051
        %v1090 = vpack.c.b16 %v1054, %v1052
        %v1091 = vpack.c.b16 %v1057, %v1055
        %v1092 = vpack.c.b16 %v1058, %v1056
        %v1093 = vpack.c.b16 %v1061, %v1059
        %v1094 = vpack.c.b16 %v1062, %v1060
        %1127 = vmatpush.bf16.msra.mxu0 %v1077
        %1128 = vmatpush.bf16.msra.mxu0 %v1075
        %1129 = vmatpush.bf16.msra.mxu0 %v1073
        %1130 = vmatpush.bf16.msra.mxu0 %v1071
        %1131 = vmatpush.bf16.msra.mxu0 %v1069
        %1132 = vmatpush.bf16.msra.mxu0 %v1067
        %1133 = vmatpush.bf16.msra.mxu0 %v1065
        %1134 = vmatpush.bf16.msra.mxu0 %v1063
        %1135 = vmatmul.bf16.gmra.mxu0 %v913
        %v1136 = vpop.f32.mrf.mxu0
        %v1137 = vadd.f32 %v963, %v1136
        %v1138 = vpop.f32.mrf.mxu0
        %v1139 = vadd.f32 %v963, %v1138
        %1140 = vmatmul.bf16.gmra.mxu0 %v915
        %v1141 = vpop.f32.mrf.mxu0
        %v1142 = vadd.f32 %v963, %v1141
        %v1143 = vpop.f32.mrf.mxu0
        %v1144 = vadd.f32 %v963, %v1143
        %1145 = vmatmul.bf16.gmra.mxu0 %v917
        %v1146 = vpop.f32.mrf.mxu0
        %v1147 = vadd.f32 %v963, %v1146
        %v1148 = vpop.f32.mrf.mxu0
        %v1149 = vadd.f32 %v963, %v1148
        %1150 = vmatmul.bf16.gmra.mxu0 %v919
        %v1151 = vpop.f32.mrf.mxu0
        %v1152 = vadd.f32 %v963, %v1151
        %v1153 = vpop.f32.mrf.mxu0
        %v1154 = vadd.f32 %v963, %v1153
        %1155 = vmatmul.bf16.gmra.mxu0 %v921
        %v1156 = vpop.f32.mrf.mxu0
        %v1157 = vadd.f32 %v963, %v1156
        %v1158 = vpop.f32.mrf.mxu0
        %v1159 = vadd.f32 %v963, %v1158
        %1160 = vmatmul.bf16.gmra.mxu0 %v923
        %v1161 = vpop.f32.mrf.mxu0
        %v1162 = vadd.f32 %v963, %v1161
        %v1163 = vpop.f32.mrf.mxu0
        %v1164 = vadd.f32 %v963, %v1163
        %1165 = vmatmul.bf16.gmra.mxu0 %v925
        %v1166 = vpop.f32.mrf.mxu0
        %v1167 = vadd.f32 %v963, %v1166
        %v1168 = vpop.f32.mrf.mxu0
        %v1169 = vadd.f32 %v963, %v1168
        %1170 = vmatmul.bf16.gmra.mxu0 %v927
        %v1171 = vpop.f32.mrf.mxu0
        %v1172 = vadd.f32 %v963, %v1171
        %v1173 = vpop.f32.mrf.mxu0
        %v1174 = vadd.f32 %v963, %v1173
        %1175 = vdwg.mxu0
        %1176 = vmatpush.bf16.msra.mxu0 %v1093
        %1177 = vmatpush.bf16.msra.mxu0 %v1091
        %1178 = vmatpush.bf16.msra.mxu0 %v1089
        %1179 = vmatpush.bf16.msra.mxu0 %v1087
        %1180 = vmatpush.bf16.msra.mxu0 %v1085
        %1181 = vmatpush.bf16.msra.mxu0 %v1083
        %1182 = vmatpush.bf16.msra.mxu0 %v1081
        %1183 = vmatpush.bf16.msra.mxu0 %v1079
        %1184 = vmatmul.bf16.gmra.mxu0 %v914
        %v1185 = vpop.f32.mrf.mxu0
        %v1186 = vadd.f32 %v1137, %v1185
        %v1187 = vpop.f32.mrf.mxu0
        %v1188 = vadd.f32 %v1139, %v1187
        %1189 = vmatmul.bf16.gmra.mxu0 %v916
        %v1190 = vpop.f32.mrf.mxu0
        %v1191 = vadd.f32 %v1142, %v1190
        %v1192 = vpop.f32.mrf.mxu0
        %v1193 = vadd.f32 %v1144, %v1192
        %1194 = vmatmul.bf16.gmra.mxu0 %v918
        %v1195 = vpop.f32.mrf.mxu0
        %v1196 = vadd.f32 %v1147, %v1195
        %v1197 = vpop.f32.mrf.mxu0
        %v1198 = vadd.f32 %v1149, %v1197
        %1199 = vmatmul.bf16.gmra.mxu0 %v920
        %v1200 = vpop.f32.mrf.mxu0
        %v1201 = vadd.f32 %v1152, %v1200
        %v1202 = vpop.f32.mrf.mxu0
        %v1203 = vadd.f32 %v1154, %v1202
        %1204 = vmatmul.bf16.gmra.mxu0 %v922
        %v1205 = vpop.f32.mrf.mxu0
        %v1206 = vadd.f32 %v1157, %v1205
        %v1207 = vpop.f32.mrf.mxu0
        %v1208 = vadd.f32 %v1159, %v1207
        %1209 = vmatmul.bf16.gmra.mxu0 %v924
        %v1210 = vpop.f32.mrf.mxu0
        %v1211 = vadd.f32 %v1162, %v1210
        %v1212 = vpop.f32.mrf.mxu0
        %v1213 = vadd.f32 %v1164, %v1212
        %1214 = vmatmul.bf16.gmra.mxu0 %v926
        %v1215 = vpop.f32.mrf.mxu0
        %v1216 = vadd.f32 %v1167, %v1215
        %v1217 = vpop.f32.mrf.mxu0
        %v1218 = vadd.f32 %v1169, %v1217
        %1219 = vmatmul.bf16.gmra.mxu0 %v928
        %v1220 = vpop.f32.mrf.mxu0
        %v1221 = vadd.f32 %v1172, %v1220
        %v1222 = vpop.f32.mrf.mxu0
        %v1223 = vadd.f32 %v1174, %v1222
        %1224 = vdwg.mxu0
        %1225 = vmatpush.bf16.msra.mxu0 %v1078
        %1226 = vmatpush.bf16.msra.mxu0 %v1076
        %1227 = vmatpush.bf16.msra.mxu0 %v1074
        %1228 = vmatpush.bf16.msra.mxu0 %v1072
        %1229 = vmatpush.bf16.msra.mxu0 %v1070
        %1230 = vmatpush.bf16.msra.mxu0 %v1068
        %1231 = vmatpush.bf16.msra.mxu0 %v1066
        %1232 = vmatpush.bf16.msra.mxu0 %v1064
        %1233 = vmatmul.bf16.gmra.mxu0 %v913
        %v1234 = vpop.f32.mrf.mxu0
        %v1235 = vadd.f32 %v964, %v1234
        %v1236 = vpop.f32.mrf.mxu0
        %v1237 = vadd.f32 %v964, %v1236
        %1238 = vmatmul.bf16.gmra.mxu0 %v915
        %v1239 = vpop.f32.mrf.mxu0
        %v1240 = vadd.f32 %v964, %v1239
        %v1241 = vpop.f32.mrf.mxu0
        %v1242 = vadd.f32 %v964, %v1241
        %1243 = vmatmul.bf16.gmra.mxu0 %v917
        %v1244 = vpop.f32.mrf.mxu0
        %v1245 = vadd.f32 %v964, %v1244
        %v1246 = vpop.f32.mrf.mxu0
        %v1247 = vadd.f32 %v964, %v1246
        %1248 = vmatmul.bf16.gmra.mxu0 %v919
        %v1249 = vpop.f32.mrf.mxu0
        %v1250 = vadd.f32 %v964, %v1249
        %v1251 = vpop.f32.mrf.mxu0
        %v1252 = vadd.f32 %v964, %v1251
        %1253 = vmatmul.bf16.gmra.mxu0 %v921
        %v1254 = vpop.f32.mrf.mxu0
        %v1255 = vadd.f32 %v964, %v1254
        %v1256 = vpop.f32.mrf.mxu0
        %v1257 = vadd.f32 %v964, %v1256
        %1258 = vmatmul.bf16.gmra.mxu0 %v923
        %v1259 = vpop.f32.mrf.mxu0
        %v1260 = vadd.f32 %v964, %v1259
        %v1261 = vpop.f32.mrf.mxu0
        %v1262 = vadd.f32 %v964, %v1261
        %1263 = vmatmul.bf16.gmra.mxu0 %v925
        %v1264 = vpop.f32.mrf.mxu0
        %v1265 = vadd.f32 %v964, %v1264
        %v1266 = vpop.f32.mrf.mxu0
        %v1267 = vadd.f32 %v964, %v1266
        %1268 = vmatmul.bf16.gmra.mxu0 %v927
        %v1269 = vpop.f32.mrf.mxu0
        %v1270 = vadd.f32 %v964, %v1269
        %v1271 = vpop.f32.mrf.mxu0
        %v1272 = vadd.f32 %v964, %v1271
        %1273 = vdwg.mxu0
        %1274 = vmatpush.bf16.msra.mxu0 %v1094
        %1275 = vmatpush.bf16.msra.mxu0 %v1092
        %1276 = vmatpush.bf16.msra.mxu0 %v1090
        %1277 = vmatpush.bf16.msra.mxu0 %v1088
        %1278 = vmatpush.bf16.msra.mxu0 %v1086
        %1279 = vmatpush.bf16.msra.mxu0 %v1084
        %1280 = vmatpush.bf16.msra.mxu0 %v1082
        %1281 = vmatpush.bf16.msra.mxu0 %v1080
        %1282 = vmatmul.bf16.gmra.mxu0 %v914
        %v1283 = vpop.f32.mrf.mxu0
        %v1284 = vadd.f32 %v1235, %v1283
        %v1285 = vpop.f32.mrf.mxu0
        %v1286 = vadd.f32 %v1237, %v1285
        %1287 = vmatmul.bf16.gmra.mxu0 %v916
        %v1288 = vpop.f32.mrf.mxu0
        %v1289 = vadd.f32 %v1240, %v1288
        %v1290 = vpop.f32.mrf.mxu0
        %v1291 = vadd.f32 %v1242, %v1290
        %1292 = vmatmul.bf16.gmra.mxu0 %v918
        %v1293 = vpop.f32.mrf.mxu0
        %v1294 = vadd.f32 %v1245, %v1293
        %v1295 = vpop.f32.mrf.mxu0
        %v1296 = vadd.f32 %v1247, %v1295
        %1297 = vmatmul.bf16.gmra.mxu0 %v920
        %v1298 = vpop.f32.mrf.mxu0
        %v1299 = vadd.f32 %v1250, %v1298
        %v1300 = vpop.f32.mrf.mxu0
        %v1301 = vadd.f32 %v1252, %v1300
        %1302 = vmatmul.bf16.gmra.mxu0 %v922
        %v1303 = vpop.f32.mrf.mxu0
        %v1304 = vadd.f32 %v1255, %v1303
        %v1305 = vpop.f32.mrf.mxu0
        %v1306 = vadd.f32 %v1257, %v1305
        %1307 = vmatmul.bf16.gmra.mxu0 %v924
        %v1308 = vpop.f32.mrf.mxu0
        %v1309 = vadd.f32 %v1260, %v1308
        %v1310 = vpop.f32.mrf.mxu0
        %v1311 = vadd.f32 %v1262, %v1310
        %1312 = vmatmul.bf16.gmra.mxu0 %v926
        %v1313 = vpop.f32.mrf.mxu0
        %v1314 = vadd.f32 %v1265, %v1313
        %v1315 = vpop.f32.mrf.mxu0
        %v1316 = vadd.f32 %v1267, %v1315
        %1317 = vmatmul.bf16.gmra.mxu0 %v928
        %v1318 = vpop.f32.mrf.mxu0
        %v1319 = vadd.f32 %v1270, %v1318
        %v1320 = vpop.f32.mrf.mxu0
        %v1321 = vadd.f32 %v1272, %v1320
        %1322 = vdwg.mxu0
        %v1323 = vmax.f32 %v1186, 0.0
        %v1324 = vmax.f32 %v1284, 0.0
        %v1325 = vmax.f32 %v1188, 0.0
        %v1326 = vmax.f32 %v1286, 0.0
        %v1327 = vmax.f32 %v1191, 0.0
        %v1328 = vmax.f32 %v1289, 0.0
        %v1329 = vmax.f32 %v1193, 0.0
        %v1330 = vmax.f32 %v1291, 0.0
        %v1331 = vmax.f32 %v1196, 0.0
        %v1332 = vmax.f32 %v1294, 0.0
        %v1333 = vmax.f32 %v1198, 0.0
        %v1334 = vmax.f32 %v1296, 0.0
        %v1335 = vmax.f32 %v1201, 0.0
        %v1336 = vmax.f32 %v1299, 0.0
        %v1337 = vmax.f32 %v1203, 0.0
        %v1338 = vmax.f32 %v1301, 0.0
        %v1339 = vmax.f32 %v1206, 0.0
        %v1340 = vmax.f32 %v1304, 0.0
        %v1341 = vmax.f32 %v1208, 0.0
        %v1342 = vmax.f32 %v1306, 0.0
        %v1343 = vmax.f32 %v1211, 0.0
        %v1344 = vmax.f32 %v1309, 0.0
        %v1345 = vmax.f32 %v1213, 0.0
        %v1346 = vmax.f32 %v1311, 0.0
        %v1347 = vmax.f32 %v1216, 0.0
        %v1348 = vmax.f32 %v1314, 0.0
        %v1349 = vmax.f32 %v1218, 0.0
        %v1350 = vmax.f32 %v1316, 0.0
        %v1351 = vmax.f32 %v1221, 0.0
        %v1352 = vmax.f32 %v1319, 0.0
        %v1353 = vmax.f32 %v1223, 0.0
        %v1354 = vmax.f32 %v1321, 0.0
        %v1355 = vpack.c.bf16 %v1325, %v1323
        %v1356 = vpack.c.bf16 %v1326, %v1324
        %v1357 = vpack.c.bf16 %v1329, %v1327
        %v1358 = vpack.c.bf16 %v1330, %v1328
        %v1359 = vpack.c.bf16 %v1333, %v1331
        %v1360 = vpack.c.bf16 %v1334, %v1332
        %v1361 = vpack.c.bf16 %v1337, %v1335
        %v1362 = vpack.c.bf16 %v1338, %v1336
        %v1363 = vpack.c.bf16 %v1341, %v1339
        %v1364 = vpack.c.bf16 %v1342, %v1340
        %v1365 = vpack.c.bf16 %v1345, %v1343
        %v1366 = vpack.c.bf16 %v1346, %v1344
        %v1367 = vpack.c.bf16 %v1349, %v1347
        %v1368 = vpack.c.bf16 %v1350, %v1348
        %v1369 = vpack.c.bf16 %v1353, %v1351
        %v1370 = vpack.c.bf16 %v1354, %v1352
        %v1371 = vld [vmem:[%s5] sm:$0xf]
        %v1372 = vld [vmem:[%s5 + $0x4] sm:$0xf]
        %v1373 = vld [vmem:[%s5 + $0x8] sm:$0xf]
        %v1374 = vld [vmem:[%s5 + $0xc] sm:$0xf]
        %v1375 = vld [vmem:[%s5 + $0x10] sm:$0xf]
        %v1376 = vld [vmem:[%s5 + $0x14] sm:$0xf]
        %v1377 = vld [vmem:[%s5 + $0x18] sm:$0xf]
        %v1378 = vld [vmem:[%s5 + $0x1c] sm:$0xf]
        %v1379 = vld [vmem:[%s5 + $0x20] sm:$0xf]
        %v1380 = vld [vmem:[%s5 + $0x24] sm:$0xf]
        %v1381 = vld [vmem:[%s5 + $0x28] sm:$0xf]
        %v1382 = vld [vmem:[%s5 + $0x2c] sm:$0xf]
        %v1383 = vld [vmem:[%s5 + $0x30] sm:$0xf]
        %v1384 = vld [vmem:[%s5 + $0x34] sm:$0xf]
        %v1385 = vld [vmem:[%s5 + $0x38] sm:$0xf]
        %v1386 = vld [vmem:[%s5 + $0x3c] sm:$0xf]
        %v1387 = vld [vmem:[%s5 + $0x40] sm:$0xf]
        %v1388 = vld [vmem:[%s5 + $0x44] sm:$0xf]
        %v1389 = vld [vmem:[%s5 + $0x48] sm:$0xf]
        %v1390 = vld [vmem:[%s5 + $0x4c] sm:$0xf]
        %v1391 = vld [vmem:[%s5 + $0x50] sm:$0xf]
        %v1392 = vld [vmem:[%s5 + $0x54] sm:$0xf]
        %v1393 = vld [vmem:[%s5 + $0x58] sm:$0xf]
        %v1394 = vld [vmem:[%s5 + $0x5c] sm:$0xf]
        %v1395 = vld [vmem:[%s5 + $0x60] sm:$0xf]
        %v1396 = vld [vmem:[%s5 + $0x64] sm:$0xf]
        %v1397 = vld [vmem:[%s5 + $0x68] sm:$0xf]
        %v1398 = vld [vmem:[%s5 + $0x6c] sm:$0xf]
        %v1399 = vld [vmem:[%s5 + $0x70] sm:$0xf]
        %v1400 = vld [vmem:[%s5 + $0x74] sm:$0xf]
        %v1401 = vld [vmem:[%s5 + $0x78] sm:$0xf]
        %v1402 = vld [vmem:[%s5 + $0x7c] sm:$0xf]
        %v1435 = vunpack.c.l.b16 %v1371
        %v1436 = vunpack.c.l.b16 %v1372
        %v1437 = vunpack.c.l.b16 %v1373
        %v1438 = vunpack.c.l.b16 %v1374
        %v1439 = vunpack.c.l.b16 %v1375
        %v1440 = vunpack.c.l.b16 %v1376
        %v1441 = vunpack.c.l.b16 %v1377
        %v1442 = vunpack.c.l.b16 %v1378
        %v1443 = vunpack.c.l.b16 %v1379
        %v1444 = vunpack.c.l.b16 %v1380
        %v1445 = vunpack.c.l.b16 %v1381
        %v1446 = vunpack.c.l.b16 %v1382
        %v1447 = vunpack.c.l.b16 %v1383
        %v1448 = vunpack.c.l.b16 %v1384
        %v1449 = vunpack.c.l.b16 %v1385
        %v1450 = vunpack.c.l.b16 %v1386
        %v1451 = vunpack.c.l.b16 %v1387
        %v1452 = vunpack.c.l.b16 %v1388
        %v1453 = vunpack.c.l.b16 %v1389
        %v1454 = vunpack.c.l.b16 %v1390
        %v1455 = vunpack.c.l.b16 %v1391
        %v1456 = vunpack.c.l.b16 %v1392
        %v1457 = vunpack.c.l.b16 %v1393
        %v1458 = vunpack.c.l.b16 %v1394
        %v1459 = vunpack.c.l.b16 %v1395
        %v1460 = vunpack.c.l.b16 %v1396
        %v1461 = vunpack.c.l.b16 %v1397
        %v1462 = vunpack.c.l.b16 %v1398
        %v1463 = vunpack.c.l.b16 %v1399
        %v1464 = vunpack.c.l.b16 %v1400
        %v1465 = vunpack.c.l.b16 %v1401
        %v1466 = vunpack.c.l.b16 %v1402
        %v1467 = vpack.c.b16 %v1436, %v1435
        %v1468 = vpack.c.b16 %v1438, %v1437
        %v1469 = vpack.c.b16 %v1440, %v1439
        %v1470 = vpack.c.b16 %v1442, %v1441
        %v1471 = vpack.c.b16 %v1444, %v1443
        %v1472 = vpack.c.b16 %v1446, %v1445
        %v1473 = vpack.c.b16 %v1448, %v1447
        %v1474 = vpack.c.b16 %v1450, %v1449
        %v1475 = vpack.c.b16 %v1452, %v1451
        %v1476 = vpack.c.b16 %v1454, %v1453
        %v1477 = vpack.c.b16 %v1456, %v1455
        %v1478 = vpack.c.b16 %v1458, %v1457
        %v1479 = vpack.c.b16 %v1460, %v1459
        %v1480 = vpack.c.b16 %v1462, %v1461
        %v1481 = vpack.c.b16 %v1464, %v1463
        %v1482 = vpack.c.b16 %v1466, %v1465
        %1499 = vmatpush.bf16.msra.mxu0 %v1474
        %1500 = vmatpush.bf16.msra.mxu0 %v1473
        %1501 = vmatpush.bf16.msra.mxu0 %v1472
        %1502 = vmatpush.bf16.msra.mxu0 %v1471
        %1503 = vmatpush.bf16.msra.mxu0 %v1470
        %1504 = vmatpush.bf16.msra.mxu0 %v1469
        %1505 = vmatpush.bf16.msra.mxu0 %v1468
        %1506 = vmatpush.bf16.msra.mxu0 %v1467
        %1507 = vmatmul.bf16.gmra.mxu0 %v1355
        %v1508 = vpop.f32.mrf.mxu0
        %v1509 = vadd.f32 0.0, %v1508
        %v1510 = vpop.f32.mrf.mxu0
        %v1511 = vadd.f32 0.0, %v1510
        %1512 = vmatmul.bf16.gmra.mxu0 %v1357
        %v1513 = vpop.f32.mrf.mxu0
        %v1514 = vadd.f32 0.0, %v1513
        %v1515 = vpop.f32.mrf.mxu0
        %v1516 = vadd.f32 0.0, %v1515
        %1517 = vmatmul.bf16.gmra.mxu0 %v1359
        %v1518 = vpop.f32.mrf.mxu0
        %v1519 = vadd.f32 0.0, %v1518
        %v1520 = vpop.f32.mrf.mxu0
        %v1521 = vadd.f32 0.0, %v1520
        %1522 = vmatmul.bf16.gmra.mxu0 %v1361
        %v1523 = vpop.f32.mrf.mxu0
        %v1524 = vadd.f32 0.0, %v1523
        %v1525 = vpop.f32.mrf.mxu0
        %v1526 = vadd.f32 0.0, %v1525
        %1527 = vmatmul.bf16.gmra.mxu0 %v1363
        %v1528 = vpop.f32.mrf.mxu0
        %v1529 = vadd.f32 0.0, %v1528
        %v1530 = vpop.f32.mrf.mxu0
        %v1531 = vadd.f32 0.0, %v1530
        %1532 = vmatmul.bf16.gmra.mxu0 %v1365
        %v1533 = vpop.f32.mrf.mxu0
        %v1534 = vadd.f32 0.0, %v1533
        %v1535 = vpop.f32.mrf.mxu0
        %v1536 = vadd.f32 0.0, %v1535
        %1537 = vmatmul.bf16.gmra.mxu0 %v1367
        %v1538 = vpop.f32.mrf.mxu0
        %v1539 = vadd.f32 0.0, %v1538
        %v1540 = vpop.f32.mrf.mxu0
        %v1541 = vadd.f32 0.0, %v1540
        %1542 = vmatmul.bf16.gmra.mxu0 %v1369
        %v1543 = vpop.f32.mrf.mxu0
        %v1544 = vadd.f32 0.0, %v1543
        %v1545 = vpop.f32.mrf.mxu0
        %v1546 = vadd.f32 0.0, %v1545
        %1547 = vdwg.mxu0
        %1548 = vmatpush.bf16.msra.mxu0 %v1482
        %1549 = vmatpush.bf16.msra.mxu0 %v1481
        %1550 = vmatpush.bf16.msra.mxu0 %v1480
        %1551 = vmatpush.bf16.msra.mxu0 %v1479
        %1552 = vmatpush.bf16.msra.mxu0 %v1478
        %1553 = vmatpush.bf16.msra.mxu0 %v1477
        %1554 = vmatpush.bf16.msra.mxu0 %v1476
        %1555 = vmatpush.bf16.msra.mxu0 %v1475
        %1556 = vmatmul.bf16.gmra.mxu0 %v1356
        %v1557 = vpop.f32.mrf.mxu0
        %v1558 = vadd.f32 %v1509, %v1557
        %v1559 = vpop.f32.mrf.mxu0
        %v1560 = vadd.f32 %v1511, %v1559
        %1561 = vmatmul.bf16.gmra.mxu0 %v1358
        %v1562 = vpop.f32.mrf.mxu0
        %v1563 = vadd.f32 %v1514, %v1562
        %v1564 = vpop.f32.mrf.mxu0
        %v1565 = vadd.f32 %v1516, %v1564
        %1566 = vmatmul.bf16.gmra.mxu0 %v1360
        %v1567 = vpop.f32.mrf.mxu0
        %v1568 = vadd.f32 %v1519, %v1567
        %v1569 = vpop.f32.mrf.mxu0
        %v1570 = vadd.f32 %v1521, %v1569
        %1571 = vmatmul.bf16.gmra.mxu0 %v1362
        %v1572 = vpop.f32.mrf.mxu0
        %v1573 = vadd.f32 %v1524, %v1572
        %v1574 = vpop.f32.mrf.mxu0
        %v1575 = vadd.f32 %v1526, %v1574
        %1576 = vmatmul.bf16.gmra.mxu0 %v1364
        %v1577 = vpop.f32.mrf.mxu0
        %v1578 = vadd.f32 %v1529, %v1577
        %v1579 = vpop.f32.mrf.mxu0
        %v1580 = vadd.f32 %v1531, %v1579
        %1581 = vmatmul.bf16.gmra.mxu0 %v1366
        %v1582 = vpop.f32.mrf.mxu0
        %v1583 = vadd.f32 %v1534, %v1582
        %v1584 = vpop.f32.mrf.mxu0
        %v1585 = vadd.f32 %v1536, %v1584
        %1586 = vmatmul.bf16.gmra.mxu0 %v1368
        %v1587 = vpop.f32.mrf.mxu0
        %v1588 = vadd.f32 %v1539, %v1587
        %v1589 = vpop.f32.mrf.mxu0
        %v1590 = vadd.f32 %v1541, %v1589
        %1591 = vmatmul.bf16.gmra.mxu0 %v1370
        %v1592 = vpop.f32.mrf.mxu0
        %v1593 = vadd.f32 %v1544, %v1592
        %v1594 = vpop.f32.mrf.mxu0
        %v1595 = vadd.f32 %v1546, %v1594
        %1596 = vdwg.mxu0
        %v1597 = vpack.c.bf16 %v1560, %v1558
        %v1598 = vpack.c.bf16 %v1565, %v1563
        %v1599 = vpack.c.bf16 %v1570, %v1568
        %v1600 = vpack.c.bf16 %v1575, %v1573
        %v1601 = vpack.c.bf16 %v1580, %v1578
        %v1602 = vpack.c.bf16 %v1585, %v1583
        %v1603 = vpack.c.bf16 %v1590, %v1588
        %v1604 = vpack.c.bf16 %v1595, %v1593
        %vm1605 = vcmask 523264
        %v1607 = vsel %vm1605, %v1597, 0
        %v1610 = vsel %vm1605, %v1598, 0
        %v1613 = vsel %vm1605, %v1599, 0
        %v1616 = vsel %vm1605, %v1600, 0
        %v1619 = vsel %vm1605, %v1601, 0
        %v1622 = vsel %vm1605, %v1602, 0
        %v1625 = vsel %vm1605, %v1603, 0
        %v1628 = vsel %vm1605, %v1604, 0
        %1630 = vmatpush.bf16.xpose.msra.mxu0 %v1628
        %1631 = vmatpush.bf16.xpose.msra.mxu0 %v1625
        %1632 = vmatpush.bf16.xpose.msra.mxu0 %v1622
        %1633 = vmatpush.bf16.xpose.msra.mxu0 %v1619
        %1634 = vmatpush.bf16.xpose.msra.mxu0 %v1616
        %1635 = vmatpush.bf16.xpose.msra.mxu0 %v1613
        %1636 = vmatpush.bf16.xpose.msra.mxu0 %v1610
        %1637 = vmatpush.bf16.xpose.msra.mxu0 %v1607
        %1638 = vmatmul.bf16.gmra.mxu0 %v1607
        %v1639 = vpop.f32.mrf.mxu0
        %v1640 = vadd.f32 0.0, %v1639
        %v1641 = vpop.f32.mrf.mxu0
        %v1642 = vadd.f32 0.0, %v1641
        %1643 = vmatmul.bf16.gmra.mxu0 %v1610
        %v1644 = vpop.f32.mrf.mxu0
        %v1645 = vadd.f32 0.0, %v1644
        %v1646 = vpop.f32.mrf.mxu0
        %v1647 = vadd.f32 0.0, %v1646
        %1648 = vmatmul.bf16.gmra.mxu0 %v1613
        %v1649 = vpop.f32.mrf.mxu0
        %v1650 = vadd.f32 0.0, %v1649
        %v1651 = vpop.f32.mrf.mxu0
        %v1652 = vadd.f32 0.0, %v1651
        %1653 = vmatmul.bf16.gmra.mxu0 %v1616
        %v1654 = vpop.f32.mrf.mxu0
        %v1655 = vadd.f32 0.0, %v1654
        %v1656 = vpop.f32.mrf.mxu0
        %v1657 = vadd.f32 0.0, %v1656
        %1658 = vmatmul.bf16.gmra.mxu0 %v1619
        %v1659 = vpop.f32.mrf.mxu0
        %v1660 = vadd.f32 0.0, %v1659
        %v1661 = vpop.f32.mrf.mxu0
        %v1662 = vadd.f32 0.0, %v1661
        %1663 = vmatmul.bf16.gmra.mxu0 %v1622
        %v1664 = vpop.f32.mrf.mxu0
        %v1665 = vadd.f32 0.0, %v1664
        %v1666 = vpop.f32.mrf.mxu0
        %v1667 = vadd.f32 0.0, %v1666
        %1668 = vmatmul.bf16.gmra.mxu0 %v1625
        %v1669 = vpop.f32.mrf.mxu0
        %v1670 = vadd.f32 0.0, %v1669
        %v1671 = vpop.f32.mrf.mxu0
        %v1672 = vadd.f32 0.0, %v1671
        %1673 = vmatmul.bf16.gmra.mxu0 %v1628
        %v1674 = vpop.f32.mrf.mxu0
        %v1675 = vadd.f32 0.0, %v1674
        %v1676 = vpop.f32.mrf.mxu0
        %v1677 = vadd.f32 0.0, %v1676
        %1678 = vdwg.mxu0
        %1679 = vmax.xlane.f32.xlu0 %v1640
        %v1680 = vpop.xlane.xlu0 %1679
        %1681 = vmax.xlane.f32.xlu0 %v1642
        %v1682 = vpop.xlane.xlu0 %1681
        %1683 = vmax.xlane.f32.xlu0 %v1645
        %v1684 = vpop.xlane.xlu0 %1683
        %1685 = vmax.xlane.f32.xlu0 %v1647
        %v1686 = vpop.xlane.xlu0 %1685
        %1687 = vmax.xlane.f32.xlu0 %v1650
        %v1688 = vpop.xlane.xlu0 %1687
        %1689 = vmax.xlane.f32.xlu0 %v1652
        %v1690 = vpop.xlane.xlu0 %1689
        %1691 = vmax.xlane.f32.xlu0 %v1655
        %v1692 = vpop.xlane.xlu0 %1691
        %1693 = vmax.xlane.f32.xlu0 %v1657
        %v1694 = vpop.xlane.xlu0 %1693
        %1695 = vmax.xlane.f32.xlu0 %v1660
        %v1696 = vpop.xlane.xlu0 %1695
        %1697 = vmax.xlane.f32.xlu0 %v1662
        %v1698 = vpop.xlane.xlu0 %1697
        %1699 = vmax.xlane.f32.xlu0 %v1665
        %v1700 = vpop.xlane.xlu0 %1699
        %1701 = vmax.xlane.f32.xlu0 %v1667
        %v1702 = vpop.xlane.xlu0 %1701
        %1703 = vmax.xlane.f32.xlu0 %v1670
        %v1704 = vpop.xlane.xlu0 %1703
        %1705 = vmax.xlane.f32.xlu0 %v1672
        %v1706 = vpop.xlane.xlu0 %1705
        %1707 = vmax.xlane.f32.xlu0 %v1675
        %v1708 = vpop.xlane.xlu0 %1707
        %1709 = vmax.xlane.f32.xlu0 %v1677
        %v1710 = vpop.xlane.xlu0 %1709
        %v1711 = vsub.f32 %v1640, %v1680
        %v1712 = vsub.f32 %v1642, %v1682
        %v1713 = vsub.f32 %v1645, %v1684
        %v1714 = vsub.f32 %v1647, %v1686
        %v1715 = vsub.f32 %v1650, %v1688
        %v1716 = vsub.f32 %v1652, %v1690
        %v1717 = vsub.f32 %v1655, %v1692
        %v1718 = vsub.f32 %v1657, %v1694
        %v1719 = vsub.f32 %v1660, %v1696
        %v1720 = vsub.f32 %v1662, %v1698
        %v1721 = vsub.f32 %v1665, %v1700
        %v1722 = vsub.f32 %v1667, %v1702
        %v1723 = vsub.f32 %v1670, %v1704
        %v1724 = vsub.f32 %v1672, %v1706
        %v1725 = vsub.f32 %v1675, %v1708
        %v1726 = vsub.f32 %v1677, %v1710
        %v1727 = vmul.f32 %v1711, 1.442695
        %v1728 = vpow.pop %v1727
        %v1729 = vmul.f32 %v1712, 1.442695
        %v1730 = vpow.pop %v1729
        %v1731 = vmul.f32 %v1713, 1.442695
        %v1732 = vpow.pop %v1731
        %v1733 = vmul.f32 %v1714, 1.442695
        %v1734 = vpow.pop %v1733
        %v1735 = vmul.f32 %v1715, 1.442695
        %v1736 = vpow.pop %v1735
        %v1737 = vmul.f32 %v1716, 1.442695
        %v1738 = vpow.pop %v1737
        %v1739 = vmul.f32 %v1717, 1.442695
        %v1740 = vpow.pop %v1739
        %v1741 = vmul.f32 %v1718, 1.442695
        %v1742 = vpow.pop %v1741
        %v1743 = vmul.f32 %v1719, 1.442695
        %v1744 = vpow.pop %v1743
        %v1745 = vmul.f32 %v1720, 1.442695
        %v1746 = vpow.pop %v1745
        %v1747 = vmul.f32 %v1721, 1.442695
        %v1748 = vpow.pop %v1747
        %v1749 = vmul.f32 %v1722, 1.442695
        %v1750 = vpow.pop %v1749
        %v1751 = vmul.f32 %v1723, 1.442695
        %v1752 = vpow.pop %v1751
        %v1753 = vmul.f32 %v1724, 1.442695
        %v1754 = vpow.pop %v1753
        %v1755 = vmul.f32 %v1725, 1.442695
        %v1756 = vpow.pop %v1755
        %v1757 = vmul.f32 %v1726, 1.442695
        %v1758 = vpow.pop %v1757
        %1759 = vadd.xlane.f32.xlu0 %v1728
        %v1760 = vpop.xlane.xlu0 %1759
        %1761 = vadd.xlane.f32.xlu0 %v1730
        %v1762 = vpop.xlane.xlu0 %1761
        %1763 = vadd.xlane.f32.xlu0 %v1732
        %v1764 = vpop.xlane.xlu0 %1763
        %1765 = vadd.xlane.f32.xlu0 %v1734
        %v1766 = vpop.xlane.xlu0 %1765
        %1767 = vadd.xlane.f32.xlu0 %v1736
        %v1768 = vpop.xlane.xlu0 %1767
        %1769 = vadd.xlane.f32.xlu0 %v1738
        %v1770 = vpop.xlane.xlu0 %1769
        %1771 = vadd.xlane.f32.xlu0 %v1740
        %v1772 = vpop.xlane.xlu0 %1771
        %1773 = vadd.xlane.f32.xlu0 %v1742
        %v1774 = vpop.xlane.xlu0 %1773
        %1775 = vadd.xlane.f32.xlu0 %v1744
        %v1776 = vpop.xlane.xlu0 %1775
        %1777 = vadd.xlane.f32.xlu0 %v1746
        %v1778 = vpop.xlane.xlu0 %1777
        %1779 = vadd.xlane.f32.xlu0 %v1748
        %v1780 = vpop.xlane.xlu0 %1779
        %1781 = vadd.xlane.f32.xlu0 %v1750
        %v1782 = vpop.xlane.xlu0 %1781
        %1783 = vadd.xlane.f32.xlu0 %v1752
        %v1784 = vpop.xlane.xlu0 %1783
        %1785 = vadd.xlane.f32.xlu0 %v1754
        %v1786 = vpop.xlane.xlu0 %1785
        %1787 = vadd.xlane.f32.xlu0 %v1756
        %v1788 = vpop.xlane.xlu0 %1787
        %1789 = vadd.xlane.f32.xlu0 %v1758
        %v1790 = vpop.xlane.xlu0 %1789
        %v1791 = vrcp.pop %v1760
        %v1792 = vmul.f32 %v1760, %v1791
        %v1793 = vsub.f32 1.0, %v1792
        %v1794 = vmul.f32 %v1791, %v1793
        %v1795 = vadd.f32 %v1791, %v1794
        %vm1796 = vweird.f32 %v1760
        %vm1797 = vweird.f32 %v1791
        %vm1798 = vmor %vm1796, %vm1797
        %v1799 = vsel %vm1798, %v1791, %v1795
        %v1800 = vand.u32 2147483647, %v1760
        %vm1801 = vcmp.eq.f32.partialorder %v1800, 8.507059e+37
        %v1802 = vand.u32 %v1760, 2147483648
        %v1803 = vor.u32 1.1754944e-38, %v1802
        %v1804 = vsel %vm1801, %v1803, %v1799
        %v1805 = vmul.f32 %v1728, %v1804
        %v1806 = vrcp.pop %v1762
        %v1807 = vmul.f32 %v1762, %v1806
        %v1808 = vsub.f32 1.0, %v1807
        %v1809 = vmul.f32 %v1806, %v1808
        %v1810 = vadd.f32 %v1806, %v1809
        %vm1811 = vweird.f32 %v1762
        %vm1812 = vweird.f32 %v1806
        %vm1813 = vmor %vm1811, %vm1812
        %v1814 = vsel %vm1813, %v1806, %v1810
        %v1815 = vand.u32 2147483647, %v1762
        %vm1816 = vcmp.eq.f32.partialorder %v1815, 8.507059e+37
        %v1817 = vand.u32 %v1762, 2147483648
        %v1818 = vor.u32 1.1754944e-38, %v1817
        %v1819 = vsel %vm1816, %v1818, %v1814
        %v1820 = vmul.f32 %v1730, %v1819
        %v1821 = vrcp.pop %v1764
        %v1822 = vmul.f32 %v1764, %v1821
        %v1823 = vsub.f32 1.0, %v1822
        %v1824 = vmul.f32 %v1821, %v1823
        %v1825 = vadd.f32 %v1821, %v1824
        %vm1826 = vweird.f32 %v1764
        %vm1827 = vweird.f32 %v1821
        %vm1828 = vmor %vm1826, %vm1827
        %v1829 = vsel %vm1828, %v1821, %v1825
        %v1830 = vand.u32 2147483647, %v1764
        %vm1831 = vcmp.eq.f32.partialorder %v1830, 8.507059e+37
        %v1832 = vand.u32 %v1764, 2147483648
        %v1833 = vor.u32 1.1754944e-38, %v1832
        %v1834 = vsel %vm1831, %v1833, %v1829
        %v1835 = vmul.f32 %v1732, %v1834
        %v1836 = vrcp.pop %v1766
        %v1837 = vmul.f32 %v1766, %v1836
        %v1838 = vsub.f32 1.0, %v1837
        %v1839 = vmul.f32 %v1836, %v1838
        %v1840 = vadd.f32 %v1836, %v1839
        %vm1841 = vweird.f32 %v1766
        %vm1842 = vweird.f32 %v1836
        %vm1843 = vmor %vm1841, %vm1842
        %v1844 = vsel %vm1843, %v1836, %v1840
        %v1845 = vand.u32 2147483647, %v1766
        %vm1846 = vcmp.eq.f32.partialorder %v1845, 8.507059e+37
        %v1847 = vand.u32 %v1766, 2147483648
        %v1848 = vor.u32 1.1754944e-38, %v1847
        %v1849 = vsel %vm1846, %v1848, %v1844
        %v1850 = vmul.f32 %v1734, %v1849
        %v1851 = vrcp.pop %v1768
        %v1852 = vmul.f32 %v1768, %v1851
        %v1853 = vsub.f32 1.0, %v1852
        %v1854 = vmul.f32 %v1851, %v1853
        %v1855 = vadd.f32 %v1851, %v1854
        %vm1856 = vweird.f32 %v1768
        %vm1857 = vweird.f32 %v1851
        %vm1858 = vmor %vm1856, %vm1857
        %v1859 = vsel %vm1858, %v1851, %v1855
        %v1860 = vand.u32 2147483647, %v1768
        %vm1861 = vcmp.eq.f32.partialorder %v1860, 8.507059e+37
        %v1862 = vand.u32 %v1768, 2147483648
        %v1863 = vor.u32 1.1754944e-38, %v1862
        %v1864 = vsel %vm1861, %v1863, %v1859
        %v1865 = vmul.f32 %v1736, %v1864
        %v1866 = vrcp.pop %v1770
        %v1867 = vmul.f32 %v1770, %v1866
        %v1868 = vsub.f32 1.0, %v1867
        %v1869 = vmul.f32 %v1866, %v1868
        %v1870 = vadd.f32 %v1866, %v1869
        %vm1871 = vweird.f32 %v1770
        %vm1872 = vweird.f32 %v1866
        %vm1873 = vmor %vm1871, %vm1872
        %v1874 = vsel %vm1873, %v1866, %v1870
        %v1875 = vand.u32 2147483647, %v1770
        %vm1876 = vcmp.eq.f32.partialorder %v1875, 8.507059e+37
        %v1877 = vand.u32 %v1770, 2147483648
        %v1878 = vor.u32 1.1754944e-38, %v1877
        %v1879 = vsel %vm1876, %v1878, %v1874
        %v1880 = vmul.f32 %v1738, %v1879
        %v1881 = vrcp.pop %v1772
        %v1882 = vmul.f32 %v1772, %v1881
        %v1883 = vsub.f32 1.0, %v1882
        %v1884 = vmul.f32 %v1881, %v1883
        %v1885 = vadd.f32 %v1881, %v1884
        %vm1886 = vweird.f32 %v1772
        %vm1887 = vweird.f32 %v1881
        %vm1888 = vmor %vm1886, %vm1887
        %v1889 = vsel %vm1888, %v1881, %v1885
        %v1890 = vand.u32 2147483647, %v1772
        %vm1891 = vcmp.eq.f32.partialorder %v1890, 8.507059e+37
        %v1892 = vand.u32 %v1772, 2147483648
        %v1893 = vor.u32 1.1754944e-38, %v1892
        %v1894 = vsel %vm1891, %v1893, %v1889
        %v1895 = vmul.f32 %v1740, %v1894
        %v1896 = vrcp.pop %v1774
        %v1897 = vmul.f32 %v1774, %v1896
        %v1898 = vsub.f32 1.0, %v1897
        %v1899 = vmul.f32 %v1896, %v1898
        %v1900 = vadd.f32 %v1896, %v1899
        %vm1901 = vweird.f32 %v1774
        %vm1902 = vweird.f32 %v1896
        %vm1903 = vmor %vm1901, %vm1902
        %v1904 = vsel %vm1903, %v1896, %v1900
        %v1905 = vand.u32 2147483647, %v1774
        %vm1906 = vcmp.eq.f32.partialorder %v1905, 8.507059e+37
        %v1907 = vand.u32 %v1774, 2147483648
        %v1908 = vor.u32 1.1754944e-38, %v1907
        %v1909 = vsel %vm1906, %v1908, %v1904
        %v1910 = vmul.f32 %v1742, %v1909
        %v1911 = vrcp.pop %v1776
        %v1912 = vmul.f32 %v1776, %v1911
        %v1913 = vsub.f32 1.0, %v1912
        %v1914 = vmul.f32 %v1911, %v1913
        %v1915 = vadd.f32 %v1911, %v1914
        %vm1916 = vweird.f32 %v1776
        %vm1917 = vweird.f32 %v1911
        %vm1918 = vmor %vm1916, %vm1917
        %v1919 = vsel %vm1918, %v1911, %v1915
        %v1920 = vand.u32 2147483647, %v1776
        %vm1921 = vcmp.eq.f32.partialorder %v1920, 8.507059e+37
        %v1922 = vand.u32 %v1776, 2147483648
        %v1923 = vor.u32 1.1754944e-38, %v1922
        %v1924 = vsel %vm1921, %v1923, %v1919
        %v1925 = vmul.f32 %v1744, %v1924
        %v1926 = vrcp.pop %v1778
        %v1927 = vmul.f32 %v1778, %v1926
        %v1928 = vsub.f32 1.0, %v1927
        %v1929 = vmul.f32 %v1926, %v1928
        %v1930 = vadd.f32 %v1926, %v1929
        %vm1931 = vweird.f32 %v1778
        %vm1932 = vweird.f32 %v1926
        %vm1933 = vmor %vm1931, %vm1932
        %v1934 = vsel %vm1933, %v1926, %v1930
        %v1935 = vand.u32 2147483647, %v1778
        %vm1936 = vcmp.eq.f32.partialorder %v1935, 8.507059e+37
        %v1937 = vand.u32 %v1778, 2147483648
        %v1938 = vor.u32 1.1754944e-38, %v1937
        %v1939 = vsel %vm1936, %v1938, %v1934
        %v1940 = vmul.f32 %v1746, %v1939
        %v1941 = vrcp.pop %v1780
        %v1942 = vmul.f32 %v1780, %v1941
        %v1943 = vsub.f32 1.0, %v1942
        %v1944 = vmul.f32 %v1941, %v1943
        %v1945 = vadd.f32 %v1941, %v1944
        %vm1946 = vweird.f32 %v1780
        %vm1947 = vweird.f32 %v1941
        %vm1948 = vmor %vm1946, %vm1947
        %v1949 = vsel %vm1948, %v1941, %v1945
        %v1950 = vand.u32 2147483647, %v1780
        %vm1951 = vcmp.eq.f32.partialorder %v1950, 8.507059e+37
        %v1952 = vand.u32 %v1780, 2147483648
        %v1953 = vor.u32 1.1754944e-38, %v1952
        %v1954 = vsel %vm1951, %v1953, %v1949
        %v1955 = vmul.f32 %v1748, %v1954
        %v1956 = vrcp.pop %v1782
        %v1957 = vmul.f32 %v1782, %v1956
        %v1958 = vsub.f32 1.0, %v1957
        %v1959 = vmul.f32 %v1956, %v1958
        %v1960 = vadd.f32 %v1956, %v1959
        %vm1961 = vweird.f32 %v1782
        %vm1962 = vweird.f32 %v1956
        %vm1963 = vmor %vm1961, %vm1962
        %v1964 = vsel %vm1963, %v1956, %v1960
        %v1965 = vand.u32 2147483647, %v1782
        %vm1966 = vcmp.eq.f32.partialorder %v1965, 8.507059e+37
        %v1967 = vand.u32 %v1782, 2147483648
        %v1968 = vor.u32 1.1754944e-38, %v1967
        %v1969 = vsel %vm1966, %v1968, %v1964
        %v1970 = vmul.f32 %v1750, %v1969
        %v1971 = vrcp.pop %v1784
        %v1972 = vmul.f32 %v1784, %v1971
        %v1973 = vsub.f32 1.0, %v1972
        %v1974 = vmul.f32 %v1971, %v1973
        %v1975 = vadd.f32 %v1971, %v1974
        %vm1976 = vweird.f32 %v1784
        %vm1977 = vweird.f32 %v1971
        %vm1978 = vmor %vm1976, %vm1977
        %v1979 = vsel %vm1978, %v1971, %v1975
        %v1980 = vand.u32 2147483647, %v1784
        %vm1981 = vcmp.eq.f32.partialorder %v1980, 8.507059e+37
        %v1982 = vand.u32 %v1784, 2147483648
        %v1983 = vor.u32 1.1754944e-38, %v1982
        %v1984 = vsel %vm1981, %v1983, %v1979
        %v1985 = vmul.f32 %v1752, %v1984
        %v1986 = vrcp.pop %v1786
        %v1987 = vmul.f32 %v1786, %v1986
        %v1988 = vsub.f32 1.0, %v1987
        %v1989 = vmul.f32 %v1986, %v1988
        %v1990 = vadd.f32 %v1986, %v1989
        %vm1991 = vweird.f32 %v1786
        %vm1992 = vweird.f32 %v1986
        %vm1993 = vmor %vm1991, %vm1992
        %v1994 = vsel %vm1993, %v1986, %v1990
        %v1995 = vand.u32 2147483647, %v1786
        %vm1996 = vcmp.eq.f32.partialorder %v1995, 8.507059e+37
        %v1997 = vand.u32 %v1786, 2147483648
        %v1998 = vor.u32 1.1754944e-38, %v1997
        %v1999 = vsel %vm1996, %v1998, %v1994
        %v2000 = vmul.f32 %v1754, %v1999
        %v2001 = vrcp.pop %v1788
        %v2002 = vmul.f32 %v1788, %v2001
        %v2003 = vsub.f32 1.0, %v2002
        %v2004 = vmul.f32 %v2001, %v2003
        %v2005 = vadd.f32 %v2001, %v2004
        %vm2006 = vweird.f32 %v1788
        %vm2007 = vweird.f32 %v2001
        %vm2008 = vmor %vm2006, %vm2007
        %v2009 = vsel %vm2008, %v2001, %v2005
        %v2010 = vand.u32 2147483647, %v1788
        %vm2011 = vcmp.eq.f32.partialorder %v2010, 8.507059e+37
        %v2012 = vand.u32 %v1788, 2147483648
        %v2013 = vor.u32 1.1754944e-38, %v2012
        %v2014 = vsel %vm2011, %v2013, %v2009
        %v2015 = vmul.f32 %v1756, %v2014
        %v2016 = vrcp.pop %v1790
        %v2017 = vmul.f32 %v1790, %v2016
        %v2018 = vsub.f32 1.0, %v2017
        %v2019 = vmul.f32 %v2016, %v2018
        %v2020 = vadd.f32 %v2016, %v2019
        %vm2021 = vweird.f32 %v1790
        %vm2022 = vweird.f32 %v2016
        %vm2023 = vmor %vm2021, %vm2022
        %v2024 = vsel %vm2023, %v2016, %v2020
        %v2025 = vand.u32 2147483647, %v1790
        %vm2026 = vcmp.eq.f32.partialorder %v2025, 8.507059e+37
        %v2027 = vand.u32 %v1790, 2147483648
        %v2028 = vor.u32 1.1754944e-38, %v2027
        %v2029 = vsel %vm2026, %v2028, %v2024
        %v2030 = vmul.f32 %v1758, %v2029
        %v2031 = vadd.f32 %v1805, %v1820
        %v2032 = vadd.f32 %v2031, %v1835
        %v2033 = vadd.f32 %v2032, %v1850
        %v2034 = vadd.f32 %v2033, %v1865
        %v2035 = vadd.f32 %v2034, %v1880
        %v2036 = vadd.f32 %v2035, %v1895
        %v2037 = vadd.f32 %v2036, %v1910
        %v2038 = vadd.f32 %v2037, %v1925
        %v2039 = vadd.f32 %v2038, %v1940
        %v2040 = vadd.f32 %v2039, %v1955
        %v2041 = vadd.f32 %v2040, %v1970
        %v2042 = vadd.f32 %v2041, %v1985
        %v2043 = vadd.f32 %v2042, %v2000
        %v2044 = vadd.f32 %v2043, %v2015
        %v2045 = vadd.f32 %v2044, %v2030
        %v2046 = vrot.slane %v2045, 4
        %v2047 = vadd.f32 %v2045, %v2046
        %v2048 = vrot.slane %v2047, 2
        %v2049 = vadd.f32 %v2047, %v2048
        %v2050 = vrot.slane %v2049, 1
        %v2051 = vadd.f32 %v2049, %v2050
        %v2052 = vadd.f32 %v2051, 1e-09
        %v2053 = vrcp.pop %v2052
        %v2054 = vmul.f32 %v1805, %v2053
        %v2055 = vmul.f32 %v1820, %v2053
        %v2056 = vmul.f32 %v1835, %v2053
        %v2057 = vmul.f32 %v1850, %v2053
        %v2058 = vmul.f32 %v1865, %v2053
        %v2059 = vmul.f32 %v1880, %v2053
        %v2060 = vmul.f32 %v1895, %v2053
        %v2061 = vmul.f32 %v1910, %v2053
        %v2062 = vmul.f32 %v1925, %v2053
        %v2063 = vmul.f32 %v1940, %v2053
        %v2064 = vmul.f32 %v1955, %v2053
        %v2065 = vmul.f32 %v1970, %v2053
        %v2066 = vmul.f32 %v1985, %v2053
        %v2067 = vmul.f32 %v2000, %v2053
        %v2068 = vmul.f32 %v2015, %v2053
        %v2069 = vmul.f32 %v2030, %v2053
        %v2070 = vld [vmem:[%s6] sm:$0xff]
        %v2071 = vld [vmem:[%s6 + $0x8] sm:$0xff]
        %v2072 = vld [vmem:[%s6 + $0x10] sm:$0xff]
        %v2073 = vld [vmem:[%s6 + $0x18] sm:$0xff]
        %v2074 = vld [vmem:[%s6 + $0x20] sm:$0xff]
        %v2075 = vld [vmem:[%s6 + $0x28] sm:$0xff]
        %v2076 = vld [vmem:[%s6 + $0x30] sm:$0xff]
        %v2077 = vld [vmem:[%s6 + $0x38] sm:$0xff]
        %v2078 = vld [vmem:[%s6 + $0x40] sm:$0xff]
        %v2079 = vld [vmem:[%s6 + $0x48] sm:$0xff]
        %v2080 = vld [vmem:[%s6 + $0x50] sm:$0xff]
        %v2081 = vld [vmem:[%s6 + $0x58] sm:$0xff]
        %v2082 = vld [vmem:[%s6 + $0x60] sm:$0xff]
        %v2083 = vld [vmem:[%s6 + $0x68] sm:$0xff]
        %v2084 = vld [vmem:[%s6 + $0x70] sm:$0xff]
        %v2085 = vld [vmem:[%s6 + $0x78] sm:$0xff]
        %v2086 = vld [vmem:[%s6 + $0x80] sm:$0xff]
        %v2087 = vld [vmem:[%s6 + $0x88] sm:$0xff]
        %v2088 = vld [vmem:[%s6 + $0x90] sm:$0xff]
        %v2089 = vld [vmem:[%s6 + $0x98] sm:$0xff]
        %v2090 = vld [vmem:[%s6 + $0xa0] sm:$0xff]
        %v2091 = vld [vmem:[%s6 + $0xa8] sm:$0xff]
        %v2092 = vld [vmem:[%s6 + $0xb0] sm:$0xff]
        %v2093 = vld [vmem:[%s6 + $0xb8] sm:$0xff]
        %v2094 = vld [vmem:[%s6 + $0xc0] sm:$0xff]
        %v2095 = vld [vmem:[%s6 + $0xc8] sm:$0xff]
        %v2096 = vld [vmem:[%s6 + $0xd0] sm:$0xff]
        %v2097 = vld [vmem:[%s6 + $0xd8] sm:$0xff]
        %v2098 = vld [vmem:[%s6 + $0xe0] sm:$0xff]
        %v2099 = vld [vmem:[%s6 + $0xe8] sm:$0xff]
        %v2100 = vld [vmem:[%s6 + $0xf0] sm:$0xff]
        %v2101 = vld [vmem:[%s6 + $0xf8] sm:$0xff]
        %v2102 = vld [vmem:[%s7] sm:$0x3]
        %v2104 = vperm.slane %v2102, 0
        %v2105 = vperm.slane %v2102, 1
        %v2140 = vunpack.c.l.b16 %v2070
        %v2141 = vunpack.c.h.b16 %v2070
        %v2142 = vunpack.c.l.b16 %v2071
        %v2143 = vunpack.c.h.b16 %v2071
        %v2144 = vunpack.c.l.b16 %v2072
        %v2145 = vunpack.c.h.b16 %v2072
        %v2146 = vunpack.c.l.b16 %v2073
        %v2147 = vunpack.c.h.b16 %v2073
        %v2148 = vunpack.c.l.b16 %v2074
        %v2149 = vunpack.c.h.b16 %v2074
        %v2150 = vunpack.c.l.b16 %v2075
        %v2151 = vunpack.c.h.b16 %v2075
        %v2152 = vunpack.c.l.b16 %v2076
        %v2153 = vunpack.c.h.b16 %v2076
        %v2154 = vunpack.c.l.b16 %v2077
        %v2155 = vunpack.c.h.b16 %v2077
        %v2156 = vunpack.c.l.b16 %v2078
        %v2157 = vunpack.c.h.b16 %v2078
        %v2158 = vunpack.c.l.b16 %v2079
        %v2159 = vunpack.c.h.b16 %v2079
        %v2160 = vunpack.c.l.b16 %v2080
        %v2161 = vunpack.c.h.b16 %v2080
        %v2162 = vunpack.c.l.b16 %v2081
        %v2163 = vunpack.c.h.b16 %v2081
        %v2164 = vunpack.c.l.b16 %v2082
        %v2165 = vunpack.c.h.b16 %v2082
        %v2166 = vunpack.c.l.b16 %v2083
        %v2167 = vunpack.c.h.b16 %v2083
        %v2168 = vunpack.c.l.b16 %v2084
        %v2169 = vunpack.c.h.b16 %v2084
        %v2170 = vunpack.c.l.b16 %v2085
        %v2171 = vunpack.c.h.b16 %v2085
        %v2172 = vunpack.c.l.b16 %v2086
        %v2173 = vunpack.c.h.b16 %v2086
        %v2174 = vunpack.c.l.b16 %v2087
        %v2175 = vunpack.c.h.b16 %v2087
        %v2176 = vunpack.c.l.b16 %v2088
        %v2177 = vunpack.c.h.b16 %v2088
        %v2178 = vunpack.c.l.b16 %v2089
        %v2179 = vunpack.c.h.b16 %v2089
        %v2180 = vunpack.c.l.b16 %v2090
        %v2181 = vunpack.c.h.b16 %v2090
        %v2182 = vunpack.c.l.b16 %v2091
        %v2183 = vunpack.c.h.b16 %v2091
        %v2184 = vunpack.c.l.b16 %v2092
        %v2185 = vunpack.c.h.b16 %v2092
        %v2186 = vunpack.c.l.b16 %v2093
        %v2187 = vunpack.c.h.b16 %v2093
        %v2188 = vunpack.c.l.b16 %v2094
        %v2189 = vunpack.c.h.b16 %v2094
        %v2190 = vunpack.c.l.b16 %v2095
        %v2191 = vunpack.c.h.b16 %v2095
        %v2192 = vunpack.c.l.b16 %v2096
        %v2193 = vunpack.c.h.b16 %v2096
        %v2194 = vunpack.c.l.b16 %v2097
        %v2195 = vunpack.c.h.b16 %v2097
        %v2196 = vunpack.c.l.b16 %v2098
        %v2197 = vunpack.c.h.b16 %v2098
        %v2198 = vunpack.c.l.b16 %v2099
        %v2199 = vunpack.c.h.b16 %v2099
        %v2200 = vunpack.c.l.b16 %v2100
        %v2201 = vunpack.c.h.b16 %v2100
        %v2202 = vunpack.c.l.b16 %v2101
        %v2203 = vunpack.c.h.b16 %v2101
        %v2204 = vpack.c.b16 %v2142, %v2140
        %v2205 = vpack.c.b16 %v2143, %v2141
        %v2206 = vpack.c.b16 %v2146, %v2144
        %v2207 = vpack.c.b16 %v2147, %v2145
        %v2208 = vpack.c.b16 %v2150, %v2148
        %v2209 = vpack.c.b16 %v2151, %v2149
        %v2210 = vpack.c.b16 %v2154, %v2152
        %v2211 = vpack.c.b16 %v2155, %v2153
        %v2212 = vpack.c.b16 %v2158, %v2156
        %v2213 = vpack.c.b16 %v2159, %v2157
        %v2214 = vpack.c.b16 %v2162, %v2160
        %v2215 = vpack.c.b16 %v2163, %v2161
        %v2216 = vpack.c.b16 %v2166, %v2164
        %v2217 = vpack.c.b16 %v2167, %v2165
        %v2218 = vpack.c.b16 %v2170, %v2168
        %v2219 = vpack.c.b16 %v2171, %v2169
        %v2220 = vpack.c.b16 %v2174, %v2172
        %v2221 = vpack.c.b16 %v2175, %v2173
        %v2222 = vpack.c.b16 %v2178, %v2176
        %v2223 = vpack.c.b16 %v2179, %v2177
        %v2224 = vpack.c.b16 %v2182, %v2180
        %v2225 = vpack.c.b16 %v2183, %v2181
        %v2226 = vpack.c.b16 %v2186, %v2184
        %v2227 = vpack.c.b16 %v2187, %v2185
        %v2228 = vpack.c.b16 %v2190, %v2188
        %v2229 = vpack.c.b16 %v2191, %v2189
        %v2230 = vpack.c.b16 %v2194, %v2192
        %v2231 = vpack.c.b16 %v2195, %v2193
        %v2232 = vpack.c.b16 %v2198, %v2196
        %v2233 = vpack.c.b16 %v2199, %v2197
        %v2234 = vpack.c.b16 %v2202, %v2200
        %v2235 = vpack.c.b16 %v2203, %v2201
        %2268 = vmatpush.bf16.msra.mxu0 %v2218
        %2269 = vmatpush.bf16.msra.mxu0 %v2216
        %2270 = vmatpush.bf16.msra.mxu0 %v2214
        %2271 = vmatpush.bf16.msra.mxu0 %v2212
        %2272 = vmatpush.bf16.msra.mxu0 %v2210
        %2273 = vmatpush.bf16.msra.mxu0 %v2208
        %2274 = vmatpush.bf16.msra.mxu0 %v2206
        %2275 = vmatpush.bf16.msra.mxu0 %v2204
        %2276 = vmatmul.bf16.gmra.mxu0 %v1355
        %v2277 = vpop.f32.mrf.mxu0
        %v2278 = vadd.f32 %v2104, %v2277
        %v2279 = vpop.f32.mrf.mxu0
        %v2280 = vadd.f32 %v2104, %v2279
        %2281 = vmatmul.bf16.gmra.mxu0 %v1357
        %v2282 = vpop.f32.mrf.mxu0
        %v2283 = vadd.f32 %v2104, %v2282
        %v2284 = vpop.f32.mrf.mxu0
        %v2285 = vadd.f32 %v2104, %v2284
        %2286 = vmatmul.bf16.gmra.mxu0 %v1359
        %v2287 = vpop.f32.mrf.mxu0
        %v2288 = vadd.f32 %v2104, %v2287
        %v2289 = vpop.f32.mrf.mxu0
        %v2290 = vadd.f32 %v2104, %v2289
        %2291 = vmatmul.bf16.gmra.mxu0 %v1361
        %v2292 = vpop.f32.mrf.mxu0
        %v2293 = vadd.f32 %v2104, %v2292
        %v2294 = vpop.f32.mrf.mxu0
        %v2295 = vadd.f32 %v2104, %v2294
        %2296 = vmatmul.bf16.gmra.mxu0 %v1363
        %v2297 = vpop.f32.mrf.mxu0
        %v2298 = vadd.f32 %v2104, %v2297
        %v2299 = vpop.f32.mrf.mxu0
        %v2300 = vadd.f32 %v2104, %v2299
        %2301 = vmatmul.bf16.gmra.mxu0 %v1365
        %v2302 = vpop.f32.mrf.mxu0
        %v2303 = vadd.f32 %v2104, %v2302
        %v2304 = vpop.f32.mrf.mxu0
        %v2305 = vadd.f32 %v2104, %v2304
        %2306 = vmatmul.bf16.gmra.mxu0 %v1367
        %v2307 = vpop.f32.mrf.mxu0
        %v2308 = vadd.f32 %v2104, %v2307
        %v2309 = vpop.f32.mrf.mxu0
        %v2310 = vadd.f32 %v2104, %v2309
        %2311 = vmatmul.bf16.gmra.mxu0 %v1369
        %v2312 = vpop.f32.mrf.mxu0
        %v2313 = vadd.f32 %v2104, %v2312
        %v2314 = vpop.f32.mrf.mxu0
        %v2315 = vadd.f32 %v2104, %v2314
        %2316 = vdwg.mxu0
        %2317 = vmatpush.bf16.msra.mxu0 %v2234
        %2318 = vmatpush.bf16.msra.mxu0 %v2232
        %2319 = vmatpush.bf16.msra.mxu0 %v2230
        %2320 = vmatpush.bf16.msra.mxu0 %v2228
        %2321 = vmatpush.bf16.msra.mxu0 %v2226
        %2322 = vmatpush.bf16.msra.mxu0 %v2224
        %2323 = vmatpush.bf16.msra.mxu0 %v2222
        %2324 = vmatpush.bf16.msra.mxu0 %v2220
        %2325 = vmatmul.bf16.gmra.mxu0 %v1356
        %v2326 = vpop.f32.mrf.mxu0
        %v2327 = vadd.f32 %v2278, %v2326
        %v2328 = vpop.f32.mrf.mxu0
        %v2329 = vadd.f32 %v2280, %v2328
        %2330 = vmatmul.bf16.gmra.mxu0 %v1358
        %v2331 = vpop.f32.mrf.mxu0
        %v2332 = vadd.f32 %v2283, %v2331
        %v2333 = vpop.f32.mrf.mxu0
        %v2334 = vadd.f32 %v2285, %v2333
        %2335 = vmatmul.bf16.gmra.mxu0 %v1360
        %v2336 = vpop.f32.mrf.mxu0
        %v2337 = vadd.f32 %v2288, %v2336
        %v2338 = vpop.f32.mrf.mxu0
        %v2339 = vadd.f32 %v2290, %v2338
        %2340 = vmatmul.bf16.gmra.mxu0 %v1362
        %v2341 = vpop.f32.mrf.mxu0
        %v2342 = vadd.f32 %v2293, %v2341
        %v2343 = vpop.f32.mrf.mxu0
        %v2344 = vadd.f32 %v2295, %v2343
        %2345 = vmatmul.bf16.gmra.mxu0 %v1364
        %v2346 = vpop.f32.mrf.mxu0
        %v2347 = vadd.f32 %v2298, %v2346
        %v2348 = vpop.f32.mrf.mxu0
        %v2349 = vadd.f32 %v2300, %v2348
        %2350 = vmatmul.bf16.gmra.mxu0 %v1366
        %v2351 = vpop.f32.mrf.mxu0
        %v2352 = vadd.f32 %v2303, %v2351
        %v2353 = vpop.f32.mrf.mxu0
        %v2354 = vadd.f32 %v2305, %v2353
        %2355 = vmatmul.bf16.gmra.mxu0 %v1368
        %v2356 = vpop.f32.mrf.mxu0
        %v2357 = vadd.f32 %v2308, %v2356
        %v2358 = vpop.f32.mrf.mxu0
        %v2359 = vadd.f32 %v2310, %v2358
        %2360 = vmatmul.bf16.gmra.mxu0 %v1370
        %v2361 = vpop.f32.mrf.mxu0
        %v2362 = vadd.f32 %v2313, %v2361
        %v2363 = vpop.f32.mrf.mxu0
        %v2364 = vadd.f32 %v2315, %v2363
        %2365 = vdwg.mxu0
        %2366 = vmatpush.bf16.msra.mxu0 %v2219
        %2367 = vmatpush.bf16.msra.mxu0 %v2217
        %2368 = vmatpush.bf16.msra.mxu0 %v2215
        %2369 = vmatpush.bf16.msra.mxu0 %v2213
        %2370 = vmatpush.bf16.msra.mxu0 %v2211
        %2371 = vmatpush.bf16.msra.mxu0 %v2209
        %2372 = vmatpush.bf16.msra.mxu0 %v2207
        %2373 = vmatpush.bf16.msra.mxu0 %v2205
        %2374 = vmatmul.bf16.gmra.mxu0 %v1355
        %v2375 = vpop.f32.mrf.mxu0
        %v2376 = vadd.f32 %v2105, %v2375
        %v2377 = vpop.f32.mrf.mxu0
        %v2378 = vadd.f32 %v2105, %v2377
        %2379 = vmatmul.bf16.gmra.mxu0 %v1357
        %v2380 = vpop.f32.mrf.mxu0
        %v2381 = vadd.f32 %v2105, %v2380
        %v2382 = vpop.f32.mrf.mxu0
        %v2383 = vadd.f32 %v2105, %v2382
        %2384 = vmatmul.bf16.gmra.mxu0 %v1359
        %v2385 = vpop.f32.mrf.mxu0
        %v2386 = vadd.f32 %v2105, %v2385
        %v2387 = vpop.f32.mrf.mxu0
        %v2388 = vadd.f32 %v2105, %v2387
        %2389 = vmatmul.bf16.gmra.mxu0 %v1361
        %v2390 = vpop.f32.mrf.mxu0
        %v2391 = vadd.f32 %v2105, %v2390
        %v2392 = vpop.f32.mrf.mxu0
        %v2393 = vadd.f32 %v2105, %v2392
        %2394 = vmatmul.bf16.gmra.mxu0 %v1363
        %v2395 = vpop.f32.mrf.mxu0
        %v2396 = vadd.f32 %v2105, %v2395
        %v2397 = vpop.f32.mrf.mxu0
        %v2398 = vadd.f32 %v2105, %v2397
        %2399 = vmatmul.bf16.gmra.mxu0 %v1365
        %v2400 = vpop.f32.mrf.mxu0
        %v2401 = vadd.f32 %v2105, %v2400
        %v2402 = vpop.f32.mrf.mxu0
        %v2403 = vadd.f32 %v2105, %v2402
        %2404 = vmatmul.bf16.gmra.mxu0 %v1367
        %v2405 = vpop.f32.mrf.mxu0
        %v2406 = vadd.f32 %v2105, %v2405
        %v2407 = vpop.f32.mrf.mxu0
        %v2408 = vadd.f32 %v2105, %v2407
        %2409 = vmatmul.bf16.gmra.mxu0 %v1369
        %v2410 = vpop.f32.mrf.mxu0
        %v2411 = vadd.f32 %v2105, %v2410
        %v2412 = vpop.f32.mrf.mxu0
        %v2413 = vadd.f32 %v2105, %v2412
        %2414 = vdwg.mxu0
        %2415 = vmatpush.bf16.msra.mxu0 %v2235
        %2416 = vmatpush.bf16.msra.mxu0 %v2233
        %2417 = vmatpush.bf16.msra.mxu0 %v2231
        %2418 = vmatpush.bf16.msra.mxu0 %v2229
        %2419 = vmatpush.bf16.msra.mxu0 %v2227
        %2420 = vmatpush.bf16.msra.mxu0 %v2225
        %2421 = vmatpush.bf16.msra.mxu0 %v2223
        %2422 = vmatpush.bf16.msra.mxu0 %v2221
        %2423 = vmatmul.bf16.gmra.mxu0 %v1356
        %v2424 = vpop.f32.mrf.mxu0
        %v2425 = vadd.f32 %v2376, %v2424
        %v2426 = vpop.f32.mrf.mxu0
        %v2427 = vadd.f32 %v2378, %v2426
        %2428 = vmatmul.bf16.gmra.mxu0 %v1358
        %v2429 = vpop.f32.mrf.mxu0
        %v2430 = vadd.f32 %v2381, %v2429
        %v2431 = vpop.f32.mrf.mxu0
        %v2432 = vadd.f32 %v2383, %v2431
        %2433 = vmatmul.bf16.gmra.mxu0 %v1360
        %v2434 = vpop.f32.mrf.mxu0
        %v2435 = vadd.f32 %v2386, %v2434
        %v2436 = vpop.f32.mrf.mxu0
        %v2437 = vadd.f32 %v2388, %v2436
        %2438 = vmatmul.bf16.gmra.mxu0 %v1362
        %v2439 = vpop.f32.mrf.mxu0
        %v2440 = vadd.f32 %v2391, %v2439
        %v2441 = vpop.f32.mrf.mxu0
        %v2442 = vadd.f32 %v2393, %v2441
        %2443 = vmatmul.bf16.gmra.mxu0 %v1364
        %v2444 = vpop.f32.mrf.mxu0
        %v2445 = vadd.f32 %v2396, %v2444
        %v2446 = vpop.f32.mrf.mxu0
        %v2447 = vadd.f32 %v2398, %v2446
        %2448 = vmatmul.bf16.gmra.mxu0 %v1366
        %v2449 = vpop.f32.mrf.mxu0
        %v2450 = vadd.f32 %v2401, %v2449
        %v2451 = vpop.f32.mrf.mxu0
        %v2452 = vadd.f32 %v2403, %v2451
        %2453 = vmatmul.bf16.gmra.mxu0 %v1368
        %v2454 = vpop.f32.mrf.mxu0
        %v2455 = vadd.f32 %v2406, %v2454
        %v2456 = vpop.f32.mrf.mxu0
        %v2457 = vadd.f32 %v2408, %v2456
        %2458 = vmatmul.bf16.gmra.mxu0 %v1370
        %v2459 = vpop.f32.mrf.mxu0
        %v2460 = vadd.f32 %v2411, %v2459
        %v2461 = vpop.f32.mrf.mxu0
        %v2462 = vadd.f32 %v2413, %v2461
        %2463 = vdwg.mxu0
        %v2464 = vpack.c.bf16 %v2055, %v2054
        %v2465 = vpack.c.bf16 %v2057, %v2056
        %v2466 = vpack.c.bf16 %v2059, %v2058
        %v2467 = vpack.c.bf16 %v2061, %v2060
        %v2468 = vpack.c.bf16 %v2063, %v2062
        %v2469 = vpack.c.bf16 %v2065, %v2064
        %v2470 = vpack.c.bf16 %v2067, %v2066
        %v2471 = vpack.c.bf16 %v2069, %v2068
        %v2472 = vpack.c.bf16 %v2329, %v2327
        %v2473 = vpack.c.bf16 %v2427, %v2425
        %v2474 = vpack.c.bf16 %v2334, %v2332
        %v2475 = vpack.c.bf16 %v2432, %v2430
        %v2476 = vpack.c.bf16 %v2339, %v2337
        %v2477 = vpack.c.bf16 %v2437, %v2435
        %v2478 = vpack.c.bf16 %v2344, %v2342
        %v2479 = vpack.c.bf16 %v2442, %v2440
        %v2480 = vpack.c.bf16 %v2349, %v2347
        %v2481 = vpack.c.bf16 %v2447, %v2445
        %v2482 = vpack.c.bf16 %v2354, %v2352
        %v2483 = vpack.c.bf16 %v2452, %v2450
        %v2484 = vpack.c.bf16 %v2359, %v2357
        %v2485 = vpack.c.bf16 %v2457, %v2455
        %v2486 = vpack.c.bf16 %v2364, %v2362
        %v2487 = vpack.c.bf16 %v2462, %v2460
        %2488 = vxpose.xlu0.c.b16.start [1/8] %v2464, 128
        %2489 = vxpose.xlu0.c.b16.cont [2/8] %v2465, 128
        %2490 = vxpose.xlu0.c.b16.cont [3/8] %v2466, 128
        %2491 = vxpose.xlu0.c.b16.cont [4/8] %v2467, 128
        %2492 = vxpose.xlu0.c.b16.cont [5/8] %v2468, 128
        %2493 = vxpose.xlu0.c.b16.cont [6/8] %v2469, 128
        %2494 = vxpose.xlu0.c.b16.cont [7/8] %v2470, 128
        %2495 = vxpose.xlu0.c.b16.end [8/8] %v2471, 128
        %v2496 = vpop.trf.xlu0
        %v2497 = vpop.trf.xlu0
        %v2498 = vpop.trf.xlu0
        %v2499 = vpop.trf.xlu0
        %v2500 = vpop.trf.xlu0
        %v2501 = vpop.trf.xlu0
        %v2502 = vpop.trf.xlu0
        %v2503 = vpop.trf.xlu0
        %2504 = vmatpush.bf16.msra.mxu0 %v2486
        %2505 = vmatpush.bf16.msra.mxu0 %v2484
        %2506 = vmatpush.bf16.msra.mxu0 %v2482
        %2507 = vmatpush.bf16.msra.mxu0 %v2480
        %2508 = vmatpush.bf16.msra.mxu0 %v2478
        %2509 = vmatpush.bf16.msra.mxu0 %v2476
        %2510 = vmatpush.bf16.msra.mxu0 %v2474
        %2511 = vmatpush.bf16.msra.mxu0 %v2472
        %2512 = vmatmul.bf16.gmra.mxu0 %v2496
        %v2513 = vpop.f32.mrf.mxu0
        %v2514 = vadd.f32 0.0, %v2513
        %v2515 = vpop.f32.mrf.mxu0
        %v2516 = vadd.f32 0.0, %v2515
        %2517 = vmatmul.bf16.gmra.mxu0 %v2497
        %v2518 = vpop.f32.mrf.mxu0
        %v2519 = vadd.f32 0.0, %v2518
        %v2520 = vpop.f32.mrf.mxu0
        %v2521 = vadd.f32 0.0, %v2520
        %2522 = vmatmul.bf16.gmra.mxu0 %v2498
        %v2523 = vpop.f32.mrf.mxu0
        %v2524 = vadd.f32 0.0, %v2523
        %v2525 = vpop.f32.mrf.mxu0
        %v2526 = vadd.f32 0.0, %v2525
        %2527 = vmatmul.bf16.gmra.mxu0 %v2499
        %v2528 = vpop.f32.mrf.mxu0
        %v2529 = vadd.f32 0.0, %v2528
        %v2530 = vpop.f32.mrf.mxu0
        %v2531 = vadd.f32 0.0, %v2530
        %2532 = vmatmul.bf16.gmra.mxu0 %v2500
        %v2533 = vpop.f32.mrf.mxu0
        %v2534 = vadd.f32 0.0, %v2533
        %v2535 = vpop.f32.mrf.mxu0
        %v2536 = vadd.f32 0.0, %v2535
        %2537 = vmatmul.bf16.gmra.mxu0 %v2501
        %v2538 = vpop.f32.mrf.mxu0
        %v2539 = vadd.f32 0.0, %v2538
        %v2540 = vpop.f32.mrf.mxu0
        %v2541 = vadd.f32 0.0, %v2540
        %2542 = vmatmul.bf16.gmra.mxu0 %v2502
        %v2543 = vpop.f32.mrf.mxu0
        %v2544 = vadd.f32 0.0, %v2543
        %v2545 = vpop.f32.mrf.mxu0
        %v2546 = vadd.f32 0.0, %v2545
        %2547 = vmatmul.bf16.gmra.mxu0 %v2503
        %v2548 = vpop.f32.mrf.mxu0
        %v2549 = vadd.f32 0.0, %v2548
        %v2550 = vpop.f32.mrf.mxu0
        %v2551 = vadd.f32 0.0, %v2550
        %2552 = vdwg.mxu0
        %2553 = vmatpush.bf16.msra.mxu0 %v2487
        %2554 = vmatpush.bf16.msra.mxu0 %v2485
        %2555 = vmatpush.bf16.msra.mxu0 %v2483
        %2556 = vmatpush.bf16.msra.mxu0 %v2481
        %2557 = vmatpush.bf16.msra.mxu0 %v2479
        %2558 = vmatpush.bf16.msra.mxu0 %v2477
        %2559 = vmatpush.bf16.msra.mxu0 %v2475
        %2560 = vmatpush.bf16.msra.mxu0 %v2473
        %2561 = vmatmul.bf16.gmra.mxu0 %v2496
        %v2562 = vpop.f32.mrf.mxu0
        %v2563 = vadd.f32 0.0, %v2562
        %v2564 = vpop.f32.mrf.mxu0
        %v2565 = vadd.f32 0.0, %v2564
        %2566 = vmatmul.bf16.gmra.mxu0 %v2497
        %v2567 = vpop.f32.mrf.mxu0
        %v2568 = vadd.f32 0.0, %v2567
        %v2569 = vpop.f32.mrf.mxu0
        %v2570 = vadd.f32 0.0, %v2569
        %2571 = vmatmul.bf16.gmra.mxu0 %v2498
        %v2572 = vpop.f32.mrf.mxu0
        %v2573 = vadd.f32 0.0, %v2572
        %v2574 = vpop.f32.mrf.mxu0
        %v2575 = vadd.f32 0.0, %v2574
        %2576 = vmatmul.bf16.gmra.mxu0 %v2499
        %v2577 = vpop.f32.mrf.mxu0
        %v2578 = vadd.f32 0.0, %v2577
        %v2579 = vpop.f32.mrf.mxu0
        %v2580 = vadd.f32 0.0, %v2579
        %2581 = vmatmul.bf16.gmra.mxu0 %v2500
        %v2582 = vpop.f32.mrf.mxu0
        %v2583 = vadd.f32 0.0, %v2582
        %v2584 = vpop.f32.mrf.mxu0
        %v2585 = vadd.f32 0.0, %v2584
        %2586 = vmatmul.bf16.gmra.mxu0 %v2501
        %v2587 = vpop.f32.mrf.mxu0
        %v2588 = vadd.f32 0.0, %v2587
        %v2589 = vpop.f32.mrf.mxu0
        %v2590 = vadd.f32 0.0, %v2589
        %2591 = vmatmul.bf16.gmra.mxu0 %v2502
        %v2592 = vpop.f32.mrf.mxu0
        %v2593 = vadd.f32 0.0, %v2592
        %v2594 = vpop.f32.mrf.mxu0
        %v2595 = vadd.f32 0.0, %v2594
        %2596 = vmatmul.bf16.gmra.mxu0 %v2503
        %v2597 = vpop.f32.mrf.mxu0
        %v2598 = vadd.f32 0.0, %v2597
        %v2599 = vpop.f32.mrf.mxu0
        %v2600 = vadd.f32 0.0, %v2599
        %2601 = vdwg.mxu0
        %v2602 = vsub.f32 %v1323, %v2514
        %v2603 = vsub.f32 %v1324, %v2563
        %v2604 = vsub.f32 %v1325, %v2516
        %v2605 = vsub.f32 %v1326, %v2565
        %v2606 = vsub.f32 %v1327, %v2519
        %v2607 = vsub.f32 %v1328, %v2568
        %v2608 = vsub.f32 %v1329, %v2521
        %v2609 = vsub.f32 %v1330, %v2570
        %v2610 = vsub.f32 %v1331, %v2524
        %v2611 = vsub.f32 %v1332, %v2573
        %v2612 = vsub.f32 %v1333, %v2526
        %v2613 = vsub.f32 %v1334, %v2575
        %v2614 = vsub.f32 %v1335, %v2529
        %v2615 = vsub.f32 %v1336, %v2578
        %v2616 = vsub.f32 %v1337, %v2531
        %v2617 = vsub.f32 %v1338, %v2580
        %v2618 = vsub.f32 %v1339, %v2534
        %v2619 = vsub.f32 %v1340, %v2583
        %v2620 = vsub.f32 %v1341, %v2536
        %v2621 = vsub.f32 %v1342, %v2585
        %v2622 = vsub.f32 %v1343, %v2539
        %v2623 = vsub.f32 %v1344, %v2588
        %v2624 = vsub.f32 %v1345, %v2541
        %v2625 = vsub.f32 %v1346, %v2590
        %v2626 = vsub.f32 %v1347, %v2544
        %v2627 = vsub.f32 %v1348, %v2593
        %v2628 = vsub.f32 %v1349, %v2546
        %v2629 = vsub.f32 %v1350, %v2595
        %v2630 = vsub.f32 %v1351, %v2549
        %v2631 = vsub.f32 %v1352, %v2598
        %v2632 = vsub.f32 %v1353, %v2551
        %v2633 = vsub.f32 %v1354, %v2600
        %v2634 = vpack.c.bf16 %v2604, %v2602
        %v2635 = vpack.c.bf16 %v2605, %v2603
        %v2636 = vpack.c.bf16 %v2608, %v2606
        %v2637 = vpack.c.bf16 %v2609, %v2607
        %v2638 = vpack.c.bf16 %v2612, %v2610
        %v2639 = vpack.c.bf16 %v2613, %v2611
        %v2640 = vpack.c.bf16 %v2616, %v2614
        %v2641 = vpack.c.bf16 %v2617, %v2615
        %v2642 = vpack.c.bf16 %v2620, %v2618
        %v2643 = vpack.c.bf16 %v2621, %v2619
        %v2644 = vpack.c.bf16 %v2624, %v2622
        %v2645 = vpack.c.bf16 %v2625, %v2623
        %v2646 = vpack.c.bf16 %v2628, %v2626
        %v2647 = vpack.c.bf16 %v2629, %v2627
        %v2648 = vpack.c.bf16 %v2632, %v2630
        %v2649 = vpack.c.bf16 %v2633, %v2631
        %v2650 = vld [vmem:[#allocation7] sm:$0xff]
        %v2651 = vld [vmem:[#allocation7 + $0x8] sm:$0xff]
        %v2652 = vld [vmem:[#allocation7 + $0x10] sm:$0xff]
        %v2653 = vld [vmem:[#allocation7 + $0x18] sm:$0xff]
        %v2654 = vld [vmem:[#allocation7 + $0x20] sm:$0xff]
        %v2655 = vld [vmem:[#allocation7 + $0x28] sm:$0xff]
        %v2656 = vld [vmem:[#allocation7 + $0x30] sm:$0xff]
        %v2657 = vld [vmem:[#allocation7 + $0x38] sm:$0xff]
        %v2658 = vld [vmem:[#allocation7 + $0x40] sm:$0xff]
        %v2659 = vld [vmem:[#allocation7 + $0x48] sm:$0xff]
        %v2660 = vld [vmem:[#allocation7 + $0x50] sm:$0xff]
        %v2661 = vld [vmem:[#allocation7 + $0x58] sm:$0xff]
        %v2662 = vld [vmem:[#allocation7 + $0x60] sm:$0xff]
        %v2663 = vld [vmem:[#allocation7 + $0x68] sm:$0xff]
        %v2664 = vld [vmem:[#allocation7 + $0x70] sm:$0xff]
        %v2665 = vld [vmem:[#allocation7 + $0x78] sm:$0xff]
        %v2666 = vld [vmem:[#allocation7 + $0x80] sm:$0xff]
        %v2667 = vld [vmem:[#allocation7 + $0x88] sm:$0xff]
        %v2668 = vld [vmem:[#allocation7 + $0x90] sm:$0xff]
        %v2669 = vld [vmem:[#allocation7 + $0x98] sm:$0xff]
        %v2670 = vld [vmem:[#allocation7 + $0xa0] sm:$0xff]
        %v2671 = vld [vmem:[#allocation7 + $0xa8] sm:$0xff]
        %v2672 = vld [vmem:[#allocation7 + $0xb0] sm:$0xff]
        %v2673 = vld [vmem:[#allocation7 + $0xb8] sm:$0xff]
        %v2674 = vld [vmem:[#allocation7 + $0xc0] sm:$0xff]
        %v2675 = vld [vmem:[#allocation7 + $0xc8] sm:$0xff]
        %v2676 = vld [vmem:[#allocation7 + $0xd0] sm:$0xff]
        %v2677 = vld [vmem:[#allocation7 + $0xd8] sm:$0xff]
        %v2678 = vld [vmem:[#allocation7 + $0xe0] sm:$0xff]
        %v2679 = vld [vmem:[#allocation7 + $0xe8] sm:$0xff]
        %v2680 = vld [vmem:[#allocation7 + $0xf0] sm:$0xff]
        %v2681 = vld [vmem:[#allocation7 + $0xf8] sm:$0xff]
        %v2682 = vld [vmem:[#allocation9] sm:$0x3]
        %v2684 = vperm.slane %v2682, 0
        %v2685 = vperm.slane %v2682, 1
        %v2720 = vunpack.c.l.b16 %v2650
        %v2721 = vunpack.c.h.b16 %v2650
        %v2722 = vunpack.c.l.b16 %v2651
        %v2723 = vunpack.c.h.b16 %v2651
        %v2724 = vunpack.c.l.b16 %v2652
        %v2725 = vunpack.c.h.b16 %v2652
        %v2726 = vunpack.c.l.b16 %v2653
        %v2727 = vunpack.c.h.b16 %v2653
        %v2728 = vunpack.c.l.b16 %v2654
        %v2729 = vunpack.c.h.b16 %v2654
        %v2730 = vunpack.c.l.b16 %v2655
        %v2731 = vunpack.c.h.b16 %v2655
        %v2732 = vunpack.c.l.b16 %v2656
        %v2733 = vunpack.c.h.b16 %v2656
        %v2734 = vunpack.c.l.b16 %v2657
        %v2735 = vunpack.c.h.b16 %v2657
        %v2736 = vunpack.c.l.b16 %v2658
        %v2737 = vunpack.c.h.b16 %v2658
        %v2738 = vunpack.c.l.b16 %v2659
        %v2739 = vunpack.c.h.b16 %v2659
        %v2740 = vunpack.c.l.b16 %v2660
        %v2741 = vunpack.c.h.b16 %v2660
        %v2742 = vunpack.c.l.b16 %v2661
        %v2743 = vunpack.c.h.b16 %v2661
        %v2744 = vunpack.c.l.b16 %v2662
        %v2745 = vunpack.c.h.b16 %v2662
        %v2746 = vunpack.c.l.b16 %v2663
        %v2747 = vunpack.c.h.b16 %v2663
        %v2748 = vunpack.c.l.b16 %v2664
        %v2749 = vunpack.c.h.b16 %v2664
        %v2750 = vunpack.c.l.b16 %v2665
        %v2751 = vunpack.c.h.b16 %v2665
        %v2752 = vunpack.c.l.b16 %v2666
        %v2753 = vunpack.c.h.b16 %v2666
        %v2754 = vunpack.c.l.b16 %v2667
        %v2755 = vunpack.c.h.b16 %v2667
        %v2756 = vunpack.c.l.b16 %v2668
        %v2757 = vunpack.c.h.b16 %v2668
        %v2758 = vunpack.c.l.b16 %v2669
        %v2759 = vunpack.c.h.b16 %v2669
        %v2760 = vunpack.c.l.b16 %v2670
        %v2761 = vunpack.c.h.b16 %v2670
        %v2762 = vunpack.c.l.b16 %v2671
        %v2763 = vunpack.c.h.b16 %v2671
        %v2764 = vunpack.c.l.b16 %v2672
        %v2765 = vunpack.c.h.b16 %v2672
        %v2766 = vunpack.c.l.b16 %v2673
        %v2767 = vunpack.c.h.b16 %v2673
        %v2768 = vunpack.c.l.b16 %v2674
        %v2769 = vunpack.c.h.b16 %v2674
        %v2770 = vunpack.c.l.b16 %v2675
        %v2771 = vunpack.c.h.b16 %v2675
        %v2772 = vunpack.c.l.b16 %v2676
        %v2773 = vunpack.c.h.b16 %v2676
        %v2774 = vunpack.c.l.b16 %v2677
        %v2775 = vunpack.c.h.b16 %v2677
        %v2776 = vunpack.c.l.b16 %v2678
        %v2777 = vunpack.c.h.b16 %v2678
        %v2778 = vunpack.c.l.b16 %v2679
        %v2779 = vunpack.c.h.b16 %v2679
        %v2780 = vunpack.c.l.b16 %v2680
        %v2781 = vunpack.c.h.b16 %v2680
        %v2782 = vunpack.c.l.b16 %v2681
        %v2783 = vunpack.c.h.b16 %v2681
        %v2784 = vpack.c.b16 %v2722, %v2720
        %v2785 = vpack.c.b16 %v2723, %v2721
        %v2786 = vpack.c.b16 %v2726, %v2724
        %v2787 = vpack.c.b16 %v2727, %v2725
        %v2788 = vpack.c.b16 %v2730, %v2728
        %v2789 = vpack.c.b16 %v2731, %v2729
        %v2790 = vpack.c.b16 %v2734, %v2732
        %v2791 = vpack.c.b16 %v2735, %v2733
        %v2792 = vpack.c.b16 %v2738, %v2736
        %v2793 = vpack.c.b16 %v2739, %v2737
        %v2794 = vpack.c.b16 %v2742, %v2740
        %v2795 = vpack.c.b16 %v2743, %v2741
        %v2796 = vpack.c.b16 %v2746, %v2744
        %v2797 = vpack.c.b16 %v2747, %v2745
        %v2798 = vpack.c.b16 %v2750, %v2748
        %v2799 = vpack.c.b16 %v2751, %v2749
        %v2800 = vpack.c.b16 %v2754, %v2752
        %v2801 = vpack.c.b16 %v2755, %v2753
        %v2802 = vpack.c.b16 %v2758, %v2756
        %v2803 = vpack.c.b16 %v2759, %v2757
        %v2804 = vpack.c.b16 %v2762, %v2760
        %v2805 = vpack.c.b16 %v2763, %v2761
        %v2806 = vpack.c.b16 %v2766, %v2764
        %v2807 = vpack.c.b16 %v2767, %v2765
        %v2808 = vpack.c.b16 %v2770, %v2768
        %v2809 = vpack.c.b16 %v2771, %v2769
        %v2810 = vpack.c.b16 %v2774, %v2772
        %v2811 = vpack.c.b16 %v2775, %v2773
        %v2812 = vpack.c.b16 %v2778, %v2776
        %v2813 = vpack.c.b16 %v2779, %v2777
        %v2814 = vpack.c.b16 %v2782, %v2780
        %v2815 = vpack.c.b16 %v2783, %v2781
        %2848 = vmatpush.bf16.msra.mxu0 %v2798
        %2849 = vmatpush.bf16.msra.mxu0 %v2796
        %2850 = vmatpush.bf16.msra.mxu0 %v2794
        %2851 = vmatpush.bf16.msra.mxu0 %v2792
        %2852 = vmatpush.bf16.msra.mxu0 %v2790
        %2853 = vmatpush.bf16.msra.mxu0 %v2788
        %2854 = vmatpush.bf16.msra.mxu0 %v2786
        %2855 = vmatpush.bf16.msra.mxu0 %v2784
        %2856 = vmatmul.bf16.gmra.mxu0 %v2634
        %v2857 = vpop.f32.mrf.mxu0
        %v2858 = vadd.f32 %v2684, %v2857
        %v2859 = vpop.f32.mrf.mxu0
        %v2860 = vadd.f32 %v2684, %v2859
        %2861 = vmatmul.bf16.gmra.mxu0 %v2636
        %v2862 = vpop.f32.mrf.mxu0
        %v2863 = vadd.f32 %v2684, %v2862
        %v2864 = vpop.f32.mrf.mxu0
        %v2865 = vadd.f32 %v2684, %v2864
        %2866 = vmatmul.bf16.gmra.mxu0 %v2638
        %v2867 = vpop.f32.mrf.mxu0
        %v2868 = vadd.f32 %v2684, %v2867
        %v2869 = vpop.f32.mrf.mxu0
        %v2870 = vadd.f32 %v2684, %v2869
        %2871 = vmatmul.bf16.gmra.mxu0 %v2640
        %v2872 = vpop.f32.mrf.mxu0
        %v2873 = vadd.f32 %v2684, %v2872
        %v2874 = vpop.f32.mrf.mxu0
        %v2875 = vadd.f32 %v2684, %v2874
        %2876 = vmatmul.bf16.gmra.mxu0 %v2642
        %v2877 = vpop.f32.mrf.mxu0
        %v2878 = vadd.f32 %v2684, %v2877
        %v2879 = vpop.f32.mrf.mxu0
        %v2880 = vadd.f32 %v2684, %v2879
        %2881 = vmatmul.bf16.gmra.mxu0 %v2644
        %v2882 = vpop.f32.mrf.mxu0
        %v2883 = vadd.f32 %v2684, %v2882
        %v2884 = vpop.f32.mrf.mxu0
        %v2885 = vadd.f32 %v2684, %v2884
        %2886 = vmatmul.bf16.gmra.mxu0 %v2646
        %v2887 = vpop.f32.mrf.mxu0
        %v2888 = vadd.f32 %v2684, %v2887
        %v2889 = vpop.f32.mrf.mxu0
        %v2890 = vadd.f32 %v2684, %v2889
        %2891 = vmatmul.bf16.gmra.mxu0 %v2648
        %v2892 = vpop.f32.mrf.mxu0
        %v2893 = vadd.f32 %v2684, %v2892
        %v2894 = vpop.f32.mrf.mxu0
        %v2895 = vadd.f32 %v2684, %v2894
        %2896 = vdwg.mxu0
        %2897 = vmatpush.bf16.msra.mxu0 %v2814
        %2898 = vmatpush.bf16.msra.mxu0 %v2812
        %2899 = vmatpush.bf16.msra.mxu0 %v2810
        %2900 = vmatpush.bf16.msra.mxu0 %v2808
        %2901 = vmatpush.bf16.msra.mxu0 %v2806
        %2902 = vmatpush.bf16.msra.mxu0 %v2804
        %2903 = vmatpush.bf16.msra.mxu0 %v2802
        %2904 = vmatpush.bf16.msra.mxu0 %v2800
        %2905 = vmatmul.bf16.gmra.mxu0 %v2635
        %v2906 = vpop.f32.mrf.mxu0
        %v2907 = vadd.f32 %v2858, %v2906
        %v2908 = vpop.f32.mrf.mxu0
        %v2909 = vadd.f32 %v2860, %v2908
        %2910 = vmatmul.bf16.gmra.mxu0 %v2637
        %v2911 = vpop.f32.mrf.mxu0
        %v2912 = vadd.f32 %v2863, %v2911
        %v2913 = vpop.f32.mrf.mxu0
        %v2914 = vadd.f32 %v2865, %v2913
        %2915 = vmatmul.bf16.gmra.mxu0 %v2639
        %v2916 = vpop.f32.mrf.mxu0
        %v2917 = vadd.f32 %v2868, %v2916
        %v2918 = vpop.f32.mrf.mxu0
        %v2919 = vadd.f32 %v2870, %v2918
        %2920 = vmatmul.bf16.gmra.mxu0 %v2641
        %v2921 = vpop.f32.mrf.mxu0
        %v2922 = vadd.f32 %v2873, %v2921
        %v2923 = vpop.f32.mrf.mxu0
        %v2924 = vadd.f32 %v2875, %v2923
        %2925 = vmatmul.bf16.gmra.mxu0 %v2643
        %v2926 = vpop.f32.mrf.mxu0
        %v2927 = vadd.f32 %v2878, %v2926
        %v2928 = vpop.f32.mrf.mxu0
        %v2929 = vadd.f32 %v2880, %v2928
        %2930 = vmatmul.bf16.gmra.mxu0 %v2645
        %v2931 = vpop.f32.mrf.mxu0
        %v2932 = vadd.f32 %v2883, %v2931
        %v2933 = vpop.f32.mrf.mxu0
        %v2934 = vadd.f32 %v2885, %v2933
        %2935 = vmatmul.bf16.gmra.mxu0 %v2647
        %v2936 = vpop.f32.mrf.mxu0
        %v2937 = vadd.f32 %v2888, %v2936
        %v2938 = vpop.f32.mrf.mxu0
        %v2939 = vadd.f32 %v2890, %v2938
        %2940 = vmatmul.bf16.gmra.mxu0 %v2649
        %v2941 = vpop.f32.mrf.mxu0
        %v2942 = vadd.f32 %v2893, %v2941
        %v2943 = vpop.f32.mrf.mxu0
        %v2944 = vadd.f32 %v2895, %v2943
        %2945 = vdwg.mxu0
        %2946 = vmatpush.bf16.msra.mxu0 %v2799
        %2947 = vmatpush.bf16.msra.mxu0 %v2797
        %2948 = vmatpush.bf16.msra.mxu0 %v2795
        %2949 = vmatpush.bf16.msra.mxu0 %v2793
        %2950 = vmatpush.bf16.msra.mxu0 %v2791
        %2951 = vmatpush.bf16.msra.mxu0 %v2789
        %2952 = vmatpush.bf16.msra.mxu0 %v2787
        %2953 = vmatpush.bf16.msra.mxu0 %v2785
        %2954 = vmatmul.bf16.gmra.mxu0 %v2634
        %v2955 = vpop.f32.mrf.mxu0
        %v2956 = vadd.f32 %v2685, %v2955
        %v2957 = vpop.f32.mrf.mxu0
        %v2958 = vadd.f32 %v2685, %v2957
        %2959 = vmatmul.bf16.gmra.mxu0 %v2636
        %v2960 = vpop.f32.mrf.mxu0
        %v2961 = vadd.f32 %v2685, %v2960
        %v2962 = vpop.f32.mrf.mxu0
        %v2963 = vadd.f32 %v2685, %v2962
        %2964 = vmatmul.bf16.gmra.mxu0 %v2638
        %v2965 = vpop.f32.mrf.mxu0
        %v2966 = vadd.f32 %v2685, %v2965
        %v2967 = vpop.f32.mrf.mxu0
        %v2968 = vadd.f32 %v2685, %v2967
        %2969 = vmatmul.bf16.gmra.mxu0 %v2640
        %v2970 = vpop.f32.mrf.mxu0
        %v2971 = vadd.f32 %v2685, %v2970
        %v2972 = vpop.f32.mrf.mxu0
        %v2973 = vadd.f32 %v2685, %v2972
        %2974 = vmatmul.bf16.gmra.mxu0 %v2642
        %v2975 = vpop.f32.mrf.mxu0
        %v2976 = vadd.f32 %v2685, %v2975
        %v2977 = vpop.f32.mrf.mxu0
        %v2978 = vadd.f32 %v2685, %v2977
        %2979 = vmatmul.bf16.gmra.mxu0 %v2644
        %v2980 = vpop.f32.mrf.mxu0
        %v2981 = vadd.f32 %v2685, %v2980
        %v2982 = vpop.f32.mrf.mxu0
        %v2983 = vadd.f32 %v2685, %v2982
        %2984 = vmatmul.bf16.gmra.mxu0 %v2646
        %v2985 = vpop.f32.mrf.mxu0
        %v2986 = vadd.f32 %v2685, %v2985
        %v2987 = vpop.f32.mrf.mxu0
        %v2988 = vadd.f32 %v2685, %v2987
        %2989 = vmatmul.bf16.gmra.mxu0 %v2648
        %v2990 = vpop.f32.mrf.mxu0
        %v2991 = vadd.f32 %v2685, %v2990
        %v2992 = vpop.f32.mrf.mxu0
        %v2993 = vadd.f32 %v2685, %v2992
        %2994 = vdwg.mxu0
        %2995 = vmatpush.bf16.msra.mxu0 %v2815
        %2996 = vmatpush.bf16.msra.mxu0 %v2813
        %2997 = vmatpush.bf16.msra.mxu0 %v2811
        %2998 = vmatpush.bf16.msra.mxu0 %v2809
        %2999 = vmatpush.bf16.msra.mxu0 %v2807
        %3000 = vmatpush.bf16.msra.mxu0 %v2805
        %3001 = vmatpush.bf16.msra.mxu0 %v2803
        %3002 = vmatpush.bf16.msra.mxu0 %v2801
        %3003 = vmatmul.bf16.gmra.mxu0 %v2635
        %v3004 = vpop.f32.mrf.mxu0
        %v3005 = vadd.f32 %v2956, %v3004
        %v3006 = vpop.f32.mrf.mxu0
        %v3007 = vadd.f32 %v2958, %v3006
        %3008 = vmatmul.bf16.gmra.mxu0 %v2637
        %v3009 = vpop.f32.mrf.mxu0
        %v3010 = vadd.f32 %v2961, %v3009
        %v3011 = vpop.f32.mrf.mxu0
        %v3012 = vadd.f32 %v2963, %v3011
        %3013 = vmatmul.bf16.gmra.mxu0 %v2639
        %v3014 = vpop.f32.mrf.mxu0
        %v3015 = vadd.f32 %v2966, %v3014
        %v3016 = vpop.f32.mrf.mxu0
        %v3017 = vadd.f32 %v2968, %v3016
        %3018 = vmatmul.bf16.gmra.mxu0 %v2641
        %v3019 = vpop.f32.mrf.mxu0
        %v3020 = vadd.f32 %v2971, %v3019
        %v3021 = vpop.f32.mrf.mxu0
        %v3022 = vadd.f32 %v2973, %v3021
        %3023 = vmatmul.bf16.gmra.mxu0 %v2643
        %v3024 = vpop.f32.mrf.mxu0
        %v3025 = vadd.f32 %v2976, %v3024
        %v3026 = vpop.f32.mrf.mxu0
        %v3027 = vadd.f32 %v2978, %v3026
        %3028 = vmatmul.bf16.gmra.mxu0 %v2645
        %v3029 = vpop.f32.mrf.mxu0
        %v3030 = vadd.f32 %v2981, %v3029
        %v3031 = vpop.f32.mrf.mxu0
        %v3032 = vadd.f32 %v2983, %v3031
        %3033 = vmatmul.bf16.gmra.mxu0 %v2647
        %v3034 = vpop.f32.mrf.mxu0
        %v3035 = vadd.f32 %v2986, %v3034
        %v3036 = vpop.f32.mrf.mxu0
        %v3037 = vadd.f32 %v2988, %v3036
        %3038 = vmatmul.bf16.gmra.mxu0 %v2649
        %v3039 = vpop.f32.mrf.mxu0
        %v3040 = vadd.f32 %v2991, %v3039
        %v3041 = vpop.f32.mrf.mxu0
        %v3042 = vadd.f32 %v2993, %v3041
        %3043 = vdwg.mxu0
        %v3044 = vmax.f32 %v2907, 0.0
        %v3045 = vmax.f32 %v3005, 0.0
        %v3046 = vmax.f32 %v2909, 0.0
        %v3047 = vmax.f32 %v3007, 0.0
        %v3048 = vmax.f32 %v2912, 0.0
        %v3049 = vmax.f32 %v3010, 0.0
        %v3050 = vmax.f32 %v2914, 0.0
        %v3051 = vmax.f32 %v3012, 0.0
        %v3052 = vmax.f32 %v2917, 0.0
        %v3053 = vmax.f32 %v3015, 0.0
        %v3054 = vmax.f32 %v2919, 0.0
        %v3055 = vmax.f32 %v3017, 0.0
        %v3056 = vmax.f32 %v2922, 0.0
        %v3057 = vmax.f32 %v3020, 0.0
        %v3058 = vmax.f32 %v2924, 0.0
        %v3059 = vmax.f32 %v3022, 0.0
        %v3060 = vmax.f32 %v2927, 0.0
        %v3061 = vmax.f32 %v3025, 0.0
        %v3062 = vmax.f32 %v2929, 0.0
        %v3063 = vmax.f32 %v3027, 0.0
        %v3064 = vmax.f32 %v2932, 0.0
        %v3065 = vmax.f32 %v3030, 0.0
        %v3066 = vmax.f32 %v2934, 0.0
        %v3067 = vmax.f32 %v3032, 0.0
        %v3068 = vmax.f32 %v2937, 0.0
        %v3069 = vmax.f32 %v3035, 0.0
        %v3070 = vmax.f32 %v2939, 0.0
        %v3071 = vmax.f32 %v3037, 0.0
        %v3072 = vmax.f32 %v2942, 0.0
        %v3073 = vmax.f32 %v3040, 0.0
        %v3074 = vmax.f32 %v2944, 0.0
        %v3075 = vmax.f32 %v3042, 0.0
        %v3076 = vadd.f32 %v1323, %v3044
        %v3077 = vadd.f32 %v1324, %v3045
        %v3078 = vadd.f32 %v1325, %v3046
        %v3079 = vadd.f32 %v1326, %v3047
        %v3080 = vadd.f32 %v1327, %v3048
        %v3081 = vadd.f32 %v1328, %v3049
        %v3082 = vadd.f32 %v1329, %v3050
        %v3083 = vadd.f32 %v1330, %v3051
        %v3084 = vadd.f32 %v1331, %v3052
        %v3085 = vadd.f32 %v1332, %v3053
        %v3086 = vadd.f32 %v1333, %v3054
        %v3087 = vadd.f32 %v1334, %v3055
        %v3088 = vadd.f32 %v1335, %v3056
        %v3089 = vadd.f32 %v1336, %v3057
        %v3090 = vadd.f32 %v1337, %v3058
        %v3091 = vadd.f32 %v1338, %v3059
        %v3092 = vadd.f32 %v1339, %v3060
        %v3093 = vadd.f32 %v1340, %v3061
        %v3094 = vadd.f32 %v1341, %v3062
        %v3095 = vadd.f32 %v1342, %v3063
        %v3096 = vadd.f32 %v1343, %v3064
        %v3097 = vadd.f32 %v1344, %v3065
        %v3098 = vadd.f32 %v1345, %v3066
        %v3099 = vadd.f32 %v1346, %v3067
        %v3100 = vadd.f32 %v1347, %v3068
        %v3101 = vadd.f32 %v1348, %v3069
        %v3102 = vadd.f32 %v1349, %v3070
        %v3103 = vadd.f32 %v1350, %v3071
        %v3104 = vadd.f32 %v1351, %v3072
        %v3105 = vadd.f32 %v1352, %v3073
        %v3106 = vadd.f32 %v1353, %v3074
        %v3107 = vadd.f32 %v1354, %v3075
        %3108 = vst [vmem:[%s438] sm:$0xff] %v3076
        %3109 = vst [vmem:[%s438 + $0x8] sm:$0xff] %v3077
        %3110 = vst [vmem:[%s438 + $0x10] sm:$0xff] %v3078
        %3111 = vst [vmem:[%s438 + $0x18] sm:$0xff] %v3079
        %3112 = vst [vmem:[%s438 + $0x20] sm:$0xff] %v3080
        %3113 = vst [vmem:[%s438 + $0x28] sm:$0xff] %v3081
        %3114 = vst [vmem:[%s438 + $0x30] sm:$0xff] %v3082
        %3115 = vst [vmem:[%s438 + $0x38] sm:$0xff] %v3083
        %3116 = vst [vmem:[%s438 + $0x40] sm:$0xff] %v3084
        %3117 = vst [vmem:[%s438 + $0x48] sm:$0xff] %v3085
        %3118 = vst [vmem:[%s438 + $0x50] sm:$0xff] %v3086
        %3119 = vst [vmem:[%s438 + $0x58] sm:$0xff] %v3087
        %3120 = vst [vmem:[%s438 + $0x60] sm:$0xff] %v3088
        %3121 = vst [vmem:[%s438 + $0x68] sm:$0xff] %v3089
        %3122 = vst [vmem:[%s438 + $0x70] sm:$0xff] %v3090
        %3123 = vst [vmem:[%s438 + $0x78] sm:$0xff] %v3091
        %3124 = vst [vmem:[%s438 + $0x80] sm:$0xff] %v3092
        %3125 = vst [vmem:[%s438 + $0x88] sm:$0xff] %v3093
        %3126 = vst [vmem:[%s438 + $0x90] sm:$0xff] %v3094
        %3127 = vst [vmem:[%s438 + $0x98] sm:$0xff] %v3095
        %3128 = vst [vmem:[%s438 + $0xa0] sm:$0xff] %v3096
        %3129 = vst [vmem:[%s438 + $0xa8] sm:$0xff] %v3097
        %3130 = vst [vmem:[%s438 + $0xb0] sm:$0xff] %v3098
        %3131 = vst [vmem:[%s438 + $0xb8] sm:$0xff] %v3099
        %3132 = vst [vmem:[%s438 + $0xc0] sm:$0xff] %v3100
        %3133 = vst [vmem:[%s438 + $0xc8] sm:$0xff] %v3101
        %3134 = vst [vmem:[%s438 + $0xd0] sm:$0xff] %v3102
        %3135 = vst [vmem:[%s438 + $0xd8] sm:$0xff] %v3103
        %3136 = vst [vmem:[%s438 + $0xe0] sm:$0xff] %v3104
        %3137 = vst [vmem:[%s438 + $0xe8] sm:$0xff] %v3105
        %3138 = vst [vmem:[%s438 + $0xf0] sm:$0xff] %v3106
        %3139 = vst [vmem:[%s438 + $0xf8] sm:$0xff] %v3107
        %v3140 = vpack.c.bf16 %v3078, %v3076
        %v3141 = vpack.c.bf16 %v3079, %v3077
        %v3142 = vpack.c.bf16 %v3082, %v3080
        %v3143 = vpack.c.bf16 %v3083, %v3081
        %v3144 = vpack.c.bf16 %v3086, %v3084
        %v3145 = vpack.c.bf16 %v3087, %v3085
        %v3146 = vpack.c.bf16 %v3090, %v3088
        %v3147 = vpack.c.bf16 %v3091, %v3089
        %v3148 = vpack.c.bf16 %v3094, %v3092
        %v3149 = vpack.c.bf16 %v3095, %v3093
        %v3150 = vpack.c.bf16 %v3098, %v3096
        %v3151 = vpack.c.bf16 %v3099, %v3097
        %v3152 = vpack.c.bf16 %v3102, %v3100
        %v3153 = vpack.c.bf16 %v3103, %v3101
        %v3154 = vpack.c.bf16 %v3106, %v3104
        %v3155 = vpack.c.bf16 %v3107, %v3105
        %s3156 = scalar_lea.vmem %s5, 128
        %v3157 = vld [vmem:[%s3156] sm:$0xf]
        %v3158 = vld [vmem:[%s3156 + $0x4] sm:$0xf]
        %v3159 = vld [vmem:[%s3156 + $0x8] sm:$0xf]
        %v3160 = vld [vmem:[%s3156 + $0xc] sm:$0xf]
        %v3161 = vld [vmem:[%s3156 + $0x10] sm:$0xf]
        %v3162 = vld [vmem:[%s3156 + $0x14] sm:$0xf]
        %v3163 = vld [vmem:[%s3156 + $0x18] sm:$0xf]
        %v3164 = vld [vmem:[%s3156 + $0x1c] sm:$0xf]
        %v3165 = vld [vmem:[%s3156 + $0x20] sm:$0xf]
        %v3166 = vld [vmem:[%s3156 + $0x24] sm:$0xf]
        %v3167 = vld [vmem:[%s3156 + $0x28] sm:$0xf]
        %v3168 = vld [vmem:[%s3156 + $0x2c] sm:$0xf]
        %v3169 = vld [vmem:[%s3156 + $0x30] sm:$0xf]
        %v3170 = vld [vmem:[%s3156 + $0x34] sm:$0xf]
        %v3171 = vld [vmem:[%s3156 + $0x38] sm:$0xf]
        %v3172 = vld [vmem:[%s3156 + $0x3c] sm:$0xf]
        %v3173 = vld [vmem:[%s3156 + $0x40] sm:$0xf]
        %v3174 = vld [vmem:[%s3156 + $0x44] sm:$0xf]
        %v3175 = vld [vmem:[%s3156 + $0x48] sm:$0xf]
        %v3176 = vld [vmem:[%s3156 + $0x4c] sm:$0xf]
        %v3177 = vld [vmem:[%s3156 + $0x50] sm:$0xf]
        %v3178 = vld [vmem:[%s3156 + $0x54] sm:$0xf]
        %v3179 = vld [vmem:[%s3156 + $0x58] sm:$0xf]
        %v3180 = vld [vmem:[%s3156 + $0x5c] sm:$0xf]
        %v3181 = vld [vmem:[%s3156 + $0x60] sm:$0xf]
        %v3182 = vld [vmem:[%s3156 + $0x64] sm:$0xf]
        %v3183 = vld [vmem:[%s3156 + $0x68] sm:$0xf]
        %v3184 = vld [vmem:[%s3156 + $0x6c] sm:$0xf]
        %v3185 = vld [vmem:[%s3156 + $0x70] sm:$0xf]
        %v3186 = vld [vmem:[%s3156 + $0x74] sm:$0xf]
        %v3187 = vld [vmem:[%s3156 + $0x78] sm:$0xf]
        %v3188 = vld [vmem:[%s3156 + $0x7c] sm:$0xf]
        %v3221 = vunpack.c.l.b16 %v3157
        %v3222 = vunpack.c.l.b16 %v3158
        %v3223 = vunpack.c.l.b16 %v3159
        %v3224 = vunpack.c.l.b16 %v3160
        %v3225 = vunpack.c.l.b16 %v3161
        %v3226 = vunpack.c.l.b16 %v3162
        %v3227 = vunpack.c.l.b16 %v3163
        %v3228 = vunpack.c.l.b16 %v3164
        %v3229 = vunpack.c.l.b16 %v3165
        %v3230 = vunpack.c.l.b16 %v3166
        %v3231 = vunpack.c.l.b16 %v3167
        %v3232 = vunpack.c.l.b16 %v3168
        %v3233 = vunpack.c.l.b16 %v3169
        %v3234 = vunpack.c.l.b16 %v3170
        %v3235 = vunpack.c.l.b16 %v3171
        %v3236 = vunpack.c.l.b16 %v3172
        %v3237 = vunpack.c.l.b16 %v3173
        %v3238 = vunpack.c.l.b16 %v3174
        %v3239 = vunpack.c.l.b16 %v3175
        %v3240 = vunpack.c.l.b16 %v3176
        %v3241 = vunpack.c.l.b16 %v3177
        %v3242 = vunpack.c.l.b16 %v3178
        %v3243 = vunpack.c.l.b16 %v3179
        %v3244 = vunpack.c.l.b16 %v3180
        %v3245 = vunpack.c.l.b16 %v3181
        %v3246 = vunpack.c.l.b16 %v3182
        %v3247 = vunpack.c.l.b16 %v3183
        %v3248 = vunpack.c.l.b16 %v3184
        %v3249 = vunpack.c.l.b16 %v3185
        %v3250 = vunpack.c.l.b16 %v3186
        %v3251 = vunpack.c.l.b16 %v3187
        %v3252 = vunpack.c.l.b16 %v3188
        %v3253 = vpack.c.b16 %v3222, %v3221
        %v3254 = vpack.c.b16 %v3224, %v3223
        %v3255 = vpack.c.b16 %v3226, %v3225
        %v3256 = vpack.c.b16 %v3228, %v3227
        %v3257 = vpack.c.b16 %v3230, %v3229
        %v3258 = vpack.c.b16 %v3232, %v3231
        %v3259 = vpack.c.b16 %v3234, %v3233
        %v3260 = vpack.c.b16 %v3236, %v3235
        %v3261 = vpack.c.b16 %v3238, %v3237
        %v3262 = vpack.c.b16 %v3240, %v3239
        %v3263 = vpack.c.b16 %v3242, %v3241
        %v3264 = vpack.c.b16 %v3244, %v3243
        %v3265 = vpack.c.b16 %v3246, %v3245
        %v3266 = vpack.c.b16 %v3248, %v3247
        %v3267 = vpack.c.b16 %v3250, %v3249
        %v3268 = vpack.c.b16 %v3252, %v3251
        %3285 = vmatpush.bf16.msra.mxu0 %v3260
        %3286 = vmatpush.bf16.msra.mxu0 %v3259
        %3287 = vmatpush.bf16.msra.mxu0 %v3258
        %3288 = vmatpush.bf16.msra.mxu0 %v3257
        %3289 = vmatpush.bf16.msra.mxu0 %v3256
        %3290 = vmatpush.bf16.msra.mxu0 %v3255
        %3291 = vmatpush.bf16.msra.mxu0 %v3254
        %3292 = vmatpush.bf16.msra.mxu0 %v3253
        %3293 = vmatmul.bf16.gmra.mxu0 %v3140
        %v3294 = vpop.f32.mrf.mxu0
        %v3295 = vadd.f32 0.0, %v3294
        %v3296 = vpop.f32.mrf.mxu0
        %v3297 = vadd.f32 0.0, %v3296
        %3298 = vmatmul.bf16.gmra.mxu0 %v3142
        %v3299 = vpop.f32.mrf.mxu0
        %v3300 = vadd.f32 0.0, %v3299
        %v3301 = vpop.f32.mrf.mxu0
        %v3302 = vadd.f32 0.0, %v3301
        %3303 = vmatmul.bf16.gmra.mxu0 %v3144
        %v3304 = vpop.f32.mrf.mxu0
        %v3305 = vadd.f32 0.0, %v3304
        %v3306 = vpop.f32.mrf.mxu0
        %v3307 = vadd.f32 0.0, %v3306
        %3308 = vmatmul.bf16.gmra.mxu0 %v3146
        %v3309 = vpop.f32.mrf.mxu0
        %v3310 = vadd.f32 0.0, %v3309
        %v3311 = vpop.f32.mrf.mxu0
        %v3312 = vadd.f32 0.0, %v3311
        %3313 = vmatmul.bf16.gmra.mxu0 %v3148
        %v3314 = vpop.f32.mrf.mxu0
        %v3315 = vadd.f32 0.0, %v3314
        %v3316 = vpop.f32.mrf.mxu0
        %v3317 = vadd.f32 0.0, %v3316
        %3318 = vmatmul.bf16.gmra.mxu0 %v3150
        %v3319 = vpop.f32.mrf.mxu0
        %v3320 = vadd.f32 0.0, %v3319
        %v3321 = vpop.f32.mrf.mxu0
        %v3322 = vadd.f32 0.0, %v3321
        %3323 = vmatmul.bf16.gmra.mxu0 %v3152
        %v3324 = vpop.f32.mrf.mxu0
        %v3325 = vadd.f32 0.0, %v3324
        %v3326 = vpop.f32.mrf.mxu0
        %v3327 = vadd.f32 0.0, %v3326
        %3328 = vmatmul.bf16.gmra.mxu0 %v3154
        %v3329 = vpop.f32.mrf.mxu0
        %v3330 = vadd.f32 0.0, %v3329
        %v3331 = vpop.f32.mrf.mxu0
        %v3332 = vadd.f32 0.0, %v3331
        %3333 = vdwg.mxu0
        %3334 = vmatpush.bf16.msra.mxu0 %v3268
        %3335 = vmatpush.bf16.msra.mxu0 %v3267
        %3336 = vmatpush.bf16.msra.mxu0 %v3266
        %3337 = vmatpush.bf16.msra.mxu0 %v3265
        %3338 = vmatpush.bf16.msra.mxu0 %v3264
        %3339 = vmatpush.bf16.msra.mxu0 %v3263
        %3340 = vmatpush.bf16.msra.mxu0 %v3262
        %3341 = vmatpush.bf16.msra.mxu0 %v3261
        %3342 = vmatmul.bf16.gmra.mxu0 %v3141
        %v3343 = vpop.f32.mrf.mxu0
        %v3344 = vadd.f32 %v3295, %v3343
        %v3345 = vpop.f32.mrf.mxu0
        %v3346 = vadd.f32 %v3297, %v3345
        %3347 = vmatmul.bf16.gmra.mxu0 %v3143
        %v3348 = vpop.f32.mrf.mxu0
        %v3349 = vadd.f32 %v3300, %v3348
        %v3350 = vpop.f32.mrf.mxu0
        %v3351 = vadd.f32 %v3302, %v3350
        %3352 = vmatmul.bf16.gmra.mxu0 %v3145
        %v3353 = vpop.f32.mrf.mxu0
        %v3354 = vadd.f32 %v3305, %v3353
        %v3355 = vpop.f32.mrf.mxu0
        %v3356 = vadd.f32 %v3307, %v3355
        %3357 = vmatmul.bf16.gmra.mxu0 %v3147
        %v3358 = vpop.f32.mrf.mxu0
        %v3359 = vadd.f32 %v3310, %v3358
        %v3360 = vpop.f32.mrf.mxu0
        %v3361 = vadd.f32 %v3312, %v3360
        %3362 = vmatmul.bf16.gmra.mxu0 %v3149
        %v3363 = vpop.f32.mrf.mxu0
        %v3364 = vadd.f32 %v3315, %v3363
        %v3365 = vpop.f32.mrf.mxu0
        %v3366 = vadd.f32 %v3317, %v3365
        %3367 = vmatmul.bf16.gmra.mxu0 %v3151
        %v3368 = vpop.f32.mrf.mxu0
        %v3369 = vadd.f32 %v3320, %v3368
        %v3370 = vpop.f32.mrf.mxu0
        %v3371 = vadd.f32 %v3322, %v3370
        %3372 = vmatmul.bf16.gmra.mxu0 %v3153
        %v3373 = vpop.f32.mrf.mxu0
        %v3374 = vadd.f32 %v3325, %v3373
        %v3375 = vpop.f32.mrf.mxu0
        %v3376 = vadd.f32 %v3327, %v3375
        %3377 = vmatmul.bf16.gmra.mxu0 %v3155
        %v3378 = vpop.f32.mrf.mxu0
        %v3379 = vadd.f32 %v3330, %v3378
        %v3380 = vpop.f32.mrf.mxu0
        %v3381 = vadd.f32 %v3332, %v3380
        %3382 = vdwg.mxu0
        %v3383 = vpack.c.bf16 %v3346, %v3344
        %v3384 = vpack.c.bf16 %v3351, %v3349
        %v3385 = vpack.c.bf16 %v3356, %v3354
        %v3386 = vpack.c.bf16 %v3361, %v3359
        %v3387 = vpack.c.bf16 %v3366, %v3364
        %v3388 = vpack.c.bf16 %v3371, %v3369
        %v3389 = vpack.c.bf16 %v3376, %v3374
        %v3390 = vpack.c.bf16 %v3381, %v3379
        %v3392 = vsel %vm1605, %v3383, 0
        %v3395 = vsel %vm1605, %v3384, 0
        %v3398 = vsel %vm1605, %v3385, 0
        %v3401 = vsel %vm1605, %v3386, 0
        %v3404 = vsel %vm1605, %v3387, 0
        %v3407 = vsel %vm1605, %v3388, 0
        %v3410 = vsel %vm1605, %v3389, 0
        %v3413 = vsel %vm1605, %v3390, 0
        %3415 = vmatpush.bf16.xpose.msra.mxu0 %v3413
        %3416 = vmatpush.bf16.xpose.msra.mxu0 %v3410
        %3417 = vmatpush.bf16.xpose.msra.mxu0 %v3407
        %3418 = vmatpush.bf16.xpose.msra.mxu0 %v3404
        %3419 = vmatpush.bf16.xpose.msra.mxu0 %v3401
        %3420 = vmatpush.bf16.xpose.msra.mxu0 %v3398
        %3421 = vmatpush.bf16.xpose.msra.mxu0 %v3395
        %3422 = vmatpush.bf16.xpose.msra.mxu0 %v3392
        %3423 = vmatmul.bf16.gmra.mxu0 %v3392
        %v3424 = vpop.f32.mrf.mxu0
        %v3425 = vadd.f32 0.0, %v3424
        %v3426 = vpop.f32.mrf.mxu0
        %v3427 = vadd.f32 0.0, %v3426
        %3428 = vmatmul.bf16.gmra.mxu0 %v3395
        %v3429 = vpop.f32.mrf.mxu0
        %v3430 = vadd.f32 0.0, %v3429
        %v3431 = vpop.f32.mrf.mxu0
        %v3432 = vadd.f32 0.0, %v3431
        %3433 = vmatmul.bf16.gmra.mxu0 %v3398
        %v3434 = vpop.f32.mrf.mxu0
        %v3435 = vadd.f32 0.0, %v3434
        %v3436 = vpop.f32.mrf.mxu0
        %v3437 = vadd.f32 0.0, %v3436
        %3438 = vmatmul.bf16.gmra.mxu0 %v3401
        %v3439 = vpop.f32.mrf.mxu0
        %v3440 = vadd.f32 0.0, %v3439
        %v3441 = vpop.f32.mrf.mxu0
        %v3442 = vadd.f32 0.0, %v3441
        %3443 = vmatmul.bf16.gmra.mxu0 %v3404
        %v3444 = vpop.f32.mrf.mxu0
        %v3445 = vadd.f32 0.0, %v3444
        %v3446 = vpop.f32.mrf.mxu0
        %v3447 = vadd.f32 0.0, %v3446
        %3448 = vmatmul.bf16.gmra.mxu0 %v3407
        %v3449 = vpop.f32.mrf.mxu0
        %v3450 = vadd.f32 0.0, %v3449
        %v3451 = vpop.f32.mrf.mxu0
        %v3452 = vadd.f32 0.0, %v3451
        %3453 = vmatmul.bf16.gmra.mxu0 %v3410
        %v3454 = vpop.f32.mrf.mxu0
        %v3455 = vadd.f32 0.0, %v3454
        %v3456 = vpop.f32.mrf.mxu0
        %v3457 = vadd.f32 0.0, %v3456
        %3458 = vmatmul.bf16.gmra.mxu0 %v3413
        %v3459 = vpop.f32.mrf.mxu0
        %v3460 = vadd.f32 0.0, %v3459
        %v3461 = vpop.f32.mrf.mxu0
        %v3462 = vadd.f32 0.0, %v3461
        %3463 = vdwg.mxu0
        %3464 = vmax.xlane.f32.xlu0 %v3425
        %v3465 = vpop.xlane.xlu0 %3464
        %3466 = vmax.xlane.f32.xlu0 %v3427
        %v3467 = vpop.xlane.xlu0 %3466
        %3468 = vmax.xlane.f32.xlu0 %v3430
        %v3469 = vpop.xlane.xlu0 %3468
        %3470 = vmax.xlane.f32.xlu0 %v3432
        %v3471 = vpop.xlane.xlu0 %3470
        %3472 = vmax.xlane.f32.xlu0 %v3435
        %v3473 = vpop.xlane.xlu0 %3472
        %3474 = vmax.xlane.f32.xlu0 %v3437
        %v3475 = vpop.xlane.xlu0 %3474
        %3476 = vmax.xlane.f32.xlu0 %v3440
        %v3477 = vpop.xlane.xlu0 %3476
        %3478 = vmax.xlane.f32.xlu0 %v3442
        %v3479 = vpop.xlane.xlu0 %3478
        %3480 = vmax.xlane.f32.xlu0 %v3445
        %v3481 = vpop.xlane.xlu0 %3480
        %3482 = vmax.xlane.f32.xlu0 %v3447
        %v3483 = vpop.xlane.xlu0 %3482
        %3484 = vmax.xlane.f32.xlu0 %v3450
        %v3485 = vpop.xlane.xlu0 %3484
        %3486 = vmax.xlane.f32.xlu0 %v3452
        %v3487 = vpop.xlane.xlu0 %3486
        %3488 = vmax.xlane.f32.xlu0 %v3455
        %v3489 = vpop.xlane.xlu0 %3488
        %3490 = vmax.xlane.f32.xlu0 %v3457
        %v3491 = vpop.xlane.xlu0 %3490
        %3492 = vmax.xlane.f32.xlu0 %v3460
        %v3493 = vpop.xlane.xlu0 %3492
        %3494 = vmax.xlane.f32.xlu0 %v3462
        %v3495 = vpop.xlane.xlu0 %3494
        %v3496 = vsub.f32 %v3425, %v3465
        %v3497 = vsub.f32 %v3427, %v3467
        %v3498 = vsub.f32 %v3430, %v3469
        %v3499 = vsub.f32 %v3432, %v3471
        %v3500 = vsub.f32 %v3435, %v3473
        %v3501 = vsub.f32 %v3437, %v3475
        %v3502 = vsub.f32 %v3440, %v3477
        %v3503 = vsub.f32 %v3442, %v3479
        %v3504 = vsub.f32 %v3445, %v3481
        %v3505 = vsub.f32 %v3447, %v3483
        %v3506 = vsub.f32 %v3450, %v3485
        %v3507 = vsub.f32 %v3452, %v3487
        %v3508 = vsub.f32 %v3455, %v3489
        %v3509 = vsub.f32 %v3457, %v3491
        %v3510 = vsub.f32 %v3460, %v3493
        %v3511 = vsub.f32 %v3462, %v3495
        %v3512 = vmul.f32 %v3496, 1.442695
        %v3513 = vpow.pop %v3512
        %v3514 = vmul.f32 %v3497, 1.442695
        %v3515 = vpow.pop %v3514
        %v3516 = vmul.f32 %v3498, 1.442695
        %v3517 = vpow.pop %v3516
        %v3518 = vmul.f32 %v3499, 1.442695
        %v3519 = vpow.pop %v3518
        %v3520 = vmul.f32 %v3500, 1.442695
        %v3521 = vpow.pop %v3520
        %v3522 = vmul.f32 %v3501, 1.442695
        %v3523 = vpow.pop %v3522
        %v3524 = vmul.f32 %v3502, 1.442695
        %v3525 = vpow.pop %v3524
        %v3526 = vmul.f32 %v3503, 1.442695
        %v3527 = vpow.pop %v3526
        %v3528 = vmul.f32 %v3504, 1.442695
        %v3529 = vpow.pop %v3528
        %v3530 = vmul.f32 %v3505, 1.442695
        %v3531 = vpow.pop %v3530
        %v3532 = vmul.f32 %v3506, 1.442695
        %v3533 = vpow.pop %v3532
        %v3534 = vmul.f32 %v3507, 1.442695
        %v3535 = vpow.pop %v3534
        %v3536 = vmul.f32 %v3508, 1.442695
        %v3537 = vpow.pop %v3536
        %v3538 = vmul.f32 %v3509, 1.442695
        %v3539 = vpow.pop %v3538
        %v3540 = vmul.f32 %v3510, 1.442695
        %v3541 = vpow.pop %v3540
        %v3542 = vmul.f32 %v3511, 1.442695
        %v3543 = vpow.pop %v3542
        %3544 = vadd.xlane.f32.xlu0 %v3513
        %v3545 = vpop.xlane.xlu0 %3544
        %3546 = vadd.xlane.f32.xlu0 %v3515
        %v3547 = vpop.xlane.xlu0 %3546
        %3548 = vadd.xlane.f32.xlu0 %v3517
        %v3549 = vpop.xlane.xlu0 %3548
        %3550 = vadd.xlane.f32.xlu0 %v3519
        %v3551 = vpop.xlane.xlu0 %3550
        %3552 = vadd.xlane.f32.xlu0 %v3521
        %v3553 = vpop.xlane.xlu0 %3552
        %3554 = vadd.xlane.f32.xlu0 %v3523
        %v3555 = vpop.xlane.xlu0 %3554
        %3556 = vadd.xlane.f32.xlu0 %v3525
        %v3557 = vpop.xlane.xlu0 %3556
        %3558 = vadd.xlane.f32.xlu0 %v3527
        %v3559 = vpop.xlane.xlu0 %3558
        %3560 = vadd.xlane.f32.xlu0 %v3529
        %v3561 = vpop.xlane.xlu0 %3560
        %3562 = vadd.xlane.f32.xlu0 %v3531
        %v3563 = vpop.xlane.xlu0 %3562
        %3564 = vadd.xlane.f32.xlu0 %v3533
        %v3565 = vpop.xlane.xlu0 %3564
        %3566 = vadd.xlane.f32.xlu0 %v3535
        %v3567 = vpop.xlane.xlu0 %3566
        %3568 = vadd.xlane.f32.xlu0 %v3537
        %v3569 = vpop.xlane.xlu0 %3568
        %3570 = vadd.xlane.f32.xlu0 %v3539
        %v3571 = vpop.xlane.xlu0 %3570
        %3572 = vadd.xlane.f32.xlu0 %v3541
        %v3573 = vpop.xlane.xlu0 %3572
        %3574 = vadd.xlane.f32.xlu0 %v3543
        %v3575 = vpop.xlane.xlu0 %3574
        %v3576 = vrcp.pop %v3545
        %v3577 = vmul.f32 %v3545, %v3576
        %v3578 = vsub.f32 1.0, %v3577
        %v3579 = vmul.f32 %v3576, %v3578
        %v3580 = vadd.f32 %v3576, %v3579
        %vm3581 = vweird.f32 %v3545
        %vm3582 = vweird.f32 %v3576
        %vm3583 = vmor %vm3581, %vm3582
        %v3584 = vsel %vm3583, %v3576, %v3580
        %v3585 = vand.u32 2147483647, %v3545
        %vm3586 = vcmp.eq.f32.partialorder %v3585, 8.507059e+37
        %v3587 = vand.u32 %v3545, 2147483648
        %v3588 = vor.u32 1.1754944e-38, %v3587
        %v3589 = vsel %vm3586, %v3588, %v3584
        %v3590 = vmul.f32 %v3513, %v3589
        %v3591 = vrcp.pop %v3547
        %v3592 = vmul.f32 %v3547, %v3591
        %v3593 = vsub.f32 1.0, %v3592
        %v3594 = vmul.f32 %v3591, %v3593
        %v3595 = vadd.f32 %v3591, %v3594
        %vm3596 = vweird.f32 %v3547
        %vm3597 = vweird.f32 %v3591
        %vm3598 = vmor %vm3596, %vm3597
        %v3599 = vsel %vm3598, %v3591, %v3595
        %v3600 = vand.u32 2147483647, %v3547
        %vm3601 = vcmp.eq.f32.partialorder %v3600, 8.507059e+37
        %v3602 = vand.u32 %v3547, 2147483648
        %v3603 = vor.u32 1.1754944e-38, %v3602
        %v3604 = vsel %vm3601, %v3603, %v3599
        %v3605 = vmul.f32 %v3515, %v3604
        %v3606 = vrcp.pop %v3549
        %v3607 = vmul.f32 %v3549, %v3606
        %v3608 = vsub.f32 1.0, %v3607
        %v3609 = vmul.f32 %v3606, %v3608
        %v3610 = vadd.f32 %v3606, %v3609
        %vm3611 = vweird.f32 %v3549
        %vm3612 = vweird.f32 %v3606
        %vm3613 = vmor %vm3611, %vm3612
        %v3614 = vsel %vm3613, %v3606, %v3610
        %v3615 = vand.u32 2147483647, %v3549
        %vm3616 = vcmp.eq.f32.partialorder %v3615, 8.507059e+37
        %v3617 = vand.u32 %v3549, 2147483648
        %v3618 = vor.u32 1.1754944e-38, %v3617
        %v3619 = vsel %vm3616, %v3618, %v3614
        %v3620 = vmul.f32 %v3517, %v3619
        %v3621 = vrcp.pop %v3551
        %v3622 = vmul.f32 %v3551, %v3621
        %v3623 = vsub.f32 1.0, %v3622
        %v3624 = vmul.f32 %v3621, %v3623
        %v3625 = vadd.f32 %v3621, %v3624
        %vm3626 = vweird.f32 %v3551
        %vm3627 = vweird.f32 %v3621
        %vm3628 = vmor %vm3626, %vm3627
        %v3629 = vsel %vm3628, %v3621, %v3625
        %v3630 = vand.u32 2147483647, %v3551
        %vm3631 = vcmp.eq.f32.partialorder %v3630, 8.507059e+37
        %v3632 = vand.u32 %v3551, 2147483648
        %v3633 = vor.u32 1.1754944e-38, %v3632
        %v3634 = vsel %vm3631, %v3633, %v3629
        %v3635 = vmul.f32 %v3519, %v3634
        %v3636 = vrcp.pop %v3553
        %v3637 = vmul.f32 %v3553, %v3636
        %v3638 = vsub.f32 1.0, %v3637
        %v3639 = vmul.f32 %v3636, %v3638
        %v3640 = vadd.f32 %v3636, %v3639
        %vm3641 = vweird.f32 %v3553
        %vm3642 = vweird.f32 %v3636
        %vm3643 = vmor %vm3641, %vm3642
        %v3644 = vsel %vm3643, %v3636, %v3640
        %v3645 = vand.u32 2147483647, %v3553
        %vm3646 = vcmp.eq.f32.partialorder %v3645, 8.507059e+37
        %v3647 = vand.u32 %v3553, 2147483648
        %v3648 = vor.u32 1.1754944e-38, %v3647
        %v3649 = vsel %vm3646, %v3648, %v3644
        %v3650 = vmul.f32 %v3521, %v3649
        %v3651 = vrcp.pop %v3555
        %v3652 = vmul.f32 %v3555, %v3651
        %v3653 = vsub.f32 1.0, %v3652
        %v3654 = vmul.f32 %v3651, %v3653
        %v3655 = vadd.f32 %v3651, %v3654
        %vm3656 = vweird.f32 %v3555
        %vm3657 = vweird.f32 %v3651
        %vm3658 = vmor %vm3656, %vm3657
        %v3659 = vsel %vm3658, %v3651, %v3655
        %v3660 = vand.u32 2147483647, %v3555
        %vm3661 = vcmp.eq.f32.partialorder %v3660, 8.507059e+37
        %v3662 = vand.u32 %v3555, 2147483648
        %v3663 = vor.u32 1.1754944e-38, %v3662
        %v3664 = vsel %vm3661, %v3663, %v3659
        %v3665 = vmul.f32 %v3523, %v3664
        %v3666 = vrcp.pop %v3557
        %v3667 = vmul.f32 %v3557, %v3666
        %v3668 = vsub.f32 1.0, %v3667
        %v3669 = vmul.f32 %v3666, %v3668
        %v3670 = vadd.f32 %v3666, %v3669
        %vm3671 = vweird.f32 %v3557
        %vm3672 = vweird.f32 %v3666
        %vm3673 = vmor %vm3671, %vm3672
        %v3674 = vsel %vm3673, %v3666, %v3670
        %v3675 = vand.u32 2147483647, %v3557
        %vm3676 = vcmp.eq.f32.partialorder %v3675, 8.507059e+37
        %v3677 = vand.u32 %v3557, 2147483648
        %v3678 = vor.u32 1.1754944e-38, %v3677
        %v3679 = vsel %vm3676, %v3678, %v3674
        %v3680 = vmul.f32 %v3525, %v3679
        %v3681 = vrcp.pop %v3559
        %v3682 = vmul.f32 %v3559, %v3681
        %v3683 = vsub.f32 1.0, %v3682
        %v3684 = vmul.f32 %v3681, %v3683
        %v3685 = vadd.f32 %v3681, %v3684
        %vm3686 = vweird.f32 %v3559
        %vm3687 = vweird.f32 %v3681
        %vm3688 = vmor %vm3686, %vm3687
        %v3689 = vsel %vm3688, %v3681, %v3685
        %v3690 = vand.u32 2147483647, %v3559
        %vm3691 = vcmp.eq.f32.partialorder %v3690, 8.507059e+37
        %v3692 = vand.u32 %v3559, 2147483648
        %v3693 = vor.u32 1.1754944e-38, %v3692
        %v3694 = vsel %vm3691, %v3693, %v3689
        %v3695 = vmul.f32 %v3527, %v3694
        %v3696 = vrcp.pop %v3561
        %v3697 = vmul.f32 %v3561, %v3696
        %v3698 = vsub.f32 1.0, %v3697
        %v3699 = vmul.f32 %v3696, %v3698
        %v3700 = vadd.f32 %v3696, %v3699
        %vm3701 = vweird.f32 %v3561
        %vm3702 = vweird.f32 %v3696
        %vm3703 = vmor %vm3701, %vm3702
        %v3704 = vsel %vm3703, %v3696, %v3700
        %v3705 = vand.u32 2147483647, %v3561
        %vm3706 = vcmp.eq.f32.partialorder %v3705, 8.507059e+37
        %v3707 = vand.u32 %v3561, 2147483648
        %v3708 = vor.u32 1.1754944e-38, %v3707
        %v3709 = vsel %vm3706, %v3708, %v3704
        %v3710 = vmul.f32 %v3529, %v3709
        %v3711 = vrcp.pop %v3563
        %v3712 = vmul.f32 %v3563, %v3711
        %v3713 = vsub.f32 1.0, %v3712
        %v3714 = vmul.f32 %v3711, %v3713
        %v3715 = vadd.f32 %v3711, %v3714
        %vm3716 = vweird.f32 %v3563
        %vm3717 = vweird.f32 %v3711
        %vm3718 = vmor %vm3716, %vm3717
        %v3719 = vsel %vm3718, %v3711, %v3715
        %v3720 = vand.u32 2147483647, %v3563
        %vm3721 = vcmp.eq.f32.partialorder %v3720, 8.507059e+37
        %v3722 = vand.u32 %v3563, 2147483648
        %v3723 = vor.u32 1.1754944e-38, %v3722
        %v3724 = vsel %vm3721, %v3723, %v3719
        %v3725 = vmul.f32 %v3531, %v3724
        %v3726 = vrcp.pop %v3565
        %v3727 = vmul.f32 %v3565, %v3726
        %v3728 = vsub.f32 1.0, %v3727
        %v3729 = vmul.f32 %v3726, %v3728
        %v3730 = vadd.f32 %v3726, %v3729
        %vm3731 = vweird.f32 %v3565
        %vm3732 = vweird.f32 %v3726
        %vm3733 = vmor %vm3731, %vm3732
        %v3734 = vsel %vm3733, %v3726, %v3730
        %v3735 = vand.u32 2147483647, %v3565
        %vm3736 = vcmp.eq.f32.partialorder %v3735, 8.507059e+37
        %v3737 = vand.u32 %v3565, 2147483648
        %v3738 = vor.u32 1.1754944e-38, %v3737
        %v3739 = vsel %vm3736, %v3738, %v3734
        %v3740 = vmul.f32 %v3533, %v3739
        %v3741 = vrcp.pop %v3567
        %v3742 = vmul.f32 %v3567, %v3741
        %v3743 = vsub.f32 1.0, %v3742
        %v3744 = vmul.f32 %v3741, %v3743
        %v3745 = vadd.f32 %v3741, %v3744
        %vm3746 = vweird.f32 %v3567
        %vm3747 = vweird.f32 %v3741
        %vm3748 = vmor %vm3746, %vm3747
        %v3749 = vsel %vm3748, %v3741, %v3745
        %v3750 = vand.u32 2147483647, %v3567
        %vm3751 = vcmp.eq.f32.partialorder %v3750, 8.507059e+37
        %v3752 = vand.u32 %v3567, 2147483648
        %v3753 = vor.u32 1.1754944e-38, %v3752
        %v3754 = vsel %vm3751, %v3753, %v3749
        %v3755 = vmul.f32 %v3535, %v3754
        %v3756 = vrcp.pop %v3569
        %v3757 = vmul.f32 %v3569, %v3756
        %v3758 = vsub.f32 1.0, %v3757
        %v3759 = vmul.f32 %v3756, %v3758
        %v3760 = vadd.f32 %v3756, %v3759
        %vm3761 = vweird.f32 %v3569
        %vm3762 = vweird.f32 %v3756
        %vm3763 = vmor %vm3761, %vm3762
        %v3764 = vsel %vm3763, %v3756, %v3760
        %v3765 = vand.u32 2147483647, %v3569
        %vm3766 = vcmp.eq.f32.partialorder %v3765, 8.507059e+37
        %v3767 = vand.u32 %v3569, 2147483648
        %v3768 = vor.u32 1.1754944e-38, %v3767
        %v3769 = vsel %vm3766, %v3768, %v3764
        %v3770 = vmul.f32 %v3537, %v3769
        %v3771 = vrcp.pop %v3571
        %v3772 = vmul.f32 %v3571, %v3771
        %v3773 = vsub.f32 1.0, %v3772
        %v3774 = vmul.f32 %v3771, %v3773
        %v3775 = vadd.f32 %v3771, %v3774
        %vm3776 = vweird.f32 %v3571
        %vm3777 = vweird.f32 %v3771
        %vm3778 = vmor %vm3776, %vm3777
        %v3779 = vsel %vm3778, %v3771, %v3775
        %v3780 = vand.u32 2147483647, %v3571
        %vm3781 = vcmp.eq.f32.partialorder %v3780, 8.507059e+37
        %v3782 = vand.u32 %v3571, 2147483648
        %v3783 = vor.u32 1.1754944e-38, %v3782
        %v3784 = vsel %vm3781, %v3783, %v3779
        %v3785 = vmul.f32 %v3539, %v3784
        %v3786 = vrcp.pop %v3573
        %v3787 = vmul.f32 %v3573, %v3786
        %v3788 = vsub.f32 1.0, %v3787
        %v3789 = vmul.f32 %v3786, %v3788
        %v3790 = vadd.f32 %v3786, %v3789
        %vm3791 = vweird.f32 %v3573
        %vm3792 = vweird.f32 %v3786
        %vm3793 = vmor %vm3791, %vm3792
        %v3794 = vsel %vm3793, %v3786, %v3790
        %v3795 = vand.u32 2147483647, %v3573
        %vm3796 = vcmp.eq.f32.partialorder %v3795, 8.507059e+37
        %v3797 = vand.u32 %v3573, 2147483648
        %v3798 = vor.u32 1.1754944e-38, %v3797
        %v3799 = vsel %vm3796, %v3798, %v3794
        %v3800 = vmul.f32 %v3541, %v3799
        %v3801 = vrcp.pop %v3575
        %v3802 = vmul.f32 %v3575, %v3801
        %v3803 = vsub.f32 1.0, %v3802
        %v3804 = vmul.f32 %v3801, %v3803
        %v3805 = vadd.f32 %v3801, %v3804
        %vm3806 = vweird.f32 %v3575
        %vm3807 = vweird.f32 %v3801
        %vm3808 = vmor %vm3806, %vm3807
        %v3809 = vsel %vm3808, %v3801, %v3805
        %v3810 = vand.u32 2147483647, %v3575
        %vm3811 = vcmp.eq.f32.partialorder %v3810, 8.507059e+37
        %v3812 = vand.u32 %v3575, 2147483648
        %v3813 = vor.u32 1.1754944e-38, %v3812
        %v3814 = vsel %vm3811, %v3813, %v3809
        %v3815 = vmul.f32 %v3543, %v3814
        %v3816 = vadd.f32 %v3590, %v3605
        %v3817 = vadd.f32 %v3816, %v3620
        %v3818 = vadd.f32 %v3817, %v3635
        %v3819 = vadd.f32 %v3818, %v3650
        %v3820 = vadd.f32 %v3819, %v3665
        %v3821 = vadd.f32 %v3820, %v3680
        %v3822 = vadd.f32 %v3821, %v3695
        %v3823 = vadd.f32 %v3822, %v3710
        %v3824 = vadd.f32 %v3823, %v3725
        %v3825 = vadd.f32 %v3824, %v3740
        %v3826 = vadd.f32 %v3825, %v3755
        %v3827 = vadd.f32 %v3826, %v3770
        %v3828 = vadd.f32 %v3827, %v3785
        %v3829 = vadd.f32 %v3828, %v3800
        %v3830 = vadd.f32 %v3829, %v3815
        %v3831 = vrot.slane %v3830, 4
        %v3832 = vadd.f32 %v3830, %v3831
        %v3833 = vrot.slane %v3832, 2
        %v3834 = vadd.f32 %v3832, %v3833
        %v3835 = vrot.slane %v3834, 1
        %v3836 = vadd.f32 %v3834, %v3835
        %v3837 = vadd.f32 %v3836, 1e-09
        %v3838 = vrcp.pop %v3837
        %v3839 = vmul.f32 %v3590, %v3838
        %v3840 = vmul.f32 %v3605, %v3838
        %v3841 = vmul.f32 %v3620, %v3838
        %v3842 = vmul.f32 %v3635, %v3838
        %v3843 = vmul.f32 %v3650, %v3838
        %v3844 = vmul.f32 %v3665, %v3838
        %v3845 = vmul.f32 %v3680, %v3838
        %v3846 = vmul.f32 %v3695, %v3838
        %v3847 = vmul.f32 %v3710, %v3838
        %v3848 = vmul.f32 %v3725, %v3838
        %v3849 = vmul.f32 %v3740, %v3838
        %v3850 = vmul.f32 %v3755, %v3838
        %v3851 = vmul.f32 %v3770, %v3838
        %v3852 = vmul.f32 %v3785, %v3838
        %v3853 = vmul.f32 %v3800, %v3838
        %v3854 = vmul.f32 %v3815, %v3838
        %s3855 = scalar_lea.vmem %s6, 256
        %v3856 = vld [vmem:[%s3855] sm:$0xff]
        %v3857 = vld [vmem:[%s3855 + $0x8] sm:$0xff]
        %v3858 = vld [vmem:[%s3855 + $0x10] sm:$0xff]
        %v3859 = vld [vmem:[%s3855 + $0x18] sm:$0xff]
        %v3860 = vld [vmem:[%s3855 + $0x20] sm:$0xff]
        %v3861 = vld [vmem:[%s3855 + $0x28] sm:$0xff]
        %v3862 = vld [vmem:[%s3855 + $0x30] sm:$0xff]
        %v3863 = vld [vmem:[%s3855 + $0x38] sm:$0xff]
        %v3864 = vld [vmem:[%s3855 + $0x40] sm:$0xff]
        %v3865 = vld [vmem:[%s3855 + $0x48] sm:$0xff]
        %v3866 = vld [vmem:[%s3855 + $0x50] sm:$0xff]
        %v3867 = vld [vmem:[%s3855 + $0x58] sm:$0xff]
        %v3868 = vld [vmem:[%s3855 + $0x60] sm:$0xff]
        %v3869 = vld [vmem:[%s3855 + $0x68] sm:$0xff]
        %v3870 = vld [vmem:[%s3855 + $0x70] sm:$0xff]
        %v3871 = vld [vmem:[%s3855 + $0x78] sm:$0xff]
        %v3872 = vld [vmem:[%s3855 + $0x80] sm:$0xff]
        %v3873 = vld [vmem:[%s3855 + $0x88] sm:$0xff]
        %v3874 = vld [vmem:[%s3855 + $0x90] sm:$0xff]
        %v3875 = vld [vmem:[%s3855 + $0x98] sm:$0xff]
        %v3876 = vld [vmem:[%s3855 + $0xa0] sm:$0xff]
        %v3877 = vld [vmem:[%s3855 + $0xa8] sm:$0xff]
        %v3878 = vld [vmem:[%s3855 + $0xb0] sm:$0xff]
        %v3879 = vld [vmem:[%s3855 + $0xb8] sm:$0xff]
        %v3880 = vld [vmem:[%s3855 + $0xc0] sm:$0xff]
        %v3881 = vld [vmem:[%s3855 + $0xc8] sm:$0xff]
        %v3882 = vld [vmem:[%s3855 + $0xd0] sm:$0xff]
        %v3883 = vld [vmem:[%s3855 + $0xd8] sm:$0xff]
        %v3884 = vld [vmem:[%s3855 + $0xe0] sm:$0xff]
        %v3885 = vld [vmem:[%s3855 + $0xe8] sm:$0xff]
        %v3886 = vld [vmem:[%s3855 + $0xf0] sm:$0xff]
        %v3887 = vld [vmem:[%s3855 + $0xf8] sm:$0xff]
        %s3888 = scalar_lea.vmem %s7, 2
        %v3889 = vld [vmem:[%s3888] sm:$0x3]
        %v3891 = vperm.slane %v3889, 0
        %v3892 = vperm.slane %v3889, 1
        %v3927 = vunpack.c.l.b16 %v3856
        %v3928 = vunpack.c.h.b16 %v3856
        %v3929 = vunpack.c.l.b16 %v3857
        %v3930 = vunpack.c.h.b16 %v3857
        %v3931 = vunpack.c.l.b16 %v3858
        %v3932 = vunpack.c.h.b16 %v3858
        %v3933 = vunpack.c.l.b16 %v3859
        %v3934 = vunpack.c.h.b16 %v3859
        %v3935 = vunpack.c.l.b16 %v3860
        %v3936 = vunpack.c.h.b16 %v3860
        %v3937 = vunpack.c.l.b16 %v3861
        %v3938 = vunpack.c.h.b16 %v3861
        %v3939 = vunpack.c.l.b16 %v3862
        %v3940 = vunpack.c.h.b16 %v3862
        %v3941 = vunpack.c.l.b16 %v3863
        %v3942 = vunpack.c.h.b16 %v3863
        %v3943 = vunpack.c.l.b16 %v3864
        %v3944 = vunpack.c.h.b16 %v3864
        %v3945 = vunpack.c.l.b16 %v3865
        %v3946 = vunpack.c.h.b16 %v3865
        %v3947 = vunpack.c.l.b16 %v3866
        %v3948 = vunpack.c.h.b16 %v3866
        %v3949 = vunpack.c.l.b16 %v3867
        %v3950 = vunpack.c.h.b16 %v3867
        %v3951 = vunpack.c.l.b16 %v3868
        %v3952 = vunpack.c.h.b16 %v3868
        %v3953 = vunpack.c.l.b16 %v3869
        %v3954 = vunpack.c.h.b16 %v3869
        %v3955 = vunpack.c.l.b16 %v3870
        %v3956 = vunpack.c.h.b16 %v3870
        %v3957 = vunpack.c.l.b16 %v3871
        %v3958 = vunpack.c.h.b16 %v3871
        %v3959 = vunpack.c.l.b16 %v3872
        %v3960 = vunpack.c.h.b16 %v3872
        %v3961 = vunpack.c.l.b16 %v3873
        %v3962 = vunpack.c.h.b16 %v3873
        %v3963 = vunpack.c.l.b16 %v3874
        %v3964 = vunpack.c.h.b16 %v3874
        %v3965 = vunpack.c.l.b16 %v3875
        %v3966 = vunpack.c.h.b16 %v3875
        %v3967 = vunpack.c.l.b16 %v3876
        %v3968 = vunpack.c.h.b16 %v3876
        %v3969 = vunpack.c.l.b16 %v3877
        %v3970 = vunpack.c.h.b16 %v3877
        %v3971 = vunpack.c.l.b16 %v3878
        %v3972 = vunpack.c.h.b16 %v3878
        %v3973 = vunpack.c.l.b16 %v3879
        %v3974 = vunpack.c.h.b16 %v3879
        %v3975 = vunpack.c.l.b16 %v3880
        %v3976 = vunpack.c.h.b16 %v3880
        %v3977 = vunpack.c.l.b16 %v3881
        %v3978 = vunpack.c.h.b16 %v3881
        %v3979 = vunpack.c.l.b16 %v3882
        %v3980 = vunpack.c.h.b16 %v3882
        %v3981 = vunpack.c.l.b16 %v3883
        %v3982 = vunpack.c.h.b16 %v3883
        %v3983 = vunpack.c.l.b16 %v3884
        %v3984 = vunpack.c.h.b16 %v3884
        %v3985 = vunpack.c.l.b16 %v3885
        %v3986 = vunpack.c.h.b16 %v3885
        %v3987 = vunpack.c.l.b16 %v3886
        %v3988 = vunpack.c.h.b16 %v3886
        %v3989 = vunpack.c.l.b16 %v3887
        %v3990 = vunpack.c.h.b16 %v3887
        %v3991 = vpack.c.b16 %v3929, %v3927
        %v3992 = vpack.c.b16 %v3930, %v3928
        %v3993 = vpack.c.b16 %v3933, %v3931
        %v3994 = vpack.c.b16 %v3934, %v3932
        %v3995 = vpack.c.b16 %v3937, %v3935
        %v3996 = vpack.c.b16 %v3938, %v3936
        %v3997 = vpack.c.b16 %v3941, %v3939
        %v3998 = vpack.c.b16 %v3942, %v3940
        %v3999 = vpack.c.b16 %v3945, %v3943
        %v4000 = vpack.c.b16 %v3946, %v3944
        %v4001 = vpack.c.b16 %v3949, %v3947
        %v4002 = vpack.c.b16 %v3950, %v3948
        %v4003 = vpack.c.b16 %v3953, %v3951
        %v4004 = vpack.c.b16 %v3954, %v3952
        %v4005 = vpack.c.b16 %v3957, %v3955
        %v4006 = vpack.c.b16 %v3958, %v3956
        %v4007 = vpack.c.b16 %v3961, %v3959
        %v4008 = vpack.c.b16 %v3962, %v3960
        %v4009 = vpack.c.b16 %v3965, %v3963
        %v4010 = vpack.c.b16 %v3966, %v3964
        %v4011 = vpack.c.b16 %v3969, %v3967
        %v4012 = vpack.c.b16 %v3970, %v3968
        %v4013 = vpack.c.b16 %v3973, %v3971
        %v4014 = vpack.c.b16 %v3974, %v3972
        %v4015 = vpack.c.b16 %v3977, %v3975
        %v4016 = vpack.c.b16 %v3978, %v3976
        %v4017 = vpack.c.b16 %v3981, %v3979
        %v4018 = vpack.c.b16 %v3982, %v3980
        %v4019 = vpack.c.b16 %v3985, %v3983
        %v4020 = vpack.c.b16 %v3986, %v3984
        %v4021 = vpack.c.b16 %v3989, %v3987
        %v4022 = vpack.c.b16 %v3990, %v3988
        %4055 = vmatpush.bf16.msra.mxu0 %v4005
        %4056 = vmatpush.bf16.msra.mxu0 %v4003
        %4057 = vmatpush.bf16.msra.mxu0 %v4001
        %4058 = vmatpush.bf16.msra.mxu0 %v3999
        %4059 = vmatpush.bf16.msra.mxu0 %v3997
        %4060 = vmatpush.bf16.msra.mxu0 %v3995
        %4061 = vmatpush.bf16.msra.mxu0 %v3993
        %4062 = vmatpush.bf16.msra.mxu0 %v3991
        %4063 = vmatmul.bf16.gmra.mxu0 %v3140
        %v4064 = vpop.f32.mrf.mxu0
        %v4065 = vadd.f32 %v3891, %v4064
        %v4066 = vpop.f32.mrf.mxu0
        %v4067 = vadd.f32 %v3891, %v4066
        %4068 = vmatmul.bf16.gmra.mxu0 %v3142
        %v4069 = vpop.f32.mrf.mxu0
        %v4070 = vadd.f32 %v3891, %v4069
        %v4071 = vpop.f32.mrf.mxu0
        %v4072 = vadd.f32 %v3891, %v4071
        %4073 = vmatmul.bf16.gmra.mxu0 %v3144
        %v4074 = vpop.f32.mrf.mxu0
        %v4075 = vadd.f32 %v3891, %v4074
        %v4076 = vpop.f32.mrf.mxu0
        %v4077 = vadd.f32 %v3891, %v4076
        %4078 = vmatmul.bf16.gmra.mxu0 %v3146
        %v4079 = vpop.f32.mrf.mxu0
        %v4080 = vadd.f32 %v3891, %v4079
        %v4081 = vpop.f32.mrf.mxu0
        %v4082 = vadd.f32 %v3891, %v4081
        %4083 = vmatmul.bf16.gmra.mxu0 %v3148
        %v4084 = vpop.f32.mrf.mxu0
        %v4085 = vadd.f32 %v3891, %v4084
        %v4086 = vpop.f32.mrf.mxu0
        %v4087 = vadd.f32 %v3891, %v4086
        %4088 = vmatmul.bf16.gmra.mxu0 %v3150
        %v4089 = vpop.f32.mrf.mxu0
        %v4090 = vadd.f32 %v3891, %v4089
        %v4091 = vpop.f32.mrf.mxu0
        %v4092 = vadd.f32 %v3891, %v4091
        %4093 = vmatmul.bf16.gmra.mxu0 %v3152
        %v4094 = vpop.f32.mrf.mxu0
        %v4095 = vadd.f32 %v3891, %v4094
        %v4096 = vpop.f32.mrf.mxu0
        %v4097 = vadd.f32 %v3891, %v4096
        %4098 = vmatmul.bf16.gmra.mxu0 %v3154
        %v4099 = vpop.f32.mrf.mxu0
        %v4100 = vadd.f32 %v3891, %v4099
        %v4101 = vpop.f32.mrf.mxu0
        %v4102 = vadd.f32 %v3891, %v4101
        %4103 = vdwg.mxu0
        %4104 = vmatpush.bf16.msra.mxu0 %v4021
        %4105 = vmatpush.bf16.msra.mxu0 %v4019
        %4106 = vmatpush.bf16.msra.mxu0 %v4017
        %4107 = vmatpush.bf16.msra.mxu0 %v4015
        %4108 = vmatpush.bf16.msra.mxu0 %v4013
        %4109 = vmatpush.bf16.msra.mxu0 %v4011
        %4110 = vmatpush.bf16.msra.mxu0 %v4009
        %4111 = vmatpush.bf16.msra.mxu0 %v4007
        %4112 = vmatmul.bf16.gmra.mxu0 %v3141
        %v4113 = vpop.f32.mrf.mxu0
        %v4114 = vadd.f32 %v4065, %v4113
        %v4115 = vpop.f32.mrf.mxu0
        %v4116 = vadd.f32 %v4067, %v4115
        %4117 = vmatmul.bf16.gmra.mxu0 %v3143
        %v4118 = vpop.f32.mrf.mxu0
        %v4119 = vadd.f32 %v4070, %v4118
        %v4120 = vpop.f32.mrf.mxu0
        %v4121 = vadd.f32 %v4072, %v4120
        %4122 = vmatmul.bf16.gmra.mxu0 %v3145
        %v4123 = vpop.f32.mrf.mxu0
        %v4124 = vadd.f32 %v4075, %v4123
        %v4125 = vpop.f32.mrf.mxu0
        %v4126 = vadd.f32 %v4077, %v4125
        %4127 = vmatmul.bf16.gmra.mxu0 %v3147
        %v4128 = vpop.f32.mrf.mxu0
        %v4129 = vadd.f32 %v4080, %v4128
        %v4130 = vpop.f32.mrf.mxu0
        %v4131 = vadd.f32 %v4082, %v4130
        %4132 = vmatmul.bf16.gmra.mxu0 %v3149
        %v4133 = vpop.f32.mrf.mxu0
        %v4134 = vadd.f32 %v4085, %v4133
        %v4135 = vpop.f32.mrf.mxu0
        %v4136 = vadd.f32 %v4087, %v4135
        %4137 = vmatmul.bf16.gmra.mxu0 %v3151
        %v4138 = vpop.f32.mrf.mxu0
        %v4139 = vadd.f32 %v4090, %v4138
        %v4140 = vpop.f32.mrf.mxu0
        %v4141 = vadd.f32 %v4092, %v4140
        %4142 = vmatmul.bf16.gmra.mxu0 %v3153
        %v4143 = vpop.f32.mrf.mxu0
        %v4144 = vadd.f32 %v4095, %v4143
        %v4145 = vpop.f32.mrf.mxu0
        %v4146 = vadd.f32 %v4097, %v4145
        %4147 = vmatmul.bf16.gmra.mxu0 %v3155
        %v4148 = vpop.f32.mrf.mxu0
        %v4149 = vadd.f32 %v4100, %v4148
        %v4150 = vpop.f32.mrf.mxu0
        %v4151 = vadd.f32 %v4102, %v4150
        %4152 = vdwg.mxu0
        %4153 = vmatpush.bf16.msra.mxu0 %v4006
        %4154 = vmatpush.bf16.msra.mxu0 %v4004
        %4155 = vmatpush.bf16.msra.mxu0 %v4002
        %4156 = vmatpush.bf16.msra.mxu0 %v4000
        %4157 = vmatpush.bf16.msra.mxu0 %v3998
        %4158 = vmatpush.bf16.msra.mxu0 %v3996
        %4159 = vmatpush.bf16.msra.mxu0 %v3994
        %4160 = vmatpush.bf16.msra.mxu0 %v3992
        %4161 = vmatmul.bf16.gmra.mxu0 %v3140
        %v4162 = vpop.f32.mrf.mxu0
        %v4163 = vadd.f32 %v3892, %v4162
        %v4164 = vpop.f32.mrf.mxu0
        %v4165 = vadd.f32 %v3892, %v4164
        %4166 = vmatmul.bf16.gmra.mxu0 %v3142
        %v4167 = vpop.f32.mrf.mxu0
        %v4168 = vadd.f32 %v3892, %v4167
        %v4169 = vpop.f32.mrf.mxu0
        %v4170 = vadd.f32 %v3892, %v4169
        %4171 = vmatmul.bf16.gmra.mxu0 %v3144
        %v4172 = vpop.f32.mrf.mxu0
        %v4173 = vadd.f32 %v3892, %v4172
        %v4174 = vpop.f32.mrf.mxu0
        %v4175 = vadd.f32 %v3892, %v4174
        %4176 = vmatmul.bf16.gmra.mxu0 %v3146
        %v4177 = vpop.f32.mrf.mxu0
        %v4178 = vadd.f32 %v3892, %v4177
        %v4179 = vpop.f32.mrf.mxu0
        %v4180 = vadd.f32 %v3892, %v4179
        %4181 = vmatmul.bf16.gmra.mxu0 %v3148
        %v4182 = vpop.f32.mrf.mxu0
        %v4183 = vadd.f32 %v3892, %v4182
        %v4184 = vpop.f32.mrf.mxu0
        %v4185 = vadd.f32 %v3892, %v4184
        %4186 = vmatmul.bf16.gmra.mxu0 %v3150
        %v4187 = vpop.f32.mrf.mxu0
        %v4188 = vadd.f32 %v3892, %v4187
        %v4189 = vpop.f32.mrf.mxu0
        %v4190 = vadd.f32 %v3892, %v4189
        %4191 = vmatmul.bf16.gmra.mxu0 %v3152
        %v4192 = vpop.f32.mrf.mxu0
        %v4193 = vadd.f32 %v3892, %v4192
        %v4194 = vpop.f32.mrf.mxu0
        %v4195 = vadd.f32 %v3892, %v4194
        %4196 = vmatmul.bf16.gmra.mxu0 %v3154
        %v4197 = vpop.f32.mrf.mxu0
        %v4198 = vadd.f32 %v3892, %v4197
        %v4199 = vpop.f32.mrf.mxu0
        %v4200 = vadd.f32 %v3892, %v4199
        %4201 = vdwg.mxu0
        %4202 = vmatpush.bf16.msra.mxu0 %v4022
        %4203 = vmatpush.bf16.msra.mxu0 %v4020
        %4204 = vmatpush.bf16.msra.mxu0 %v4018
        %4205 = vmatpush.bf16.msra.mxu0 %v4016
        %4206 = vmatpush.bf16.msra.mxu0 %v4014
        %4207 = vmatpush.bf16.msra.mxu0 %v4012
        %4208 = vmatpush.bf16.msra.mxu0 %v4010
        %4209 = vmatpush.bf16.msra.mxu0 %v4008
        %4210 = vmatmul.bf16.gmra.mxu0 %v3141
        %v4211 = vpop.f32.mrf.mxu0
        %v4212 = vadd.f32 %v4163, %v4211
        %v4213 = vpop.f32.mrf.mxu0
        %v4214 = vadd.f32 %v4165, %v4213
        %4215 = vmatmul.bf16.gmra.mxu0 %v3143
        %v4216 = vpop.f32.mrf.mxu0
        %v4217 = vadd.f32 %v4168, %v4216
        %v4218 = vpop.f32.mrf.mxu0
        %v4219 = vadd.f32 %v4170, %v4218
        %4220 = vmatmul.bf16.gmra.mxu0 %v3145
        %v4221 = vpop.f32.mrf.mxu0
        %v4222 = vadd.f32 %v4173, %v4221
        %v4223 = vpop.f32.mrf.mxu0
        %v4224 = vadd.f32 %v4175, %v4223
        %4225 = vmatmul.bf16.gmra.mxu0 %v3147
        %v4226 = vpop.f32.mrf.mxu0
        %v4227 = vadd.f32 %v4178, %v4226
        %v4228 = vpop.f32.mrf.mxu0
        %v4229 = vadd.f32 %v4180, %v4228
        %4230 = vmatmul.bf16.gmra.mxu0 %v3149
        %v4231 = vpop.f32.mrf.mxu0
        %v4232 = vadd.f32 %v4183, %v4231
        %v4233 = vpop.f32.mrf.mxu0
        %v4234 = vadd.f32 %v4185, %v4233
        %4235 = vmatmul.bf16.gmra.mxu0 %v3151
        %v4236 = vpop.f32.mrf.mxu0
        %v4237 = vadd.f32 %v4188, %v4236
        %v4238 = vpop.f32.mrf.mxu0
        %v4239 = vadd.f32 %v4190, %v4238
        %4240 = vmatmul.bf16.gmra.mxu0 %v3153
        %v4241 = vpop.f32.mrf.mxu0
        %v4242 = vadd.f32 %v4193, %v4241
        %v4243 = vpop.f32.mrf.mxu0
        %v4244 = vadd.f32 %v4195, %v4243
        %4245 = vmatmul.bf16.gmra.mxu0 %v3155
        %v4246 = vpop.f32.mrf.mxu0
        %v4247 = vadd.f32 %v4198, %v4246
        %v4248 = vpop.f32.mrf.mxu0
        %v4249 = vadd.f32 %v4200, %v4248
        %4250 = vdwg.mxu0
        %v4251 = vpack.c.bf16 %v3840, %v3839
        %v4252 = vpack.c.bf16 %v3842, %v3841
        %v4253 = vpack.c.bf16 %v3844, %v3843
        %v4254 = vpack.c.bf16 %v3846, %v3845
        %v4255 = vpack.c.bf16 %v3848, %v3847
        %v4256 = vpack.c.bf16 %v3850, %v3849
        %v4257 = vpack.c.bf16 %v3852, %v3851
        %v4258 = vpack.c.bf16 %v3854, %v3853
        %v4259 = vpack.c.bf16 %v4116, %v4114
        %v4260 = vpack.c.bf16 %v4214, %v4212
        %v4261 = vpack.c.bf16 %v4121, %v4119
        %v4262 = vpack.c.bf16 %v4219, %v4217
        %v4263 = vpack.c.bf16 %v4126, %v4124
        %v4264 = vpack.c.bf16 %v4224, %v4222
        %v4265 = vpack.c.bf16 %v4131, %v4129
        %v4266 = vpack.c.bf16 %v4229, %v4227
        %v4267 = vpack.c.bf16 %v4136, %v4134
        %v4268 = vpack.c.bf16 %v4234, %v4232
        %v4269 = vpack.c.bf16 %v4141, %v4139
        %v4270 = vpack.c.bf16 %v4239, %v4237
        %v4271 = vpack.c.bf16 %v4146, %v4144
        %v4272 = vpack.c.bf16 %v4244, %v4242
        %v4273 = vpack.c.bf16 %v4151, %v4149
        %v4274 = vpack.c.bf16 %v4249, %v4247
        %4275 = vxpose.xlu0.c.b16.start [1/8] %v4251, 128
        %4276 = vxpose.xlu0.c.b16.cont [2/8] %v4252, 128
        %4277 = vxpose.xlu0.c.b16.cont [3/8] %v4253, 128
        %4278 = vxpose.xlu0.c.b16.cont [4/8] %v4254, 128
        %4279 = vxpose.xlu0.c.b16.cont [5/8] %v4255, 128
        %4280 = vxpose.xlu0.c.b16.cont [6/8] %v4256, 128
        %4281 = vxpose.xlu0.c.b16.cont [7/8] %v4257, 128
        %4282 = vxpose.xlu0.c.b16.end [8/8] %v4258, 128
        %v4283 = vpop.trf.xlu0
        %v4284 = vpop.trf.xlu0
        %v4285 = vpop.trf.xlu0
        %v4286 = vpop.trf.xlu0
        %v4287 = vpop.trf.xlu0
        %v4288 = vpop.trf.xlu0
        %v4289 = vpop.trf.xlu0
        %v4290 = vpop.trf.xlu0
        %4291 = vmatpush.bf16.msra.mxu0 %v4273
        %4292 = vmatpush.bf16.msra.mxu0 %v4271
        %4293 = vmatpush.bf16.msra.mxu0 %v4269
        %4294 = vmatpush.bf16.msra.mxu0 %v4267
        %4295 = vmatpush.bf16.msra.mxu0 %v4265
        %4296 = vmatpush.bf16.msra.mxu0 %v4263
        %4297 = vmatpush.bf16.msra.mxu0 %v4261
        %4298 = vmatpush.bf16.msra.mxu0 %v4259
        %4299 = vmatmul.bf16.gmra.mxu0 %v4283
        %v4300 = vpop.f32.mrf.mxu0
        %v4301 = vadd.f32 0.0, %v4300
        %v4302 = vpop.f32.mrf.mxu0
        %v4303 = vadd.f32 0.0, %v4302
        %4304 = vmatmul.bf16.gmra.mxu0 %v4284
        %v4305 = vpop.f32.mrf.mxu0
        %v4306 = vadd.f32 0.0, %v4305
        %v4307 = vpop.f32.mrf.mxu0
        %v4308 = vadd.f32 0.0, %v4307
        %4309 = vmatmul.bf16.gmra.mxu0 %v4285
        %v4310 = vpop.f32.mrf.mxu0
        %v4311 = vadd.f32 0.0, %v4310
        %v4312 = vpop.f32.mrf.mxu0
        %v4313 = vadd.f32 0.0, %v4312
        %4314 = vmatmul.bf16.gmra.mxu0 %v4286
        %v4315 = vpop.f32.mrf.mxu0
        %v4316 = vadd.f32 0.0, %v4315
        %v4317 = vpop.f32.mrf.mxu0
        %v4318 = vadd.f32 0.0, %v4317
        %4319 = vmatmul.bf16.gmra.mxu0 %v4287
        %v4320 = vpop.f32.mrf.mxu0
        %v4321 = vadd.f32 0.0, %v4320
        %v4322 = vpop.f32.mrf.mxu0
        %v4323 = vadd.f32 0.0, %v4322
        %4324 = vmatmul.bf16.gmra.mxu0 %v4288
        %v4325 = vpop.f32.mrf.mxu0
        %v4326 = vadd.f32 0.0, %v4325
        %v4327 = vpop.f32.mrf.mxu0
        %v4328 = vadd.f32 0.0, %v4327
        %4329 = vmatmul.bf16.gmra.mxu0 %v4289
        %v4330 = vpop.f32.mrf.mxu0
        %v4331 = vadd.f32 0.0, %v4330
        %v4332 = vpop.f32.mrf.mxu0
        %v4333 = vadd.f32 0.0, %v4332
        %4334 = vmatmul.bf16.gmra.mxu0 %v4290
        %v4335 = vpop.f32.mrf.mxu0
        %v4336 = vadd.f32 0.0, %v4335
        %v4337 = vpop.f32.mrf.mxu0
        %v4338 = vadd.f32 0.0, %v4337
        %4339 = vdwg.mxu0
        %4340 = vmatpush.bf16.msra.mxu0 %v4274
        %4341 = vmatpush.bf16.msra.mxu0 %v4272
        %4342 = vmatpush.bf16.msra.mxu0 %v4270
        %4343 = vmatpush.bf16.msra.mxu0 %v4268
        %4344 = vmatpush.bf16.msra.mxu0 %v4266
        %4345 = vmatpush.bf16.msra.mxu0 %v4264
        %4346 = vmatpush.bf16.msra.mxu0 %v4262
        %4347 = vmatpush.bf16.msra.mxu0 %v4260
        %4348 = vmatmul.bf16.gmra.mxu0 %v4283
        %v4349 = vpop.f32.mrf.mxu0
        %v4350 = vadd.f32 0.0, %v4349
        %v4351 = vpop.f32.mrf.mxu0
        %v4352 = vadd.f32 0.0, %v4351
        %4353 = vmatmul.bf16.gmra.mxu0 %v4284
        %v4354 = vpop.f32.mrf.mxu0
        %v4355 = vadd.f32 0.0, %v4354
        %v4356 = vpop.f32.mrf.mxu0
        %v4357 = vadd.f32 0.0, %v4356
        %4358 = vmatmul.bf16.gmra.mxu0 %v4285
        %v4359 = vpop.f32.mrf.mxu0
        %v4360 = vadd.f32 0.0, %v4359
        %v4361 = vpop.f32.mrf.mxu0
        %v4362 = vadd.f32 0.0, %v4361
        %4363 = vmatmul.bf16.gmra.mxu0 %v4286
        %v4364 = vpop.f32.mrf.mxu0
        %v4365 = vadd.f32 0.0, %v4364
        %v4366 = vpop.f32.mrf.mxu0
        %v4367 = vadd.f32 0.0, %v4366
        %4368 = vmatmul.bf16.gmra.mxu0 %v4287
        %v4369 = vpop.f32.mrf.mxu0
        %v4370 = vadd.f32 0.0, %v4369
        %v4371 = vpop.f32.mrf.mxu0
        %v4372 = vadd.f32 0.0, %v4371
        %4373 = vmatmul.bf16.gmra.mxu0 %v4288
        %v4374 = vpop.f32.mrf.mxu0
        %v4375 = vadd.f32 0.0, %v4374
        %v4376 = vpop.f32.mrf.mxu0
        %v4377 = vadd.f32 0.0, %v4376
        %4378 = vmatmul.bf16.gmra.mxu0 %v4289
        %v4379 = vpop.f32.mrf.mxu0
        %v4380 = vadd.f32 0.0, %v4379
        %v4381 = vpop.f32.mrf.mxu0
        %v4382 = vadd.f32 0.0, %v4381
        %4383 = vmatmul.bf16.gmra.mxu0 %v4290
        %v4384 = vpop.f32.mrf.mxu0
        %v4385 = vadd.f32 0.0, %v4384
        %v4386 = vpop.f32.mrf.mxu0
        %v4387 = vadd.f32 0.0, %v4386
        %4388 = vdwg.mxu0
        %v4389 = vsub.f32 %v3076, %v4301
        %v4390 = vsub.f32 %v3077, %v4350
        %v4391 = vsub.f32 %v3078, %v4303
        %v4392 = vsub.f32 %v3079, %v4352
        %v4393 = vsub.f32 %v3080, %v4306
        %v4394 = vsub.f32 %v3081, %v4355
        %v4395 = vsub.f32 %v3082, %v4308
        %v4396 = vsub.f32 %v3083, %v4357
        %v4397 = vsub.f32 %v3084, %v4311
        %v4398 = vsub.f32 %v3085, %v4360
        %v4399 = vsub.f32 %v3086, %v4313
        %v4400 = vsub.f32 %v3087, %v4362
        %v4401 = vsub.f32 %v3088, %v4316
        %v4402 = vsub.f32 %v3089, %v4365
        %v4403 = vsub.f32 %v3090, %v4318
        %v4404 = vsub.f32 %v3091, %v4367
        %v4405 = vsub.f32 %v3092, %v4321
        %v4406 = vsub.f32 %v3093, %v4370
        %v4407 = vsub.f32 %v3094, %v4323
        %v4408 = vsub.f32 %v3095, %v4372
        %v4409 = vsub.f32 %v3096, %v4326
        %v4410 = vsub.f32 %v3097, %v4375
        %v4411 = vsub.f32 %v3098, %v4328
        %v4412 = vsub.f32 %v3099, %v4377
        %v4413 = vsub.f32 %v3100, %v4331
        %v4414 = vsub.f32 %v3101, %v4380
        %v4415 = vsub.f32 %v3102, %v4333
        %v4416 = vsub.f32 %v3103, %v4382
        %v4417 = vsub.f32 %v3104, %v4336
        %v4418 = vsub.f32 %v3105, %v4385
        %v4419 = vsub.f32 %v3106, %v4338
        %v4420 = vsub.f32 %v3107, %v4387
        %v4421 = vpack.c.bf16 %v4391, %v4389
        %v4422 = vpack.c.bf16 %v4392, %v4390
        %v4423 = vpack.c.bf16 %v4395, %v4393
        %v4424 = vpack.c.bf16 %v4396, %v4394
        %v4425 = vpack.c.bf16 %v4399, %v4397
        %v4426 = vpack.c.bf16 %v4400, %v4398
        %v4427 = vpack.c.bf16 %v4403, %v4401
        %v4428 = vpack.c.bf16 %v4404, %v4402
        %v4429 = vpack.c.bf16 %v4407, %v4405
        %v4430 = vpack.c.bf16 %v4408, %v4406
        %v4431 = vpack.c.bf16 %v4411, %v4409
        %v4432 = vpack.c.bf16 %v4412, %v4410
        %v4433 = vpack.c.bf16 %v4415, %v4413
        %v4434 = vpack.c.bf16 %v4416, %v4414
        %v4435 = vpack.c.bf16 %v4419, %v4417
        %v4436 = vpack.c.bf16 %v4420, %v4418
        %s4437 = scalar_lea.vmem [#allocation7], 256
        %v4438 = vld [vmem:[%s4437] sm:$0xff]
        %v4439 = vld [vmem:[%s4437 + $0x8] sm:$0xff]
        %v4440 = vld [vmem:[%s4437 + $0x10] sm:$0xff]
        %v4441 = vld [vmem:[%s4437 + $0x18] sm:$0xff]
        %v4442 = vld [vmem:[%s4437 + $0x20] sm:$0xff]
        %v4443 = vld [vmem:[%s4437 + $0x28] sm:$0xff]
        %v4444 = vld [vmem:[%s4437 + $0x30] sm:$0xff]
        %v4445 = vld [vmem:[%s4437 + $0x38] sm:$0xff]
        %v4446 = vld [vmem:[%s4437 + $0x40] sm:$0xff]
        %v4447 = vld [vmem:[%s4437 + $0x48] sm:$0xff]
        %v4448 = vld [vmem:[%s4437 + $0x50] sm:$0xff]
        %v4449 = vld [vmem:[%s4437 + $0x58] sm:$0xff]
        %v4450 = vld [vmem:[%s4437 + $0x60] sm:$0xff]
        %v4451 = vld [vmem:[%s4437 + $0x68] sm:$0xff]
        %v4452 = vld [vmem:[%s4437 + $0x70] sm:$0xff]
        %v4453 = vld [vmem:[%s4437 + $0x78] sm:$0xff]
        %v4454 = vld [vmem:[%s4437 + $0x80] sm:$0xff]
        %v4455 = vld [vmem:[%s4437 + $0x88] sm:$0xff]
        %v4456 = vld [vmem:[%s4437 + $0x90] sm:$0xff]
        %v4457 = vld [vmem:[%s4437 + $0x98] sm:$0xff]
        %v4458 = vld [vmem:[%s4437 + $0xa0] sm:$0xff]
        %v4459 = vld [vmem:[%s4437 + $0xa8] sm:$0xff]
        %v4460 = vld [vmem:[%s4437 + $0xb0] sm:$0xff]
        %v4461 = vld [vmem:[%s4437 + $0xb8] sm:$0xff]
        %v4462 = vld [vmem:[%s4437 + $0xc0] sm:$0xff]
        %v4463 = vld [vmem:[%s4437 + $0xc8] sm:$0xff]
        %v4464 = vld [vmem:[%s4437 + $0xd0] sm:$0xff]
        %v4465 = vld [vmem:[%s4437 + $0xd8] sm:$0xff]
        %v4466 = vld [vmem:[%s4437 + $0xe0] sm:$0xff]
        %v4467 = vld [vmem:[%s4437 + $0xe8] sm:$0xff]
        %v4468 = vld [vmem:[%s4437 + $0xf0] sm:$0xff]
        %v4469 = vld [vmem:[%s4437 + $0xf8] sm:$0xff]
        %s4470 = scalar_lea.vmem [#allocation9], 2
        %v4471 = vld [vmem:[%s4470] sm:$0x3]
        %v4473 = vperm.slane %v4471, 0
        %v4474 = vperm.slane %v4471, 1
        %v4509 = vunpack.c.l.b16 %v4438
        %v4510 = vunpack.c.h.b16 %v4438
        %v4511 = vunpack.c.l.b16 %v4439
        %v4512 = vunpack.c.h.b16 %v4439
        %v4513 = vunpack.c.l.b16 %v4440
        %v4514 = vunpack.c.h.b16 %v4440
        %v4515 = vunpack.c.l.b16 %v4441
        %v4516 = vunpack.c.h.b16 %v4441
        %v4517 = vunpack.c.l.b16 %v4442
        %v4518 = vunpack.c.h.b16 %v4442
        %v4519 = vunpack.c.l.b16 %v4443
        %v4520 = vunpack.c.h.b16 %v4443
        %v4521 = vunpack.c.l.b16 %v4444
        %v4522 = vunpack.c.h.b16 %v4444
        %v4523 = vunpack.c.l.b16 %v4445
        %v4524 = vunpack.c.h.b16 %v4445
        %v4525 = vunpack.c.l.b16 %v4446
        %v4526 = vunpack.c.h.b16 %v4446
        %v4527 = vunpack.c.l.b16 %v4447
        %v4528 = vunpack.c.h.b16 %v4447
        %v4529 = vunpack.c.l.b16 %v4448
        %v4530 = vunpack.c.h.b16 %v4448
        %v4531 = vunpack.c.l.b16 %v4449
        %v4532 = vunpack.c.h.b16 %v4449
        %v4533 = vunpack.c.l.b16 %v4450
        %v4534 = vunpack.c.h.b16 %v4450
        %v4535 = vunpack.c.l.b16 %v4451
        %v4536 = vunpack.c.h.b16 %v4451
        %v4537 = vunpack.c.l.b16 %v4452
        %v4538 = vunpack.c.h.b16 %v4452
        %v4539 = vunpack.c.l.b16 %v4453
        %v4540 = vunpack.c.h.b16 %v4453
        %v4541 = vunpack.c.l.b16 %v4454
        %v4542 = vunpack.c.h.b16 %v4454
        %v4543 = vunpack.c.l.b16 %v4455
        %v4544 = vunpack.c.h.b16 %v4455
        %v4545 = vunpack.c.l.b16 %v4456
        %v4546 = vunpack.c.h.b16 %v4456
        %v4547 = vunpack.c.l.b16 %v4457
        %v4548 = vunpack.c.h.b16 %v4457
        %v4549 = vunpack.c.l.b16 %v4458
        %v4550 = vunpack.c.h.b16 %v4458
        %v4551 = vunpack.c.l.b16 %v4459
        %v4552 = vunpack.c.h.b16 %v4459
        %v4553 = vunpack.c.l.b16 %v4460
        %v4554 = vunpack.c.h.b16 %v4460
        %v4555 = vunpack.c.l.b16 %v4461
        %v4556 = vunpack.c.h.b16 %v4461
        %v4557 = vunpack.c.l.b16 %v4462
        %v4558 = vunpack.c.h.b16 %v4462
        %v4559 = vunpack.c.l.b16 %v4463
        %v4560 = vunpack.c.h.b16 %v4463
        %v4561 = vunpack.c.l.b16 %v4464
        %v4562 = vunpack.c.h.b16 %v4464
        %v4563 = vunpack.c.l.b16 %v4465
        %v4564 = vunpack.c.h.b16 %v4465
        %v4565 = vunpack.c.l.b16 %v4466
        %v4566 = vunpack.c.h.b16 %v4466
        %v4567 = vunpack.c.l.b16 %v4467
        %v4568 = vunpack.c.h.b16 %v4467
        %v4569 = vunpack.c.l.b16 %v4468
        %v4570 = vunpack.c.h.b16 %v4468
        %v4571 = vunpack.c.l.b16 %v4469
        %v4572 = vunpack.c.h.b16 %v4469
        %v4573 = vpack.c.b16 %v4511, %v4509
        %v4574 = vpack.c.b16 %v4512, %v4510
        %v4575 = vpack.c.b16 %v4515, %v4513
        %v4576 = vpack.c.b16 %v4516, %v4514
        %v4577 = vpack.c.b16 %v4519, %v4517
        %v4578 = vpack.c.b16 %v4520, %v4518
        %v4579 = vpack.c.b16 %v4523, %v4521
        %v4580 = vpack.c.b16 %v4524, %v4522
        %v4581 = vpack.c.b16 %v4527, %v4525
        %v4582 = vpack.c.b16 %v4528, %v4526
        %v4583 = vpack.c.b16 %v4531, %v4529
        %v4584 = vpack.c.b16 %v4532, %v4530
        %v4585 = vpack.c.b16 %v4535, %v4533
        %v4586 = vpack.c.b16 %v4536, %v4534
        %v4587 = vpack.c.b16 %v4539, %v4537
        %v4588 = vpack.c.b16 %v4540, %v4538
        %v4589 = vpack.c.b16 %v4543, %v4541
        %v4590 = vpack.c.b16 %v4544, %v4542
        %v4591 = vpack.c.b16 %v4547, %v4545
        %v4592 = vpack.c.b16 %v4548, %v4546
        %v4593 = vpack.c.b16 %v4551, %v4549
        %v4594 = vpack.c.b16 %v4552, %v4550
        %v4595 = vpack.c.b16 %v4555, %v4553
        %v4596 = vpack.c.b16 %v4556, %v4554
        %v4597 = vpack.c.b16 %v4559, %v4557
        %v4598 = vpack.c.b16 %v4560, %v4558
        %v4599 = vpack.c.b16 %v4563, %v4561
        %v4600 = vpack.c.b16 %v4564, %v4562
        %v4601 = vpack.c.b16 %v4567, %v4565
        %v4602 = vpack.c.b16 %v4568, %v4566
        %v4603 = vpack.c.b16 %v4571, %v4569
        %v4604 = vpack.c.b16 %v4572, %v4570
        %4637 = vmatpush.bf16.msra.mxu0 %v4587
        %4638 = vmatpush.bf16.msra.mxu0 %v4585
        %4639 = vmatpush.bf16.msra.mxu0 %v4583
        %4640 = vmatpush.bf16.msra.mxu0 %v4581
        %4641 = vmatpush.bf16.msra.mxu0 %v4579
        %4642 = vmatpush.bf16.msra.mxu0 %v4577
        %4643 = vmatpush.bf16.msra.mxu0 %v4575
        %4644 = vmatpush.bf16.msra.mxu0 %v4573
        %4645 = vmatmul.bf16.gmra.mxu0 %v4421
        %v4646 = vpop.f32.mrf.mxu0
        %v4647 = vadd.f32 %v4473, %v4646
        %v4648 = vpop.f32.mrf.mxu0
        %v4649 = vadd.f32 %v4473, %v4648
        %4650 = vmatmul.bf16.gmra.mxu0 %v4423
        %v4651 = vpop.f32.mrf.mxu0
        %v4652 = vadd.f32 %v4473, %v4651
        %v4653 = vpop.f32.mrf.mxu0
        %v4654 = vadd.f32 %v4473, %v4653
        %4655 = vmatmul.bf16.gmra.mxu0 %v4425
        %v4656 = vpop.f32.mrf.mxu0
        %v4657 = vadd.f32 %v4473, %v4656
        %v4658 = vpop.f32.mrf.mxu0
        %v4659 = vadd.f32 %v4473, %v4658
        %4660 = vmatmul.bf16.gmra.mxu0 %v4427
        %v4661 = vpop.f32.mrf.mxu0
        %v4662 = vadd.f32 %v4473, %v4661
        %v4663 = vpop.f32.mrf.mxu0
        %v4664 = vadd.f32 %v4473, %v4663
        %4665 = vmatmul.bf16.gmra.mxu0 %v4429
        %v4666 = vpop.f32.mrf.mxu0
        %v4667 = vadd.f32 %v4473, %v4666
        %v4668 = vpop.f32.mrf.mxu0
        %v4669 = vadd.f32 %v4473, %v4668
        %4670 = vmatmul.bf16.gmra.mxu0 %v4431
        %v4671 = vpop.f32.mrf.mxu0
        %v4672 = vadd.f32 %v4473, %v4671
        %v4673 = vpop.f32.mrf.mxu0
        %v4674 = vadd.f32 %v4473, %v4673
        %4675 = vmatmul.bf16.gmra.mxu0 %v4433
        %v4676 = vpop.f32.mrf.mxu0
        %v4677 = vadd.f32 %v4473, %v4676
        %v4678 = vpop.f32.mrf.mxu0
        %v4679 = vadd.f32 %v4473, %v4678
        %4680 = vmatmul.bf16.gmra.mxu0 %v4435
        %v4681 = vpop.f32.mrf.mxu0
        %v4682 = vadd.f32 %v4473, %v4681
        %v4683 = vpop.f32.mrf.mxu0
        %v4684 = vadd.f32 %v4473, %v4683
        %4685 = vdwg.mxu0
        %4686 = vmatpush.bf16.msra.mxu0 %v4603
        %4687 = vmatpush.bf16.msra.mxu0 %v4601
        %4688 = vmatpush.bf16.msra.mxu0 %v4599
        %4689 = vmatpush.bf16.msra.mxu0 %v4597
        %4690 = vmatpush.bf16.msra.mxu0 %v4595
        %4691 = vmatpush.bf16.msra.mxu0 %v4593
        %4692 = vmatpush.bf16.msra.mxu0 %v4591
        %4693 = vmatpush.bf16.msra.mxu0 %v4589
        %4694 = vmatmul.bf16.gmra.mxu0 %v4422
        %v4695 = vpop.f32.mrf.mxu0
        %v4696 = vadd.f32 %v4647, %v4695
        %v4697 = vpop.f32.mrf.mxu0
        %v4698 = vadd.f32 %v4649, %v4697
        %4699 = vmatmul.bf16.gmra.mxu0 %v4424
        %v4700 = vpop.f32.mrf.mxu0
        %v4701 = vadd.f32 %v4652, %v4700
        %v4702 = vpop.f32.mrf.mxu0
        %v4703 = vadd.f32 %v4654, %v4702
        %4704 = vmatmul.bf16.gmra.mxu0 %v4426
        %v4705 = vpop.f32.mrf.mxu0
        %v4706 = vadd.f32 %v4657, %v4705
        %v4707 = vpop.f32.mrf.mxu0
        %v4708 = vadd.f32 %v4659, %v4707
        %4709 = vmatmul.bf16.gmra.mxu0 %v4428
        %v4710 = vpop.f32.mrf.mxu0
        %v4711 = vadd.f32 %v4662, %v4710
        %v4712 = vpop.f32.mrf.mxu0
        %v4713 = vadd.f32 %v4664, %v4712
        %4714 = vmatmul.bf16.gmra.mxu0 %v4430
        %v4715 = vpop.f32.mrf.mxu0
        %v4716 = vadd.f32 %v4667, %v4715
        %v4717 = vpop.f32.mrf.mxu0
        %v4718 = vadd.f32 %v4669, %v4717
        %4719 = vmatmul.bf16.gmra.mxu0 %v4432
        %v4720 = vpop.f32.mrf.mxu0
        %v4721 = vadd.f32 %v4672, %v4720
        %v4722 = vpop.f32.mrf.mxu0
        %v4723 = vadd.f32 %v4674, %v4722
        %4724 = vmatmul.bf16.gmra.mxu0 %v4434
        %v4725 = vpop.f32.mrf.mxu0
        %v4726 = vadd.f32 %v4677, %v4725
        %v4727 = vpop.f32.mrf.mxu0
        %v4728 = vadd.f32 %v4679, %v4727
        %4729 = vmatmul.bf16.gmra.mxu0 %v4436
        %v4730 = vpop.f32.mrf.mxu0
        %v4731 = vadd.f32 %v4682, %v4730
        %v4732 = vpop.f32.mrf.mxu0
        %v4733 = vadd.f32 %v4684, %v4732
        %4734 = vdwg.mxu0
        %4735 = vmatpush.bf16.msra.mxu0 %v4588
        %4736 = vmatpush.bf16.msra.mxu0 %v4586
        %4737 = vmatpush.bf16.msra.mxu0 %v4584
        %4738 = vmatpush.bf16.msra.mxu0 %v4582
        %4739 = vmatpush.bf16.msra.mxu0 %v4580
        %4740 = vmatpush.bf16.msra.mxu0 %v4578
        %4741 = vmatpush.bf16.msra.mxu0 %v4576
        %4742 = vmatpush.bf16.msra.mxu0 %v4574
        %4743 = vmatmul.bf16.gmra.mxu0 %v4421
        %v4744 = vpop.f32.mrf.mxu0
        %v4745 = vadd.f32 %v4474, %v4744
        %v4746 = vpop.f32.mrf.mxu0
        %v4747 = vadd.f32 %v4474, %v4746
        %4748 = vmatmul.bf16.gmra.mxu0 %v4423
        %v4749 = vpop.f32.mrf.mxu0
        %v4750 = vadd.f32 %v4474, %v4749
        %v4751 = vpop.f32.mrf.mxu0
        %v4752 = vadd.f32 %v4474, %v4751
        %4753 = vmatmul.bf16.gmra.mxu0 %v4425
        %v4754 = vpop.f32.mrf.mxu0
        %v4755 = vadd.f32 %v4474, %v4754
        %v4756 = vpop.f32.mrf.mxu0
        %v4757 = vadd.f32 %v4474, %v4756
        %4758 = vmatmul.bf16.gmra.mxu0 %v4427
        %v4759 = vpop.f32.mrf.mxu0
        %v4760 = vadd.f32 %v4474, %v4759
        %v4761 = vpop.f32.mrf.mxu0
        %v4762 = vadd.f32 %v4474, %v4761
        %4763 = vmatmul.bf16.gmra.mxu0 %v4429
        %v4764 = vpop.f32.mrf.mxu0
        %v4765 = vadd.f32 %v4474, %v4764
        %v4766 = vpop.f32.mrf.mxu0
        %v4767 = vadd.f32 %v4474, %v4766
        %4768 = vmatmul.bf16.gmra.mxu0 %v4431
        %v4769 = vpop.f32.mrf.mxu0
        %v4770 = vadd.f32 %v4474, %v4769
        %v4771 = vpop.f32.mrf.mxu0
        %v4772 = vadd.f32 %v4474, %v4771
        %4773 = vmatmul.bf16.gmra.mxu0 %v4433
        %v4774 = vpop.f32.mrf.mxu0
        %v4775 = vadd.f32 %v4474, %v4774
        %v4776 = vpop.f32.mrf.mxu0
        %v4777 = vadd.f32 %v4474, %v4776
        %4778 = vmatmul.bf16.gmra.mxu0 %v4435
        %v4779 = vpop.f32.mrf.mxu0
        %v4780 = vadd.f32 %v4474, %v4779
        %v4781 = vpop.f32.mrf.mxu0
        %v4782 = vadd.f32 %v4474, %v4781
        %4783 = vdwg.mxu0
        %4784 = vmatpush.bf16.msra.mxu0 %v4604
        %4785 = vmatpush.bf16.msra.mxu0 %v4602
        %4786 = vmatpush.bf16.msra.mxu0 %v4600
        %4787 = vmatpush.bf16.msra.mxu0 %v4598
        %4788 = vmatpush.bf16.msra.mxu0 %v4596
        %4789 = vmatpush.bf16.msra.mxu0 %v4594
        %4790 = vmatpush.bf16.msra.mxu0 %v4592
        %4791 = vmatpush.bf16.msra.mxu0 %v4590
        %4792 = vmatmul.bf16.gmra.mxu0 %v4422
        %v4793 = vpop.f32.mrf.mxu0
        %v4794 = vadd.f32 %v4745, %v4793
        %v4795 = vpop.f32.mrf.mxu0
        %v4796 = vadd.f32 %v4747, %v4795
        %4797 = vmatmul.bf16.gmra.mxu0 %v4424
        %v4798 = vpop.f32.mrf.mxu0
        %v4799 = vadd.f32 %v4750, %v4798
        %v4800 = vpop.f32.mrf.mxu0
        %v4801 = vadd.f32 %v4752, %v4800
        %4802 = vmatmul.bf16.gmra.mxu0 %v4426
        %v4803 = vpop.f32.mrf.mxu0
        %v4804 = vadd.f32 %v4755, %v4803
        %v4805 = vpop.f32.mrf.mxu0
        %v4806 = vadd.f32 %v4757, %v4805
        %4807 = vmatmul.bf16.gmra.mxu0 %v4428
        %v4808 = vpop.f32.mrf.mxu0
        %v4809 = vadd.f32 %v4760, %v4808
        %v4810 = vpop.f32.mrf.mxu0
        %v4811 = vadd.f32 %v4762, %v4810
        %4812 = vmatmul.bf16.gmra.mxu0 %v4430
        %v4813 = vpop.f32.mrf.mxu0
        %v4814 = vadd.f32 %v4765, %v4813
        %v4815 = vpop.f32.mrf.mxu0
        %v4816 = vadd.f32 %v4767, %v4815
        %4817 = vmatmul.bf16.gmra.mxu0 %v4432
        %v4818 = vpop.f32.mrf.mxu0
        %v4819 = vadd.f32 %v4770, %v4818
        %v4820 = vpop.f32.mrf.mxu0
        %v4821 = vadd.f32 %v4772, %v4820
        %4822 = vmatmul.bf16.gmra.mxu0 %v4434
        %v4823 = vpop.f32.mrf.mxu0
        %v4824 = vadd.f32 %v4775, %v4823
        %v4825 = vpop.f32.mrf.mxu0
        %v4826 = vadd.f32 %v4777, %v4825
        %4827 = vmatmul.bf16.gmra.mxu0 %v4436
        %v4828 = vpop.f32.mrf.mxu0
        %v4829 = vadd.f32 %v4780, %v4828
        %v4830 = vpop.f32.mrf.mxu0
        %v4831 = vadd.f32 %v4782, %v4830
        %4832 = vdwg.mxu0
        %v4833 = vmax.f32 %v4696, 0.0
        %v4834 = vmax.f32 %v4794, 0.0
        %v4835 = vmax.f32 %v4698, 0.0
        %v4836 = vmax.f32 %v4796, 0.0
        %v4837 = vmax.f32 %v4701, 0.0
        %v4838 = vmax.f32 %v4799, 0.0
        %v4839 = vmax.f32 %v4703, 0.0
        %v4840 = vmax.f32 %v4801, 0.0
        %v4841 = vmax.f32 %v4706, 0.0
        %v4842 = vmax.f32 %v4804, 0.0
        %v4843 = vmax.f32 %v4708, 0.0
        %v4844 = vmax.f32 %v4806, 0.0
        %v4845 = vmax.f32 %v4711, 0.0
        %v4846 = vmax.f32 %v4809, 0.0
        %v4847 = vmax.f32 %v4713, 0.0
        %v4848 = vmax.f32 %v4811, 0.0
        %v4849 = vmax.f32 %v4716, 0.0
        %v4850 = vmax.f32 %v4814, 0.0
        %v4851 = vmax.f32 %v4718, 0.0
        %v4852 = vmax.f32 %v4816, 0.0
        %v4853 = vmax.f32 %v4721, 0.0
        %v4854 = vmax.f32 %v4819, 0.0
        %v4855 = vmax.f32 %v4723, 0.0
        %v4856 = vmax.f32 %v4821, 0.0
        %v4857 = vmax.f32 %v4726, 0.0
        %v4858 = vmax.f32 %v4824, 0.0
        %v4859 = vmax.f32 %v4728, 0.0
        %v4860 = vmax.f32 %v4826, 0.0
        %v4861 = vmax.f32 %v4731, 0.0
        %v4862 = vmax.f32 %v4829, 0.0
        %v4863 = vmax.f32 %v4733, 0.0
        %v4864 = vmax.f32 %v4831, 0.0
        %v4865 = vadd.f32 %v3076, %v4833
        %v4866 = vadd.f32 %v3077, %v4834
        %v4867 = vadd.f32 %v3078, %v4835
        %v4868 = vadd.f32 %v3079, %v4836
        %v4869 = vadd.f32 %v3080, %v4837
        %v4870 = vadd.f32 %v3081, %v4838
        %v4871 = vadd.f32 %v3082, %v4839
        %v4872 = vadd.f32 %v3083, %v4840
        %v4873 = vadd.f32 %v3084, %v4841
        %v4874 = vadd.f32 %v3085, %v4842
        %v4875 = vadd.f32 %v3086, %v4843
        %v4876 = vadd.f32 %v3087, %v4844
        %v4877 = vadd.f32 %v3088, %v4845
        %v4878 = vadd.f32 %v3089, %v4846
        %v4879 = vadd.f32 %v3090, %v4847
        %v4880 = vadd.f32 %v3091, %v4848
        %v4881 = vadd.f32 %v3092, %v4849
        %v4882 = vadd.f32 %v3093, %v4850
        %v4883 = vadd.f32 %v3094, %v4851
        %v4884 = vadd.f32 %v3095, %v4852
        %v4885 = vadd.f32 %v3096, %v4853
        %v4886 = vadd.f32 %v3097, %v4854
        %v4887 = vadd.f32 %v3098, %v4855
        %v4888 = vadd.f32 %v3099, %v4856
        %v4889 = vadd.f32 %v3100, %v4857
        %v4890 = vadd.f32 %v3101, %v4858
        %v4891 = vadd.f32 %v3102, %v4859
        %v4892 = vadd.f32 %v3103, %v4860
        %v4893 = vadd.f32 %v3104, %v4861
        %v4894 = vadd.f32 %v3105, %v4862
        %v4895 = vadd.f32 %v3106, %v4863
        %v4896 = vadd.f32 %v3107, %v4864
        %s4897 = scalar_lea.vmem %s438, 256
        %4898 = vst [vmem:[%s4897] sm:$0xff] %v4865
        %4899 = vst [vmem:[%s4897 + $0x8] sm:$0xff] %v4866
        %4900 = vst [vmem:[%s4897 + $0x10] sm:$0xff] %v4867
        %4901 = vst [vmem:[%s4897 + $0x18] sm:$0xff] %v4868
        %4902 = vst [vmem:[%s4897 + $0x20] sm:$0xff] %v4869
        %4903 = vst [vmem:[%s4897 + $0x28] sm:$0xff] %v4870
        %4904 = vst [vmem:[%s4897 + $0x30] sm:$0xff] %v4871
        %4905 = vst [vmem:[%s4897 + $0x38] sm:$0xff] %v4872
        %4906 = vst [vmem:[%s4897 + $0x40] sm:$0xff] %v4873
        %4907 = vst [vmem:[%s4897 + $0x48] sm:$0xff] %v4874
        %4908 = vst [vmem:[%s4897 + $0x50] sm:$0xff] %v4875
        %4909 = vst [vmem:[%s4897 + $0x58] sm:$0xff] %v4876
        %4910 = vst [vmem:[%s4897 + $0x60] sm:$0xff] %v4877
        %4911 = vst [vmem:[%s4897 + $0x68] sm:$0xff] %v4878
        %4912 = vst [vmem:[%s4897 + $0x70] sm:$0xff] %v4879
        %4913 = vst [vmem:[%s4897 + $0x78] sm:$0xff] %v4880
        %4914 = vst [vmem:[%s4897 + $0x80] sm:$0xff] %v4881
        %4915 = vst [vmem:[%s4897 + $0x88] sm:$0xff] %v4882
        %4916 = vst [vmem:[%s4897 + $0x90] sm:$0xff] %v4883
        %4917 = vst [vmem:[%s4897 + $0x98] sm:$0xff] %v4884
        %4918 = vst [vmem:[%s4897 + $0xa0] sm:$0xff] %v4885
        %4919 = vst [vmem:[%s4897 + $0xa8] sm:$0xff] %v4886
        %4920 = vst [vmem:[%s4897 + $0xb0] sm:$0xff] %v4887
        %4921 = vst [vmem:[%s4897 + $0xb8] sm:$0xff] %v4888
        %4922 = vst [vmem:[%s4897 + $0xc0] sm:$0xff] %v4889
        %4923 = vst [vmem:[%s4897 + $0xc8] sm:$0xff] %v4890
        %4924 = vst [vmem:[%s4897 + $0xd0] sm:$0xff] %v4891
        %4925 = vst [vmem:[%s4897 + $0xd8] sm:$0xff] %v4892
        %4926 = vst [vmem:[%s4897 + $0xe0] sm:$0xff] %v4893
        %4927 = vst [vmem:[%s4897 + $0xe8] sm:$0xff] %v4894
        %4928 = vst [vmem:[%s4897 + $0xf0] sm:$0xff] %v4895
        %4929 = vst [vmem:[%s4897 + $0xf8] sm:$0xff] %v4896
        %v4930 = vpack.c.bf16 %v4867, %v4865
        %v4931 = vpack.c.bf16 %v4868, %v4866
        %v4932 = vpack.c.bf16 %v4871, %v4869
        %v4933 = vpack.c.bf16 %v4872, %v4870
        %v4934 = vpack.c.bf16 %v4875, %v4873
        %v4935 = vpack.c.bf16 %v4876, %v4874
        %v4936 = vpack.c.bf16 %v4879, %v4877
        %v4937 = vpack.c.bf16 %v4880, %v4878
        %v4938 = vpack.c.bf16 %v4883, %v4881
        %v4939 = vpack.c.bf16 %v4884, %v4882
        %v4940 = vpack.c.bf16 %v4887, %v4885
        %v4941 = vpack.c.bf16 %v4888, %v4886
        %v4942 = vpack.c.bf16 %v4891, %v4889
        %v4943 = vpack.c.bf16 %v4892, %v4890
        %v4944 = vpack.c.bf16 %v4895, %v4893
        %v4945 = vpack.c.bf16 %v4896, %v4894
        %s4946 = scalar_lea.vmem %s5, 256
        %v4947 = vld [vmem:[%s4946] sm:$0xf]
        %v4948 = vld [vmem:[%s4946 + $0x4] sm:$0xf]
        %v4949 = vld [vmem:[%s4946 + $0x8] sm:$0xf]
        %v4950 = vld [vmem:[%s4946 + $0xc] sm:$0xf]
        %v4951 = vld [vmem:[%s4946 + $0x10] sm:$0xf]
        %v4952 = vld [vmem:[%s4946 + $0x14] sm:$0xf]
        %v4953 = vld [vmem:[%s4946 + $0x18] sm:$0xf]
        %v4954 = vld [vmem:[%s4946 + $0x1c] sm:$0xf]
        %v4955 = vld [vmem:[%s4946 + $0x20] sm:$0xf]
        %v4956 = vld [vmem:[%s4946 + $0x24] sm:$0xf]
        %v4957 = vld [vmem:[%s4946 + $0x28] sm:$0xf]
        %v4958 = vld [vmem:[%s4946 + $0x2c] sm:$0xf]
        %v4959 = vld [vmem:[%s4946 + $0x30] sm:$0xf]
        %v4960 = vld [vmem:[%s4946 + $0x34] sm:$0xf]
        %v4961 = vld [vmem:[%s4946 + $0x38] sm:$0xf]
        %v4962 = vld [vmem:[%s4946 + $0x3c] sm:$0xf]
        %v4963 = vld [vmem:[%s4946 + $0x40] sm:$0xf]
        %v4964 = vld [vmem:[%s4946 + $0x44] sm:$0xf]
        %v4965 = vld [vmem:[%s4946 + $0x48] sm:$0xf]
        %v4966 = vld [vmem:[%s4946 + $0x4c] sm:$0xf]
        %v4967 = vld [vmem:[%s4946 + $0x50] sm:$0xf]
        %v4968 = vld [vmem:[%s4946 + $0x54] sm:$0xf]
        %v4969 = vld [vmem:[%s4946 + $0x58] sm:$0xf]
        %v4970 = vld [vmem:[%s4946 + $0x5c] sm:$0xf]
        %v4971 = vld [vmem:[%s4946 + $0x60] sm:$0xf]
        %v4972 = vld [vmem:[%s4946 + $0x64] sm:$0xf]
        %v4973 = vld [vmem:[%s4946 + $0x68] sm:$0xf]
        %v4974 = vld [vmem:[%s4946 + $0x6c] sm:$0xf]
        %v4975 = vld [vmem:[%s4946 + $0x70] sm:$0xf]
        %v4976 = vld [vmem:[%s4946 + $0x74] sm:$0xf]
        %v4977 = vld [vmem:[%s4946 + $0x78] sm:$0xf]
        %v4978 = vld [vmem:[%s4946 + $0x7c] sm:$0xf]
        %v5011 = vunpack.c.l.b16 %v4947
        %v5012 = vunpack.c.l.b16 %v4948
        %v5013 = vunpack.c.l.b16 %v4949
        %v5014 = vunpack.c.l.b16 %v4950
        %v5015 = vunpack.c.l.b16 %v4951
        %v5016 = vunpack.c.l.b16 %v4952
        %v5017 = vunpack.c.l.b16 %v4953
        %v5018 = vunpack.c.l.b16 %v4954
        %v5019 = vunpack.c.l.b16 %v4955
        %v5020 = vunpack.c.l.b16 %v4956
        %v5021 = vunpack.c.l.b16 %v4957
        %v5022 = vunpack.c.l.b16 %v4958
        %v5023 = vunpack.c.l.b16 %v4959
        %v5024 = vunpack.c.l.b16 %v4960
        %v5025 = vunpack.c.l.b16 %v4961
        %v5026 = vunpack.c.l.b16 %v4962
        %v5027 = vunpack.c.l.b16 %v4963
        %v5028 = vunpack.c.l.b16 %v4964
        %v5029 = vunpack.c.l.b16 %v4965
        %v5030 = vunpack.c.l.b16 %v4966
        %v5031 = vunpack.c.l.b16 %v4967
        %v5032 = vunpack.c.l.b16 %v4968
        %v5033 = vunpack.c.l.b16 %v4969
        %v5034 = vunpack.c.l.b16 %v4970
        %v5035 = vunpack.c.l.b16 %v4971
        %v5036 = vunpack.c.l.b16 %v4972
        %v5037 = vunpack.c.l.b16 %v4973
        %v5038 = vunpack.c.l.b16 %v4974
        %v5039 = vunpack.c.l.b16 %v4975
        %v5040 = vunpack.c.l.b16 %v4976
        %v5041 = vunpack.c.l.b16 %v4977
        %v5042 = vunpack.c.l.b16 %v4978
        %v5043 = vpack.c.b16 %v5012, %v5011
        %v5044 = vpack.c.b16 %v5014, %v5013
        %v5045 = vpack.c.b16 %v5016, %v5015
        %v5046 = vpack.c.b16 %v5018, %v5017
        %v5047 = vpack.c.b16 %v5020, %v5019
        %v5048 = vpack.c.b16 %v5022, %v5021
        %v5049 = vpack.c.b16 %v5024, %v5023
        %v5050 = vpack.c.b16 %v5026, %v5025
        %v5051 = vpack.c.b16 %v5028, %v5027
        %v5052 = vpack.c.b16 %v5030, %v5029
        %v5053 = vpack.c.b16 %v5032, %v5031
        %v5054 = vpack.c.b16 %v5034, %v5033
        %v5055 = vpack.c.b16 %v5036, %v5035
        %v5056 = vpack.c.b16 %v5038, %v5037
        %v5057 = vpack.c.b16 %v5040, %v5039
        %v5058 = vpack.c.b16 %v5042, %v5041
        %5075 = vmatpush.bf16.msra.mxu0 %v5050
        %5076 = vmatpush.bf16.msra.mxu0 %v5049
        %5077 = vmatpush.bf16.msra.mxu0 %v5048
        %5078 = vmatpush.bf16.msra.mxu0 %v5047
        %5079 = vmatpush.bf16.msra.mxu0 %v5046
        %5080 = vmatpush.bf16.msra.mxu0 %v5045
        %5081 = vmatpush.bf16.msra.mxu0 %v5044
        %5082 = vmatpush.bf16.msra.mxu0 %v5043
        %5083 = vmatmul.bf16.gmra.mxu0 %v4930
        %v5084 = vpop.f32.mrf.mxu0
        %v5085 = vadd.f32 0.0, %v5084
        %v5086 = vpop.f32.mrf.mxu0
        %v5087 = vadd.f32 0.0, %v5086
        %5088 = vmatmul.bf16.gmra.mxu0 %v4932
        %v5089 = vpop.f32.mrf.mxu0
        %v5090 = vadd.f32 0.0, %v5089
        %v5091 = vpop.f32.mrf.mxu0
        %v5092 = vadd.f32 0.0, %v5091
        %5093 = vmatmul.bf16.gmra.mxu0 %v4934
        %v5094 = vpop.f32.mrf.mxu0
        %v5095 = vadd.f32 0.0, %v5094
        %v5096 = vpop.f32.mrf.mxu0
        %v5097 = vadd.f32 0.0, %v5096
        %5098 = vmatmul.bf16.gmra.mxu0 %v4936
        %v5099 = vpop.f32.mrf.mxu0
        %v5100 = vadd.f32 0.0, %v5099
        %v5101 = vpop.f32.mrf.mxu0
        %v5102 = vadd.f32 0.0, %v5101
        %5103 = vmatmul.bf16.gmra.mxu0 %v4938
        %v5104 = vpop.f32.mrf.mxu0
        %v5105 = vadd.f32 0.0, %v5104
        %v5106 = vpop.f32.mrf.mxu0
        %v5107 = vadd.f32 0.0, %v5106
        %5108 = vmatmul.bf16.gmra.mxu0 %v4940
        %v5109 = vpop.f32.mrf.mxu0
        %v5110 = vadd.f32 0.0, %v5109
        %v5111 = vpop.f32.mrf.mxu0
        %v5112 = vadd.f32 0.0, %v5111
        %5113 = vmatmul.bf16.gmra.mxu0 %v4942
        %v5114 = vpop.f32.mrf.mxu0
        %v5115 = vadd.f32 0.0, %v5114
        %v5116 = vpop.f32.mrf.mxu0
        %v5117 = vadd.f32 0.0, %v5116
        %5118 = vmatmul.bf16.gmra.mxu0 %v4944
        %v5119 = vpop.f32.mrf.mxu0
        %v5120 = vadd.f32 0.0, %v5119
        %v5121 = vpop.f32.mrf.mxu0
        %v5122 = vadd.f32 0.0, %v5121
        %5123 = vdwg.mxu0
        %5124 = vmatpush.bf16.msra.mxu0 %v5058
        %5125 = vmatpush.bf16.msra.mxu0 %v5057
        %5126 = vmatpush.bf16.msra.mxu0 %v5056
        %5127 = vmatpush.bf16.msra.mxu0 %v5055
        %5128 = vmatpush.bf16.msra.mxu0 %v5054
        %5129 = vmatpush.bf16.msra.mxu0 %v5053
        %5130 = vmatpush.bf16.msra.mxu0 %v5052
        %5131 = vmatpush.bf16.msra.mxu0 %v5051
        %5132 = vmatmul.bf16.gmra.mxu0 %v4931
        %v5133 = vpop.f32.mrf.mxu0
        %v5134 = vadd.f32 %v5085, %v5133
        %v5135 = vpop.f32.mrf.mxu0
        %v5136 = vadd.f32 %v5087, %v5135
        %5137 = vmatmul.bf16.gmra.mxu0 %v4933
        %v5138 = vpop.f32.mrf.mxu0
        %v5139 = vadd.f32 %v5090, %v5138
        %v5140 = vpop.f32.mrf.mxu0
        %v5141 = vadd.f32 %v5092, %v5140
        %5142 = vmatmul.bf16.gmra.mxu0 %v4935
        %v5143 = vpop.f32.mrf.mxu0
        %v5144 = vadd.f32 %v5095, %v5143
        %v5145 = vpop.f32.mrf.mxu0
        %v5146 = vadd.f32 %v5097, %v5145
        %5147 = vmatmul.bf16.gmra.mxu0 %v4937
        %v5148 = vpop.f32.mrf.mxu0
        %v5149 = vadd.f32 %v5100, %v5148
        %v5150 = vpop.f32.mrf.mxu0
        %v5151 = vadd.f32 %v5102, %v5150
        %5152 = vmatmul.bf16.gmra.mxu0 %v4939
        %v5153 = vpop.f32.mrf.mxu0
        %v5154 = vadd.f32 %v5105, %v5153
        %v5155 = vpop.f32.mrf.mxu0
        %v5156 = vadd.f32 %v5107, %v5155
        %5157 = vmatmul.bf16.gmra.mxu0 %v4941
        %v5158 = vpop.f32.mrf.mxu0
        %v5159 = vadd.f32 %v5110, %v5158
        %v5160 = vpop.f32.mrf.mxu0
        %v5161 = vadd.f32 %v5112, %v5160
        %5162 = vmatmul.bf16.gmra.mxu0 %v4943
        %v5163 = vpop.f32.mrf.mxu0
        %v5164 = vadd.f32 %v5115, %v5163
        %v5165 = vpop.f32.mrf.mxu0
        %v5166 = vadd.f32 %v5117, %v5165
        %5167 = vmatmul.bf16.gmra.mxu0 %v4945
        %v5168 = vpop.f32.mrf.mxu0
        %v5169 = vadd.f32 %v5120, %v5168
        %v5170 = vpop.f32.mrf.mxu0
        %v5171 = vadd.f32 %v5122, %v5170
        %5172 = vdwg.mxu0
        %v5173 = vpack.c.bf16 %v5136, %v5134
        %v5174 = vpack.c.bf16 %v5141, %v5139
        %v5175 = vpack.c.bf16 %v5146, %v5144
        %v5176 = vpack.c.bf16 %v5151, %v5149
        %v5177 = vpack.c.bf16 %v5156, %v5154
        %v5178 = vpack.c.bf16 %v5161, %v5159
        %v5179 = vpack.c.bf16 %v5166, %v5164
        %v5180 = vpack.c.bf16 %v5171, %v5169
        %v5182 = vsel %vm1605, %v5173, 0
        %v5185 = vsel %vm1605, %v5174, 0
        %v5188 = vsel %vm1605, %v5175, 0
        %v5191 = vsel %vm1605, %v5176, 0
        %v5194 = vsel %vm1605, %v5177, 0
        %v5197 = vsel %vm1605, %v5178, 0
        %v5200 = vsel %vm1605, %v5179, 0
        %v5203 = vsel %vm1605, %v5180, 0
        %5205 = vmatpush.bf16.xpose.msra.mxu0 %v5203
        %5206 = vmatpush.bf16.xpose.msra.mxu0 %v5200
        %5207 = vmatpush.bf16.xpose.msra.mxu0 %v5197
        %5208 = vmatpush.bf16.xpose.msra.mxu0 %v5194
        %5209 = vmatpush.bf16.xpose.msra.mxu0 %v5191
        %5210 = vmatpush.bf16.xpose.msra.mxu0 %v5188
        %5211 = vmatpush.bf16.xpose.msra.mxu0 %v5185
        %5212 = vmatpush.bf16.xpose.msra.mxu0 %v5182
        %5213 = vmatmul.bf16.gmra.mxu0 %v5182
        %v5214 = vpop.f32.mrf.mxu0
        %v5215 = vadd.f32 0.0, %v5214
        %v5216 = vpop.f32.mrf.mxu0
        %v5217 = vadd.f32 0.0, %v5216
        %5218 = vmatmul.bf16.gmra.mxu0 %v5185
        %v5219 = vpop.f32.mrf.mxu0
        %v5220 = vadd.f32 0.0, %v5219
        %v5221 = vpop.f32.mrf.mxu0
        %v5222 = vadd.f32 0.0, %v5221
        %5223 = vmatmul.bf16.gmra.mxu0 %v5188
        %v5224 = vpop.f32.mrf.mxu0
        %v5225 = vadd.f32 0.0, %v5224
        %v5226 = vpop.f32.mrf.mxu0
        %v5227 = vadd.f32 0.0, %v5226
        %5228 = vmatmul.bf16.gmra.mxu0 %v5191
        %v5229 = vpop.f32.mrf.mxu0
        %v5230 = vadd.f32 0.0, %v5229
        %v5231 = vpop.f32.mrf.mxu0
        %v5232 = vadd.f32 0.0, %v5231
        %5233 = vmatmul.bf16.gmra.mxu0 %v5194
        %v5234 = vpop.f32.mrf.mxu0
        %v5235 = vadd.f32 0.0, %v5234
        %v5236 = vpop.f32.mrf.mxu0
        %v5237 = vadd.f32 0.0, %v5236
        %5238 = vmatmul.bf16.gmra.mxu0 %v5197
        %v5239 = vpop.f32.mrf.mxu0
        %v5240 = vadd.f32 0.0, %v5239
        %v5241 = vpop.f32.mrf.mxu0
        %v5242 = vadd.f32 0.0, %v5241
        %5243 = vmatmul.bf16.gmra.mxu0 %v5200
        %v5244 = vpop.f32.mrf.mxu0
        %v5245 = vadd.f32 0.0, %v5244
        %v5246 = vpop.f32.mrf.mxu0
        %v5247 = vadd.f32 0.0, %v5246
        %5248 = vmatmul.bf16.gmra.mxu0 %v5203
        %v5249 = vpop.f32.mrf.mxu0
        %v5250 = vadd.f32 0.0, %v5249
        %v5251 = vpop.f32.mrf.mxu0
        %v5252 = vadd.f32 0.0, %v5251
        %5253 = vdwg.mxu0
        %5254 = vmax.xlane.f32.xlu0 %v5215
        %v5255 = vpop.xlane.xlu0 %5254
        %5256 = vmax.xlane.f32.xlu0 %v5217
        %v5257 = vpop.xlane.xlu0 %5256
        %5258 = vmax.xlane.f32.xlu0 %v5220
        %v5259 = vpop.xlane.xlu0 %5258
        %5260 = vmax.xlane.f32.xlu0 %v5222
        %v5261 = vpop.xlane.xlu0 %5260
        %5262 = vmax.xlane.f32.xlu0 %v5225
        %v5263 = vpop.xlane.xlu0 %5262
        %5264 = vmax.xlane.f32.xlu0 %v5227
        %v5265 = vpop.xlane.xlu0 %5264
        %5266 = vmax.xlane.f32.xlu0 %v5230
        %v5267 = vpop.xlane.xlu0 %5266
        %5268 = vmax.xlane.f32.xlu0 %v5232
        %v5269 = vpop.xlane.xlu0 %5268
        %5270 = vmax.xlane.f32.xlu0 %v5235
        %v5271 = vpop.xlane.xlu0 %5270
        %5272 = vmax.xlane.f32.xlu0 %v5237
        %v5273 = vpop.xlane.xlu0 %5272
        %5274 = vmax.xlane.f32.xlu0 %v5240
        %v5275 = vpop.xlane.xlu0 %5274
        %5276 = vmax.xlane.f32.xlu0 %v5242
        %v5277 = vpop.xlane.xlu0 %5276
        %5278 = vmax.xlane.f32.xlu0 %v5245
        %v5279 = vpop.xlane.xlu0 %5278
        %5280 = vmax.xlane.f32.xlu0 %v5247
        %v5281 = vpop.xlane.xlu0 %5280
        %5282 = vmax.xlane.f32.xlu0 %v5250
        %v5283 = vpop.xlane.xlu0 %5282
        %5284 = vmax.xlane.f32.xlu0 %v5252
        %v5285 = vpop.xlane.xlu0 %5284
        %v5286 = vsub.f32 %v5215, %v5255
        %v5287 = vsub.f32 %v5217, %v5257
        %v5288 = vsub.f32 %v5220, %v5259
        %v5289 = vsub.f32 %v5222, %v5261
        %v5290 = vsub.f32 %v5225, %v5263
        %v5291 = vsub.f32 %v5227, %v5265
        %v5292 = vsub.f32 %v5230, %v5267
        %v5293 = vsub.f32 %v5232, %v5269
        %v5294 = vsub.f32 %v5235, %v5271
        %v5295 = vsub.f32 %v5237, %v5273
        %v5296 = vsub.f32 %v5240, %v5275
        %v5297 = vsub.f32 %v5242, %v5277
        %v5298 = vsub.f32 %v5245, %v5279
        %v5299 = vsub.f32 %v5247, %v5281
        %v5300 = vsub.f32 %v5250, %v5283
        %v5301 = vsub.f32 %v5252, %v5285
        %v5302 = vmul.f32 %v5286, 1.442695
        %v5303 = vpow.pop %v5302
        %v5304 = vmul.f32 %v5287, 1.442695
        %v5305 = vpow.pop %v5304
        %v5306 = vmul.f32 %v5288, 1.442695
        %v5307 = vpow.pop %v5306
        %v5308 = vmul.f32 %v5289, 1.442695
        %v5309 = vpow.pop %v5308
        %v5310 = vmul.f32 %v5290, 1.442695
        %v5311 = vpow.pop %v5310
        %v5312 = vmul.f32 %v5291, 1.442695
        %v5313 = vpow.pop %v5312
        %v5314 = vmul.f32 %v5292, 1.442695
        %v5315 = vpow.pop %v5314
        %v5316 = vmul.f32 %v5293, 1.442695
        %v5317 = vpow.pop %v5316
        %v5318 = vmul.f32 %v5294, 1.442695
        %v5319 = vpow.pop %v5318
        %v5320 = vmul.f32 %v5295, 1.442695
        %v5321 = vpow.pop %v5320
        %v5322 = vmul.f32 %v5296, 1.442695
        %v5323 = vpow.pop %v5322
        %v5324 = vmul.f32 %v5297, 1.442695
        %v5325 = vpow.pop %v5324
        %v5326 = vmul.f32 %v5298, 1.442695
        %v5327 = vpow.pop %v5326
        %v5328 = vmul.f32 %v5299, 1.442695
        %v5329 = vpow.pop %v5328
        %v5330 = vmul.f32 %v5300, 1.442695
        %v5331 = vpow.pop %v5330
        %v5332 = vmul.f32 %v5301, 1.442695
        %v5333 = vpow.pop %v5332
        %5334 = vadd.xlane.f32.xlu0 %v5303
        %v5335 = vpop.xlane.xlu0 %5334
        %5336 = vadd.xlane.f32.xlu0 %v5305
        %v5337 = vpop.xlane.xlu0 %5336
        %5338 = vadd.xlane.f32.xlu0 %v5307
        %v5339 = vpop.xlane.xlu0 %5338
        %5340 = vadd.xlane.f32.xlu0 %v5309
        %v5341 = vpop.xlane.xlu0 %5340
        %5342 = vadd.xlane.f32.xlu0 %v5311
        %v5343 = vpop.xlane.xlu0 %5342
        %5344 = vadd.xlane.f32.xlu0 %v5313
        %v5345 = vpop.xlane.xlu0 %5344
        %5346 = vadd.xlane.f32.xlu0 %v5315
        %v5347 = vpop.xlane.xlu0 %5346
        %5348 = vadd.xlane.f32.xlu0 %v5317
        %v5349 = vpop.xlane.xlu0 %5348
        %5350 = vadd.xlane.f32.xlu0 %v5319
        %v5351 = vpop.xlane.xlu0 %5350
        %5352 = vadd.xlane.f32.xlu0 %v5321
        %v5353 = vpop.xlane.xlu0 %5352
        %5354 = vadd.xlane.f32.xlu0 %v5323
        %v5355 = vpop.xlane.xlu0 %5354
        %5356 = vadd.xlane.f32.xlu0 %v5325
        %v5357 = vpop.xlane.xlu0 %5356
        %5358 = vadd.xlane.f32.xlu0 %v5327
        %v5359 = vpop.xlane.xlu0 %5358
        %5360 = vadd.xlane.f32.xlu0 %v5329
        %v5361 = vpop.xlane.xlu0 %5360
        %5362 = vadd.xlane.f32.xlu0 %v5331
        %v5363 = vpop.xlane.xlu0 %5362
        %5364 = vadd.xlane.f32.xlu0 %v5333
        %v5365 = vpop.xlane.xlu0 %5364
        %v5366 = vrcp.pop %v5335
        %v5367 = vmul.f32 %v5335, %v5366
        %v5368 = vsub.f32 1.0, %v5367
        %v5369 = vmul.f32 %v5366, %v5368
        %v5370 = vadd.f32 %v5366, %v5369
        %vm5371 = vweird.f32 %v5335
        %vm5372 = vweird.f32 %v5366
        %vm5373 = vmor %vm5371, %vm5372
        %v5374 = vsel %vm5373, %v5366, %v5370
        %v5375 = vand.u32 2147483647, %v5335
        %vm5376 = vcmp.eq.f32.partialorder %v5375, 8.507059e+37
        %v5377 = vand.u32 %v5335, 2147483648
        %v5378 = vor.u32 1.1754944e-38, %v5377
        %v5379 = vsel %vm5376, %v5378, %v5374
        %v5380 = vmul.f32 %v5303, %v5379
        %v5381 = vrcp.pop %v5337
        %v5382 = vmul.f32 %v5337, %v5381
        %v5383 = vsub.f32 1.0, %v5382
        %v5384 = vmul.f32 %v5381, %v5383
        %v5385 = vadd.f32 %v5381, %v5384
        %vm5386 = vweird.f32 %v5337
        %vm5387 = vweird.f32 %v5381
        %vm5388 = vmor %vm5386, %vm5387
        %v5389 = vsel %vm5388, %v5381, %v5385
        %v5390 = vand.u32 2147483647, %v5337
        %vm5391 = vcmp.eq.f32.partialorder %v5390, 8.507059e+37
        %v5392 = vand.u32 %v5337, 2147483648
        %v5393 = vor.u32 1.1754944e-38, %v5392
        %v5394 = vsel %vm5391, %v5393, %v5389
        %v5395 = vmul.f32 %v5305, %v5394
        %v5396 = vrcp.pop %v5339
        %v5397 = vmul.f32 %v5339, %v5396
        %v5398 = vsub.f32 1.0, %v5397
        %v5399 = vmul.f32 %v5396, %v5398
        %v5400 = vadd.f32 %v5396, %v5399
        %vm5401 = vweird.f32 %v5339
        %vm5402 = vweird.f32 %v5396
        %vm5403 = vmor %vm5401, %vm5402
        %v5404 = vsel %vm5403, %v5396, %v5400
        %v5405 = vand.u32 2147483647, %v5339
        %vm5406 = vcmp.eq.f32.partialorder %v5405, 8.507059e+37
        %v5407 = vand.u32 %v5339, 2147483648
        %v5408 = vor.u32 1.1754944e-38, %v5407
        %v5409 = vsel %vm5406, %v5408, %v5404
        %v5410 = vmul.f32 %v5307, %v5409
        %v5411 = vrcp.pop %v5341
        %v5412 = vmul.f32 %v5341, %v5411
        %v5413 = vsub.f32 1.0, %v5412
        %v5414 = vmul.f32 %v5411, %v5413
        %v5415 = vadd.f32 %v5411, %v5414
        %vm5416 = vweird.f32 %v5341
        %vm5417 = vweird.f32 %v5411
        %vm5418 = vmor %vm5416, %vm5417
        %v5419 = vsel %vm5418, %v5411, %v5415
        %v5420 = vand.u32 2147483647, %v5341
        %vm5421 = vcmp.eq.f32.partialorder %v5420, 8.507059e+37
        %v5422 = vand.u32 %v5341, 2147483648
        %v5423 = vor.u32 1.1754944e-38, %v5422
        %v5424 = vsel %vm5421, %v5423, %v5419
        %v5425 = vmul.f32 %v5309, %v5424
        %v5426 = vrcp.pop %v5343
        %v5427 = vmul.f32 %v5343, %v5426
        %v5428 = vsub.f32 1.0, %v5427
        %v5429 = vmul.f32 %v5426, %v5428
        %v5430 = vadd.f32 %v5426, %v5429
        %vm5431 = vweird.f32 %v5343
        %vm5432 = vweird.f32 %v5426
        %vm5433 = vmor %vm5431, %vm5432
        %v5434 = vsel %vm5433, %v5426, %v5430
        %v5435 = vand.u32 2147483647, %v5343
        %vm5436 = vcmp.eq.f32.partialorder %v5435, 8.507059e+37
        %v5437 = vand.u32 %v5343, 2147483648
        %v5438 = vor.u32 1.1754944e-38, %v5437
        %v5439 = vsel %vm5436, %v5438, %v5434
        %v5440 = vmul.f32 %v5311, %v5439
        %v5441 = vrcp.pop %v5345
        %v5442 = vmul.f32 %v5345, %v5441
        %v5443 = vsub.f32 1.0, %v5442
        %v5444 = vmul.f32 %v5441, %v5443
        %v5445 = vadd.f32 %v5441, %v5444
        %vm5446 = vweird.f32 %v5345
        %vm5447 = vweird.f32 %v5441
        %vm5448 = vmor %vm5446, %vm5447
        %v5449 = vsel %vm5448, %v5441, %v5445
        %v5450 = vand.u32 2147483647, %v5345
        %vm5451 = vcmp.eq.f32.partialorder %v5450, 8.507059e+37
        %v5452 = vand.u32 %v5345, 2147483648
        %v5453 = vor.u32 1.1754944e-38, %v5452
        %v5454 = vsel %vm5451, %v5453, %v5449
        %v5455 = vmul.f32 %v5313, %v5454
        %v5456 = vrcp.pop %v5347
        %v5457 = vmul.f32 %v5347, %v5456
        %v5458 = vsub.f32 1.0, %v5457
        %v5459 = vmul.f32 %v5456, %v5458
        %v5460 = vadd.f32 %v5456, %v5459
        %vm5461 = vweird.f32 %v5347
        %vm5462 = vweird.f32 %v5456
        %vm5463 = vmor %vm5461, %vm5462
        %v5464 = vsel %vm5463, %v5456, %v5460
        %v5465 = vand.u32 2147483647, %v5347
        %vm5466 = vcmp.eq.f32.partialorder %v5465, 8.507059e+37
        %v5467 = vand.u32 %v5347, 2147483648
        %v5468 = vor.u32 1.1754944e-38, %v5467
        %v5469 = vsel %vm5466, %v5468, %v5464
        %v5470 = vmul.f32 %v5315, %v5469
        %v5471 = vrcp.pop %v5349
        %v5472 = vmul.f32 %v5349, %v5471
        %v5473 = vsub.f32 1.0, %v5472
        %v5474 = vmul.f32 %v5471, %v5473
        %v5475 = vadd.f32 %v5471, %v5474
        %vm5476 = vweird.f32 %v5349
        %vm5477 = vweird.f32 %v5471
        %vm5478 = vmor %vm5476, %vm5477
        %v5479 = vsel %vm5478, %v5471, %v5475
        %v5480 = vand.u32 2147483647, %v5349
        %vm5481 = vcmp.eq.f32.partialorder %v5480, 8.507059e+37
        %v5482 = vand.u32 %v5349, 2147483648
        %v5483 = vor.u32 1.1754944e-38, %v5482
        %v5484 = vsel %vm5481, %v5483, %v5479
        %v5485 = vmul.f32 %v5317, %v5484
        %v5486 = vrcp.pop %v5351
        %v5487 = vmul.f32 %v5351, %v5486
        %v5488 = vsub.f32 1.0, %v5487
        %v5489 = vmul.f32 %v5486, %v5488
        %v5490 = vadd.f32 %v5486, %v5489
        %vm5491 = vweird.f32 %v5351
        %vm5492 = vweird.f32 %v5486
        %vm5493 = vmor %vm5491, %vm5492
        %v5494 = vsel %vm5493, %v5486, %v5490
        %v5495 = vand.u32 2147483647, %v5351
        %vm5496 = vcmp.eq.f32.partialorder %v5495, 8.507059e+37
        %v5497 = vand.u32 %v5351, 2147483648
        %v5498 = vor.u32 1.1754944e-38, %v5497
        %v5499 = vsel %vm5496, %v5498, %v5494
        %v5500 = vmul.f32 %v5319, %v5499
        %v5501 = vrcp.pop %v5353
        %v5502 = vmul.f32 %v5353, %v5501
        %v5503 = vsub.f32 1.0, %v5502
        %v5504 = vmul.f32 %v5501, %v5503
        %v5505 = vadd.f32 %v5501, %v5504
        %vm5506 = vweird.f32 %v5353
        %vm5507 = vweird.f32 %v5501
        %vm5508 = vmor %vm5506, %vm5507
        %v5509 = vsel %vm5508, %v5501, %v5505
        %v5510 = vand.u32 2147483647, %v5353
        %vm5511 = vcmp.eq.f32.partialorder %v5510, 8.507059e+37
        %v5512 = vand.u32 %v5353, 2147483648
        %v5513 = vor.u32 1.1754944e-38, %v5512
        %v5514 = vsel %vm5511, %v5513, %v5509
        %v5515 = vmul.f32 %v5321, %v5514
        %v5516 = vrcp.pop %v5355
        %v5517 = vmul.f32 %v5355, %v5516
        %v5518 = vsub.f32 1.0, %v5517
        %v5519 = vmul.f32 %v5516, %v5518
        %v5520 = vadd.f32 %v5516, %v5519
        %vm5521 = vweird.f32 %v5355
        %vm5522 = vweird.f32 %v5516
        %vm5523 = vmor %vm5521, %vm5522
        %v5524 = vsel %vm5523, %v5516, %v5520
        %v5525 = vand.u32 2147483647, %v5355
        %vm5526 = vcmp.eq.f32.partialorder %v5525, 8.507059e+37
        %v5527 = vand.u32 %v5355, 2147483648
        %v5528 = vor.u32 1.1754944e-38, %v5527
        %v5529 = vsel %vm5526, %v5528, %v5524
        %v5530 = vmul.f32 %v5323, %v5529
        %v5531 = vrcp.pop %v5357
        %v5532 = vmul.f32 %v5357, %v5531
        %v5533 = vsub.f32 1.0, %v5532
        %v5534 = vmul.f32 %v5531, %v5533
        %v5535 = vadd.f32 %v5531, %v5534
        %vm5536 = vweird.f32 %v5357
        %vm5537 = vweird.f32 %v5531
        %vm5538 = vmor %vm5536, %vm5537
        %v5539 = vsel %vm5538, %v5531, %v5535
        %v5540 = vand.u32 2147483647, %v5357
        %vm5541 = vcmp.eq.f32.partialorder %v5540, 8.507059e+37
        %v5542 = vand.u32 %v5357, 2147483648
        %v5543 = vor.u32 1.1754944e-38, %v5542
        %v5544 = vsel %vm5541, %v5543, %v5539
        %v5545 = vmul.f32 %v5325, %v5544
        %v5546 = vrcp.pop %v5359
        %v5547 = vmul.f32 %v5359, %v5546
        %v5548 = vsub.f32 1.0, %v5547
        %v5549 = vmul.f32 %v5546, %v5548
        %v5550 = vadd.f32 %v5546, %v5549
        %vm5551 = vweird.f32 %v5359
        %vm5552 = vweird.f32 %v5546
        %vm5553 = vmor %vm5551, %vm5552
        %v5554 = vsel %vm5553, %v5546, %v5550
        %v5555 = vand.u32 2147483647, %v5359
        %vm5556 = vcmp.eq.f32.partialorder %v5555, 8.507059e+37
        %v5557 = vand.u32 %v5359, 2147483648
        %v5558 = vor.u32 1.1754944e-38, %v5557
        %v5559 = vsel %vm5556, %v5558, %v5554
        %v5560 = vmul.f32 %v5327, %v5559
        %v5561 = vrcp.pop %v5361
        %v5562 = vmul.f32 %v5361, %v5561
        %v5563 = vsub.f32 1.0, %v5562
        %v5564 = vmul.f32 %v5561, %v5563
        %v5565 = vadd.f32 %v5561, %v5564
        %vm5566 = vweird.f32 %v5361
        %vm5567 = vweird.f32 %v5561
        %vm5568 = vmor %vm5566, %vm5567
        %v5569 = vsel %vm5568, %v5561, %v5565
        %v5570 = vand.u32 2147483647, %v5361
        %vm5571 = vcmp.eq.f32.partialorder %v5570, 8.507059e+37
        %v5572 = vand.u32 %v5361, 2147483648
        %v5573 = vor.u32 1.1754944e-38, %v5572
        %v5574 = vsel %vm5571, %v5573, %v5569
        %v5575 = vmul.f32 %v5329, %v5574
        %v5576 = vrcp.pop %v5363
        %v5577 = vmul.f32 %v5363, %v5576
        %v5578 = vsub.f32 1.0, %v5577
        %v5579 = vmul.f32 %v5576, %v5578
        %v5580 = vadd.f32 %v5576, %v5579
        %vm5581 = vweird.f32 %v5363
        %vm5582 = vweird.f32 %v5576
        %vm5583 = vmor %vm5581, %vm5582
        %v5584 = vsel %vm5583, %v5576, %v5580
        %v5585 = vand.u32 2147483647, %v5363
        %vm5586 = vcmp.eq.f32.partialorder %v5585, 8.507059e+37
        %v5587 = vand.u32 %v5363, 2147483648
        %v5588 = vor.u32 1.1754944e-38, %v5587
        %v5589 = vsel %vm5586, %v5588, %v5584
        %v5590 = vmul.f32 %v5331, %v5589
        %v5591 = vrcp.pop %v5365
        %v5592 = vmul.f32 %v5365, %v5591
        %v5593 = vsub.f32 1.0, %v5592
        %v5594 = vmul.f32 %v5591, %v5593
        %v5595 = vadd.f32 %v5591, %v5594
        %vm5596 = vweird.f32 %v5365
        %vm5597 = vweird.f32 %v5591
        %vm5598 = vmor %vm5596, %vm5597
        %v5599 = vsel %vm5598, %v5591, %v5595
        %v5600 = vand.u32 2147483647, %v5365
        %vm5601 = vcmp.eq.f32.partialorder %v5600, 8.507059e+37
        %v5602 = vand.u32 %v5365, 2147483648
        %v5603 = vor.u32 1.1754944e-38, %v5602
        %v5604 = vsel %vm5601, %v5603, %v5599
        %v5605 = vmul.f32 %v5333, %v5604
        %v5606 = vadd.f32 %v5380, %v5395
        %v5607 = vadd.f32 %v5606, %v5410
        %v5608 = vadd.f32 %v5607, %v5425
        %v5609 = vadd.f32 %v5608, %v5440
        %v5610 = vadd.f32 %v5609, %v5455
        %v5611 = vadd.f32 %v5610, %v5470
        %v5612 = vadd.f32 %v5611, %v5485
        %v5613 = vadd.f32 %v5612, %v5500
        %v5614 = vadd.f32 %v5613, %v5515
        %v5615 = vadd.f32 %v5614, %v5530
        %v5616 = vadd.f32 %v5615, %v5545
        %v5617 = vadd.f32 %v5616, %v5560
        %v5618 = vadd.f32 %v5617, %v5575
        %v5619 = vadd.f32 %v5618, %v5590
        %v5620 = vadd.f32 %v5619, %v5605
        %v5621 = vrot.slane %v5620, 4
        %v5622 = vadd.f32 %v5620, %v5621
        %v5623 = vrot.slane %v5622, 2
        %v5624 = vadd.f32 %v5622, %v5623
        %v5625 = vrot.slane %v5624, 1
        %v5626 = vadd.f32 %v5624, %v5625
        %v5627 = vadd.f32 %v5626, 1e-09
        %v5628 = vrcp.pop %v5627
        %v5629 = vmul.f32 %v5380, %v5628
        %v5630 = vmul.f32 %v5395, %v5628
        %v5631 = vmul.f32 %v5410, %v5628
        %v5632 = vmul.f32 %v5425, %v5628
        %v5633 = vmul.f32 %v5440, %v5628
        %v5634 = vmul.f32 %v5455, %v5628
        %v5635 = vmul.f32 %v5470, %v5628
        %v5636 = vmul.f32 %v5485, %v5628
        %v5637 = vmul.f32 %v5500, %v5628
        %v5638 = vmul.f32 %v5515, %v5628
        %v5639 = vmul.f32 %v5530, %v5628
        %v5640 = vmul.f32 %v5545, %v5628
        %v5641 = vmul.f32 %v5560, %v5628
        %v5642 = vmul.f32 %v5575, %v5628
        %v5643 = vmul.f32 %v5590, %v5628
        %v5644 = vmul.f32 %v5605, %v5628
        %s5645 = scalar_lea.vmem %s6, 512
        %v5646 = vld [vmem:[%s5645] sm:$0xff]
        %v5647 = vld [vmem:[%s5645 + $0x8] sm:$0xff]
        %v5648 = vld [vmem:[%s5645 + $0x10] sm:$0xff]
        %v5649 = vld [vmem:[%s5645 + $0x18] sm:$0xff]
        %v5650 = vld [vmem:[%s5645 + $0x20] sm:$0xff]
        %v5651 = vld [vmem:[%s5645 + $0x28] sm:$0xff]
        %v5652 = vld [vmem:[%s5645 + $0x30] sm:$0xff]
        %v5653 = vld [vmem:[%s5645 + $0x38] sm:$0xff]
        %v5654 = vld [vmem:[%s5645 + $0x40] sm:$0xff]
        %v5655 = vld [vmem:[%s5645 + $0x48] sm:$0xff]
        %v5656 = vld [vmem:[%s5645 + $0x50] sm:$0xff]
        %v5657 = vld [vmem:[%s5645 + $0x58] sm:$0xff]
        %v5658 = vld [vmem:[%s5645 + $0x60] sm:$0xff]
        %v5659 = vld [vmem:[%s5645 + $0x68] sm:$0xff]
        %v5660 = vld [vmem:[%s5645 + $0x70] sm:$0xff]
        %v5661 = vld [vmem:[%s5645 + $0x78] sm:$0xff]
        %v5662 = vld [vmem:[%s5645 + $0x80] sm:$0xff]
        %v5663 = vld [vmem:[%s5645 + $0x88] sm:$0xff]
        %v5664 = vld [vmem:[%s5645 + $0x90] sm:$0xff]
        %v5665 = vld [vmem:[%s5645 + $0x98] sm:$0xff]
        %v5666 = vld [vmem:[%s5645 + $0xa0] sm:$0xff]
        %v5667 = vld [vmem:[%s5645 + $0xa8] sm:$0xff]
        %v5668 = vld [vmem:[%s5645 + $0xb0] sm:$0xff]
        %v5669 = vld [vmem:[%s5645 + $0xb8] sm:$0xff]
        %v5670 = vld [vmem:[%s5645 + $0xc0] sm:$0xff]
        %v5671 = vld [vmem:[%s5645 + $0xc8] sm:$0xff]
        %v5672 = vld [vmem:[%s5645 + $0xd0] sm:$0xff]
        %v5673 = vld [vmem:[%s5645 + $0xd8] sm:$0xff]
        %v5674 = vld [vmem:[%s5645 + $0xe0] sm:$0xff]
        %v5675 = vld [vmem:[%s5645 + $0xe8] sm:$0xff]
        %v5676 = vld [vmem:[%s5645 + $0xf0] sm:$0xff]
        %v5677 = vld [vmem:[%s5645 + $0xf8] sm:$0xff]
        %s5678 = scalar_lea.vmem %s7, 4
        %v5679 = vld [vmem:[%s5678] sm:$0x3]
        %v5681 = vperm.slane %v5679, 0
        %v5682 = vperm.slane %v5679, 1
        %v5717 = vunpack.c.l.b16 %v5646
        %v5718 = vunpack.c.h.b16 %v5646
        %v5719 = vunpack.c.l.b16 %v5647
        %v5720 = vunpack.c.h.b16 %v5647
        %v5721 = vunpack.c.l.b16 %v5648
        %v5722 = vunpack.c.h.b16 %v5648
        %v5723 = vunpack.c.l.b16 %v5649
        %v5724 = vunpack.c.h.b16 %v5649
        %v5725 = vunpack.c.l.b16 %v5650
        %v5726 = vunpack.c.h.b16 %v5650
        %v5727 = vunpack.c.l.b16 %v5651
        %v5728 = vunpack.c.h.b16 %v5651
        %v5729 = vunpack.c.l.b16 %v5652
        %v5730 = vunpack.c.h.b16 %v5652
        %v5731 = vunpack.c.l.b16 %v5653
        %v5732 = vunpack.c.h.b16 %v5653
        %v5733 = vunpack.c.l.b16 %v5654
        %v5734 = vunpack.c.h.b16 %v5654
        %v5735 = vunpack.c.l.b16 %v5655
        %v5736 = vunpack.c.h.b16 %v5655
        %v5737 = vunpack.c.l.b16 %v5656
        %v5738 = vunpack.c.h.b16 %v5656
        %v5739 = vunpack.c.l.b16 %v5657
        %v5740 = vunpack.c.h.b16 %v5657
        %v5741 = vunpack.c.l.b16 %v5658
        %v5742 = vunpack.c.h.b16 %v5658
        %v5743 = vunpack.c.l.b16 %v5659
        %v5744 = vunpack.c.h.b16 %v5659
        %v5745 = vunpack.c.l.b16 %v5660
        %v5746 = vunpack.c.h.b16 %v5660
        %v5747 = vunpack.c.l.b16 %v5661
        %v5748 = vunpack.c.h.b16 %v5661
        %v5749 = vunpack.c.l.b16 %v5662
        %v5750 = vunpack.c.h.b16 %v5662
        %v5751 = vunpack.c.l.b16 %v5663
        %v5752 = vunpack.c.h.b16 %v5663
        %v5753 = vunpack.c.l.b16 %v5664
        %v5754 = vunpack.c.h.b16 %v5664
        %v5755 = vunpack.c.l.b16 %v5665
        %v5756 = vunpack.c.h.b16 %v5665
        %v5757 = vunpack.c.l.b16 %v5666
        %v5758 = vunpack.c.h.b16 %v5666
        %v5759 = vunpack.c.l.b16 %v5667
        %v5760 = vunpack.c.h.b16 %v5667
        %v5761 = vunpack.c.l.b16 %v5668
        %v5762 = vunpack.c.h.b16 %v5668
        %v5763 = vunpack.c.l.b16 %v5669
        %v5764 = vunpack.c.h.b16 %v5669
        %v5765 = vunpack.c.l.b16 %v5670
        %v5766 = vunpack.c.h.b16 %v5670
        %v5767 = vunpack.c.l.b16 %v5671
        %v5768 = vunpack.c.h.b16 %v5671
        %v5769 = vunpack.c.l.b16 %v5672
        %v5770 = vunpack.c.h.b16 %v5672
        %v5771 = vunpack.c.l.b16 %v5673
        %v5772 = vunpack.c.h.b16 %v5673
        %v5773 = vunpack.c.l.b16 %v5674
        %v5774 = vunpack.c.h.b16 %v5674
        %v5775 = vunpack.c.l.b16 %v5675
        %v5776 = vunpack.c.h.b16 %v5675
        %v5777 = vunpack.c.l.b16 %v5676
        %v5778 = vunpack.c.h.b16 %v5676
        %v5779 = vunpack.c.l.b16 %v5677
        %v5780 = vunpack.c.h.b16 %v5677
        %v5781 = vpack.c.b16 %v5719, %v5717
        %v5782 = vpack.c.b16 %v5720, %v5718
        %v5783 = vpack.c.b16 %v5723, %v5721
        %v5784 = vpack.c.b16 %v5724, %v5722
        %v5785 = vpack.c.b16 %v5727, %v5725
        %v5786 = vpack.c.b16 %v5728, %v5726
        %v5787 = vpack.c.b16 %v5731, %v5729
        %v5788 = vpack.c.b16 %v5732, %v5730
        %v5789 = vpack.c.b16 %v5735, %v5733
        %v5790 = vpack.c.b16 %v5736, %v5734
        %v5791 = vpack.c.b16 %v5739, %v5737
        %v5792 = vpack.c.b16 %v5740, %v5738
        %v5793 = vpack.c.b16 %v5743, %v5741
        %v5794 = vpack.c.b16 %v5744, %v5742
        %v5795 = vpack.c.b16 %v5747, %v5745
        %v5796 = vpack.c.b16 %v5748, %v5746
        %v5797 = vpack.c.b16 %v5751, %v5749
        %v5798 = vpack.c.b16 %v5752, %v5750
        %v5799 = vpack.c.b16 %v5755, %v5753
        %v5800 = vpack.c.b16 %v5756, %v5754
        %v5801 = vpack.c.b16 %v5759, %v5757
        %v5802 = vpack.c.b16 %v5760, %v5758
        %v5803 = vpack.c.b16 %v5763, %v5761
        %v5804 = vpack.c.b16 %v5764, %v5762
        %v5805 = vpack.c.b16 %v5767, %v5765
        %v5806 = vpack.c.b16 %v5768, %v5766
        %v5807 = vpack.c.b16 %v5771, %v5769
        %v5808 = vpack.c.b16 %v5772, %v5770
        %v5809 = vpack.c.b16 %v5775, %v5773
        %v5810 = vpack.c.b16 %v5776, %v5774
        %v5811 = vpack.c.b16 %v5779, %v5777
        %v5812 = vpack.c.b16 %v5780, %v5778
        %5845 = vmatpush.bf16.msra.mxu0 %v5795
        %5846 = vmatpush.bf16.msra.mxu0 %v5793
        %5847 = vmatpush.bf16.msra.mxu0 %v5791
        %5848 = vmatpush.bf16.msra.mxu0 %v5789
        %5849 = vmatpush.bf16.msra.mxu0 %v5787
        %5850 = vmatpush.bf16.msra.mxu0 %v5785
        %5851 = vmatpush.bf16.msra.mxu0 %v5783
        %5852 = vmatpush.bf16.msra.mxu0 %v5781
        %5853 = vmatmul.bf16.gmra.mxu0 %v4930
        %v5854 = vpop.f32.mrf.mxu0
        %v5855 = vadd.f32 %v5681, %v5854
        %v5856 = vpop.f32.mrf.mxu0
        %v5857 = vadd.f32 %v5681, %v5856
        %5858 = vmatmul.bf16.gmra.mxu0 %v4932
        %v5859 = vpop.f32.mrf.mxu0
        %v5860 = vadd.f32 %v5681, %v5859
        %v5861 = vpop.f32.mrf.mxu0
        %v5862 = vadd.f32 %v5681, %v5861
        %5863 = vmatmul.bf16.gmra.mxu0 %v4934
        %v5864 = vpop.f32.mrf.mxu0
        %v5865 = vadd.f32 %v5681, %v5864
        %v5866 = vpop.f32.mrf.mxu0
        %v5867 = vadd.f32 %v5681, %v5866
        %5868 = vmatmul.bf16.gmra.mxu0 %v4936
        %v5869 = vpop.f32.mrf.mxu0
        %v5870 = vadd.f32 %v5681, %v5869
        %v5871 = vpop.f32.mrf.mxu0
        %v5872 = vadd.f32 %v5681, %v5871
        %5873 = vmatmul.bf16.gmra.mxu0 %v4938
        %v5874 = vpop.f32.mrf.mxu0
        %v5875 = vadd.f32 %v5681, %v5874
        %v5876 = vpop.f32.mrf.mxu0
        %v5877 = vadd.f32 %v5681, %v5876
        %5878 = vmatmul.bf16.gmra.mxu0 %v4940
        %v5879 = vpop.f32.mrf.mxu0
        %v5880 = vadd.f32 %v5681, %v5879
        %v5881 = vpop.f32.mrf.mxu0
        %v5882 = vadd.f32 %v5681, %v5881
        %5883 = vmatmul.bf16.gmra.mxu0 %v4942
        %v5884 = vpop.f32.mrf.mxu0
        %v5885 = vadd.f32 %v5681, %v5884
        %v5886 = vpop.f32.mrf.mxu0
        %v5887 = vadd.f32 %v5681, %v5886
        %5888 = vmatmul.bf16.gmra.mxu0 %v4944
        %v5889 = vpop.f32.mrf.mxu0
        %v5890 = vadd.f32 %v5681, %v5889
        %v5891 = vpop.f32.mrf.mxu0
        %v5892 = vadd.f32 %v5681, %v5891
        %5893 = vdwg.mxu0
        %5894 = vmatpush.bf16.msra.mxu0 %v5811
        %5895 = vmatpush.bf16.msra.mxu0 %v5809
        %5896 = vmatpush.bf16.msra.mxu0 %v5807
        %5897 = vmatpush.bf16.msra.mxu0 %v5805
        %5898 = vmatpush.bf16.msra.mxu0 %v5803
        %5899 = vmatpush.bf16.msra.mxu0 %v5801
        %5900 = vmatpush.bf16.msra.mxu0 %v5799
        %5901 = vmatpush.bf16.msra.mxu0 %v5797
        %5902 = vmatmul.bf16.gmra.mxu0 %v4931
        %v5903 = vpop.f32.mrf.mxu0
        %v5904 = vadd.f32 %v5855, %v5903
        %v5905 = vpop.f32.mrf.mxu0
        %v5906 = vadd.f32 %v5857, %v5905
        %5907 = vmatmul.bf16.gmra.mxu0 %v4933
        %v5908 = vpop.f32.mrf.mxu0
        %v5909 = vadd.f32 %v5860, %v5908
        %v5910 = vpop.f32.mrf.mxu0
        %v5911 = vadd.f32 %v5862, %v5910
        %5912 = vmatmul.bf16.gmra.mxu0 %v4935
        %v5913 = vpop.f32.mrf.mxu0
        %v5914 = vadd.f32 %v5865, %v5913
        %v5915 = vpop.f32.mrf.mxu0
        %v5916 = vadd.f32 %v5867, %v5915
        %5917 = vmatmul.bf16.gmra.mxu0 %v4937
        %v5918 = vpop.f32.mrf.mxu0
        %v5919 = vadd.f32 %v5870, %v5918
        %v5920 = vpop.f32.mrf.mxu0
        %v5921 = vadd.f32 %v5872, %v5920
        %5922 = vmatmul.bf16.gmra.mxu0 %v4939
        %v5923 = vpop.f32.mrf.mxu0
        %v5924 = vadd.f32 %v5875, %v5923
        %v5925 = vpop.f32.mrf.mxu0
        %v5926 = vadd.f32 %v5877, %v5925
        %5927 = vmatmul.bf16.gmra.mxu0 %v4941
        %v5928 = vpop.f32.mrf.mxu0
        %v5929 = vadd.f32 %v5880, %v5928
        %v5930 = vpop.f32.mrf.mxu0
        %v5931 = vadd.f32 %v5882, %v5930
        %5932 = vmatmul.bf16.gmra.mxu0 %v4943
        %v5933 = vpop.f32.mrf.mxu0
        %v5934 = vadd.f32 %v5885, %v5933
        %v5935 = vpop.f32.mrf.mxu0
        %v5936 = vadd.f32 %v5887, %v5935
        %5937 = vmatmul.bf16.gmra.mxu0 %v4945
        %v5938 = vpop.f32.mrf.mxu0
        %v5939 = vadd.f32 %v5890, %v5938
        %v5940 = vpop.f32.mrf.mxu0
        %v5941 = vadd.f32 %v5892, %v5940
        %5942 = vdwg.mxu0
        %5943 = vmatpush.bf16.msra.mxu0 %v5796
        %5944 = vmatpush.bf16.msra.mxu0 %v5794
        %5945 = vmatpush.bf16.msra.mxu0 %v5792
        %5946 = vmatpush.bf16.msra.mxu0 %v5790
        %5947 = vmatpush.bf16.msra.mxu0 %v5788
        %5948 = vmatpush.bf16.msra.mxu0 %v5786
        %5949 = vmatpush.bf16.msra.mxu0 %v5784
        %5950 = vmatpush.bf16.msra.mxu0 %v5782
        %5951 = vmatmul.bf16.gmra.mxu0 %v4930
        %v5952 = vpop.f32.mrf.mxu0
        %v5953 = vadd.f32 %v5682, %v5952
        %v5954 = vpop.f32.mrf.mxu0
        %v5955 = vadd.f32 %v5682, %v5954
        %5956 = vmatmul.bf16.gmra.mxu0 %v4932
        %v5957 = vpop.f32.mrf.mxu0
        %v5958 = vadd.f32 %v5682, %v5957
        %v5959 = vpop.f32.mrf.mxu0
        %v5960 = vadd.f32 %v5682, %v5959
        %5961 = vmatmul.bf16.gmra.mxu0 %v4934
        %v5962 = vpop.f32.mrf.mxu0
        %v5963 = vadd.f32 %v5682, %v5962
        %v5964 = vpop.f32.mrf.mxu0
        %v5965 = vadd.f32 %v5682, %v5964
        %5966 = vmatmul.bf16.gmra.mxu0 %v4936
        %v5967 = vpop.f32.mrf.mxu0
        %v5968 = vadd.f32 %v5682, %v5967
        %v5969 = vpop.f32.mrf.mxu0
        %v5970 = vadd.f32 %v5682, %v5969
        %5971 = vmatmul.bf16.gmra.mxu0 %v4938
        %v5972 = vpop.f32.mrf.mxu0
        %v5973 = vadd.f32 %v5682, %v5972
        %v5974 = vpop.f32.mrf.mxu0
        %v5975 = vadd.f32 %v5682, %v5974
        %5976 = vmatmul.bf16.gmra.mxu0 %v4940
        %v5977 = vpop.f32.mrf.mxu0
        %v5978 = vadd.f32 %v5682, %v5977
        %v5979 = vpop.f32.mrf.mxu0
        %v5980 = vadd.f32 %v5682, %v5979
        %5981 = vmatmul.bf16.gmra.mxu0 %v4942
        %v5982 = vpop.f32.mrf.mxu0
        %v5983 = vadd.f32 %v5682, %v5982
        %v5984 = vpop.f32.mrf.mxu0
        %v5985 = vadd.f32 %v5682, %v5984
        %5986 = vmatmul.bf16.gmra.mxu0 %v4944
        %v5987 = vpop.f32.mrf.mxu0
        %v5988 = vadd.f32 %v5682, %v5987
        %v5989 = vpop.f32.mrf.mxu0
        %v5990 = vadd.f32 %v5682, %v5989
        %5991 = vdwg.mxu0
        %5992 = vmatpush.bf16.msra.mxu0 %v5812
        %5993 = vmatpush.bf16.msra.mxu0 %v5810
        %5994 = vmatpush.bf16.msra.mxu0 %v5808
        %5995 = vmatpush.bf16.msra.mxu0 %v5806
        %5996 = vmatpush.bf16.msra.mxu0 %v5804
        %5997 = vmatpush.bf16.msra.mxu0 %v5802
        %5998 = vmatpush.bf16.msra.mxu0 %v5800
        %5999 = vmatpush.bf16.msra.mxu0 %v5798
        %6000 = vmatmul.bf16.gmra.mxu0 %v4931
        %v6001 = vpop.f32.mrf.mxu0
        %v6002 = vadd.f32 %v5953, %v6001
        %v6003 = vpop.f32.mrf.mxu0
        %v6004 = vadd.f32 %v5955, %v6003
        %6005 = vmatmul.bf16.gmra.mxu0 %v4933
        %v6006 = vpop.f32.mrf.mxu0
        %v6007 = vadd.f32 %v5958, %v6006
        %v6008 = vpop.f32.mrf.mxu0
        %v6009 = vadd.f32 %v5960, %v6008
        %6010 = vmatmul.bf16.gmra.mxu0 %v4935
        %v6011 = vpop.f32.mrf.mxu0
        %v6012 = vadd.f32 %v5963, %v6011
        %v6013 = vpop.f32.mrf.mxu0
        %v6014 = vadd.f32 %v5965, %v6013
        %6015 = vmatmul.bf16.gmra.mxu0 %v4937
        %v6016 = vpop.f32.mrf.mxu0
        %v6017 = vadd.f32 %v5968, %v6016
        %v6018 = vpop.f32.mrf.mxu0
        %v6019 = vadd.f32 %v5970, %v6018
        %6020 = vmatmul.bf16.gmra.mxu0 %v4939
        %v6021 = vpop.f32.mrf.mxu0
        %v6022 = vadd.f32 %v5973, %v6021
        %v6023 = vpop.f32.mrf.mxu0
        %v6024 = vadd.f32 %v5975, %v6023
        %6025 = vmatmul.bf16.gmra.mxu0 %v4941
        %v6026 = vpop.f32.mrf.mxu0
        %v6027 = vadd.f32 %v5978, %v6026
        %v6028 = vpop.f32.mrf.mxu0
        %v6029 = vadd.f32 %v5980, %v6028
        %6030 = vmatmul.bf16.gmra.mxu0 %v4943
        %v6031 = vpop.f32.mrf.mxu0
        %v6032 = vadd.f32 %v5983, %v6031
        %v6033 = vpop.f32.mrf.mxu0
        %v6034 = vadd.f32 %v5985, %v6033
        %6035 = vmatmul.bf16.gmra.mxu0 %v4945
        %v6036 = vpop.f32.mrf.mxu0
        %v6037 = vadd.f32 %v5988, %v6036
        %v6038 = vpop.f32.mrf.mxu0
        %v6039 = vadd.f32 %v5990, %v6038
        %6040 = vdwg.mxu0
        %v6041 = vpack.c.bf16 %v5630, %v5629
        %v6042 = vpack.c.bf16 %v5632, %v5631
        %v6043 = vpack.c.bf16 %v5634, %v5633
        %v6044 = vpack.c.bf16 %v5636, %v5635
        %v6045 = vpack.c.bf16 %v5638, %v5637
        %v6046 = vpack.c.bf16 %v5640, %v5639
        %v6047 = vpack.c.bf16 %v5642, %v5641
        %v6048 = vpack.c.bf16 %v5644, %v5643
        %v6049 = vpack.c.bf16 %v5906, %v5904
        %v6050 = vpack.c.bf16 %v6004, %v6002
        %v6051 = vpack.c.bf16 %v5911, %v5909
        %v6052 = vpack.c.bf16 %v6009, %v6007
        %v6053 = vpack.c.bf16 %v5916, %v5914
        %v6054 = vpack.c.bf16 %v6014, %v6012
        %v6055 = vpack.c.bf16 %v5921, %v5919
        %v6056 = vpack.c.bf16 %v6019, %v6017
        %v6057 = vpack.c.bf16 %v5926, %v5924
        %v6058 = vpack.c.bf16 %v6024, %v6022
        %v6059 = vpack.c.bf16 %v5931, %v5929
        %v6060 = vpack.c.bf16 %v6029, %v6027
        %v6061 = vpack.c.bf16 %v5936, %v5934
        %v6062 = vpack.c.bf16 %v6034, %v6032
        %v6063 = vpack.c.bf16 %v5941, %v5939
        %v6064 = vpack.c.bf16 %v6039, %v6037
        %6065 = vxpose.xlu0.c.b16.start [1/8] %v6041, 128
        %6066 = vxpose.xlu0.c.b16.cont [2/8] %v6042, 128
        %6067 = vxpose.xlu0.c.b16.cont [3/8] %v6043, 128
        %6068 = vxpose.xlu0.c.b16.cont [4/8] %v6044, 128
        %6069 = vxpose.xlu0.c.b16.cont [5/8] %v6045, 128
        %6070 = vxpose.xlu0.c.b16.cont [6/8] %v6046, 128
        %6071 = vxpose.xlu0.c.b16.cont [7/8] %v6047, 128
        %6072 = vxpose.xlu0.c.b16.end [8/8] %v6048, 128
        %v6073 = vpop.trf.xlu0
        %v6074 = vpop.trf.xlu0
        %v6075 = vpop.trf.xlu0
        %v6076 = vpop.trf.xlu0
        %v6077 = vpop.trf.xlu0
        %v6078 = vpop.trf.xlu0
        %v6079 = vpop.trf.xlu0
        %v6080 = vpop.trf.xlu0
        %6081 = vmatpush.bf16.msra.mxu0 %v6063
        %6082 = vmatpush.bf16.msra.mxu0 %v6061
        %6083 = vmatpush.bf16.msra.mxu0 %v6059
        %6084 = vmatpush.bf16.msra.mxu0 %v6057
        %6085 = vmatpush.bf16.msra.mxu0 %v6055
        %6086 = vmatpush.bf16.msra.mxu0 %v6053
        %6087 = vmatpush.bf16.msra.mxu0 %v6051
        %6088 = vmatpush.bf16.msra.mxu0 %v6049
        %6089 = vmatmul.bf16.gmra.mxu0 %v6073
        %v6090 = vpop.f32.mrf.mxu0
        %v6091 = vadd.f32 0.0, %v6090
        %v6092 = vpop.f32.mrf.mxu0
        %v6093 = vadd.f32 0.0, %v6092
        %6094 = vmatmul.bf16.gmra.mxu0 %v6074
        %v6095 = vpop.f32.mrf.mxu0
        %v6096 = vadd.f32 0.0, %v6095
        %v6097 = vpop.f32.mrf.mxu0
        %v6098 = vadd.f32 0.0, %v6097
        %6099 = vmatmul.bf16.gmra.mxu0 %v6075
        %v6100 = vpop.f32.mrf.mxu0
        %v6101 = vadd.f32 0.0, %v6100
        %v6102 = vpop.f32.mrf.mxu0
        %v6103 = vadd.f32 0.0, %v6102
        %6104 = vmatmul.bf16.gmra.mxu0 %v6076
        %v6105 = vpop.f32.mrf.mxu0
        %v6106 = vadd.f32 0.0, %v6105
        %v6107 = vpop.f32.mrf.mxu0
        %v6108 = vadd.f32 0.0, %v6107
        %6109 = vmatmul.bf16.gmra.mxu0 %v6077
        %v6110 = vpop.f32.mrf.mxu0
        %v6111 = vadd.f32 0.0, %v6110
        %v6112 = vpop.f32.mrf.mxu0
        %v6113 = vadd.f32 0.0, %v6112
        %6114 = vmatmul.bf16.gmra.mxu0 %v6078
        %v6115 = vpop.f32.mrf.mxu0
        %v6116 = vadd.f32 0.0, %v6115
        %v6117 = vpop.f32.mrf.mxu0
        %v6118 = vadd.f32 0.0, %v6117
        %6119 = vmatmul.bf16.gmra.mxu0 %v6079
        %v6120 = vpop.f32.mrf.mxu0
        %v6121 = vadd.f32 0.0, %v6120
        %v6122 = vpop.f32.mrf.mxu0
        %v6123 = vadd.f32 0.0, %v6122
        %6124 = vmatmul.bf16.gmra.mxu0 %v6080
        %v6125 = vpop.f32.mrf.mxu0
        %v6126 = vadd.f32 0.0, %v6125
        %v6127 = vpop.f32.mrf.mxu0
        %v6128 = vadd.f32 0.0, %v6127
        %6129 = vdwg.mxu0
        %6130 = vmatpush.bf16.msra.mxu0 %v6064
        %6131 = vmatpush.bf16.msra.mxu0 %v6062
        %6132 = vmatpush.bf16.msra.mxu0 %v6060
        %6133 = vmatpush.bf16.msra.mxu0 %v6058
        %6134 = vmatpush.bf16.msra.mxu0 %v6056
        %6135 = vmatpush.bf16.msra.mxu0 %v6054
        %6136 = vmatpush.bf16.msra.mxu0 %v6052
        %6137 = vmatpush.bf16.msra.mxu0 %v6050
        %6138 = vmatmul.bf16.gmra.mxu0 %v6073
        %v6139 = vpop.f32.mrf.mxu0
        %v6140 = vadd.f32 0.0, %v6139
        %v6141 = vpop.f32.mrf.mxu0
        %v6142 = vadd.f32 0.0, %v6141
        %6143 = vmatmul.bf16.gmra.mxu0 %v6074
        %v6144 = vpop.f32.mrf.mxu0
        %v6145 = vadd.f32 0.0, %v6144
        %v6146 = vpop.f32.mrf.mxu0
        %v6147 = vadd.f32 0.0, %v6146
        %6148 = vmatmul.bf16.gmra.mxu0 %v6075
        %v6149 = vpop.f32.mrf.mxu0
        %v6150 = vadd.f32 0.0, %v6149
        %v6151 = vpop.f32.mrf.mxu0
        %v6152 = vadd.f32 0.0, %v6151
        %6153 = vmatmul.bf16.gmra.mxu0 %v6076
        %v6154 = vpop.f32.mrf.mxu0
        %v6155 = vadd.f32 0.0, %v6154
        %v6156 = vpop.f32.mrf.mxu0
        %v6157 = vadd.f32 0.0, %v6156
        %6158 = vmatmul.bf16.gmra.mxu0 %v6077
        %v6159 = vpop.f32.mrf.mxu0
        %v6160 = vadd.f32 0.0, %v6159
        %v6161 = vpop.f32.mrf.mxu0
        %v6162 = vadd.f32 0.0, %v6161
        %6163 = vmatmul.bf16.gmra.mxu0 %v6078
        %v6164 = vpop.f32.mrf.mxu0
        %v6165 = vadd.f32 0.0, %v6164
        %v6166 = vpop.f32.mrf.mxu0
        %v6167 = vadd.f32 0.0, %v6166
        %6168 = vmatmul.bf16.gmra.mxu0 %v6079
        %v6169 = vpop.f32.mrf.mxu0
        %v6170 = vadd.f32 0.0, %v6169
        %v6171 = vpop.f32.mrf.mxu0
        %v6172 = vadd.f32 0.0, %v6171
        %6173 = vmatmul.bf16.gmra.mxu0 %v6080
        %v6174 = vpop.f32.mrf.mxu0
        %v6175 = vadd.f32 0.0, %v6174
        %v6176 = vpop.f32.mrf.mxu0
        %v6177 = vadd.f32 0.0, %v6176
        %6178 = vdwg.mxu0
        %v6179 = vsub.f32 %v4865, %v6091
        %v6180 = vsub.f32 %v4866, %v6140
        %v6181 = vsub.f32 %v4867, %v6093
        %v6182 = vsub.f32 %v4868, %v6142
        %v6183 = vsub.f32 %v4869, %v6096
        %v6184 = vsub.f32 %v4870, %v6145
        %v6185 = vsub.f32 %v4871, %v6098
        %v6186 = vsub.f32 %v4872, %v6147
        %v6187 = vsub.f32 %v4873, %v6101
        %v6188 = vsub.f32 %v4874, %v6150
        %v6189 = vsub.f32 %v4875, %v6103
        %v6190 = vsub.f32 %v4876, %v6152
        %v6191 = vsub.f32 %v4877, %v6106
        %v6192 = vsub.f32 %v4878, %v6155
        %v6193 = vsub.f32 %v4879, %v6108
        %v6194 = vsub.f32 %v4880, %v6157
        %v6195 = vsub.f32 %v4881, %v6111
        %v6196 = vsub.f32 %v4882, %v6160
        %v6197 = vsub.f32 %v4883, %v6113
        %v6198 = vsub.f32 %v4884, %v6162
        %v6199 = vsub.f32 %v4885, %v6116
        %v6200 = vsub.f32 %v4886, %v6165
        %v6201 = vsub.f32 %v4887, %v6118
        %v6202 = vsub.f32 %v4888, %v6167
        %v6203 = vsub.f32 %v4889, %v6121
        %v6204 = vsub.f32 %v4890, %v6170
        %v6205 = vsub.f32 %v4891, %v6123
        %v6206 = vsub.f32 %v4892, %v6172
        %v6207 = vsub.f32 %v4893, %v6126
        %v6208 = vsub.f32 %v4894, %v6175
        %v6209 = vsub.f32 %v4895, %v6128
        %v6210 = vsub.f32 %v4896, %v6177
        %v6211 = vpack.c.bf16 %v6181, %v6179
        %v6212 = vpack.c.bf16 %v6182, %v6180
        %v6213 = vpack.c.bf16 %v6185, %v6183
        %v6214 = vpack.c.bf16 %v6186, %v6184
        %v6215 = vpack.c.bf16 %v6189, %v6187
        %v6216 = vpack.c.bf16 %v6190, %v6188
        %v6217 = vpack.c.bf16 %v6193, %v6191
        %v6218 = vpack.c.bf16 %v6194, %v6192
        %v6219 = vpack.c.bf16 %v6197, %v6195
        %v6220 = vpack.c.bf16 %v6198, %v6196
        %v6221 = vpack.c.bf16 %v6201, %v6199
        %v6222 = vpack.c.bf16 %v6202, %v6200
        %v6223 = vpack.c.bf16 %v6205, %v6203
        %v6224 = vpack.c.bf16 %v6206, %v6204
        %v6225 = vpack.c.bf16 %v6209, %v6207
        %v6226 = vpack.c.bf16 %v6210, %v6208
        %s6227 = scalar_lea.vmem [#allocation7], 512
        %v6228 = vld [vmem:[%s6227] sm:$0xff]
        %v6229 = vld [vmem:[%s6227 + $0x8] sm:$0xff]
        %v6230 = vld [vmem:[%s6227 + $0x10] sm:$0xff]
        %v6231 = vld [vmem:[%s6227 + $0x18] sm:$0xff]
        %v6232 = vld [vmem:[%s6227 + $0x20] sm:$0xff]
        %v6233 = vld [vmem:[%s6227 + $0x28] sm:$0xff]
        %v6234 = vld [vmem:[%s6227 + $0x30] sm:$0xff]
        %v6235 = vld [vmem:[%s6227 + $0x38] sm:$0xff]
        %v6236 = vld [vmem:[%s6227 + $0x40] sm:$0xff]
        %v6237 = vld [vmem:[%s6227 + $0x48] sm:$0xff]
        %v6238 = vld [vmem:[%s6227 + $0x50] sm:$0xff]
        %v6239 = vld [vmem:[%s6227 + $0x58] sm:$0xff]
        %v6240 = vld [vmem:[%s6227 + $0x60] sm:$0xff]
        %v6241 = vld [vmem:[%s6227 + $0x68] sm:$0xff]
        %v6242 = vld [vmem:[%s6227 + $0x70] sm:$0xff]
        %v6243 = vld [vmem:[%s6227 + $0x78] sm:$0xff]
        %v6244 = vld [vmem:[%s6227 + $0x80] sm:$0xff]
        %v6245 = vld [vmem:[%s6227 + $0x88] sm:$0xff]
        %v6246 = vld [vmem:[%s6227 + $0x90] sm:$0xff]
        %v6247 = vld [vmem:[%s6227 + $0x98] sm:$0xff]
        %v6248 = vld [vmem:[%s6227 + $0xa0] sm:$0xff]
        %v6249 = vld [vmem:[%s6227 + $0xa8] sm:$0xff]
        %v6250 = vld [vmem:[%s6227 + $0xb0] sm:$0xff]
        %v6251 = vld [vmem:[%s6227 + $0xb8] sm:$0xff]
        %v6252 = vld [vmem:[%s6227 + $0xc0] sm:$0xff]
        %v6253 = vld [vmem:[%s6227 + $0xc8] sm:$0xff]
        %v6254 = vld [vmem:[%s6227 + $0xd0] sm:$0xff]
        %v6255 = vld [vmem:[%s6227 + $0xd8] sm:$0xff]
        %v6256 = vld [vmem:[%s6227 + $0xe0] sm:$0xff]
        %v6257 = vld [vmem:[%s6227 + $0xe8] sm:$0xff]
        %v6258 = vld [vmem:[%s6227 + $0xf0] sm:$0xff]
        %v6259 = vld [vmem:[%s6227 + $0xf8] sm:$0xff]
        %s6260 = scalar_lea.vmem [#allocation9], 4
        %v6261 = vld [vmem:[%s6260] sm:$0x3]
        %v6263 = vperm.slane %v6261, 0
        %v6264 = vperm.slane %v6261, 1
        %v6299 = vunpack.c.l.b16 %v6228
        %v6300 = vunpack.c.h.b16 %v6228
        %v6301 = vunpack.c.l.b16 %v6229
        %v6302 = vunpack.c.h.b16 %v6229
        %v6303 = vunpack.c.l.b16 %v6230
        %v6304 = vunpack.c.h.b16 %v6230
        %v6305 = vunpack.c.l.b16 %v6231
        %v6306 = vunpack.c.h.b16 %v6231
        %v6307 = vunpack.c.l.b16 %v6232
        %v6308 = vunpack.c.h.b16 %v6232
        %v6309 = vunpack.c.l.b16 %v6233
        %v6310 = vunpack.c.h.b16 %v6233
        %v6311 = vunpack.c.l.b16 %v6234
        %v6312 = vunpack.c.h.b16 %v6234
        %v6313 = vunpack.c.l.b16 %v6235
        %v6314 = vunpack.c.h.b16 %v6235
        %v6315 = vunpack.c.l.b16 %v6236
        %v6316 = vunpack.c.h.b16 %v6236
        %v6317 = vunpack.c.l.b16 %v6237
        %v6318 = vunpack.c.h.b16 %v6237
        %v6319 = vunpack.c.l.b16 %v6238
        %v6320 = vunpack.c.h.b16 %v6238
        %v6321 = vunpack.c.l.b16 %v6239
        %v6322 = vunpack.c.h.b16 %v6239
        %v6323 = vunpack.c.l.b16 %v6240
        %v6324 = vunpack.c.h.b16 %v6240
        %v6325 = vunpack.c.l.b16 %v6241
        %v6326 = vunpack.c.h.b16 %v6241
        %v6327 = vunpack.c.l.b16 %v6242
        %v6328 = vunpack.c.h.b16 %v6242
        %v6329 = vunpack.c.l.b16 %v6243
        %v6330 = vunpack.c.h.b16 %v6243
        %v6331 = vunpack.c.l.b16 %v6244
        %v6332 = vunpack.c.h.b16 %v6244
        %v6333 = vunpack.c.l.b16 %v6245
        %v6334 = vunpack.c.h.b16 %v6245
        %v6335 = vunpack.c.l.b16 %v6246
        %v6336 = vunpack.c.h.b16 %v6246
        %v6337 = vunpack.c.l.b16 %v6247
        %v6338 = vunpack.c.h.b16 %v6247
        %v6339 = vunpack.c.l.b16 %v6248
        %v6340 = vunpack.c.h.b16 %v6248
        %v6341 = vunpack.c.l.b16 %v6249
        %v6342 = vunpack.c.h.b16 %v6249
        %v6343 = vunpack.c.l.b16 %v6250
        %v6344 = vunpack.c.h.b16 %v6250
        %v6345 = vunpack.c.l.b16 %v6251
        %v6346 = vunpack.c.h.b16 %v6251
        %v6347 = vunpack.c.l.b16 %v6252
        %v6348 = vunpack.c.h.b16 %v6252
        %v6349 = vunpack.c.l.b16 %v6253
        %v6350 = vunpack.c.h.b16 %v6253
        %v6351 = vunpack.c.l.b16 %v6254
        %v6352 = vunpack.c.h.b16 %v6254
        %v6353 = vunpack.c.l.b16 %v6255
        %v6354 = vunpack.c.h.b16 %v6255
        %v6355 = vunpack.c.l.b16 %v6256
        %v6356 = vunpack.c.h.b16 %v6256
        %v6357 = vunpack.c.l.b16 %v6257
        %v6358 = vunpack.c.h.b16 %v6257
        %v6359 = vunpack.c.l.b16 %v6258
        %v6360 = vunpack.c.h.b16 %v6258
        %v6361 = vunpack.c.l.b16 %v6259
        %v6362 = vunpack.c.h.b16 %v6259
        %v6363 = vpack.c.b16 %v6301, %v6299
        %v6364 = vpack.c.b16 %v6302, %v6300
        %v6365 = vpack.c.b16 %v6305, %v6303
        %v6366 = vpack.c.b16 %v6306, %v6304
        %v6367 = vpack.c.b16 %v6309, %v6307
        %v6368 = vpack.c.b16 %v6310, %v6308
        %v6369 = vpack.c.b16 %v6313, %v6311
        %v6370 = vpack.c.b16 %v6314, %v6312
        %v6371 = vpack.c.b16 %v6317, %v6315
        %v6372 = vpack.c.b16 %v6318, %v6316
        %v6373 = vpack.c.b16 %v6321, %v6319
        %v6374 = vpack.c.b16 %v6322, %v6320
        %v6375 = vpack.c.b16 %v6325, %v6323
        %v6376 = vpack.c.b16 %v6326, %v6324
        %v6377 = vpack.c.b16 %v6329, %v6327
        %v6378 = vpack.c.b16 %v6330, %v6328
        %v6379 = vpack.c.b16 %v6333, %v6331
        %v6380 = vpack.c.b16 %v6334, %v6332
        %v6381 = vpack.c.b16 %v6337, %v6335
        %v6382 = vpack.c.b16 %v6338, %v6336
        %v6383 = vpack.c.b16 %v6341, %v6339
        %v6384 = vpack.c.b16 %v6342, %v6340
        %v6385 = vpack.c.b16 %v6345, %v6343
        %v6386 = vpack.c.b16 %v6346, %v6344
        %v6387 = vpack.c.b16 %v6349, %v6347
        %v6388 = vpack.c.b16 %v6350, %v6348
        %v6389 = vpack.c.b16 %v6353, %v6351
        %v6390 = vpack.c.b16 %v6354, %v6352
        %v6391 = vpack.c.b16 %v6357, %v6355
        %v6392 = vpack.c.b16 %v6358, %v6356
        %v6393 = vpack.c.b16 %v6361, %v6359
        %v6394 = vpack.c.b16 %v6362, %v6360
        %6427 = vmatpush.bf16.msra.mxu0 %v6377
        %6428 = vmatpush.bf16.msra.mxu0 %v6375
        %6429 = vmatpush.bf16.msra.mxu0 %v6373
        %6430 = vmatpush.bf16.msra.mxu0 %v6371
        %6431 = vmatpush.bf16.msra.mxu0 %v6369
        %6432 = vmatpush.bf16.msra.mxu0 %v6367
        %6433 = vmatpush.bf16.msra.mxu0 %v6365
        %6434 = vmatpush.bf16.msra.mxu0 %v6363
        %6435 = vmatmul.bf16.gmra.mxu0 %v6211
        %v6436 = vpop.f32.mrf.mxu0
        %v6437 = vadd.f32 %v6263, %v6436
        %v6438 = vpop.f32.mrf.mxu0
        %v6439 = vadd.f32 %v6263, %v6438
        %6440 = vmatmul.bf16.gmra.mxu0 %v6213
        %v6441 = vpop.f32.mrf.mxu0
        %v6442 = vadd.f32 %v6263, %v6441
        %v6443 = vpop.f32.mrf.mxu0
        %v6444 = vadd.f32 %v6263, %v6443
        %6445 = vmatmul.bf16.gmra.mxu0 %v6215
        %v6446 = vpop.f32.mrf.mxu0
        %v6447 = vadd.f32 %v6263, %v6446
        %v6448 = vpop.f32.mrf.mxu0
        %v6449 = vadd.f32 %v6263, %v6448
        %6450 = vmatmul.bf16.gmra.mxu0 %v6217
        %v6451 = vpop.f32.mrf.mxu0
        %v6452 = vadd.f32 %v6263, %v6451
        %v6453 = vpop.f32.mrf.mxu0
        %v6454 = vadd.f32 %v6263, %v6453
        %6455 = vmatmul.bf16.gmra.mxu0 %v6219
        %v6456 = vpop.f32.mrf.mxu0
        %v6457 = vadd.f32 %v6263, %v6456
        %v6458 = vpop.f32.mrf.mxu0
        %v6459 = vadd.f32 %v6263, %v6458
        %6460 = vmatmul.bf16.gmra.mxu0 %v6221
        %v6461 = vpop.f32.mrf.mxu0
        %v6462 = vadd.f32 %v6263, %v6461
        %v6463 = vpop.f32.mrf.mxu0
        %v6464 = vadd.f32 %v6263, %v6463
        %6465 = vmatmul.bf16.gmra.mxu0 %v6223
        %v6466 = vpop.f32.mrf.mxu0
        %v6467 = vadd.f32 %v6263, %v6466
        %v6468 = vpop.f32.mrf.mxu0
        %v6469 = vadd.f32 %v6263, %v6468
        %6470 = vmatmul.bf16.gmra.mxu0 %v6225
        %v6471 = vpop.f32.mrf.mxu0
        %v6472 = vadd.f32 %v6263, %v6471
        %v6473 = vpop.f32.mrf.mxu0
        %v6474 = vadd.f32 %v6263, %v6473
        %6475 = vdwg.mxu0
        %6476 = vmatpush.bf16.msra.mxu0 %v6393
        %6477 = vmatpush.bf16.msra.mxu0 %v6391
        %6478 = vmatpush.bf16.msra.mxu0 %v6389
        %6479 = vmatpush.bf16.msra.mxu0 %v6387
        %6480 = vmatpush.bf16.msra.mxu0 %v6385
        %6481 = vmatpush.bf16.msra.mxu0 %v6383
        %6482 = vmatpush.bf16.msra.mxu0 %v6381
        %6483 = vmatpush.bf16.msra.mxu0 %v6379
        %6484 = vmatmul.bf16.gmra.mxu0 %v6212
        %v6485 = vpop.f32.mrf.mxu0
        %v6486 = vadd.f32 %v6437, %v6485
        %v6487 = vpop.f32.mrf.mxu0
        %v6488 = vadd.f32 %v6439, %v6487
        %6489 = vmatmul.bf16.gmra.mxu0 %v6214
        %v6490 = vpop.f32.mrf.mxu0
        %v6491 = vadd.f32 %v6442, %v6490
        %v6492 = vpop.f32.mrf.mxu0
        %v6493 = vadd.f32 %v6444, %v6492
        %6494 = vmatmul.bf16.gmra.mxu0 %v6216
        %v6495 = vpop.f32.mrf.mxu0
        %v6496 = vadd.f32 %v6447, %v6495
        %v6497 = vpop.f32.mrf.mxu0
        %v6498 = vadd.f32 %v6449, %v6497
        %6499 = vmatmul.bf16.gmra.mxu0 %v6218
        %v6500 = vpop.f32.mrf.mxu0
        %v6501 = vadd.f32 %v6452, %v6500
        %v6502 = vpop.f32.mrf.mxu0
        %v6503 = vadd.f32 %v6454, %v6502
        %6504 = vmatmul.bf16.gmra.mxu0 %v6220
        %v6505 = vpop.f32.mrf.mxu0
        %v6506 = vadd.f32 %v6457, %v6505
        %v6507 = vpop.f32.mrf.mxu0
        %v6508 = vadd.f32 %v6459, %v6507
        %6509 = vmatmul.bf16.gmra.mxu0 %v6222
        %v6510 = vpop.f32.mrf.mxu0
        %v6511 = vadd.f32 %v6462, %v6510
        %v6512 = vpop.f32.mrf.mxu0
        %v6513 = vadd.f32 %v6464, %v6512
        %6514 = vmatmul.bf16.gmra.mxu0 %v6224
        %v6515 = vpop.f32.mrf.mxu0
        %v6516 = vadd.f32 %v6467, %v6515
        %v6517 = vpop.f32.mrf.mxu0
        %v6518 = vadd.f32 %v6469, %v6517
        %6519 = vmatmul.bf16.gmra.mxu0 %v6226
        %v6520 = vpop.f32.mrf.mxu0
        %v6521 = vadd.f32 %v6472, %v6520
        %v6522 = vpop.f32.mrf.mxu0
        %v6523 = vadd.f32 %v6474, %v6522
        %6524 = vdwg.mxu0
        %6525 = vmatpush.bf16.msra.mxu0 %v6378
        %6526 = vmatpush.bf16.msra.mxu0 %v6376
        %6527 = vmatpush.bf16.msra.mxu0 %v6374
        %6528 = vmatpush.bf16.msra.mxu0 %v6372
        %6529 = vmatpush.bf16.msra.mxu0 %v6370
        %6530 = vmatpush.bf16.msra.mxu0 %v6368
        %6531 = vmatpush.bf16.msra.mxu0 %v6366
        %6532 = vmatpush.bf16.msra.mxu0 %v6364
        %6533 = vmatmul.bf16.gmra.mxu0 %v6211
        %v6534 = vpop.f32.mrf.mxu0
        %v6535 = vadd.f32 %v6264, %v6534
        %v6536 = vpop.f32.mrf.mxu0
        %v6537 = vadd.f32 %v6264, %v6536
        %6538 = vmatmul.bf16.gmra.mxu0 %v6213
        %v6539 = vpop.f32.mrf.mxu0
        %v6540 = vadd.f32 %v6264, %v6539
        %v6541 = vpop.f32.mrf.mxu0
        %v6542 = vadd.f32 %v6264, %v6541
        %6543 = vmatmul.bf16.gmra.mxu0 %v6215
        %v6544 = vpop.f32.mrf.mxu0
        %v6545 = vadd.f32 %v6264, %v6544
        %v6546 = vpop.f32.mrf.mxu0
        %v6547 = vadd.f32 %v6264, %v6546
        %6548 = vmatmul.bf16.gmra.mxu0 %v6217
        %v6549 = vpop.f32.mrf.mxu0
        %v6550 = vadd.f32 %v6264, %v6549
        %v6551 = vpop.f32.mrf.mxu0
        %v6552 = vadd.f32 %v6264, %v6551
        %6553 = vmatmul.bf16.gmra.mxu0 %v6219
        %v6554 = vpop.f32.mrf.mxu0
        %v6555 = vadd.f32 %v6264, %v6554
        %v6556 = vpop.f32.mrf.mxu0
        %v6557 = vadd.f32 %v6264, %v6556
        %6558 = vmatmul.bf16.gmra.mxu0 %v6221
        %v6559 = vpop.f32.mrf.mxu0
        %v6560 = vadd.f32 %v6264, %v6559
        %v6561 = vpop.f32.mrf.mxu0
        %v6562 = vadd.f32 %v6264, %v6561
        %6563 = vmatmul.bf16.gmra.mxu0 %v6223
        %v6564 = vpop.f32.mrf.mxu0
        %v6565 = vadd.f32 %v6264, %v6564
        %v6566 = vpop.f32.mrf.mxu0
        %v6567 = vadd.f32 %v6264, %v6566
        %6568 = vmatmul.bf16.gmra.mxu0 %v6225
        %v6569 = vpop.f32.mrf.mxu0
        %v6570 = vadd.f32 %v6264, %v6569
        %v6571 = vpop.f32.mrf.mxu0
        %v6572 = vadd.f32 %v6264, %v6571
        %6573 = vdwg.mxu0
        %6574 = vmatpush.bf16.msra.mxu0 %v6394
        %6575 = vmatpush.bf16.msra.mxu0 %v6392
        %6576 = vmatpush.bf16.msra.mxu0 %v6390
        %6577 = vmatpush.bf16.msra.mxu0 %v6388
        %6578 = vmatpush.bf16.msra.mxu0 %v6386
        %6579 = vmatpush.bf16.msra.mxu0 %v6384
        %6580 = vmatpush.bf16.msra.mxu0 %v6382
        %6581 = vmatpush.bf16.msra.mxu0 %v6380
        %6582 = vmatmul.bf16.gmra.mxu0 %v6212
        %v6583 = vpop.f32.mrf.mxu0
        %v6584 = vadd.f32 %v6535, %v6583
        %v6585 = vpop.f32.mrf.mxu0
        %v6586 = vadd.f32 %v6537, %v6585
        %6587 = vmatmul.bf16.gmra.mxu0 %v6214
        %v6588 = vpop.f32.mrf.mxu0
        %v6589 = vadd.f32 %v6540, %v6588
        %v6590 = vpop.f32.mrf.mxu0
        %v6591 = vadd.f32 %v6542, %v6590
        %6592 = vmatmul.bf16.gmra.mxu0 %v6216
        %v6593 = vpop.f32.mrf.mxu0
        %v6594 = vadd.f32 %v6545, %v6593
        %v6595 = vpop.f32.mrf.mxu0
        %v6596 = vadd.f32 %v6547, %v6595
        %6597 = vmatmul.bf16.gmra.mxu0 %v6218
        %v6598 = vpop.f32.mrf.mxu0
        %v6599 = vadd.f32 %v6550, %v6598
        %v6600 = vpop.f32.mrf.mxu0
        %v6601 = vadd.f32 %v6552, %v6600
        %6602 = vmatmul.bf16.gmra.mxu0 %v6220
        %v6603 = vpop.f32.mrf.mxu0
        %v6604 = vadd.f32 %v6555, %v6603
        %v6605 = vpop.f32.mrf.mxu0
        %v6606 = vadd.f32 %v6557, %v6605
        %6607 = vmatmul.bf16.gmra.mxu0 %v6222
        %v6608 = vpop.f32.mrf.mxu0
        %v6609 = vadd.f32 %v6560, %v6608
        %v6610 = vpop.f32.mrf.mxu0
        %v6611 = vadd.f32 %v6562, %v6610
        %6612 = vmatmul.bf16.gmra.mxu0 %v6224
        %v6613 = vpop.f32.mrf.mxu0
        %v6614 = vadd.f32 %v6565, %v6613
        %v6615 = vpop.f32.mrf.mxu0
        %v6616 = vadd.f32 %v6567, %v6615
        %6617 = vmatmul.bf16.gmra.mxu0 %v6226
        %v6618 = vpop.f32.mrf.mxu0
        %v6619 = vadd.f32 %v6570, %v6618
        %v6620 = vpop.f32.mrf.mxu0
        %v6621 = vadd.f32 %v6572, %v6620
        %6622 = vdwg.mxu0
        %v6623 = vmax.f32 %v6486, 0.0
        %v6624 = vmax.f32 %v6584, 0.0
        %v6625 = vmax.f32 %v6488, 0.0
        %v6626 = vmax.f32 %v6586, 0.0
        %v6627 = vmax.f32 %v6491, 0.0
        %v6628 = vmax.f32 %v6589, 0.0
        %v6629 = vmax.f32 %v6493, 0.0
        %v6630 = vmax.f32 %v6591, 0.0
        %v6631 = vmax.f32 %v6496, 0.0
        %v6632 = vmax.f32 %v6594, 0.0
        %v6633 = vmax.f32 %v6498, 0.0
        %v6634 = vmax.f32 %v6596, 0.0
        %v6635 = vmax.f32 %v6501, 0.0
        %v6636 = vmax.f32 %v6599, 0.0
        %v6637 = vmax.f32 %v6503, 0.0
        %v6638 = vmax.f32 %v6601, 0.0
        %v6639 = vmax.f32 %v6506, 0.0
        %v6640 = vmax.f32 %v6604, 0.0
        %v6641 = vmax.f32 %v6508, 0.0
        %v6642 = vmax.f32 %v6606, 0.0
        %v6643 = vmax.f32 %v6511, 0.0
        %v6644 = vmax.f32 %v6609, 0.0
        %v6645 = vmax.f32 %v6513, 0.0
        %v6646 = vmax.f32 %v6611, 0.0
        %v6647 = vmax.f32 %v6516, 0.0
        %v6648 = vmax.f32 %v6614, 0.0
        %v6649 = vmax.f32 %v6518, 0.0
        %v6650 = vmax.f32 %v6616, 0.0
        %v6651 = vmax.f32 %v6521, 0.0
        %v6652 = vmax.f32 %v6619, 0.0
        %v6653 = vmax.f32 %v6523, 0.0
        %v6654 = vmax.f32 %v6621, 0.0
        %v6655 = vadd.f32 %v4865, %v6623
        %v6656 = vadd.f32 %v4866, %v6624
        %v6657 = vadd.f32 %v4867, %v6625
        %v6658 = vadd.f32 %v4868, %v6626
        %v6659 = vadd.f32 %v4869, %v6627
        %v6660 = vadd.f32 %v4870, %v6628
        %v6661 = vadd.f32 %v4871, %v6629
        %v6662 = vadd.f32 %v4872, %v6630
        %v6663 = vadd.f32 %v4873, %v6631
        %v6664 = vadd.f32 %v4874, %v6632
        %v6665 = vadd.f32 %v4875, %v6633
        %v6666 = vadd.f32 %v4876, %v6634
        %v6667 = vadd.f32 %v4877, %v6635
        %v6668 = vadd.f32 %v4878, %v6636
        %v6669 = vadd.f32 %v4879, %v6637
        %v6670 = vadd.f32 %v4880, %v6638
        %v6671 = vadd.f32 %v4881, %v6639
        %v6672 = vadd.f32 %v4882, %v6640
        %v6673 = vadd.f32 %v4883, %v6641
        %v6674 = vadd.f32 %v4884, %v6642
        %v6675 = vadd.f32 %v4885, %v6643
        %v6676 = vadd.f32 %v4886, %v6644
        %v6677 = vadd.f32 %v4887, %v6645
        %v6678 = vadd.f32 %v4888, %v6646
        %v6679 = vadd.f32 %v4889, %v6647
        %v6680 = vadd.f32 %v4890, %v6648
        %v6681 = vadd.f32 %v4891, %v6649
        %v6682 = vadd.f32 %v4892, %v6650
        %v6683 = vadd.f32 %v4893, %v6651
        %v6684 = vadd.f32 %v4894, %v6652
        %v6685 = vadd.f32 %v4895, %v6653
        %v6686 = vadd.f32 %v4896, %v6654
        %s6687 = scalar_lea.vmem %s438, 512
        %6688 = vst [vmem:[%s6687] sm:$0xff] %v6655
        %6689 = vst [vmem:[%s6687 + $0x8] sm:$0xff] %v6656
        %6690 = vst [vmem:[%s6687 + $0x10] sm:$0xff] %v6657
        %6691 = vst [vmem:[%s6687 + $0x18] sm:$0xff] %v6658
        %6692 = vst [vmem:[%s6687 + $0x20] sm:$0xff] %v6659
        %6693 = vst [vmem:[%s6687 + $0x28] sm:$0xff] %v6660
        %6694 = vst [vmem:[%s6687 + $0x30] sm:$0xff] %v6661
        %6695 = vst [vmem:[%s6687 + $0x38] sm:$0xff] %v6662
        %6696 = vst [vmem:[%s6687 + $0x40] sm:$0xff] %v6663
        %6697 = vst [vmem:[%s6687 + $0x48] sm:$0xff] %v6664
        %6698 = vst [vmem:[%s6687 + $0x50] sm:$0xff] %v6665
        %6699 = vst [vmem:[%s6687 + $0x58] sm:$0xff] %v6666
        %6700 = vst [vmem:[%s6687 + $0x60] sm:$0xff] %v6667
        %6701 = vst [vmem:[%s6687 + $0x68] sm:$0xff] %v6668
        %6702 = vst [vmem:[%s6687 + $0x70] sm:$0xff] %v6669
        %6703 = vst [vmem:[%s6687 + $0x78] sm:$0xff] %v6670
        %6704 = vst [vmem:[%s6687 + $0x80] sm:$0xff] %v6671
        %6705 = vst [vmem:[%s6687 + $0x88] sm:$0xff] %v6672
        %6706 = vst [vmem:[%s6687 + $0x90] sm:$0xff] %v6673
        %6707 = vst [vmem:[%s6687 + $0x98] sm:$0xff] %v6674
        %6708 = vst [vmem:[%s6687 + $0xa0] sm:$0xff] %v6675
        %6709 = vst [vmem:[%s6687 + $0xa8] sm:$0xff] %v6676
        %6710 = vst [vmem:[%s6687 + $0xb0] sm:$0xff] %v6677
        %6711 = vst [vmem:[%s6687 + $0xb8] sm:$0xff] %v6678
        %6712 = vst [vmem:[%s6687 + $0xc0] sm:$0xff] %v6679
        %6713 = vst [vmem:[%s6687 + $0xc8] sm:$0xff] %v6680
        %6714 = vst [vmem:[%s6687 + $0xd0] sm:$0xff] %v6681
        %6715 = vst [vmem:[%s6687 + $0xd8] sm:$0xff] %v6682
        %6716 = vst [vmem:[%s6687 + $0xe0] sm:$0xff] %v6683
        %6717 = vst [vmem:[%s6687 + $0xe8] sm:$0xff] %v6684
        %6718 = vst [vmem:[%s6687 + $0xf0] sm:$0xff] %v6685
        %6719 = vst [vmem:[%s6687 + $0xf8] sm:$0xff] %v6686
        %v6720 = vpack.c.bf16 %v6657, %v6655
        %v6721 = vpack.c.bf16 %v6658, %v6656
        %v6722 = vpack.c.bf16 %v6661, %v6659
        %v6723 = vpack.c.bf16 %v6662, %v6660
        %v6724 = vpack.c.bf16 %v6665, %v6663
        %v6725 = vpack.c.bf16 %v6666, %v6664
        %v6726 = vpack.c.bf16 %v6669, %v6667
        %v6727 = vpack.c.bf16 %v6670, %v6668
        %v6728 = vpack.c.bf16 %v6673, %v6671
        %v6729 = vpack.c.bf16 %v6674, %v6672
        %v6730 = vpack.c.bf16 %v6677, %v6675
        %v6731 = vpack.c.bf16 %v6678, %v6676
        %v6732 = vpack.c.bf16 %v6681, %v6679
        %v6733 = vpack.c.bf16 %v6682, %v6680
        %v6734 = vpack.c.bf16 %v6685, %v6683
        %v6735 = vpack.c.bf16 %v6686, %v6684
        %s6736 = scalar_lea.vmem %s5, 384
        %v6737 = vld [vmem:[%s6736] sm:$0xf]
        %v6738 = vld [vmem:[%s6736 + $0x4] sm:$0xf]
        %v6739 = vld [vmem:[%s6736 + $0x8] sm:$0xf]
        %v6740 = vld [vmem:[%s6736 + $0xc] sm:$0xf]
        %v6741 = vld [vmem:[%s6736 + $0x10] sm:$0xf]
        %v6742 = vld [vmem:[%s6736 + $0x14] sm:$0xf]
        %v6743 = vld [vmem:[%s6736 + $0x18] sm:$0xf]
        %v6744 = vld [vmem:[%s6736 + $0x1c] sm:$0xf]
        %v6745 = vld [vmem:[%s6736 + $0x20] sm:$0xf]
        %v6746 = vld [vmem:[%s6736 + $0x24] sm:$0xf]
        %v6747 = vld [vmem:[%s6736 + $0x28] sm:$0xf]
        %v6748 = vld [vmem:[%s6736 + $0x2c] sm:$0xf]
        %v6749 = vld [vmem:[%s6736 + $0x30] sm:$0xf]
        %v6750 = vld [vmem:[%s6736 + $0x34] sm:$0xf]
        %v6751 = vld [vmem:[%s6736 + $0x38] sm:$0xf]
        %v6752 = vld [vmem:[%s6736 + $0x3c] sm:$0xf]
        %v6753 = vld [vmem:[%s6736 + $0x40] sm:$0xf]
        %v6754 = vld [vmem:[%s6736 + $0x44] sm:$0xf]
        %v6755 = vld [vmem:[%s6736 + $0x48] sm:$0xf]
        %v6756 = vld [vmem:[%s6736 + $0x4c] sm:$0xf]
        %v6757 = vld [vmem:[%s6736 + $0x50] sm:$0xf]
        %v6758 = vld [vmem:[%s6736 + $0x54] sm:$0xf]
        %v6759 = vld [vmem:[%s6736 + $0x58] sm:$0xf]
        %v6760 = vld [vmem:[%s6736 + $0x5c] sm:$0xf]
        %v6761 = vld [vmem:[%s6736 + $0x60] sm:$0xf]
        %v6762 = vld [vmem:[%s6736 + $0x64] sm:$0xf]
        %v6763 = vld [vmem:[%s6736 + $0x68] sm:$0xf]
        %v6764 = vld [vmem:[%s6736 + $0x6c] sm:$0xf]
        %v6765 = vld [vmem:[%s6736 + $0x70] sm:$0xf]
        %v6766 = vld [vmem:[%s6736 + $0x74] sm:$0xf]
        %v6767 = vld [vmem:[%s6736 + $0x78] sm:$0xf]
        %v6768 = vld [vmem:[%s6736 + $0x7c] sm:$0xf]
        %v6801 = vunpack.c.l.b16 %v6737
        %v6802 = vunpack.c.l.b16 %v6738
        %v6803 = vunpack.c.l.b16 %v6739
        %v6804 = vunpack.c.l.b16 %v6740
        %v6805 = vunpack.c.l.b16 %v6741
        %v6806 = vunpack.c.l.b16 %v6742
        %v6807 = vunpack.c.l.b16 %v6743
        %v6808 = vunpack.c.l.b16 %v6744
        %v6809 = vunpack.c.l.b16 %v6745
        %v6810 = vunpack.c.l.b16 %v6746
        %v6811 = vunpack.c.l.b16 %v6747
        %v6812 = vunpack.c.l.b16 %v6748
        %v6813 = vunpack.c.l.b16 %v6749
        %v6814 = vunpack.c.l.b16 %v6750
        %v6815 = vunpack.c.l.b16 %v6751
        %v6816 = vunpack.c.l.b16 %v6752
        %v6817 = vunpack.c.l.b16 %v6753
        %v6818 = vunpack.c.l.b16 %v6754
        %v6819 = vunpack.c.l.b16 %v6755
        %v6820 = vunpack.c.l.b16 %v6756
        %v6821 = vunpack.c.l.b16 %v6757
        %v6822 = vunpack.c.l.b16 %v6758
        %v6823 = vunpack.c.l.b16 %v6759
        %v6824 = vunpack.c.l.b16 %v6760
        %v6825 = vunpack.c.l.b16 %v6761
        %v6826 = vunpack.c.l.b16 %v6762
        %v6827 = vunpack.c.l.b16 %v6763
        %v6828 = vunpack.c.l.b16 %v6764
        %v6829 = vunpack.c.l.b16 %v6765
        %v6830 = vunpack.c.l.b16 %v6766
        %v6831 = vunpack.c.l.b16 %v6767
        %v6832 = vunpack.c.l.b16 %v6768
        %v6833 = vpack.c.b16 %v6802, %v6801
        %v6834 = vpack.c.b16 %v6804, %v6803
        %v6835 = vpack.c.b16 %v6806, %v6805
        %v6836 = vpack.c.b16 %v6808, %v6807
        %v6837 = vpack.c.b16 %v6810, %v6809
        %v6838 = vpack.c.b16 %v6812, %v6811
        %v6839 = vpack.c.b16 %v6814, %v6813
        %v6840 = vpack.c.b16 %v6816, %v6815
        %v6841 = vpack.c.b16 %v6818, %v6817
        %v6842 = vpack.c.b16 %v6820, %v6819
        %v6843 = vpack.c.b16 %v6822, %v6821
        %v6844 = vpack.c.b16 %v6824, %v6823
        %v6845 = vpack.c.b16 %v6826, %v6825
        %v6846 = vpack.c.b16 %v6828, %v6827
        %v6847 = vpack.c.b16 %v6830, %v6829
        %v6848 = vpack.c.b16 %v6832, %v6831
        %6865 = vmatpush.bf16.msra.mxu0 %v6840
        %6866 = vmatpush.bf16.msra.mxu0 %v6839
        %6867 = vmatpush.bf16.msra.mxu0 %v6838
        %6868 = vmatpush.bf16.msra.mxu0 %v6837
        %6869 = vmatpush.bf16.msra.mxu0 %v6836
        %6870 = vmatpush.bf16.msra.mxu0 %v6835
        %6871 = vmatpush.bf16.msra.mxu0 %v6834
        %6872 = vmatpush.bf16.msra.mxu0 %v6833
        %6873 = vmatmul.bf16.gmra.mxu0 %v6720
        %v6874 = vpop.f32.mrf.mxu0
        %v6875 = vadd.f32 0.0, %v6874
        %v6876 = vpop.f32.mrf.mxu0
        %v6877 = vadd.f32 0.0, %v6876
        %6878 = vmatmul.bf16.gmra.mxu0 %v6722
        %v6879 = vpop.f32.mrf.mxu0
        %v6880 = vadd.f32 0.0, %v6879
        %v6881 = vpop.f32.mrf.mxu0
        %v6882 = vadd.f32 0.0, %v6881
        %6883 = vmatmul.bf16.gmra.mxu0 %v6724
        %v6884 = vpop.f32.mrf.mxu0
        %v6885 = vadd.f32 0.0, %v6884
        %v6886 = vpop.f32.mrf.mxu0
        %v6887 = vadd.f32 0.0, %v6886
        %6888 = vmatmul.bf16.gmra.mxu0 %v6726
        %v6889 = vpop.f32.mrf.mxu0
        %v6890 = vadd.f32 0.0, %v6889
        %v6891 = vpop.f32.mrf.mxu0
        %v6892 = vadd.f32 0.0, %v6891
        %6893 = vmatmul.bf16.gmra.mxu0 %v6728
        %v6894 = vpop.f32.mrf.mxu0
        %v6895 = vadd.f32 0.0, %v6894
        %v6896 = vpop.f32.mrf.mxu0
        %v6897 = vadd.f32 0.0, %v6896
        %6898 = vmatmul.bf16.gmra.mxu0 %v6730
        %v6899 = vpop.f32.mrf.mxu0
        %v6900 = vadd.f32 0.0, %v6899
        %v6901 = vpop.f32.mrf.mxu0
        %v6902 = vadd.f32 0.0, %v6901
        %6903 = vmatmul.bf16.gmra.mxu0 %v6732
        %v6904 = vpop.f32.mrf.mxu0
        %v6905 = vadd.f32 0.0, %v6904
        %v6906 = vpop.f32.mrf.mxu0
        %v6907 = vadd.f32 0.0, %v6906
        %6908 = vmatmul.bf16.gmra.mxu0 %v6734
        %v6909 = vpop.f32.mrf.mxu0
        %v6910 = vadd.f32 0.0, %v6909
        %v6911 = vpop.f32.mrf.mxu0
        %v6912 = vadd.f32 0.0, %v6911
        %6913 = vdwg.mxu0
        %6914 = vmatpush.bf16.msra.mxu0 %v6848
        %6915 = vmatpush.bf16.msra.mxu0 %v6847
        %6916 = vmatpush.bf16.msra.mxu0 %v6846
        %6917 = vmatpush.bf16.msra.mxu0 %v6845
        %6918 = vmatpush.bf16.msra.mxu0 %v6844
        %6919 = vmatpush.bf16.msra.mxu0 %v6843
        %6920 = vmatpush.bf16.msra.mxu0 %v6842
        %6921 = vmatpush.bf16.msra.mxu0 %v6841
        %6922 = vmatmul.bf16.gmra.mxu0 %v6721
        %v6923 = vpop.f32.mrf.mxu0
        %v6924 = vadd.f32 %v6875, %v6923
        %v6925 = vpop.f32.mrf.mxu0
        %v6926 = vadd.f32 %v6877, %v6925
        %6927 = vmatmul.bf16.gmra.mxu0 %v6723
        %v6928 = vpop.f32.mrf.mxu0
        %v6929 = vadd.f32 %v6880, %v6928
        %v6930 = vpop.f32.mrf.mxu0
        %v6931 = vadd.f32 %v6882, %v6930
        %6932 = vmatmul.bf16.gmra.mxu0 %v6725
        %v6933 = vpop.f32.mrf.mxu0
        %v6934 = vadd.f32 %v6885, %v6933
        %v6935 = vpop.f32.mrf.mxu0
        %v6936 = vadd.f32 %v6887, %v6935
        %6937 = vmatmul.bf16.gmra.mxu0 %v6727
        %v6938 = vpop.f32.mrf.mxu0
        %v6939 = vadd.f32 %v6890, %v6938
        %v6940 = vpop.f32.mrf.mxu0
        %v6941 = vadd.f32 %v6892, %v6940
        %6942 = vmatmul.bf16.gmra.mxu0 %v6729
        %v6943 = vpop.f32.mrf.mxu0
        %v6944 = vadd.f32 %v6895, %v6943
        %v6945 = vpop.f32.mrf.mxu0
        %v6946 = vadd.f32 %v6897, %v6945
        %6947 = vmatmul.bf16.gmra.mxu0 %v6731
        %v6948 = vpop.f32.mrf.mxu0
        %v6949 = vadd.f32 %v6900, %v6948
        %v6950 = vpop.f32.mrf.mxu0
        %v6951 = vadd.f32 %v6902, %v6950
        %6952 = vmatmul.bf16.gmra.mxu0 %v6733
        %v6953 = vpop.f32.mrf.mxu0
        %v6954 = vadd.f32 %v6905, %v6953
        %v6955 = vpop.f32.mrf.mxu0
        %v6956 = vadd.f32 %v6907, %v6955
        %6957 = vmatmul.bf16.gmra.mxu0 %v6735
        %v6958 = vpop.f32.mrf.mxu0
        %v6959 = vadd.f32 %v6910, %v6958
        %v6960 = vpop.f32.mrf.mxu0
        %v6961 = vadd.f32 %v6912, %v6960
        %6962 = vdwg.mxu0
        %v6963 = vpack.c.bf16 %v6926, %v6924
        %v6964 = vpack.c.bf16 %v6931, %v6929
        %v6965 = vpack.c.bf16 %v6936, %v6934
        %v6966 = vpack.c.bf16 %v6941, %v6939
        %v6967 = vpack.c.bf16 %v6946, %v6944
        %v6968 = vpack.c.bf16 %v6951, %v6949
        %v6969 = vpack.c.bf16 %v6956, %v6954
        %v6970 = vpack.c.bf16 %v6961, %v6959
        %v6972 = vsel %vm1605, %v6963, 0
        %v6975 = vsel %vm1605, %v6964, 0
        %v6978 = vsel %vm1605, %v6965, 0
        %v6981 = vsel %vm1605, %v6966, 0
        %v6984 = vsel %vm1605, %v6967, 0
        %v6987 = vsel %vm1605, %v6968, 0
        %v6990 = vsel %vm1605, %v6969, 0
        %v6993 = vsel %vm1605, %v6970, 0
        %6995 = vmatpush.bf16.xpose.msra.mxu0 %v6993
        %6996 = vmatpush.bf16.xpose.msra.mxu0 %v6990
        %6997 = vmatpush.bf16.xpose.msra.mxu0 %v6987
        %6998 = vmatpush.bf16.xpose.msra.mxu0 %v6984
        %6999 = vmatpush.bf16.xpose.msra.mxu0 %v6981
        %7000 = vmatpush.bf16.xpose.msra.mxu0 %v6978
        %7001 = vmatpush.bf16.xpose.msra.mxu0 %v6975
        %7002 = vmatpush.bf16.xpose.msra.mxu0 %v6972
        %7003 = vmatmul.bf16.gmra.mxu0 %v6972
        %v7004 = vpop.f32.mrf.mxu0
        %v7005 = vadd.f32 0.0, %v7004
        %v7006 = vpop.f32.mrf.mxu0
        %v7007 = vadd.f32 0.0, %v7006
        %7008 = vmatmul.bf16.gmra.mxu0 %v6975
        %v7009 = vpop.f32.mrf.mxu0
        %v7010 = vadd.f32 0.0, %v7009
        %v7011 = vpop.f32.mrf.mxu0
        %v7012 = vadd.f32 0.0, %v7011
        %7013 = vmatmul.bf16.gmra.mxu0 %v6978
        %v7014 = vpop.f32.mrf.mxu0
        %v7015 = vadd.f32 0.0, %v7014
        %v7016 = vpop.f32.mrf.mxu0
        %v7017 = vadd.f32 0.0, %v7016
        %7018 = vmatmul.bf16.gmra.mxu0 %v6981
        %v7019 = vpop.f32.mrf.mxu0
        %v7020 = vadd.f32 0.0, %v7019
        %v7021 = vpop.f32.mrf.mxu0
        %v7022 = vadd.f32 0.0, %v7021
        %7023 = vmatmul.bf16.gmra.mxu0 %v6984
        %v7024 = vpop.f32.mrf.mxu0
        %v7025 = vadd.f32 0.0, %v7024
        %v7026 = vpop.f32.mrf.mxu0
        %v7027 = vadd.f32 0.0, %v7026
        %7028 = vmatmul.bf16.gmra.mxu0 %v6987
        %v7029 = vpop.f32.mrf.mxu0
        %v7030 = vadd.f32 0.0, %v7029
        %v7031 = vpop.f32.mrf.mxu0
        %v7032 = vadd.f32 0.0, %v7031
        %7033 = vmatmul.bf16.gmra.mxu0 %v6990
        %v7034 = vpop.f32.mrf.mxu0
        %v7035 = vadd.f32 0.0, %v7034
        %v7036 = vpop.f32.mrf.mxu0
        %v7037 = vadd.f32 0.0, %v7036
        %7038 = vmatmul.bf16.gmra.mxu0 %v6993
        %v7039 = vpop.f32.mrf.mxu0
        %v7040 = vadd.f32 0.0, %v7039
        %v7041 = vpop.f32.mrf.mxu0
        %v7042 = vadd.f32 0.0, %v7041
        %7043 = vdwg.mxu0
        %7044 = vmax.xlane.f32.xlu0 %v7005
        %v7045 = vpop.xlane.xlu0 %7044
        %7046 = vmax.xlane.f32.xlu0 %v7007
        %v7047 = vpop.xlane.xlu0 %7046
        %7048 = vmax.xlane.f32.xlu0 %v7010
        %v7049 = vpop.xlane.xlu0 %7048
        %7050 = vmax.xlane.f32.xlu0 %v7012
        %v7051 = vpop.xlane.xlu0 %7050
        %7052 = vmax.xlane.f32.xlu0 %v7015
        %v7053 = vpop.xlane.xlu0 %7052
        %7054 = vmax.xlane.f32.xlu0 %v7017
        %v7055 = vpop.xlane.xlu0 %7054
        %7056 = vmax.xlane.f32.xlu0 %v7020
        %v7057 = vpop.xlane.xlu0 %7056
        %7058 = vmax.xlane.f32.xlu0 %v7022
        %v7059 = vpop.xlane.xlu0 %7058
        %7060 = vmax.xlane.f32.xlu0 %v7025
        %v7061 = vpop.xlane.xlu0 %7060
        %7062 = vmax.xlane.f32.xlu0 %v7027
        %v7063 = vpop.xlane.xlu0 %7062
        %7064 = vmax.xlane.f32.xlu0 %v7030
        %v7065 = vpop.xlane.xlu0 %7064
        %7066 = vmax.xlane.f32.xlu0 %v7032
        %v7067 = vpop.xlane.xlu0 %7066
        %7068 = vmax.xlane.f32.xlu0 %v7035
        %v7069 = vpop.xlane.xlu0 %7068
        %7070 = vmax.xlane.f32.xlu0 %v7037
        %v7071 = vpop.xlane.xlu0 %7070
        %7072 = vmax.xlane.f32.xlu0 %v7040
        %v7073 = vpop.xlane.xlu0 %7072
        %7074 = vmax.xlane.f32.xlu0 %v7042
        %v7075 = vpop.xlane.xlu0 %7074
        %v7076 = vsub.f32 %v7005, %v7045
        %v7077 = vsub.f32 %v7007, %v7047
        %v7078 = vsub.f32 %v7010, %v7049
        %v7079 = vsub.f32 %v7012, %v7051
        %v7080 = vsub.f32 %v7015, %v7053
        %v7081 = vsub.f32 %v7017, %v7055
        %v7082 = vsub.f32 %v7020, %v7057
        %v7083 = vsub.f32 %v7022, %v7059
        %v7084 = vsub.f32 %v7025, %v7061
        %v7085 = vsub.f32 %v7027, %v7063
        %v7086 = vsub.f32 %v7030, %v7065
        %v7087 = vsub.f32 %v7032, %v7067
        %v7088 = vsub.f32 %v7035, %v7069
        %v7089 = vsub.f32 %v7037, %v7071
        %v7090 = vsub.f32 %v7040, %v7073
        %v7091 = vsub.f32 %v7042, %v7075
        %v7092 = vmul.f32 %v7076, 1.442695
        %v7093 = vpow.pop %v7092
        %v7094 = vmul.f32 %v7077, 1.442695
        %v7095 = vpow.pop %v7094
        %v7096 = vmul.f32 %v7078, 1.442695
        %v7097 = vpow.pop %v7096
        %v7098 = vmul.f32 %v7079, 1.442695
        %v7099 = vpow.pop %v7098
        %v7100 = vmul.f32 %v7080, 1.442695
        %v7101 = vpow.pop %v7100
        %v7102 = vmul.f32 %v7081, 1.442695
        %v7103 = vpow.pop %v7102
        %v7104 = vmul.f32 %v7082, 1.442695
        %v7105 = vpow.pop %v7104
        %v7106 = vmul.f32 %v7083, 1.442695
        %v7107 = vpow.pop %v7106
        %v7108 = vmul.f32 %v7084, 1.442695
        %v7109 = vpow.pop %v7108
        %v7110 = vmul.f32 %v7085, 1.442695
        %v7111 = vpow.pop %v7110
        %v7112 = vmul.f32 %v7086, 1.442695
        %v7113 = vpow.pop %v7112
        %v7114 = vmul.f32 %v7087, 1.442695
        %v7115 = vpow.pop %v7114
        %v7116 = vmul.f32 %v7088, 1.442695
        %v7117 = vpow.pop %v7116
        %v7118 = vmul.f32 %v7089, 1.442695
        %v7119 = vpow.pop %v7118
        %v7120 = vmul.f32 %v7090, 1.442695
        %v7121 = vpow.pop %v7120
        %v7122 = vmul.f32 %v7091, 1.442695
        %v7123 = vpow.pop %v7122
        %7124 = vadd.xlane.f32.xlu0 %v7093
        %v7125 = vpop.xlane.xlu0 %7124
        %7126 = vadd.xlane.f32.xlu0 %v7095
        %v7127 = vpop.xlane.xlu0 %7126
        %7128 = vadd.xlane.f32.xlu0 %v7097
        %v7129 = vpop.xlane.xlu0 %7128
        %7130 = vadd.xlane.f32.xlu0 %v7099
        %v7131 = vpop.xlane.xlu0 %7130
        %7132 = vadd.xlane.f32.xlu0 %v7101
        %v7133 = vpop.xlane.xlu0 %7132
        %7134 = vadd.xlane.f32.xlu0 %v7103
        %v7135 = vpop.xlane.xlu0 %7134
        %7136 = vadd.xlane.f32.xlu0 %v7105
        %v7137 = vpop.xlane.xlu0 %7136
        %7138 = vadd.xlane.f32.xlu0 %v7107
        %v7139 = vpop.xlane.xlu0 %7138
        %7140 = vadd.xlane.f32.xlu0 %v7109
        %v7141 = vpop.xlane.xlu0 %7140
        %7142 = vadd.xlane.f32.xlu0 %v7111
        %v7143 = vpop.xlane.xlu0 %7142
        %7144 = vadd.xlane.f32.xlu0 %v7113
        %v7145 = vpop.xlane.xlu0 %7144
        %7146 = vadd.xlane.f32.xlu0 %v7115
        %v7147 = vpop.xlane.xlu0 %7146
        %7148 = vadd.xlane.f32.xlu0 %v7117
        %v7149 = vpop.xlane.xlu0 %7148
        %7150 = vadd.xlane.f32.xlu0 %v7119
        %v7151 = vpop.xlane.xlu0 %7150
        %7152 = vadd.xlane.f32.xlu0 %v7121
        %v7153 = vpop.xlane.xlu0 %7152
        %7154 = vadd.xlane.f32.xlu0 %v7123
        %v7155 = vpop.xlane.xlu0 %7154
        %v7156 = vrcp.pop %v7125
        %v7157 = vmul.f32 %v7125, %v7156
        %v7158 = vsub.f32 1.0, %v7157
        %v7159 = vmul.f32 %v7156, %v7158
        %v7160 = vadd.f32 %v7156, %v7159
        %vm7161 = vweird.f32 %v7125
        %vm7162 = vweird.f32 %v7156
        %vm7163 = vmor %vm7161, %vm7162
        %v7164 = vsel %vm7163, %v7156, %v7160
        %v7165 = vand.u32 2147483647, %v7125
        %vm7166 = vcmp.eq.f32.partialorder %v7165, 8.507059e+37
        %v7167 = vand.u32 %v7125, 2147483648
        %v7168 = vor.u32 1.1754944e-38, %v7167
        %v7169 = vsel %vm7166, %v7168, %v7164
        %v7170 = vmul.f32 %v7093, %v7169
        %v7171 = vrcp.pop %v7127
        %v7172 = vmul.f32 %v7127, %v7171
        %v7173 = vsub.f32 1.0, %v7172
        %v7174 = vmul.f32 %v7171, %v7173
        %v7175 = vadd.f32 %v7171, %v7174
        %vm7176 = vweird.f32 %v7127
        %vm7177 = vweird.f32 %v7171
        %vm7178 = vmor %vm7176, %vm7177
        %v7179 = vsel %vm7178, %v7171, %v7175
        %v7180 = vand.u32 2147483647, %v7127
        %vm7181 = vcmp.eq.f32.partialorder %v7180, 8.507059e+37
        %v7182 = vand.u32 %v7127, 2147483648
        %v7183 = vor.u32 1.1754944e-38, %v7182
        %v7184 = vsel %vm7181, %v7183, %v7179
        %v7185 = vmul.f32 %v7095, %v7184
        %v7186 = vrcp.pop %v7129
        %v7187 = vmul.f32 %v7129, %v7186
        %v7188 = vsub.f32 1.0, %v7187
        %v7189 = vmul.f32 %v7186, %v7188
        %v7190 = vadd.f32 %v7186, %v7189
        %vm7191 = vweird.f32 %v7129
        %vm7192 = vweird.f32 %v7186
        %vm7193 = vmor %vm7191, %vm7192
        %v7194 = vsel %vm7193, %v7186, %v7190
        %v7195 = vand.u32 2147483647, %v7129
        %vm7196 = vcmp.eq.f32.partialorder %v7195, 8.507059e+37
        %v7197 = vand.u32 %v7129, 2147483648
        %v7198 = vor.u32 1.1754944e-38, %v7197
        %v7199 = vsel %vm7196, %v7198, %v7194
        %v7200 = vmul.f32 %v7097, %v7199
        %v7201 = vrcp.pop %v7131
        %v7202 = vmul.f32 %v7131, %v7201
        %v7203 = vsub.f32 1.0, %v7202
        %v7204 = vmul.f32 %v7201, %v7203
        %v7205 = vadd.f32 %v7201, %v7204
        %vm7206 = vweird.f32 %v7131
        %vm7207 = vweird.f32 %v7201
        %vm7208 = vmor %vm7206, %vm7207
        %v7209 = vsel %vm7208, %v7201, %v7205
        %v7210 = vand.u32 2147483647, %v7131
        %vm7211 = vcmp.eq.f32.partialorder %v7210, 8.507059e+37
        %v7212 = vand.u32 %v7131, 2147483648
        %v7213 = vor.u32 1.1754944e-38, %v7212
        %v7214 = vsel %vm7211, %v7213, %v7209
        %v7215 = vmul.f32 %v7099, %v7214
        %v7216 = vrcp.pop %v7133
        %v7217 = vmul.f32 %v7133, %v7216
        %v7218 = vsub.f32 1.0, %v7217
        %v7219 = vmul.f32 %v7216, %v7218
        %v7220 = vadd.f32 %v7216, %v7219
        %vm7221 = vweird.f32 %v7133
        %vm7222 = vweird.f32 %v7216
        %vm7223 = vmor %vm7221, %vm7222
        %v7224 = vsel %vm7223, %v7216, %v7220
        %v7225 = vand.u32 2147483647, %v7133
        %vm7226 = vcmp.eq.f32.partialorder %v7225, 8.507059e+37
        %v7227 = vand.u32 %v7133, 2147483648
        %v7228 = vor.u32 1.1754944e-38, %v7227
        %v7229 = vsel %vm7226, %v7228, %v7224
        %v7230 = vmul.f32 %v7101, %v7229
        %v7231 = vrcp.pop %v7135
        %v7232 = vmul.f32 %v7135, %v7231
        %v7233 = vsub.f32 1.0, %v7232
        %v7234 = vmul.f32 %v7231, %v7233
        %v7235 = vadd.f32 %v7231, %v7234
        %vm7236 = vweird.f32 %v7135
        %vm7237 = vweird.f32 %v7231
        %vm7238 = vmor %vm7236, %vm7237
        %v7239 = vsel %vm7238, %v7231, %v7235
        %v7240 = vand.u32 2147483647, %v7135
        %vm7241 = vcmp.eq.f32.partialorder %v7240, 8.507059e+37
        %v7242 = vand.u32 %v7135, 2147483648
        %v7243 = vor.u32 1.1754944e-38, %v7242
        %v7244 = vsel %vm7241, %v7243, %v7239
        %v7245 = vmul.f32 %v7103, %v7244
        %v7246 = vrcp.pop %v7137
        %v7247 = vmul.f32 %v7137, %v7246
        %v7248 = vsub.f32 1.0, %v7247
        %v7249 = vmul.f32 %v7246, %v7248
        %v7250 = vadd.f32 %v7246, %v7249
        %vm7251 = vweird.f32 %v7137
        %vm7252 = vweird.f32 %v7246
        %vm7253 = vmor %vm7251, %vm7252
        %v7254 = vsel %vm7253, %v7246, %v7250
        %v7255 = vand.u32 2147483647, %v7137
        %vm7256 = vcmp.eq.f32.partialorder %v7255, 8.507059e+37
        %v7257 = vand.u32 %v7137, 2147483648
        %v7258 = vor.u32 1.1754944e-38, %v7257
        %v7259 = vsel %vm7256, %v7258, %v7254
        %v7260 = vmul.f32 %v7105, %v7259
        %v7261 = vrcp.pop %v7139
        %v7262 = vmul.f32 %v7139, %v7261
        %v7263 = vsub.f32 1.0, %v7262
        %v7264 = vmul.f32 %v7261, %v7263
        %v7265 = vadd.f32 %v7261, %v7264
        %vm7266 = vweird.f32 %v7139
        %vm7267 = vweird.f32 %v7261
        %vm7268 = vmor %vm7266, %vm7267
        %v7269 = vsel %vm7268, %v7261, %v7265
        %v7270 = vand.u32 2147483647, %v7139
        %vm7271 = vcmp.eq.f32.partialorder %v7270, 8.507059e+37
        %v7272 = vand.u32 %v7139, 2147483648
        %v7273 = vor.u32 1.1754944e-38, %v7272
        %v7274 = vsel %vm7271, %v7273, %v7269
        %v7275 = vmul.f32 %v7107, %v7274
        %v7276 = vrcp.pop %v7141
        %v7277 = vmul.f32 %v7141, %v7276
        %v7278 = vsub.f32 1.0, %v7277
        %v7279 = vmul.f32 %v7276, %v7278
        %v7280 = vadd.f32 %v7276, %v7279
        %vm7281 = vweird.f32 %v7141
        %vm7282 = vweird.f32 %v7276
        %vm7283 = vmor %vm7281, %vm7282
        %v7284 = vsel %vm7283, %v7276, %v7280
        %v7285 = vand.u32 2147483647, %v7141
        %vm7286 = vcmp.eq.f32.partialorder %v7285, 8.507059e+37
        %v7287 = vand.u32 %v7141, 2147483648
        %v7288 = vor.u32 1.1754944e-38, %v7287
        %v7289 = vsel %vm7286, %v7288, %v7284
        %v7290 = vmul.f32 %v7109, %v7289
        %v7291 = vrcp.pop %v7143
        %v7292 = vmul.f32 %v7143, %v7291
        %v7293 = vsub.f32 1.0, %v7292
        %v7294 = vmul.f32 %v7291, %v7293
        %v7295 = vadd.f32 %v7291, %v7294
        %vm7296 = vweird.f32 %v7143
        %vm7297 = vweird.f32 %v7291
        %vm7298 = vmor %vm7296, %vm7297
        %v7299 = vsel %vm7298, %v7291, %v7295
        %v7300 = vand.u32 2147483647, %v7143
        %vm7301 = vcmp.eq.f32.partialorder %v7300, 8.507059e+37
        %v7302 = vand.u32 %v7143, 2147483648
        %v7303 = vor.u32 1.1754944e-38, %v7302
        %v7304 = vsel %vm7301, %v7303, %v7299
        %v7305 = vmul.f32 %v7111, %v7304
        %v7306 = vrcp.pop %v7145
        %v7307 = vmul.f32 %v7145, %v7306
        %v7308 = vsub.f32 1.0, %v7307
        %v7309 = vmul.f32 %v7306, %v7308
        %v7310 = vadd.f32 %v7306, %v7309
        %vm7311 = vweird.f32 %v7145
        %vm7312 = vweird.f32 %v7306
        %vm7313 = vmor %vm7311, %vm7312
        %v7314 = vsel %vm7313, %v7306, %v7310
        %v7315 = vand.u32 2147483647, %v7145
        %vm7316 = vcmp.eq.f32.partialorder %v7315, 8.507059e+37
        %v7317 = vand.u32 %v7145, 2147483648
        %v7318 = vor.u32 1.1754944e-38, %v7317
        %v7319 = vsel %vm7316, %v7318, %v7314
        %v7320 = vmul.f32 %v7113, %v7319
        %v7321 = vrcp.pop %v7147
        %v7322 = vmul.f32 %v7147, %v7321
        %v7323 = vsub.f32 1.0, %v7322
        %v7324 = vmul.f32 %v7321, %v7323
        %v7325 = vadd.f32 %v7321, %v7324
        %vm7326 = vweird.f32 %v7147
        %vm7327 = vweird.f32 %v7321
        %vm7328 = vmor %vm7326, %vm7327
        %v7329 = vsel %vm7328, %v7321, %v7325
        %v7330 = vand.u32 2147483647, %v7147
        %vm7331 = vcmp.eq.f32.partialorder %v7330, 8.507059e+37
        %v7332 = vand.u32 %v7147, 2147483648
        %v7333 = vor.u32 1.1754944e-38, %v7332
        %v7334 = vsel %vm7331, %v7333, %v7329
        %v7335 = vmul.f32 %v7115, %v7334
        %v7336 = vrcp.pop %v7149
        %v7337 = vmul.f32 %v7149, %v7336
        %v7338 = vsub.f32 1.0, %v7337
        %v7339 = vmul.f32 %v7336, %v7338
        %v7340 = vadd.f32 %v7336, %v7339
        %vm7341 = vweird.f32 %v7149
        %vm7342 = vweird.f32 %v7336
        %vm7343 = vmor %vm7341, %vm7342
        %v7344 = vsel %vm7343, %v7336, %v7340
        %v7345 = vand.u32 2147483647, %v7149
        %vm7346 = vcmp.eq.f32.partialorder %v7345, 8.507059e+37
        %v7347 = vand.u32 %v7149, 2147483648
        %v7348 = vor.u32 1.1754944e-38, %v7347
        %v7349 = vsel %vm7346, %v7348, %v7344
        %v7350 = vmul.f32 %v7117, %v7349
        %v7351 = vrcp.pop %v7151
        %v7352 = vmul.f32 %v7151, %v7351
        %v7353 = vsub.f32 1.0, %v7352
        %v7354 = vmul.f32 %v7351, %v7353
        %v7355 = vadd.f32 %v7351, %v7354
        %vm7356 = vweird.f32 %v7151
        %vm7357 = vweird.f32 %v7351
        %vm7358 = vmor %vm7356, %vm7357
        %v7359 = vsel %vm7358, %v7351, %v7355
        %v7360 = vand.u32 2147483647, %v7151
        %vm7361 = vcmp.eq.f32.partialorder %v7360, 8.507059e+37
        %v7362 = vand.u32 %v7151, 2147483648
        %v7363 = vor.u32 1.1754944e-38, %v7362
        %v7364 = vsel %vm7361, %v7363, %v7359
        %v7365 = vmul.f32 %v7119, %v7364
        %v7366 = vrcp.pop %v7153
        %v7367 = vmul.f32 %v7153, %v7366
        %v7368 = vsub.f32 1.0, %v7367
        %v7369 = vmul.f32 %v7366, %v7368
        %v7370 = vadd.f32 %v7366, %v7369
        %vm7371 = vweird.f32 %v7153
        %vm7372 = vweird.f32 %v7366
        %vm7373 = vmor %vm7371, %vm7372
        %v7374 = vsel %vm7373, %v7366, %v7370
        %v7375 = vand.u32 2147483647, %v7153
        %vm7376 = vcmp.eq.f32.partialorder %v7375, 8.507059e+37
        %v7377 = vand.u32 %v7153, 2147483648
        %v7378 = vor.u32 1.1754944e-38, %v7377
        %v7379 = vsel %vm7376, %v7378, %v7374
        %v7380 = vmul.f32 %v7121, %v7379
        %v7381 = vrcp.pop %v7155
        %v7382 = vmul.f32 %v7155, %v7381
        %v7383 = vsub.f32 1.0, %v7382
        %v7384 = vmul.f32 %v7381, %v7383
        %v7385 = vadd.f32 %v7381, %v7384
        %vm7386 = vweird.f32 %v7155
        %vm7387 = vweird.f32 %v7381
        %vm7388 = vmor %vm7386, %vm7387
        %v7389 = vsel %vm7388, %v7381, %v7385
        %v7390 = vand.u32 2147483647, %v7155
        %vm7391 = vcmp.eq.f32.partialorder %v7390, 8.507059e+37
        %v7392 = vand.u32 %v7155, 2147483648
        %v7393 = vor.u32 1.1754944e-38, %v7392
        %v7394 = vsel %vm7391, %v7393, %v7389
        %v7395 = vmul.f32 %v7123, %v7394
        %v7396 = vadd.f32 %v7170, %v7185
        %v7397 = vadd.f32 %v7396, %v7200
        %v7398 = vadd.f32 %v7397, %v7215
        %v7399 = vadd.f32 %v7398, %v7230
        %v7400 = vadd.f32 %v7399, %v7245
        %v7401 = vadd.f32 %v7400, %v7260
        %v7402 = vadd.f32 %v7401, %v7275
        %v7403 = vadd.f32 %v7402, %v7290
        %v7404 = vadd.f32 %v7403, %v7305
        %v7405 = vadd.f32 %v7404, %v7320
        %v7406 = vadd.f32 %v7405, %v7335
        %v7407 = vadd.f32 %v7406, %v7350
        %v7408 = vadd.f32 %v7407, %v7365
        %v7409 = vadd.f32 %v7408, %v7380
        %v7410 = vadd.f32 %v7409, %v7395
        %v7411 = vrot.slane %v7410, 4
        %v7412 = vadd.f32 %v7410, %v7411
        %v7413 = vrot.slane %v7412, 2
        %v7414 = vadd.f32 %v7412, %v7413
        %v7415 = vrot.slane %v7414, 1
        %v7416 = vadd.f32 %v7414, %v7415
        %v7417 = vadd.f32 %v7416, 1e-09
        %v7418 = vrcp.pop %v7417
        %v7419 = vmul.f32 %v7170, %v7418
        %v7420 = vmul.f32 %v7185, %v7418
        %v7421 = vmul.f32 %v7200, %v7418
        %v7422 = vmul.f32 %v7215, %v7418
        %v7423 = vmul.f32 %v7230, %v7418
        %v7424 = vmul.f32 %v7245, %v7418
        %v7425 = vmul.f32 %v7260, %v7418
        %v7426 = vmul.f32 %v7275, %v7418
        %v7427 = vmul.f32 %v7290, %v7418
        %v7428 = vmul.f32 %v7305, %v7418
        %v7429 = vmul.f32 %v7320, %v7418
        %v7430 = vmul.f32 %v7335, %v7418
        %v7431 = vmul.f32 %v7350, %v7418
        %v7432 = vmul.f32 %v7365, %v7418
        %v7433 = vmul.f32 %v7380, %v7418
        %v7434 = vmul.f32 %v7395, %v7418
        %s7435 = scalar_lea.vmem %s6, 768
        %v7436 = vld [vmem:[%s7435] sm:$0xff]
        %v7437 = vld [vmem:[%s7435 + $0x8] sm:$0xff]
        %v7438 = vld [vmem:[%s7435 + $0x10] sm:$0xff]
        %v7439 = vld [vmem:[%s7435 + $0x18] sm:$0xff]
        %v7440 = vld [vmem:[%s7435 + $0x20] sm:$0xff]
        %v7441 = vld [vmem:[%s7435 + $0x28] sm:$0xff]
        %v7442 = vld [vmem:[%s7435 + $0x30] sm:$0xff]
        %v7443 = vld [vmem:[%s7435 + $0x38] sm:$0xff]
        %v7444 = vld [vmem:[%s7435 + $0x40] sm:$0xff]
        %v7445 = vld [vmem:[%s7435 + $0x48] sm:$0xff]
        %v7446 = vld [vmem:[%s7435 + $0x50] sm:$0xff]
        %v7447 = vld [vmem:[%s7435 + $0x58] sm:$0xff]
        %v7448 = vld [vmem:[%s7435 + $0x60] sm:$0xff]
        %v7449 = vld [vmem:[%s7435 + $0x68] sm:$0xff]
        %v7450 = vld [vmem:[%s7435 + $0x70] sm:$0xff]
        %v7451 = vld [vmem:[%s7435 + $0x78] sm:$0xff]
        %v7452 = vld [vmem:[%s7435 + $0x80] sm:$0xff]
        %v7453 = vld [vmem:[%s7435 + $0x88] sm:$0xff]
        %v7454 = vld [vmem:[%s7435 + $0x90] sm:$0xff]
        %v7455 = vld [vmem:[%s7435 + $0x98] sm:$0xff]
        %v7456 = vld [vmem:[%s7435 + $0xa0] sm:$0xff]
        %v7457 = vld [vmem:[%s7435 + $0xa8] sm:$0xff]
        %v7458 = vld [vmem:[%s7435 + $0xb0] sm:$0xff]
        %v7459 = vld [vmem:[%s7435 + $0xb8] sm:$0xff]
        %v7460 = vld [vmem:[%s7435 + $0xc0] sm:$0xff]
        %v7461 = vld [vmem:[%s7435 + $0xc8] sm:$0xff]
        %v7462 = vld [vmem:[%s7435 + $0xd0] sm:$0xff]
        %v7463 = vld [vmem:[%s7435 + $0xd8] sm:$0xff]
        %v7464 = vld [vmem:[%s7435 + $0xe0] sm:$0xff]
        %v7465 = vld [vmem:[%s7435 + $0xe8] sm:$0xff]
        %v7466 = vld [vmem:[%s7435 + $0xf0] sm:$0xff]
        %v7467 = vld [vmem:[%s7435 + $0xf8] sm:$0xff]
        %s7468 = scalar_lea.vmem %s7, 6
        %v7469 = vld [vmem:[%s7468] sm:$0x3]
        %v7471 = vperm.slane %v7469, 0
        %v7472 = vperm.slane %v7469, 1
        %v7507 = vunpack.c.l.b16 %v7436
        %v7508 = vunpack.c.h.b16 %v7436
        %v7509 = vunpack.c.l.b16 %v7437
        %v7510 = vunpack.c.h.b16 %v7437
        %v7511 = vunpack.c.l.b16 %v7438
        %v7512 = vunpack.c.h.b16 %v7438
        %v7513 = vunpack.c.l.b16 %v7439
        %v7514 = vunpack.c.h.b16 %v7439
        %v7515 = vunpack.c.l.b16 %v7440
        %v7516 = vunpack.c.h.b16 %v7440
        %v7517 = vunpack.c.l.b16 %v7441
        %v7518 = vunpack.c.h.b16 %v7441
        %v7519 = vunpack.c.l.b16 %v7442
        %v7520 = vunpack.c.h.b16 %v7442
        %v7521 = vunpack.c.l.b16 %v7443
        %v7522 = vunpack.c.h.b16 %v7443
        %v7523 = vunpack.c.l.b16 %v7444
        %v7524 = vunpack.c.h.b16 %v7444
        %v7525 = vunpack.c.l.b16 %v7445
        %v7526 = vunpack.c.h.b16 %v7445
        %v7527 = vunpack.c.l.b16 %v7446
        %v7528 = vunpack.c.h.b16 %v7446
        %v7529 = vunpack.c.l.b16 %v7447
        %v7530 = vunpack.c.h.b16 %v7447
        %v7531 = vunpack.c.l.b16 %v7448
        %v7532 = vunpack.c.h.b16 %v7448
        %v7533 = vunpack.c.l.b16 %v7449
        %v7534 = vunpack.c.h.b16 %v7449
        %v7535 = vunpack.c.l.b16 %v7450
        %v7536 = vunpack.c.h.b16 %v7450
        %v7537 = vunpack.c.l.b16 %v7451
        %v7538 = vunpack.c.h.b16 %v7451
        %v7539 = vunpack.c.l.b16 %v7452
        %v7540 = vunpack.c.h.b16 %v7452
        %v7541 = vunpack.c.l.b16 %v7453
        %v7542 = vunpack.c.h.b16 %v7453
        %v7543 = vunpack.c.l.b16 %v7454
        %v7544 = vunpack.c.h.b16 %v7454
        %v7545 = vunpack.c.l.b16 %v7455
        %v7546 = vunpack.c.h.b16 %v7455
        %v7547 = vunpack.c.l.b16 %v7456
        %v7548 = vunpack.c.h.b16 %v7456
        %v7549 = vunpack.c.l.b16 %v7457
        %v7550 = vunpack.c.h.b16 %v7457
        %v7551 = vunpack.c.l.b16 %v7458
        %v7552 = vunpack.c.h.b16 %v7458
        %v7553 = vunpack.c.l.b16 %v7459
        %v7554 = vunpack.c.h.b16 %v7459
        %v7555 = vunpack.c.l.b16 %v7460
        %v7556 = vunpack.c.h.b16 %v7460
        %v7557 = vunpack.c.l.b16 %v7461
        %v7558 = vunpack.c.h.b16 %v7461
        %v7559 = vunpack.c.l.b16 %v7462
        %v7560 = vunpack.c.h.b16 %v7462
        %v7561 = vunpack.c.l.b16 %v7463
        %v7562 = vunpack.c.h.b16 %v7463
        %v7563 = vunpack.c.l.b16 %v7464
        %v7564 = vunpack.c.h.b16 %v7464
        %v7565 = vunpack.c.l.b16 %v7465
        %v7566 = vunpack.c.h.b16 %v7465
        %v7567 = vunpack.c.l.b16 %v7466
        %v7568 = vunpack.c.h.b16 %v7466
        %v7569 = vunpack.c.l.b16 %v7467
        %v7570 = vunpack.c.h.b16 %v7467
        %v7571 = vpack.c.b16 %v7509, %v7507
        %v7572 = vpack.c.b16 %v7510, %v7508
        %v7573 = vpack.c.b16 %v7513, %v7511
        %v7574 = vpack.c.b16 %v7514, %v7512
        %v7575 = vpack.c.b16 %v7517, %v7515
        %v7576 = vpack.c.b16 %v7518, %v7516
        %v7577 = vpack.c.b16 %v7521, %v7519
        %v7578 = vpack.c.b16 %v7522, %v7520
        %v7579 = vpack.c.b16 %v7525, %v7523
        %v7580 = vpack.c.b16 %v7526, %v7524
        %v7581 = vpack.c.b16 %v7529, %v7527
        %v7582 = vpack.c.b16 %v7530, %v7528
        %v7583 = vpack.c.b16 %v7533, %v7531
        %v7584 = vpack.c.b16 %v7534, %v7532
        %v7585 = vpack.c.b16 %v7537, %v7535
        %v7586 = vpack.c.b16 %v7538, %v7536
        %v7587 = vpack.c.b16 %v7541, %v7539
        %v7588 = vpack.c.b16 %v7542, %v7540
        %v7589 = vpack.c.b16 %v7545, %v7543
        %v7590 = vpack.c.b16 %v7546, %v7544
        %v7591 = vpack.c.b16 %v7549, %v7547
        %v7592 = vpack.c.b16 %v7550, %v7548
        %v7593 = vpack.c.b16 %v7553, %v7551
        %v7594 = vpack.c.b16 %v7554, %v7552
        %v7595 = vpack.c.b16 %v7557, %v7555
        %v7596 = vpack.c.b16 %v7558, %v7556
        %v7597 = vpack.c.b16 %v7561, %v7559
        %v7598 = vpack.c.b16 %v7562, %v7560
        %v7599 = vpack.c.b16 %v7565, %v7563
        %v7600 = vpack.c.b16 %v7566, %v7564
        %v7601 = vpack.c.b16 %v7569, %v7567
        %v7602 = vpack.c.b16 %v7570, %v7568
        %7635 = vmatpush.bf16.msra.mxu0 %v7585
        %7636 = vmatpush.bf16.msra.mxu0 %v7583
        %7637 = vmatpush.bf16.msra.mxu0 %v7581
        %7638 = vmatpush.bf16.msra.mxu0 %v7579
        %7639 = vmatpush.bf16.msra.mxu0 %v7577
        %7640 = vmatpush.bf16.msra.mxu0 %v7575
        %7641 = vmatpush.bf16.msra.mxu0 %v7573
        %7642 = vmatpush.bf16.msra.mxu0 %v7571
        %7643 = vmatmul.bf16.gmra.mxu0 %v6720
        %v7644 = vpop.f32.mrf.mxu0
        %v7645 = vadd.f32 %v7471, %v7644
        %v7646 = vpop.f32.mrf.mxu0
        %v7647 = vadd.f32 %v7471, %v7646
        %7648 = vmatmul.bf16.gmra.mxu0 %v6722
        %v7649 = vpop.f32.mrf.mxu0
        %v7650 = vadd.f32 %v7471, %v7649
        %v7651 = vpop.f32.mrf.mxu0
        %v7652 = vadd.f32 %v7471, %v7651
        %7653 = vmatmul.bf16.gmra.mxu0 %v6724
        %v7654 = vpop.f32.mrf.mxu0
        %v7655 = vadd.f32 %v7471, %v7654
        %v7656 = vpop.f32.mrf.mxu0
        %v7657 = vadd.f32 %v7471, %v7656
        %7658 = vmatmul.bf16.gmra.mxu0 %v6726
        %v7659 = vpop.f32.mrf.mxu0
        %v7660 = vadd.f32 %v7471, %v7659
        %v7661 = vpop.f32.mrf.mxu0
        %v7662 = vadd.f32 %v7471, %v7661
        %7663 = vmatmul.bf16.gmra.mxu0 %v6728
        %v7664 = vpop.f32.mrf.mxu0
        %v7665 = vadd.f32 %v7471, %v7664
        %v7666 = vpop.f32.mrf.mxu0
        %v7667 = vadd.f32 %v7471, %v7666
        %7668 = vmatmul.bf16.gmra.mxu0 %v6730
        %v7669 = vpop.f32.mrf.mxu0
        %v7670 = vadd.f32 %v7471, %v7669
        %v7671 = vpop.f32.mrf.mxu0
        %v7672 = vadd.f32 %v7471, %v7671
        %7673 = vmatmul.bf16.gmra.mxu0 %v6732
        %v7674 = vpop.f32.mrf.mxu0
        %v7675 = vadd.f32 %v7471, %v7674
        %v7676 = vpop.f32.mrf.mxu0
        %v7677 = vadd.f32 %v7471, %v7676
        %7678 = vmatmul.bf16.gmra.mxu0 %v6734
        %v7679 = vpop.f32.mrf.mxu0
        %v7680 = vadd.f32 %v7471, %v7679
        %v7681 = vpop.f32.mrf.mxu0
        %v7682 = vadd.f32 %v7471, %v7681
        %7683 = vdwg.mxu0
        %7684 = vmatpush.bf16.msra.mxu0 %v7601
        %7685 = vmatpush.bf16.msra.mxu0 %v7599
        %7686 = vmatpush.bf16.msra.mxu0 %v7597
        %7687 = vmatpush.bf16.msra.mxu0 %v7595
        %7688 = vmatpush.bf16.msra.mxu0 %v7593
        %7689 = vmatpush.bf16.msra.mxu0 %v7591
        %7690 = vmatpush.bf16.msra.mxu0 %v7589
        %7691 = vmatpush.bf16.msra.mxu0 %v7587
        %7692 = vmatmul.bf16.gmra.mxu0 %v6721
        %v7693 = vpop.f32.mrf.mxu0
        %v7694 = vadd.f32 %v7645, %v7693
        %v7695 = vpop.f32.mrf.mxu0
        %v7696 = vadd.f32 %v7647, %v7695
        %7697 = vmatmul.bf16.gmra.mxu0 %v6723
        %v7698 = vpop.f32.mrf.mxu0
        %v7699 = vadd.f32 %v7650, %v7698
        %v7700 = vpop.f32.mrf.mxu0
        %v7701 = vadd.f32 %v7652, %v7700
        %7702 = vmatmul.bf16.gmra.mxu0 %v6725
        %v7703 = vpop.f32.mrf.mxu0
        %v7704 = vadd.f32 %v7655, %v7703
        %v7705 = vpop.f32.mrf.mxu0
        %v7706 = vadd.f32 %v7657, %v7705
        %7707 = vmatmul.bf16.gmra.mxu0 %v6727
        %v7708 = vpop.f32.mrf.mxu0
        %v7709 = vadd.f32 %v7660, %v7708
        %v7710 = vpop.f32.mrf.mxu0
        %v7711 = vadd.f32 %v7662, %v7710
        %7712 = vmatmul.bf16.gmra.mxu0 %v6729
        %v7713 = vpop.f32.mrf.mxu0
        %v7714 = vadd.f32 %v7665, %v7713
        %v7715 = vpop.f32.mrf.mxu0
        %v7716 = vadd.f32 %v7667, %v7715
        %7717 = vmatmul.bf16.gmra.mxu0 %v6731
        %v7718 = vpop.f32.mrf.mxu0
        %v7719 = vadd.f32 %v7670, %v7718
        %v7720 = vpop.f32.mrf.mxu0
        %v7721 = vadd.f32 %v7672, %v7720
        %7722 = vmatmul.bf16.gmra.mxu0 %v6733
        %v7723 = vpop.f32.mrf.mxu0
        %v7724 = vadd.f32 %v7675, %v7723
        %v7725 = vpop.f32.mrf.mxu0
        %v7726 = vadd.f32 %v7677, %v7725
        %7727 = vmatmul.bf16.gmra.mxu0 %v6735
        %v7728 = vpop.f32.mrf.mxu0
        %v7729 = vadd.f32 %v7680, %v7728
        %v7730 = vpop.f32.mrf.mxu0
        %v7731 = vadd.f32 %v7682, %v7730
        %7732 = vdwg.mxu0
        %7733 = vmatpush.bf16.msra.mxu0 %v7586
        %7734 = vmatpush.bf16.msra.mxu0 %v7584
        %7735 = vmatpush.bf16.msra.mxu0 %v7582
        %7736 = vmatpush.bf16.msra.mxu0 %v7580
        %7737 = vmatpush.bf16.msra.mxu0 %v7578
        %7738 = vmatpush.bf16.msra.mxu0 %v7576
        %7739 = vmatpush.bf16.msra.mxu0 %v7574
        %7740 = vmatpush.bf16.msra.mxu0 %v7572
        %7741 = vmatmul.bf16.gmra.mxu0 %v6720
        %v7742 = vpop.f32.mrf.mxu0
        %v7743 = vadd.f32 %v7472, %v7742
        %v7744 = vpop.f32.mrf.mxu0
        %v7745 = vadd.f32 %v7472, %v7744
        %7746 = vmatmul.bf16.gmra.mxu0 %v6722
        %v7747 = vpop.f32.mrf.mxu0
        %v7748 = vadd.f32 %v7472, %v7747
        %v7749 = vpop.f32.mrf.mxu0
        %v7750 = vadd.f32 %v7472, %v7749
        %7751 = vmatmul.bf16.gmra.mxu0 %v6724
        %v7752 = vpop.f32.mrf.mxu0
        %v7753 = vadd.f32 %v7472, %v7752
        %v7754 = vpop.f32.mrf.mxu0
        %v7755 = vadd.f32 %v7472, %v7754
        %7756 = vmatmul.bf16.gmra.mxu0 %v6726
        %v7757 = vpop.f32.mrf.mxu0
        %v7758 = vadd.f32 %v7472, %v7757
        %v7759 = vpop.f32.mrf.mxu0
        %v7760 = vadd.f32 %v7472, %v7759
        %7761 = vmatmul.bf16.gmra.mxu0 %v6728
        %v7762 = vpop.f32.mrf.mxu0
        %v7763 = vadd.f32 %v7472, %v7762
        %v7764 = vpop.f32.mrf.mxu0
        %v7765 = vadd.f32 %v7472, %v7764
        %7766 = vmatmul.bf16.gmra.mxu0 %v6730
        %v7767 = vpop.f32.mrf.mxu0
        %v7768 = vadd.f32 %v7472, %v7767
        %v7769 = vpop.f32.mrf.mxu0
        %v7770 = vadd.f32 %v7472, %v7769
        %7771 = vmatmul.bf16.gmra.mxu0 %v6732
        %v7772 = vpop.f32.mrf.mxu0
        %v7773 = vadd.f32 %v7472, %v7772
        %v7774 = vpop.f32.mrf.mxu0
        %v7775 = vadd.f32 %v7472, %v7774
        %7776 = vmatmul.bf16.gmra.mxu0 %v6734
        %v7777 = vpop.f32.mrf.mxu0
        %v7778 = vadd.f32 %v7472, %v7777
        %v7779 = vpop.f32.mrf.mxu0
        %v7780 = vadd.f32 %v7472, %v7779
        %7781 = vdwg.mxu0
        %7782 = vmatpush.bf16.msra.mxu0 %v7602
        %7783 = vmatpush.bf16.msra.mxu0 %v7600
        %7784 = vmatpush.bf16.msra.mxu0 %v7598
        %7785 = vmatpush.bf16.msra.mxu0 %v7596
        %7786 = vmatpush.bf16.msra.mxu0 %v7594
        %7787 = vmatpush.bf16.msra.mxu0 %v7592
        %7788 = vmatpush.bf16.msra.mxu0 %v7590
        %7789 = vmatpush.bf16.msra.mxu0 %v7588
        %7790 = vmatmul.bf16.gmra.mxu0 %v6721
        %v7791 = vpop.f32.mrf.mxu0
        %v7792 = vadd.f32 %v7743, %v7791
        %v7793 = vpop.f32.mrf.mxu0
        %v7794 = vadd.f32 %v7745, %v7793
        %7795 = vmatmul.bf16.gmra.mxu0 %v6723
        %v7796 = vpop.f32.mrf.mxu0
        %v7797 = vadd.f32 %v7748, %v7796
        %v7798 = vpop.f32.mrf.mxu0
        %v7799 = vadd.f32 %v7750, %v7798
        %7800 = vmatmul.bf16.gmra.mxu0 %v6725
        %v7801 = vpop.f32.mrf.mxu0
        %v7802 = vadd.f32 %v7753, %v7801
        %v7803 = vpop.f32.mrf.mxu0
        %v7804 = vadd.f32 %v7755, %v7803
        %7805 = vmatmul.bf16.gmra.mxu0 %v6727
        %v7806 = vpop.f32.mrf.mxu0
        %v7807 = vadd.f32 %v7758, %v7806
        %v7808 = vpop.f32.mrf.mxu0
        %v7809 = vadd.f32 %v7760, %v7808
        %7810 = vmatmul.bf16.gmra.mxu0 %v6729
        %v7811 = vpop.f32.mrf.mxu0
        %v7812 = vadd.f32 %v7763, %v7811
        %v7813 = vpop.f32.mrf.mxu0
        %v7814 = vadd.f32 %v7765, %v7813
        %7815 = vmatmul.bf16.gmra.mxu0 %v6731
        %v7816 = vpop.f32.mrf.mxu0
        %v7817 = vadd.f32 %v7768, %v7816
        %v7818 = vpop.f32.mrf.mxu0
        %v7819 = vadd.f32 %v7770, %v7818
        %7820 = vmatmul.bf16.gmra.mxu0 %v6733
        %v7821 = vpop.f32.mrf.mxu0
        %v7822 = vadd.f32 %v7773, %v7821
        %v7823 = vpop.f32.mrf.mxu0
        %v7824 = vadd.f32 %v7775, %v7823
        %7825 = vmatmul.bf16.gmra.mxu0 %v6735
        %v7826 = vpop.f32.mrf.mxu0
        %v7827 = vadd.f32 %v7778, %v7826
        %v7828 = vpop.f32.mrf.mxu0
        %v7829 = vadd.f32 %v7780, %v7828
        %7830 = vdwg.mxu0
        %v7831 = vpack.c.bf16 %v7420, %v7419
        %v7832 = vpack.c.bf16 %v7422, %v7421
        %v7833 = vpack.c.bf16 %v7424, %v7423
        %v7834 = vpack.c.bf16 %v7426, %v7425
        %v7835 = vpack.c.bf16 %v7428, %v7427
        %v7836 = vpack.c.bf16 %v7430, %v7429
        %v7837 = vpack.c.bf16 %v7432, %v7431
        %v7838 = vpack.c.bf16 %v7434, %v7433
        %v7839 = vpack.c.bf16 %v7696, %v7694
        %v7840 = vpack.c.bf16 %v7794, %v7792
        %v7841 = vpack.c.bf16 %v7701, %v7699
        %v7842 = vpack.c.bf16 %v7799, %v7797
        %v7843 = vpack.c.bf16 %v7706, %v7704
        %v7844 = vpack.c.bf16 %v7804, %v7802
        %v7845 = vpack.c.bf16 %v7711, %v7709
        %v7846 = vpack.c.bf16 %v7809, %v7807
        %v7847 = vpack.c.bf16 %v7716, %v7714
        %v7848 = vpack.c.bf16 %v7814, %v7812
        %v7849 = vpack.c.bf16 %v7721, %v7719
        %v7850 = vpack.c.bf16 %v7819, %v7817
        %v7851 = vpack.c.bf16 %v7726, %v7724
        %v7852 = vpack.c.bf16 %v7824, %v7822
        %v7853 = vpack.c.bf16 %v7731, %v7729
        %v7854 = vpack.c.bf16 %v7829, %v7827
        %7855 = vxpose.xlu0.c.b16.start [1/8] %v7831, 128
        %7856 = vxpose.xlu0.c.b16.cont [2/8] %v7832, 128
        %7857 = vxpose.xlu0.c.b16.cont [3/8] %v7833, 128
        %7858 = vxpose.xlu0.c.b16.cont [4/8] %v7834, 128
        %7859 = vxpose.xlu0.c.b16.cont [5/8] %v7835, 128
        %7860 = vxpose.xlu0.c.b16.cont [6/8] %v7836, 128
        %7861 = vxpose.xlu0.c.b16.cont [7/8] %v7837, 128
        %7862 = vxpose.xlu0.c.b16.end [8/8] %v7838, 128
        %v7863 = vpop.trf.xlu0
        %v7864 = vpop.trf.xlu0
        %v7865 = vpop.trf.xlu0
        %v7866 = vpop.trf.xlu0
        %v7867 = vpop.trf.xlu0
        %v7868 = vpop.trf.xlu0
        %v7869 = vpop.trf.xlu0
        %v7870 = vpop.trf.xlu0
        %7871 = vmatpush.bf16.msra.mxu0 %v7853
        %7872 = vmatpush.bf16.msra.mxu0 %v7851
        %7873 = vmatpush.bf16.msra.mxu0 %v7849
        %7874 = vmatpush.bf16.msra.mxu0 %v7847
        %7875 = vmatpush.bf16.msra.mxu0 %v7845
        %7876 = vmatpush.bf16.msra.mxu0 %v7843
        %7877 = vmatpush.bf16.msra.mxu0 %v7841
        %7878 = vmatpush.bf16.msra.mxu0 %v7839
        %7879 = vmatmul.bf16.gmra.mxu0 %v7863
        %v7880 = vpop.f32.mrf.mxu0
        %v7881 = vadd.f32 0.0, %v7880
        %v7882 = vpop.f32.mrf.mxu0
        %v7883 = vadd.f32 0.0, %v7882
        %7884 = vmatmul.bf16.gmra.mxu0 %v7864
        %v7885 = vpop.f32.mrf.mxu0
        %v7886 = vadd.f32 0.0, %v7885
        %v7887 = vpop.f32.mrf.mxu0
        %v7888 = vadd.f32 0.0, %v7887
        %7889 = vmatmul.bf16.gmra.mxu0 %v7865
        %v7890 = vpop.f32.mrf.mxu0
        %v7891 = vadd.f32 0.0, %v7890
        %v7892 = vpop.f32.mrf.mxu0
        %v7893 = vadd.f32 0.0, %v7892
        %7894 = vmatmul.bf16.gmra.mxu0 %v7866
        %v7895 = vpop.f32.mrf.mxu0
        %v7896 = vadd.f32 0.0, %v7895
        %v7897 = vpop.f32.mrf.mxu0
        %v7898 = vadd.f32 0.0, %v7897
        %7899 = vmatmul.bf16.gmra.mxu0 %v7867
        %v7900 = vpop.f32.mrf.mxu0
        %v7901 = vadd.f32 0.0, %v7900
        %v7902 = vpop.f32.mrf.mxu0
        %v7903 = vadd.f32 0.0, %v7902
        %7904 = vmatmul.bf16.gmra.mxu0 %v7868
        %v7905 = vpop.f32.mrf.mxu0
        %v7906 = vadd.f32 0.0, %v7905
        %v7907 = vpop.f32.mrf.mxu0
        %v7908 = vadd.f32 0.0, %v7907
        %7909 = vmatmul.bf16.gmra.mxu0 %v7869
        %v7910 = vpop.f32.mrf.mxu0
        %v7911 = vadd.f32 0.0, %v7910
        %v7912 = vpop.f32.mrf.mxu0
        %v7913 = vadd.f32 0.0, %v7912
        %7914 = vmatmul.bf16.gmra.mxu0 %v7870
        %v7915 = vpop.f32.mrf.mxu0
        %v7916 = vadd.f32 0.0, %v7915
        %v7917 = vpop.f32.mrf.mxu0
        %v7918 = vadd.f32 0.0, %v7917
        %7919 = vdwg.mxu0
        %7920 = vmatpush.bf16.msra.mxu0 %v7854
        %7921 = vmatpush.bf16.msra.mxu0 %v7852
        %7922 = vmatpush.bf16.msra.mxu0 %v7850
        %7923 = vmatpush.bf16.msra.mxu0 %v7848
        %7924 = vmatpush.bf16.msra.mxu0 %v7846
        %7925 = vmatpush.bf16.msra.mxu0 %v7844
        %7926 = vmatpush.bf16.msra.mxu0 %v7842
        %7927 = vmatpush.bf16.msra.mxu0 %v7840
        %7928 = vmatmul.bf16.gmra.mxu0 %v7863
        %v7929 = vpop.f32.mrf.mxu0
        %v7930 = vadd.f32 0.0, %v7929
        %v7931 = vpop.f32.mrf.mxu0
        %v7932 = vadd.f32 0.0, %v7931
        %7933 = vmatmul.bf16.gmra.mxu0 %v7864
        %v7934 = vpop.f32.mrf.mxu0
        %v7935 = vadd.f32 0.0, %v7934
        %v7936 = vpop.f32.mrf.mxu0
        %v7937 = vadd.f32 0.0, %v7936
        %7938 = vmatmul.bf16.gmra.mxu0 %v7865
        %v7939 = vpop.f32.mrf.mxu0
        %v7940 = vadd.f32 0.0, %v7939
        %v7941 = vpop.f32.mrf.mxu0
        %v7942 = vadd.f32 0.0, %v7941
        %7943 = vmatmul.bf16.gmra.mxu0 %v7866
        %v7944 = vpop.f32.mrf.mxu0
        %v7945 = vadd.f32 0.0, %v7944
        %v7946 = vpop.f32.mrf.mxu0
        %v7947 = vadd.f32 0.0, %v7946
        %7948 = vmatmul.bf16.gmra.mxu0 %v7867
        %v7949 = vpop.f32.mrf.mxu0
        %v7950 = vadd.f32 0.0, %v7949
        %v7951 = vpop.f32.mrf.mxu0
        %v7952 = vadd.f32 0.0, %v7951
        %7953 = vmatmul.bf16.gmra.mxu0 %v7868
        %v7954 = vpop.f32.mrf.mxu0
        %v7955 = vadd.f32 0.0, %v7954
        %v7956 = vpop.f32.mrf.mxu0
        %v7957 = vadd.f32 0.0, %v7956
        %7958 = vmatmul.bf16.gmra.mxu0 %v7869
        %v7959 = vpop.f32.mrf.mxu0
        %v7960 = vadd.f32 0.0, %v7959
        %v7961 = vpop.f32.mrf.mxu0
        %v7962 = vadd.f32 0.0, %v7961
        %7963 = vmatmul.bf16.gmra.mxu0 %v7870
        %v7964 = vpop.f32.mrf.mxu0
        %v7965 = vadd.f32 0.0, %v7964
        %v7966 = vpop.f32.mrf.mxu0
        %v7967 = vadd.f32 0.0, %v7966
        %7968 = vdwg.mxu0
        %v7969 = vsub.f32 %v6655, %v7881
        %v7970 = vsub.f32 %v6656, %v7930
        %v7971 = vsub.f32 %v6657, %v7883
        %v7972 = vsub.f32 %v6658, %v7932
        %v7973 = vsub.f32 %v6659, %v7886
        %v7974 = vsub.f32 %v6660, %v7935
        %v7975 = vsub.f32 %v6661, %v7888
        %v7976 = vsub.f32 %v6662, %v7937
        %v7977 = vsub.f32 %v6663, %v7891
        %v7978 = vsub.f32 %v6664, %v7940
        %v7979 = vsub.f32 %v6665, %v7893
        %v7980 = vsub.f32 %v6666, %v7942
        %v7981 = vsub.f32 %v6667, %v7896
        %v7982 = vsub.f32 %v6668, %v7945
        %v7983 = vsub.f32 %v6669, %v7898
        %v7984 = vsub.f32 %v6670, %v7947
        %v7985 = vsub.f32 %v6671, %v7901
        %v7986 = vsub.f32 %v6672, %v7950
        %v7987 = vsub.f32 %v6673, %v7903
        %v7988 = vsub.f32 %v6674, %v7952
        %v7989 = vsub.f32 %v6675, %v7906
        %v7990 = vsub.f32 %v6676, %v7955
        %v7991 = vsub.f32 %v6677, %v7908
        %v7992 = vsub.f32 %v6678, %v7957
        %v7993 = vsub.f32 %v6679, %v7911
        %v7994 = vsub.f32 %v6680, %v7960
        %v7995 = vsub.f32 %v6681, %v7913
        %v7996 = vsub.f32 %v6682, %v7962
        %v7997 = vsub.f32 %v6683, %v7916
        %v7998 = vsub.f32 %v6684, %v7965
        %v7999 = vsub.f32 %v6685, %v7918
        %v8000 = vsub.f32 %v6686, %v7967
        %v8001 = vpack.c.bf16 %v7971, %v7969
        %v8002 = vpack.c.bf16 %v7972, %v7970
        %v8003 = vpack.c.bf16 %v7975, %v7973
        %v8004 = vpack.c.bf16 %v7976, %v7974
        %v8005 = vpack.c.bf16 %v7979, %v7977
        %v8006 = vpack.c.bf16 %v7980, %v7978
        %v8007 = vpack.c.bf16 %v7983, %v7981
        %v8008 = vpack.c.bf16 %v7984, %v7982
        %v8009 = vpack.c.bf16 %v7987, %v7985
        %v8010 = vpack.c.bf16 %v7988, %v7986
        %v8011 = vpack.c.bf16 %v7991, %v7989
        %v8012 = vpack.c.bf16 %v7992, %v7990
        %v8013 = vpack.c.bf16 %v7995, %v7993
        %v8014 = vpack.c.bf16 %v7996, %v7994
        %v8015 = vpack.c.bf16 %v7999, %v7997
        %v8016 = vpack.c.bf16 %v8000, %v7998
        %s8017 = scalar_lea.vmem [#allocation7], 768
        %v8018 = vld [vmem:[%s8017] sm:$0xff]
        %v8019 = vld [vmem:[%s8017 + $0x8] sm:$0xff]
        %v8020 = vld [vmem:[%s8017 + $0x10] sm:$0xff]
        %v8021 = vld [vmem:[%s8017 + $0x18] sm:$0xff]
        %v8022 = vld [vmem:[%s8017 + $0x20] sm:$0xff]
        %v8023 = vld [vmem:[%s8017 + $0x28] sm:$0xff]
        %v8024 = vld [vmem:[%s8017 + $0x30] sm:$0xff]
        %v8025 = vld [vmem:[%s8017 + $0x38] sm:$0xff]
        %v8026 = vld [vmem:[%s8017 + $0x40] sm:$0xff]
        %v8027 = vld [vmem:[%s8017 + $0x48] sm:$0xff]
        %v8028 = vld [vmem:[%s8017 + $0x50] sm:$0xff]
        %v8029 = vld [vmem:[%s8017 + $0x58] sm:$0xff]
        %v8030 = vld [vmem:[%s8017 + $0x60] sm:$0xff]
        %v8031 = vld [vmem:[%s8017 + $0x68] sm:$0xff]
        %v8032 = vld [vmem:[%s8017 + $0x70] sm:$0xff]
        %v8033 = vld [vmem:[%s8017 + $0x78] sm:$0xff]
        %v8034 = vld [vmem:[%s8017 + $0x80] sm:$0xff]
        %v8035 = vld [vmem:[%s8017 + $0x88] sm:$0xff]
        %v8036 = vld [vmem:[%s8017 + $0x90] sm:$0xff]
        %v8037 = vld [vmem:[%s8017 + $0x98] sm:$0xff]
        %v8038 = vld [vmem:[%s8017 + $0xa0] sm:$0xff]
        %v8039 = vld [vmem:[%s8017 + $0xa8] sm:$0xff]
        %v8040 = vld [vmem:[%s8017 + $0xb0] sm:$0xff]
        %v8041 = vld [vmem:[%s8017 + $0xb8] sm:$0xff]
        %v8042 = vld [vmem:[%s8017 + $0xc0] sm:$0xff]
        %v8043 = vld [vmem:[%s8017 + $0xc8] sm:$0xff]
        %v8044 = vld [vmem:[%s8017 + $0xd0] sm:$0xff]
        %v8045 = vld [vmem:[%s8017 + $0xd8] sm:$0xff]
        %v8046 = vld [vmem:[%s8017 + $0xe0] sm:$0xff]
        %v8047 = vld [vmem:[%s8017 + $0xe8] sm:$0xff]
        %v8048 = vld [vmem:[%s8017 + $0xf0] sm:$0xff]
        %v8049 = vld [vmem:[%s8017 + $0xf8] sm:$0xff]
        %s8050 = scalar_lea.vmem [#allocation9], 6
        %v8051 = vld [vmem:[%s8050] sm:$0x3]
        %v8053 = vperm.slane %v8051, 0
        %v8054 = vperm.slane %v8051, 1
        %v8089 = vunpack.c.l.b16 %v8018
        %v8090 = vunpack.c.h.b16 %v8018
        %v8091 = vunpack.c.l.b16 %v8019
        %v8092 = vunpack.c.h.b16 %v8019
        %v8093 = vunpack.c.l.b16 %v8020
        %v8094 = vunpack.c.h.b16 %v8020
        %v8095 = vunpack.c.l.b16 %v8021
        %v8096 = vunpack.c.h.b16 %v8021
        %v8097 = vunpack.c.l.b16 %v8022
        %v8098 = vunpack.c.h.b16 %v8022
        %v8099 = vunpack.c.l.b16 %v8023
        %v8100 = vunpack.c.h.b16 %v8023
        %v8101 = vunpack.c.l.b16 %v8024
        %v8102 = vunpack.c.h.b16 %v8024
        %v8103 = vunpack.c.l.b16 %v8025
        %v8104 = vunpack.c.h.b16 %v8025
        %v8105 = vunpack.c.l.b16 %v8026
        %v8106 = vunpack.c.h.b16 %v8026
        %v8107 = vunpack.c.l.b16 %v8027
        %v8108 = vunpack.c.h.b16 %v8027
        %v8109 = vunpack.c.l.b16 %v8028
        %v8110 = vunpack.c.h.b16 %v8028
        %v8111 = vunpack.c.l.b16 %v8029
        %v8112 = vunpack.c.h.b16 %v8029
        %v8113 = vunpack.c.l.b16 %v8030
        %v8114 = vunpack.c.h.b16 %v8030
        %v8115 = vunpack.c.l.b16 %v8031
        %v8116 = vunpack.c.h.b16 %v8031
        %v8117 = vunpack.c.l.b16 %v8032
        %v8118 = vunpack.c.h.b16 %v8032
        %v8119 = vunpack.c.l.b16 %v8033
        %v8120 = vunpack.c.h.b16 %v8033
        %v8121 = vunpack.c.l.b16 %v8034
        %v8122 = vunpack.c.h.b16 %v8034
        %v8123 = vunpack.c.l.b16 %v8035
        %v8124 = vunpack.c.h.b16 %v8035
        %v8125 = vunpack.c.l.b16 %v8036
        %v8126 = vunpack.c.h.b16 %v8036
        %v8127 = vunpack.c.l.b16 %v8037
        %v8128 = vunpack.c.h.b16 %v8037
        %v8129 = vunpack.c.l.b16 %v8038
        %v8130 = vunpack.c.h.b16 %v8038
        %v8131 = vunpack.c.l.b16 %v8039
        %v8132 = vunpack.c.h.b16 %v8039
        %v8133 = vunpack.c.l.b16 %v8040
        %v8134 = vunpack.c.h.b16 %v8040
        %v8135 = vunpack.c.l.b16 %v8041
        %v8136 = vunpack.c.h.b16 %v8041
        %v8137 = vunpack.c.l.b16 %v8042
        %v8138 = vunpack.c.h.b16 %v8042
        %v8139 = vunpack.c.l.b16 %v8043
        %v8140 = vunpack.c.h.b16 %v8043
        %v8141 = vunpack.c.l.b16 %v8044
        %v8142 = vunpack.c.h.b16 %v8044
        %v8143 = vunpack.c.l.b16 %v8045
        %v8144 = vunpack.c.h.b16 %v8045
        %v8145 = vunpack.c.l.b16 %v8046
        %v8146 = vunpack.c.h.b16 %v8046
        %v8147 = vunpack.c.l.b16 %v8047
        %v8148 = vunpack.c.h.b16 %v8047
        %v8149 = vunpack.c.l.b16 %v8048
        %v8150 = vunpack.c.h.b16 %v8048
        %v8151 = vunpack.c.l.b16 %v8049
        %v8152 = vunpack.c.h.b16 %v8049
        %v8153 = vpack.c.b16 %v8091, %v8089
        %v8154 = vpack.c.b16 %v8092, %v8090
        %v8155 = vpack.c.b16 %v8095, %v8093
        %v8156 = vpack.c.b16 %v8096, %v8094
        %v8157 = vpack.c.b16 %v8099, %v8097
        %v8158 = vpack.c.b16 %v8100, %v8098
        %v8159 = vpack.c.b16 %v8103, %v8101
        %v8160 = vpack.c.b16 %v8104, %v8102
        %v8161 = vpack.c.b16 %v8107, %v8105
        %v8162 = vpack.c.b16 %v8108, %v8106
        %v8163 = vpack.c.b16 %v8111, %v8109
        %v8164 = vpack.c.b16 %v8112, %v8110
        %v8165 = vpack.c.b16 %v8115, %v8113
        %v8166 = vpack.c.b16 %v8116, %v8114
        %v8167 = vpack.c.b16 %v8119, %v8117
        %v8168 = vpack.c.b16 %v8120, %v8118
        %v8169 = vpack.c.b16 %v8123, %v8121
        %v8170 = vpack.c.b16 %v8124, %v8122
        %v8171 = vpack.c.b16 %v8127, %v8125
        %v8172 = vpack.c.b16 %v8128, %v8126
        %v8173 = vpack.c.b16 %v8131, %v8129
        %v8174 = vpack.c.b16 %v8132, %v8130
        %v8175 = vpack.c.b16 %v8135, %v8133
        %v8176 = vpack.c.b16 %v8136, %v8134
        %v8177 = vpack.c.b16 %v8139, %v8137
        %v8178 = vpack.c.b16 %v8140, %v8138
        %v8179 = vpack.c.b16 %v8143, %v8141
        %v8180 = vpack.c.b16 %v8144, %v8142
        %v8181 = vpack.c.b16 %v8147, %v8145
        %v8182 = vpack.c.b16 %v8148, %v8146
        %v8183 = vpack.c.b16 %v8151, %v8149
        %v8184 = vpack.c.b16 %v8152, %v8150
        %8217 = vmatpush.bf16.msra.mxu0 %v8167
        %8218 = vmatpush.bf16.msra.mxu0 %v8165
        %8219 = vmatpush.bf16.msra.mxu0 %v8163
        %8220 = vmatpush.bf16.msra.mxu0 %v8161
        %8221 = vmatpush.bf16.msra.mxu0 %v8159
        %8222 = vmatpush.bf16.msra.mxu0 %v8157
        %8223 = vmatpush.bf16.msra.mxu0 %v8155
        %8224 = vmatpush.bf16.msra.mxu0 %v8153
        %8225 = vmatmul.bf16.gmra.mxu0 %v8001
        %v8226 = vpop.f32.mrf.mxu0
        %v8227 = vadd.f32 %v8053, %v8226
        %v8228 = vpop.f32.mrf.mxu0
        %v8229 = vadd.f32 %v8053, %v8228
        %8230 = vmatmul.bf16.gmra.mxu0 %v8003
        %v8231 = vpop.f32.mrf.mxu0
        %v8232 = vadd.f32 %v8053, %v8231
        %v8233 = vpop.f32.mrf.mxu0
        %v8234 = vadd.f32 %v8053, %v8233
        %8235 = vmatmul.bf16.gmra.mxu0 %v8005
        %v8236 = vpop.f32.mrf.mxu0
        %v8237 = vadd.f32 %v8053, %v8236
        %v8238 = vpop.f32.mrf.mxu0
        %v8239 = vadd.f32 %v8053, %v8238
        %8240 = vmatmul.bf16.gmra.mxu0 %v8007
        %v8241 = vpop.f32.mrf.mxu0
        %v8242 = vadd.f32 %v8053, %v8241
        %v8243 = vpop.f32.mrf.mxu0
        %v8244 = vadd.f32 %v8053, %v8243
        %8245 = vmatmul.bf16.gmra.mxu0 %v8009
        %v8246 = vpop.f32.mrf.mxu0
        %v8247 = vadd.f32 %v8053, %v8246
        %v8248 = vpop.f32.mrf.mxu0
        %v8249 = vadd.f32 %v8053, %v8248
        %8250 = vmatmul.bf16.gmra.mxu0 %v8011
        %v8251 = vpop.f32.mrf.mxu0
        %v8252 = vadd.f32 %v8053, %v8251
        %v8253 = vpop.f32.mrf.mxu0
        %v8254 = vadd.f32 %v8053, %v8253
        %8255 = vmatmul.bf16.gmra.mxu0 %v8013
        %v8256 = vpop.f32.mrf.mxu0
        %v8257 = vadd.f32 %v8053, %v8256
        %v8258 = vpop.f32.mrf.mxu0
        %v8259 = vadd.f32 %v8053, %v8258
        %8260 = vmatmul.bf16.gmra.mxu0 %v8015
        %v8261 = vpop.f32.mrf.mxu0
        %v8262 = vadd.f32 %v8053, %v8261
        %v8263 = vpop.f32.mrf.mxu0
        %v8264 = vadd.f32 %v8053, %v8263
        %8265 = vdwg.mxu0
        %8266 = vmatpush.bf16.msra.mxu0 %v8183
        %8267 = vmatpush.bf16.msra.mxu0 %v8181
        %8268 = vmatpush.bf16.msra.mxu0 %v8179
        %8269 = vmatpush.bf16.msra.mxu0 %v8177
        %8270 = vmatpush.bf16.msra.mxu0 %v8175
        %8271 = vmatpush.bf16.msra.mxu0 %v8173
        %8272 = vmatpush.bf16.msra.mxu0 %v8171
        %8273 = vmatpush.bf16.msra.mxu0 %v8169
        %8274 = vmatmul.bf16.gmra.mxu0 %v8002
        %v8275 = vpop.f32.mrf.mxu0
        %v8276 = vadd.f32 %v8227, %v8275
        %v8277 = vpop.f32.mrf.mxu0
        %v8278 = vadd.f32 %v8229, %v8277
        %8279 = vmatmul.bf16.gmra.mxu0 %v8004
        %v8280 = vpop.f32.mrf.mxu0
        %v8281 = vadd.f32 %v8232, %v8280
        %v8282 = vpop.f32.mrf.mxu0
        %v8283 = vadd.f32 %v8234, %v8282
        %8284 = vmatmul.bf16.gmra.mxu0 %v8006
        %v8285 = vpop.f32.mrf.mxu0
        %v8286 = vadd.f32 %v8237, %v8285
        %v8287 = vpop.f32.mrf.mxu0
        %v8288 = vadd.f32 %v8239, %v8287
        %8289 = vmatmul.bf16.gmra.mxu0 %v8008
        %v8290 = vpop.f32.mrf.mxu0
        %v8291 = vadd.f32 %v8242, %v8290
        %v8292 = vpop.f32.mrf.mxu0
        %v8293 = vadd.f32 %v8244, %v8292
        %8294 = vmatmul.bf16.gmra.mxu0 %v8010
        %v8295 = vpop.f32.mrf.mxu0
        %v8296 = vadd.f32 %v8247, %v8295
        %v8297 = vpop.f32.mrf.mxu0
        %v8298 = vadd.f32 %v8249, %v8297
        %8299 = vmatmul.bf16.gmra.mxu0 %v8012
        %v8300 = vpop.f32.mrf.mxu0
        %v8301 = vadd.f32 %v8252, %v8300
        %v8302 = vpop.f32.mrf.mxu0
        %v8303 = vadd.f32 %v8254, %v8302
        %8304 = vmatmul.bf16.gmra.mxu0 %v8014
        %v8305 = vpop.f32.mrf.mxu0
        %v8306 = vadd.f32 %v8257, %v8305
        %v8307 = vpop.f32.mrf.mxu0
        %v8308 = vadd.f32 %v8259, %v8307
        %8309 = vmatmul.bf16.gmra.mxu0 %v8016
        %v8310 = vpop.f32.mrf.mxu0
        %v8311 = vadd.f32 %v8262, %v8310
        %v8312 = vpop.f32.mrf.mxu0
        %v8313 = vadd.f32 %v8264, %v8312
        %8314 = vdwg.mxu0
        %8315 = vmatpush.bf16.msra.mxu0 %v8168
        %8316 = vmatpush.bf16.msra.mxu0 %v8166
        %8317 = vmatpush.bf16.msra.mxu0 %v8164
        %8318 = vmatpush.bf16.msra.mxu0 %v8162
        %8319 = vmatpush.bf16.msra.mxu0 %v8160
        %8320 = vmatpush.bf16.msra.mxu0 %v8158
        %8321 = vmatpush.bf16.msra.mxu0 %v8156
        %8322 = vmatpush.bf16.msra.mxu0 %v8154
        %8323 = vmatmul.bf16.gmra.mxu0 %v8001
        %v8324 = vpop.f32.mrf.mxu0
        %v8325 = vadd.f32 %v8054, %v8324
        %v8326 = vpop.f32.mrf.mxu0
        %v8327 = vadd.f32 %v8054, %v8326
        %8328 = vmatmul.bf16.gmra.mxu0 %v8003
        %v8329 = vpop.f32.mrf.mxu0
        %v8330 = vadd.f32 %v8054, %v8329
        %v8331 = vpop.f32.mrf.mxu0
        %v8332 = vadd.f32 %v8054, %v8331
        %8333 = vmatmul.bf16.gmra.mxu0 %v8005
        %v8334 = vpop.f32.mrf.mxu0
        %v8335 = vadd.f32 %v8054, %v8334
        %v8336 = vpop.f32.mrf.mxu0
        %v8337 = vadd.f32 %v8054, %v8336
        %8338 = vmatmul.bf16.gmra.mxu0 %v8007
        %v8339 = vpop.f32.mrf.mxu0
        %v8340 = vadd.f32 %v8054, %v8339
        %v8341 = vpop.f32.mrf.mxu0
        %v8342 = vadd.f32 %v8054, %v8341
        %8343 = vmatmul.bf16.gmra.mxu0 %v8009
        %v8344 = vpop.f32.mrf.mxu0
        %v8345 = vadd.f32 %v8054, %v8344
        %v8346 = vpop.f32.mrf.mxu0
        %v8347 = vadd.f32 %v8054, %v8346
        %8348 = vmatmul.bf16.gmra.mxu0 %v8011
        %v8349 = vpop.f32.mrf.mxu0
        %v8350 = vadd.f32 %v8054, %v8349
        %v8351 = vpop.f32.mrf.mxu0
        %v8352 = vadd.f32 %v8054, %v8351
        %8353 = vmatmul.bf16.gmra.mxu0 %v8013
        %v8354 = vpop.f32.mrf.mxu0
        %v8355 = vadd.f32 %v8054, %v8354
        %v8356 = vpop.f32.mrf.mxu0
        %v8357 = vadd.f32 %v8054, %v8356
        %8358 = vmatmul.bf16.gmra.mxu0 %v8015
        %v8359 = vpop.f32.mrf.mxu0
        %v8360 = vadd.f32 %v8054, %v8359
        %v8361 = vpop.f32.mrf.mxu0
        %v8362 = vadd.f32 %v8054, %v8361
        %8363 = vdwg.mxu0
        %8364 = vmatpush.bf16.msra.mxu0 %v8184
        %8365 = vmatpush.bf16.msra.mxu0 %v8182
        %8366 = vmatpush.bf16.msra.mxu0 %v8180
        %8367 = vmatpush.bf16.msra.mxu0 %v8178
        %8368 = vmatpush.bf16.msra.mxu0 %v8176
        %8369 = vmatpush.bf16.msra.mxu0 %v8174
        %8370 = vmatpush.bf16.msra.mxu0 %v8172
        %8371 = vmatpush.bf16.msra.mxu0 %v8170
        %8372 = vmatmul.bf16.gmra.mxu0 %v8002
        %v8373 = vpop.f32.mrf.mxu0
        %v8374 = vadd.f32 %v8325, %v8373
        %v8375 = vpop.f32.mrf.mxu0
        %v8376 = vadd.f32 %v8327, %v8375
        %8377 = vmatmul.bf16.gmra.mxu0 %v8004
        %v8378 = vpop.f32.mrf.mxu0
        %v8379 = vadd.f32 %v8330, %v8378
        %v8380 = vpop.f32.mrf.mxu0
        %v8381 = vadd.f32 %v8332, %v8380
        %8382 = vmatmul.bf16.gmra.mxu0 %v8006
        %v8383 = vpop.f32.mrf.mxu0
        %v8384 = vadd.f32 %v8335, %v8383
        %v8385 = vpop.f32.mrf.mxu0
        %v8386 = vadd.f32 %v8337, %v8385
        %8387 = vmatmul.bf16.gmra.mxu0 %v8008
        %v8388 = vpop.f32.mrf.mxu0
        %v8389 = vadd.f32 %v8340, %v8388
        %v8390 = vpop.f32.mrf.mxu0
        %v8391 = vadd.f32 %v8342, %v8390
        %8392 = vmatmul.bf16.gmra.mxu0 %v8010
        %v8393 = vpop.f32.mrf.mxu0
        %v8394 = vadd.f32 %v8345, %v8393
        %v8395 = vpop.f32.mrf.mxu0
        %v8396 = vadd.f32 %v8347, %v8395
        %8397 = vmatmul.bf16.gmra.mxu0 %v8012
        %v8398 = vpop.f32.mrf.mxu0
        %v8399 = vadd.f32 %v8350, %v8398
        %v8400 = vpop.f32.mrf.mxu0
        %v8401 = vadd.f32 %v8352, %v8400
        %8402 = vmatmul.bf16.gmra.mxu0 %v8014
        %v8403 = vpop.f32.mrf.mxu0
        %v8404 = vadd.f32 %v8355, %v8403
        %v8405 = vpop.f32.mrf.mxu0
        %v8406 = vadd.f32 %v8357, %v8405
        %8407 = vmatmul.bf16.gmra.mxu0 %v8016
        %v8408 = vpop.f32.mrf.mxu0
        %v8409 = vadd.f32 %v8360, %v8408
        %v8410 = vpop.f32.mrf.mxu0
        %v8411 = vadd.f32 %v8362, %v8410
        %8412 = vdwg.mxu0
        %v8413 = vmax.f32 %v8276, 0.0
        %v8414 = vmax.f32 %v8374, 0.0
        %v8415 = vmax.f32 %v8278, 0.0
        %v8416 = vmax.f32 %v8376, 0.0
        %v8417 = vmax.f32 %v8281, 0.0
        %v8418 = vmax.f32 %v8379, 0.0
        %v8419 = vmax.f32 %v8283, 0.0
        %v8420 = vmax.f32 %v8381, 0.0
        %v8421 = vmax.f32 %v8286, 0.0
        %v8422 = vmax.f32 %v8384, 0.0
        %v8423 = vmax.f32 %v8288, 0.0
        %v8424 = vmax.f32 %v8386, 0.0
        %v8425 = vmax.f32 %v8291, 0.0
        %v8426 = vmax.f32 %v8389, 0.0
        %v8427 = vmax.f32 %v8293, 0.0
        %v8428 = vmax.f32 %v8391, 0.0
        %v8429 = vmax.f32 %v8296, 0.0
        %v8430 = vmax.f32 %v8394, 0.0
        %v8431 = vmax.f32 %v8298, 0.0
        %v8432 = vmax.f32 %v8396, 0.0
        %v8433 = vmax.f32 %v8301, 0.0
        %v8434 = vmax.f32 %v8399, 0.0
        %v8435 = vmax.f32 %v8303, 0.0
        %v8436 = vmax.f32 %v8401, 0.0
        %v8437 = vmax.f32 %v8306, 0.0
        %v8438 = vmax.f32 %v8404, 0.0
        %v8439 = vmax.f32 %v8308, 0.0
        %v8440 = vmax.f32 %v8406, 0.0
        %v8441 = vmax.f32 %v8311, 0.0
        %v8442 = vmax.f32 %v8409, 0.0
        %v8443 = vmax.f32 %v8313, 0.0
        %v8444 = vmax.f32 %v8411, 0.0
        %v8445 = vadd.f32 %v6655, %v8413
        %v8446 = vadd.f32 %v6656, %v8414
        %v8447 = vadd.f32 %v6657, %v8415
        %v8448 = vadd.f32 %v6658, %v8416
        %v8449 = vadd.f32 %v6659, %v8417
        %v8450 = vadd.f32 %v6660, %v8418
        %v8451 = vadd.f32 %v6661, %v8419
        %v8452 = vadd.f32 %v6662, %v8420
        %v8453 = vadd.f32 %v6663, %v8421
        %v8454 = vadd.f32 %v6664, %v8422
        %v8455 = vadd.f32 %v6665, %v8423
        %v8456 = vadd.f32 %v6666, %v8424
        %v8457 = vadd.f32 %v6667, %v8425
        %v8458 = vadd.f32 %v6668, %v8426
        %v8459 = vadd.f32 %v6669, %v8427
        %v8460 = vadd.f32 %v6670, %v8428
        %v8461 = vadd.f32 %v6671, %v8429
        %v8462 = vadd.f32 %v6672, %v8430
        %v8463 = vadd.f32 %v6673, %v8431
        %v8464 = vadd.f32 %v6674, %v8432
        %v8465 = vadd.f32 %v6675, %v8433
        %v8466 = vadd.f32 %v6676, %v8434
        %v8467 = vadd.f32 %v6677, %v8435
        %v8468 = vadd.f32 %v6678, %v8436
        %v8469 = vadd.f32 %v6679, %v8437
        %v8470 = vadd.f32 %v6680, %v8438
        %v8471 = vadd.f32 %v6681, %v8439
        %v8472 = vadd.f32 %v6682, %v8440
        %v8473 = vadd.f32 %v6683, %v8441
        %v8474 = vadd.f32 %v6684, %v8442
        %v8475 = vadd.f32 %v6685, %v8443
        %v8476 = vadd.f32 %v6686, %v8444
        %s8477 = scalar_lea.vmem %s438, 768
        %8478 = vst [vmem:[%s8477] sm:$0xff] %v8445
        %8479 = vst [vmem:[%s8477 + $0x8] sm:$0xff] %v8446
        %8480 = vst [vmem:[%s8477 + $0x10] sm:$0xff] %v8447
        %8481 = vst [vmem:[%s8477 + $0x18] sm:$0xff] %v8448
        %8482 = vst [vmem:[%s8477 + $0x20] sm:$0xff] %v8449
        %8483 = vst [vmem:[%s8477 + $0x28] sm:$0xff] %v8450
        %8484 = vst [vmem:[%s8477 + $0x30] sm:$0xff] %v8451
        %8485 = vst [vmem:[%s8477 + $0x38] sm:$0xff] %v8452
        %8486 = vst [vmem:[%s8477 + $0x40] sm:$0xff] %v8453
        %8487 = vst [vmem:[%s8477 + $0x48] sm:$0xff] %v8454
        %8488 = vst [vmem:[%s8477 + $0x50] sm:$0xff] %v8455
        %8489 = vst [vmem:[%s8477 + $0x58] sm:$0xff] %v8456
        %8490 = vst [vmem:[%s8477 + $0x60] sm:$0xff] %v8457
        %8491 = vst [vmem:[%s8477 + $0x68] sm:$0xff] %v8458
        %8492 = vst [vmem:[%s8477 + $0x70] sm:$0xff] %v8459
        %8493 = vst [vmem:[%s8477 + $0x78] sm:$0xff] %v8460
        %8494 = vst [vmem:[%s8477 + $0x80] sm:$0xff] %v8461
        %8495 = vst [vmem:[%s8477 + $0x88] sm:$0xff] %v8462
        %8496 = vst [vmem:[%s8477 + $0x90] sm:$0xff] %v8463
        %8497 = vst [vmem:[%s8477 + $0x98] sm:$0xff] %v8464
        %8498 = vst [vmem:[%s8477 + $0xa0] sm:$0xff] %v8465
        %8499 = vst [vmem:[%s8477 + $0xa8] sm:$0xff] %v8466
        %8500 = vst [vmem:[%s8477 + $0xb0] sm:$0xff] %v8467
        %8501 = vst [vmem:[%s8477 + $0xb8] sm:$0xff] %v8468
        %8502 = vst [vmem:[%s8477 + $0xc0] sm:$0xff] %v8469
        %8503 = vst [vmem:[%s8477 + $0xc8] sm:$0xff] %v8470
        %8504 = vst [vmem:[%s8477 + $0xd0] sm:$0xff] %v8471
        %8505 = vst [vmem:[%s8477 + $0xd8] sm:$0xff] %v8472
        %8506 = vst [vmem:[%s8477 + $0xe0] sm:$0xff] %v8473
        %8507 = vst [vmem:[%s8477 + $0xe8] sm:$0xff] %v8474
        %8508 = vst [vmem:[%s8477 + $0xf0] sm:$0xff] %v8475
        %8509 = vst [vmem:[%s8477 + $0xf8] sm:$0xff] %v8476
        %p8510 = scmp.lt.s32.totalorder %s24, 1
        %s8511 = scalar_select %p8510, %s24, 1
        %s8512 = smul.addr %s8511, 128
        %s8513 = smul.addr %s8512, 8
        %s8514 = scalar_lea.vmem %s10, %s8513
        // Predicated region
        $region81: #{stacked_attention_forward.1} parent=59 // pred_check
          %p8515 = pneg %p257
        $region82: #{stacked_attention_forward.1} parent=59 // pred_check_branch
          %8517 = sbr.rel (%p8515) target = $region84
        $region83: #{stacked_attention_forward.1} parent=59 // pred_region
          _
        $region84: #{stacked_attention_forward.1} parent=59 // pred_fallthru
          _
      $region60: #{stacked_attention_forward.1} parent=5 // pred_fallthru
        _
      %p8518 = scmp.le.s32.totalorder 2, %s19
      // Predicated region
      $region85: #{stacked_attention_forward.1} parent=5 // pred_check
        %p8519 = pneg %p8518
      $region86: #{stacked_attention_forward.1} parent=5 // pred_check_branch
        %8521 = sbr.rel (%p8519) target = $region88
      $region87: #{stacked_attention_forward.1} parent=5 // pred_region
        %s8522 = ssub.s32 %s19, 2
        // Predicated region
        $region89: #{stacked_attention_forward.1} parent=87 // pred_check
          %p8523 = pneg %p263
        $region90: #{stacked_attention_forward.1} parent=87 // pred_check_branch
          %8525 = sbr.rel (%p8523) target = $region92
        $region91: #{stacked_attention_forward.1} parent=87 // pred_region
          %p8526 = scmp.lt.s32.totalorder %s25, 1
          %s8527 = scalar_select %p8526, %s25, 1
          %s8528 = smul.addr %s8527, 128
          %s8529 = smul.addr %s8528, 8
          %s8530 = scalar_lea.vmem %s10, %s8529
        $region92: #{stacked_attention_forward.1} parent=87 // pred_fallthru
          _
      $region88: #{stacked_attention_forward.1} parent=5 // pred_fallthru
        _
    $region6: #{stacked_attention_forward.1} parent=1 // loop_footer
      %s23 = sadd.s32 1, %s19
    $region7: #{stacked_attention_forward.1} parent=1 // loop_footer_branch
      %18 = sbr.rel target = $region3
    $region8: #{stacked_attention_forward.1} parent=1 // loop_exit
      _
    %8531 = vsyncpa [#allocation3], 1
    %s8532 = scalar_lea.sflag [#allocation3], 1
    %8533 = vsyncpa %s8532, 1
    %8534 = vsyncpa [#allocation5], 1
    %8535 = vsyncpa [#allocation8], 1

</llo_original>
